<compile_context>
chip_gen: v6e
topology: v6e:2x2x1
jax: 0.10.0
libtpu: 0.0.40
codegen_flags: <defaults>
</compile_context>

<pallas_src>
import math

import numpy as np
import jax
import jax.numpy as jnp
from jax.experimental import pallas as pl
from jax.experimental.pallas import tpu as pltpu

EPS = 1e-5


def _gelu(x):
    # TODO(synk): nn.GELU() uses the exact erf form; Mosaic has no erf lowering, so the
    # tanh approximation is used (max abs error ~1e-3).
    c = math.sqrt(2.0 / math.pi)
    return 0.5 * x * (1.0 + jnp.tanh(c * (x + 0.044715 * x * x * x)))


def _vmem():
    return pl.BlockSpec(memory_space=pltpu.MemorySpace.VMEM)


def _smem():
    return pl.BlockSpec(memory_space=pltpu.MemorySpace.SMEM)


def mbconv_forward(x_nchw, p):
    B, C0, H, W = x_nchw.shape
    assert H == W, "Spa's spatial matmul requires square feature maps"
    hid = p['w1'].shape[1]
    se = p['wfc1'].shape[1]
    S = H * W
    N = B * S

    # -------- wrapper-side layout plumbing (tiny, plain XLA, outside the kernel) -----
    # channels-first, flat-spatial layout: activations are (channels, B*H*W).
    x_cn = jnp.transpose(x_nchw, (1, 0, 2, 3)).reshape(C0, N)

    bn0g = p['bn0_g'].reshape(C0, 1)
    bn0b = p['bn0_b'].reshape(C0, 1)
    w1t = p['w1'].T                                     # (hid, C0)
    bn1g = p['bn1_g'].reshape(hid, 1)
    bn1b = p['bn1_b'].reshape(hid, 1)
    wd_cols = p['wd9'].reshape(9, hid, 1)               # per-tap per-channel columns
    bn2g = p['bn2_g'].reshape(hid, 1)
    bn2b = p['bn2_b'].reshape(hid, 1)
    wfc1_cols = p['wfc1'].T.reshape(se, hid, 1)         # SE Linear1, per-unit columns
    wfc2_cols = p['wfc2'].reshape(se, hid, 1)           # SE Linear2, per-unit columns
    wm_col = p['wm'].reshape(hid, 1)                    # Spa conv_mask weight
    w2t = p['w2'].T                                     # (C0, hid)
    bn3g = p['bn3_g'].reshape(C0, 1)
    bn3b = p['bn3_b'].reshape(C0, 1)

    # -------- compile-time constants (shape-only), built with numpy ------------------
    u = np.arange(N)
    xs, ys = u % W, (u // W) % H
    taps = [(dy, dx) for dy in (-1, 0, 1) for dx in (-1, 0, 1)]     # matches ky*3+kx
    dw_mask = np.stack(
        [((xs + dx >= 0) & (xs + dx < W) & (ys + dy >= 0) & (ys + dy < H)
          ).astype(np.float32)[None, :] for dy, dx in taps], axis=0)        # (9, 1, N)
    dw_shift = [(-(dy * W + dx)) % N for dy, dx in taps]

    s = np.arange(S)
    row_mask_c = jnp.asarray(
        (s[None, :] // W == np.arange(H)[:, None]).astype(np.float32))      # (H, S)
    col_sel_np = (s[:, None] % W == np.arange(W)[None, :]).astype(np.float32)
    col_sel_c = jnp.asarray(col_sel_np)                                      # (S, W)
    col_selT_c = jnp.asarray(np.ascontiguousarray(col_sel_np.T))             # (W, S)
    cr7_c = jnp.asarray(
        np.stack([np.eye(W, k=3 - kx, dtype=np.float32) for kx in range(7)]))  # (7,W,W)
    dw_mask = jnp.asarray(dw_mask)

    # -------- Spa 7x7 conv folded into banded row matrices (depends on weights) ------
    dyi = np.arange(H)[None, :] - np.arange(H)[:, None] + 3        # ky = y' - y + 3
    valid = (dyi >= 0) & (dyi <= 6)
    dyc = np.clip(dyi, 0, 6)
    wl_parts = []
    for kx in range(7):
        wa = jnp.where(valid, p['w7a'][dyc, kx], 0.0)              # (H, H) avg channel
        wm7 = jnp.where(valid, p['w7m'][dyc, kx], 0.0)             # (H, H) max channel
        wl_parts.append(jnp.concatenate([wa, wm7], axis=1))        # (H, 2H)
    wl7 = jnp.stack(wl_parts, axis=0).astype(jnp.float32)          # (7, H, 2H)

    def bn_rows(v, g, b):
        # training-mode BatchNorm (biased variance); single pass: sum + sum-of-squares.
        inv = 1.0 / v.shape[1]
        mu = jnp.sum(v, axis=1, keepdims=True) * inv
        var = jnp.sum(v * v, axis=1, keepdims=True) * inv - mu * mu
        return (v - mu) * jax.lax.rsqrt(var + EPS) * g + b

    def kernel(x_ref, bn0g_ref, bn0b_ref, w1t_ref, bn1g_ref, bn1b_ref,
               wd_ref, dwm_ref, bn2g_ref, bn2b_ref, wfc1_ref, wfc2_ref,
               wm_ref, bm_ref, rowm_ref, csel_ref, cselT_ref, wl7_ref,
               cr7_ref, b7_ref, w2t_ref, bn3g_ref, bn3b_ref, o_ref):
        f32 = jnp.float32
        x = x_ref[...]                                              # (C0, N)

        # PreNorm BN -> 1x1 expand (MXU) -> BN1 -> GELU
        xn = bn_rows(x, bn0g_ref[...], bn0b_ref[...])
        h = jnp.dot(w1t_ref[...], xn, preferred_element_type=f32)   # (hid, N)
        h = _gelu(bn_rows(h, bn1g_ref[...], bn1b_ref[...]))

        # depthwise 3x3: lane rolls (XLU) + precomputed zero-pad masks (VPU)
        acc = h * wd_ref[4]                                         # center tap (0,0)
        for k, (dy, dx) in enumerate(taps):
            if dy == 0 and dx == 0:
                continue
            shifted = pltpu.roll(h, shift=dw_shift[k], axis=1)
            acc = acc + shifted * dwm_ref[k] * wd_ref[k]
        h = _gelu(bn_rows(acc, bn2g_ref[...], bn2b_ref[...]))       # (hid, N)

        # SE: avg-pool + 2-layer MLP + sigmoid gate (VPU only; K,N <= se kept off MXU)
        se_halves = []
        for b in range(B):
            hb = h[:, b * S:(b + 1) * S]                            # (hid, S) aligned
            pooled = jnp.sum(hb, axis=1, keepdims=True) * (1.0 / S)  # (hid, 1)
            z = [_gelu(jnp.sum(pooled * wfc1_ref[j], axis=0, keepdims=True))
                 for j in range(se)]                                # se x (1, 1)
            gate = z[0] * wfc2_ref[0]
            for j in range(1, se):
                gate = gate + z[j] * wfc2_ref[j]
            gate = jax.nn.sigmoid(gate)                             # (hid, 1)
            se_halves.append(hb * gate)
        h_se = jnp.concatenate(se_halves, axis=1)                   # (hid, N)

        # Spa context mask: 1x1 conv (sublane reduce) + bias, then softmax over the
        # BATCH dim (nn.Softmax() implicit-dim rule for 3-D input).
        cm = jnp.sum(h_se * wm_ref[...], axis=0, keepdims=True) + bm_ref[0]   # (1, N)
        cm_b = [cm[:, b * S:(b + 1) * S] for b in range(B)]
        cmax = cm_b[0]
        for b in range(1, B):
            cmax = jnp.maximum(cmax, cm_b[b])
        es = [jnp.exp(c - cmax) for c in cm_b]
        den = es[0]
        for b in range(1, B):
            den = den + es[b]
        cm_sm = [e / den for e in es]                               # B x (1, S)

        # channel mean / max maps
        avg_f = jnp.sum(h_se, axis=0, keepdims=True) * (1.0 / hid)  # (1, N)
        max_f = jnp.max(h_se, axis=0, keepdims=True)                # (1, N)

        rowm = rowm_ref[...]                                        # (H, S)
        csel = csel_ref[...]                                        # (S, W)
        cselT = cselT_ref[...]                                      # (W, S)
        gated = []
        for b in range(B):
            lo, hi = b * S, (b + 1) * S
            # flat -> (H, W): mask-mul + constant gather matmul (no reshapes)
            a2 = jnp.dot(rowm * avg_f[:, lo:hi], csel, preferred_element_type=f32)
            m2 = jnp.dot(rowm * max_f[:, lo:hi], csel, preferred_element_type=f32)
            c2 = jnp.dot(rowm * cm_sm[b], csel, preferred_element_type=f32)
            am = jnp.concatenate([a2, m2], axis=0)                  # (2H, W) avg+max
            q = jnp.dot(am, c2, preferred_element_type=f32)         # one spatial matmul
            # 7x7 conv(2->1, pad 3): 7 banded row/col matmul pairs
            g2d = jnp.dot(jnp.dot(wl7_ref[0], q, preferred_element_type=f32),
                          cr7_ref[0], preferred_element_type=f32)
            for kx in range(1, 7):
                g2d = g2d + jnp.dot(
                    jnp.dot(wl7_ref[kx], q, preferred_element_type=f32),
                    cr7_ref[kx], preferred_element_type=f32)
            g2d = jax.nn.sigmoid(g2d + b7_ref[0])                   # (H, W)
            # (H, W) -> flat (1, S): gather matmul + masked row-sum
            gflat = jnp.sum(jnp.dot(g2d, cselT, preferred_element_type=f32) * rowm,
                            axis=0, keepdims=True)                  # (1, S)
            gated.append(h_se[:, lo:hi] * gflat)
        h_gate = jnp.concatenate(gated, axis=1)                     # (hid, N)

        # 1x1 project (MXU) -> BN3 -> residual; lane-dense (C0, N) store
        y = jnp.dot(w2t_ref[...], h_gate, preferred_element_type=f32)   # (C0, N)
        y = bn_rows(y, bn3g_ref[...], bn3b_ref[...])
        o_ref[...] = x + y

    in_specs = [_vmem()] * 23
    in_specs[13] = _smem()    # bm scalar bias
    in_specs[19] = _smem()    # b7 scalar bias

    out_cn = pl.pallas_call(
        kernel,
        out_shape=jax.ShapeDtypeStruct((C0, N), jnp.float32),
        in_specs=in_specs,
        out_specs=_vmem(),
        compiler_params=pltpu.CompilerParams(
            vmem_limit_bytes=32 * 1024 * 1024),   # well inside v7x's 64 MiB budget
    )(x_cn, bn0g, bn0b, w1t, bn1g, bn1b, wd_cols, dw_mask, bn2g, bn2b,
      wfc1_cols, wfc2_cols, wm_col, p['bm'], row_mask_c, col_sel_c, col_selT_c,
      wl7, cr7_c, p['b7'], w2t, bn3g, bn3b)

    return jnp.transpose(out_cn.reshape(C0, B, H, W), (1, 0, 2, 3))


# ------------------------------------------------------------------------- main ----
if __name__ == "__main__":
    B, C0, H, W = 2, 8, 16, 16           # inp = oup = 8, image_size = 16
    expansion = 4
    hid = C0 * expansion                 # 32
    se = int(C0 * 0.25)                  # 2

    key = jax.random.PRNGKey(0)
    ks = jax.random.split(key, 12)

    def rnd(k, shape, scale=0.1):
        return scale * jax.random.normal(k, shape, jnp.float32)

    params = {
        # PreNorm BatchNorm2d(inp): default gamma=1, beta=0
        'bn0_g': jnp.ones((1, C0), jnp.float32), 'bn0_b': jnp.zeros((1, C0), jnp.float32),
        # Conv2d(inp, hidden, 1, bias=False): weight (hid, C0, 1, 1) -> (C0, hid)
        'w1': rnd(ks[0], (C0, hid)),
        'bn1_g': jnp.ones((1, hid), jnp.float32), 'bn1_b': jnp.zeros((1, hid), jnp.float32),
        # Depthwise Conv2d(hid, hid, 3, groups=hid): weight (hid,1,3,3) -> (9, hid)
        'wd9': rnd(ks[1], (9, hid)),
        'bn2_g': jnp.ones((1, hid), jnp.float32), 'bn2_b': jnp.zeros((1, hid), jnp.float32),
        # SE: Linear(hid, se, bias=False) -> (hid, se); Linear(se, hid, bias=False) -> (se, hid)
        'wfc1': rnd(ks[2], (hid, se)),
        'wfc2': rnd(ks[3], (se, hid)),
        # Spa conv_mask: Conv2d(hid, 1, 1) weight (1,hid,1,1) -> (1,hid), bias (1,)
        'wm': rnd(ks[4], (1, hid)),
        'bm': rnd(ks[5], (1,)),
        # Spa conv: Conv2d(2, 1, 7, pad=3) weight (1,2,7,7) -> two (7,7) taps, bias (1,)
        'w7a': rnd(ks[6], (7, 7)),
        'w7m': rnd(ks[7], (7, 7)),
        'b7': rnd(ks[8], (1,)),
        # Conv2d(hid, oup, 1, bias=False): weight (oup, hid, 1, 1) -> (hid, C0)
        'w2': rnd(ks[9], (hid, C0)),
        'bn3_g': jnp.ones((1, C0), jnp.float32), 'bn3_b': jnp.zeros((1, C0), jnp.float32),
    }

    x = jax.random.normal(ks[10], (B, C0, H, W), jnp.float32)   # NCHW like PyTorch

    y = jax.jit(mbconv_forward)(x, params)
    jax.block_until_ready(y)
    assert y.shape == (B, C0, H, W) and y.dtype == jnp.float32
    print("KERNEL_OK")
</pallas_src>

<mosaic_0001>
module attributes {stable_mosaic.version = 11 : i64} {
  func.func @kernel(%arg0: memref<8x512xf32, #tpu.memory_space<vmem>>, %arg1: memref<8x1xf32, #tpu.memory_space<vmem>>, %arg2: memref<8x1xf32, #tpu.memory_space<vmem>>, %arg3: memref<32x8xf32, #tpu.memory_space<vmem>>, %arg4: memref<32x1xf32, #tpu.memory_space<vmem>>, %arg5: memref<32x1xf32, #tpu.memory_space<vmem>>, %arg6: memref<9x32x1xf32, #tpu.memory_space<vmem>>, %arg7: memref<9x1x512xf32, #tpu.memory_space<vmem>>, %arg8: memref<32x1xf32, #tpu.memory_space<vmem>>, %arg9: memref<32x1xf32, #tpu.memory_space<vmem>>, %arg10: memref<2x32x1xf32, #tpu.memory_space<vmem>>, %arg11: memref<2x32x1xf32, #tpu.memory_space<vmem>>, %arg12: memref<32x1xf32, #tpu.memory_space<vmem>>, %arg13: memref<1xf32, #tpu.memory_space<smem>>, %arg14: memref<16x256xf32, #tpu.memory_space<vmem>>, %arg15: memref<256x16xf32, #tpu.memory_space<vmem>>, %arg16: memref<16x256xf32, #tpu.memory_space<vmem>>, %arg17: memref<7x16x32xf32, #tpu.memory_space<vmem>>, %arg18: memref<7x16x16xf32, #tpu.memory_space<vmem>>, %arg19: memref<1xf32, #tpu.memory_space<smem>>, %arg20: memref<8x32xf32, #tpu.memory_space<vmem>>, %arg21: memref<8x1xf32, #tpu.memory_space<vmem>>, %arg22: memref<8x1xf32, #tpu.memory_space<vmem>>, %arg23: memref<8x512xf32, #tpu.memory_space<vmem>>) attributes {dimension_semantics = [], scalar_prefetch = 0 : i64, scratch_operands = 0 : i64, tpu.core_type = #tpu.core_type<tc>} {
    %c0 = arith.constant 0 : index
    %c0_0 = arith.constant 0 : index
    %0 = vector.load %arg0[%c0, %c0_0] : memref<8x512xf32, #tpu.memory_space<vmem>>, vector<8x512xf32>
    %c0_1 = arith.constant 0 : index
    %c0_2 = arith.constant 0 : index
    %1 = vector.load %arg1[%c0_1, %c0_2] : memref<8x1xf32, #tpu.memory_space<vmem>>, vector<8x1xf32>
    %c0_3 = arith.constant 0 : index
    %c0_4 = arith.constant 0 : index
    %2 = vector.load %arg2[%c0_3, %c0_4] : memref<8x1xf32, #tpu.memory_space<vmem>>, vector<8x1xf32>
    %cst = arith.constant dense<0.000000e+00> : vector<8xf32>
    %3 = vector.multi_reduction <add>, %0, %cst [1] : vector<8x512xf32> to vector<8xf32>
    %4 = vector.shape_cast %3 : vector<8xf32> to vector<8x1xf32>
    %cst_5 = arith.constant 0.001953125 : f32
    %5 = vector.broadcast %cst_5 : f32 to vector<8x1xf32>
    %6 = arith.mulf %4, %5 : vector<8x1xf32>
    %7 = arith.mulf %0, %0 : vector<8x512xf32>
    %cst_6 = arith.constant dense<0.000000e+00> : vector<8xf32>
    %8 = vector.multi_reduction <add>, %7, %cst_6 [1] : vector<8x512xf32> to vector<8xf32>
    %9 = vector.shape_cast %8 : vector<8xf32> to vector<8x1xf32>
    %cst_7 = arith.constant 0.001953125 : f32
    %10 = vector.broadcast %cst_7 : f32 to vector<8x1xf32>
    %11 = arith.mulf %9, %10 : vector<8x1xf32>
    %12 = arith.mulf %6, %6 : vector<8x1xf32>
    %13 = arith.subf %11, %12 : vector<8x1xf32>
    %14 = vector.broadcast %6 : vector<8x1xf32> to vector<8x512xf32>
    %15 = arith.subf %0, %14 : vector<8x512xf32>
    %cst_8 = arith.constant 9.99999974E-6 : f32
    %16 = vector.broadcast %cst_8 : f32 to vector<8x1xf32>
    %17 = arith.addf %13, %16 : vector<8x1xf32>
    %18 = math.rsqrt %17 : vector<8x1xf32>
    %19 = vector.broadcast %18 : vector<8x1xf32> to vector<8x512xf32>
    %20 = arith.mulf %15, %19 : vector<8x512xf32>
    %21 = vector.broadcast %1 : vector<8x1xf32> to vector<8x512xf32>
    %22 = arith.mulf %20, %21 : vector<8x512xf32>
    %23 = vector.broadcast %2 : vector<8x1xf32> to vector<8x512xf32>
    %24 = arith.addf %22, %23 : vector<8x512xf32>
    %c0_9 = arith.constant 0 : index
    %c0_10 = arith.constant 0 : index
    %25 = vector.load %arg3[%c0_9, %c0_10] : memref<32x8xf32, #tpu.memory_space<vmem>>, vector<32x8xf32>
    %cst_11 = arith.constant dense<0.000000e+00> : vector<32x512xf32>
    %26 = tpu.matmul %25, %24, %cst_11 {dimension_numbers = #tpu.dot_dimension_numbers<[1], [0], [0], [1], [0, 0, 1, 1], [], []>} : vector<32x8xf32>, vector<8x512xf32>, vector<32x512xf32> -> vector<32x512xf32>
    %c0_12 = arith.constant 0 : index
    %c0_13 = arith.constant 0 : index
    %27 = vector.load %arg4[%c0_12, %c0_13] : memref<32x1xf32, #tpu.memory_space<vmem>>, vector<32x1xf32>
    %c0_14 = arith.constant 0 : index
    %c0_15 = arith.constant 0 : index
    %28 = vector.load %arg5[%c0_14, %c0_15] : memref<32x1xf32, #tpu.memory_space<vmem>>, vector<32x1xf32>
    %cst_16 = arith.constant dense<0.000000e+00> : vector<32xf32>
    %29 = vector.multi_reduction <add>, %26, %cst_16 [1] : vector<32x512xf32> to vector<32xf32>
    %30 = vector.shape_cast %29 : vector<32xf32> to vector<32x1xf32>
    %cst_17 = arith.constant 0.001953125 : f32
    %31 = vector.broadcast %cst_17 : f32 to vector<32x1xf32>
    %32 = arith.mulf %30, %31 : vector<32x1xf32>
    %33 = arith.mulf %26, %26 : vector<32x512xf32>
    %cst_18 = arith.constant dense<0.000000e+00> : vector<32xf32>
    %34 = vector.multi_reduction <add>, %33, %cst_18 [1] : vector<32x512xf32> to vector<32xf32>
    %35 = vector.shape_cast %34 : vector<32xf32> to vector<32x1xf32>
    %cst_19 = arith.constant 0.001953125 : f32
    %36 = vector.broadcast %cst_19 : f32 to vector<32x1xf32>
    %37 = arith.mulf %35, %36 : vector<32x1xf32>
    %38 = arith.mulf %32, %32 : vector<32x1xf32>
    %39 = arith.subf %37, %38 : vector<32x1xf32>
    %40 = vector.broadcast %32 : vector<32x1xf32> to vector<32x512xf32>
    %41 = arith.subf %26, %40 : vector<32x512xf32>
    %cst_20 = arith.constant 9.99999974E-6 : f32
    %42 = vector.broadcast %cst_20 : f32 to vector<32x1xf32>
    %43 = arith.addf %39, %42 : vector<32x1xf32>
    %44 = math.rsqrt %43 : vector<32x1xf32>
    %45 = vector.broadcast %44 : vector<32x1xf32> to vector<32x512xf32>
    %46 = arith.mulf %41, %45 : vector<32x512xf32>
    %47 = vector.broadcast %27 : vector<32x1xf32> to vector<32x512xf32>
    %48 = arith.mulf %46, %47 : vector<32x512xf32>
    %49 = vector.broadcast %28 : vector<32x1xf32> to vector<32x512xf32>
    %50 = arith.addf %48, %49 : vector<32x512xf32>
    %cst_21 = arith.constant 5.000000e-01 : f32
    %51 = vector.broadcast %cst_21 : f32 to vector<32x512xf32>
    %52 = arith.mulf %51, %50 : vector<32x512xf32>
    %cst_22 = arith.constant 4.471500e-02 : f32
    %53 = vector.broadcast %cst_22 : f32 to vector<32x512xf32>
    %54 = arith.mulf %53, %50 : vector<32x512xf32>
    %55 = arith.mulf %54, %50 : vector<32x512xf32>
    %56 = arith.mulf %55, %50 : vector<32x512xf32>
    %57 = arith.addf %50, %56 : vector<32x512xf32>
    %cst_23 = arith.constant 0.797884583 : f32
    %58 = vector.broadcast %cst_23 : f32 to vector<32x512xf32>
    %59 = arith.mulf %58, %57 : vector<32x512xf32>
    %60 = math.tanh %59 : vector<32x512xf32>
    %cst_24 = arith.constant 1.000000e+00 : f32
    %61 = vector.broadcast %cst_24 : f32 to vector<32x512xf32>
    %62 = arith.addf %61, %60 : vector<32x512xf32>
    %63 = arith.mulf %52, %62 : vector<32x512xf32>
    %c4 = arith.constant 4 : index
    %c0_25 = arith.constant 0 : index
    %c0_26 = arith.constant 0 : index
    %64 = vector.load %arg6[%c4, %c0_25, %c0_26] : memref<9x32x1xf32, #tpu.memory_space<vmem>>, vector<1x32x1xf32>
    %65 = vector.shape_cast %64 : vector<1x32x1xf32> to vector<32x1xf32>
    %66 = vector.broadcast %65 : vector<32x1xf32> to vector<32x512xf32>
    %67 = arith.mulf %63, %66 : vector<32x512xf32>
    %c17_i32 = arith.constant 17 : i32
    %68 = tpu.dynamic_rotate %63 by %c17_i32 dim 1 : vector<32x512xf32>, i32 -> vector<32x512xf32>
    %c0_27 = arith.constant 0 : index
    %c0_28 = arith.constant 0 : index
    %c0_29 = arith.constant 0 : index
    %69 = vector.load %arg7[%c0_27, %c0_28, %c0_29] : memref<9x1x512xf32, #tpu.memory_space<vmem>>, vector<1x1x512xf32>
    %70 = vector.shape_cast %69 : vector<1x1x512xf32> to vector<1x512xf32>
    %71 = vector.broadcast %70 : vector<1x512xf32> to vector<32x512xf32>
    %72 = arith.mulf %68, %71 : vector<32x512xf32>
    %c0_30 = arith.constant 0 : index
    %c0_31 = arith.constant 0 : index
    %c0_32 = arith.constant 0 : index
    %73 = vector.load %arg6[%c0_30, %c0_31, %c0_32] : memref<9x32x1xf32, #tpu.memory_space<vmem>>, vector<1x32x1xf32>
    %74 = vector.shape_cast %73 : vector<1x32x1xf32> to vector<32x1xf32>
    %75 = vector.broadcast %74 : vector<32x1xf32> to vector<32x512xf32>
    %76 = arith.mulf %72, %75 : vector<32x512xf32>
    %77 = arith.addf %67, %76 : vector<32x512xf32>
    %c16_i32 = arith.constant 16 : i32
    %78 = tpu.dynamic_rotate %63 by %c16_i32 dim 1 : vector<32x512xf32>, i32 -> vector<32x512xf32>
    %c1 = arith.constant 1 : index
    %c0_33 = arith.constant 0 : index
    %c0_34 = arith.constant 0 : index
    %79 = vector.load %arg7[%c1, %c0_33, %c0_34] : memref<9x1x512xf32, #tpu.memory_space<vmem>>, vector<1x1x512xf32>
    %80 = vector.shape_cast %79 : vector<1x1x512xf32> to vector<1x512xf32>
    %81 = vector.broadcast %80 : vector<1x512xf32> to vector<32x512xf32>
    %82 = arith.mulf %78, %81 : vector<32x512xf32>
    %c1_35 = arith.constant 1 : index
    %c0_36 = arith.constant 0 : index
    %c0_37 = arith.constant 0 : index
    %83 = vector.load %arg6[%c1_35, %c0_36, %c0_37] : memref<9x32x1xf32, #tpu.memory_space<vmem>>, vector<1x32x1xf32>
    %84 = vector.shape_cast %83 : vector<1x32x1xf32> to vector<32x1xf32>
    %85 = vector.broadcast %84 : vector<32x1xf32> to vector<32x512xf32>
    %86 = arith.mulf %82, %85 : vector<32x512xf32>
    %87 = arith.addf %77, %86 : vector<32x512xf32>
    %c15_i32 = arith.constant 15 : i32
    %88 = tpu.dynamic_rotate %63 by %c15_i32 dim 1 : vector<32x512xf32>, i32 -> vector<32x512xf32>
    %c2 = arith.constant 2 : index
    %c0_38 = arith.constant 0 : index
    %c0_39 = arith.constant 0 : index
    %89 = vector.load %arg7[%c2, %c0_38, %c0_39] : memref<9x1x512xf32, #tpu.memory_space<vmem>>, vector<1x1x512xf32>
    %90 = vector.shape_cast %89 : vector<1x1x512xf32> to vector<1x512xf32>
    %91 = vector.broadcast %90 : vector<1x512xf32> to vector<32x512xf32>
    %92 = arith.mulf %88, %91 : vector<32x512xf32>
    %c2_40 = arith.constant 2 : index
    %c0_41 = arith.constant 0 : index
    %c0_42 = arith.constant 0 : index
    %93 = vector.load %arg6[%c2_40, %c0_41, %c0_42] : memref<9x32x1xf32, #tpu.memory_space<vmem>>, vector<1x32x1xf32>
    %94 = vector.shape_cast %93 : vector<1x32x1xf32> to vector<32x1xf32>
    %95 = vector.broadcast %94 : vector<32x1xf32> to vector<32x512xf32>
    %96 = arith.mulf %92, %95 : vector<32x512xf32>
    %97 = arith.addf %87, %96 : vector<32x512xf32>
    %c1_i32 = arith.constant 1 : i32
    %98 = tpu.dynamic_rotate %63 by %c1_i32 dim 1 : vector<32x512xf32>, i32 -> vector<32x512xf32>
    %c3 = arith.constant 3 : index
    %c0_43 = arith.constant 0 : index
    %c0_44 = arith.constant 0 : index
    %99 = vector.load %arg7[%c3, %c0_43, %c0_44] : memref<9x1x512xf32, #tpu.memory_space<vmem>>, vector<1x1x512xf32>
    %100 = vector.shape_cast %99 : vector<1x1x512xf32> to vector<1x512xf32>
    %101 = vector.broadcast %100 : vector<1x512xf32> to vector<32x512xf32>
    %102 = arith.mulf %98, %101 : vector<32x512xf32>
    %c3_45 = arith.constant 3 : index
    %c0_46 = arith.constant 0 : index
    %c0_47 = arith.constant 0 : index
    %103 = vector.load %arg6[%c3_45, %c0_46, %c0_47] : memref<9x32x1xf32, #tpu.memory_space<vmem>>, vector<1x32x1xf32>
    %104 = vector.shape_cast %103 : vector<1x32x1xf32> to vector<32x1xf32>
    %105 = vector.broadcast %104 : vector<32x1xf32> to vector<32x512xf32>
    %106 = arith.mulf %102, %105 : vector<32x512xf32>
    %107 = arith.addf %97, %106 : vector<32x512xf32>
    %c511_i32 = arith.constant 511 : i32
    %108 = tpu.dynamic_rotate %63 by %c511_i32 dim 1 : vector<32x512xf32>, i32 -> vector<32x512xf32>
    %c5 = arith.constant 5 : index
    %c0_48 = arith.constant 0 : index
    %c0_49 = arith.constant 0 : index
    %109 = vector.load %arg7[%c5, %c0_48, %c0_49] : memref<9x1x512xf32, #tpu.memory_space<vmem>>, vector<1x1x512xf32>
    %110 = vector.shape_cast %109 : vector<1x1x512xf32> to vector<1x512xf32>
    %111 = vector.broadcast %110 : vector<1x512xf32> to vector<32x512xf32>
    %112 = arith.mulf %108, %111 : vector<32x512xf32>
    %c5_50 = arith.constant 5 : index
    %c0_51 = arith.constant 0 : index
    %c0_52 = arith.constant 0 : index
    %113 = vector.load %arg6[%c5_50, %c0_51, %c0_52] : memref<9x32x1xf32, #tpu.memory_space<vmem>>, vector<1x32x1xf32>
    %114 = vector.shape_cast %113 : vector<1x32x1xf32> to vector<32x1xf32>
    %115 = vector.broadcast %114 : vector<32x1xf32> to vector<32x512xf32>
    %116 = arith.mulf %112, %115 : vector<32x512xf32>
    %117 = arith.addf %107, %116 : vector<32x512xf32>
    %c497_i32 = arith.constant 497 : i32
    %118 = tpu.dynamic_rotate %63 by %c497_i32 dim 1 : vector<32x512xf32>, i32 -> vector<32x512xf32>
    %c6 = arith.constant 6 : index
    %c0_53 = arith.constant 0 : index
    %c0_54 = arith.constant 0 : index
    %119 = vector.load %arg7[%c6, %c0_53, %c0_54] : memref<9x1x512xf32, #tpu.memory_space<vmem>>, vector<1x1x512xf32>
    %120 = vector.shape_cast %119 : vector<1x1x512xf32> to vector<1x512xf32>
    %121 = vector.broadcast %120 : vector<1x512xf32> to vector<32x512xf32>
    %122 = arith.mulf %118, %121 : vector<32x512xf32>
    %c6_55 = arith.constant 6 : index
    %c0_56 = arith.constant 0 : index
    %c0_57 = arith.constant 0 : index
    %123 = vector.load %arg6[%c6_55, %c0_56, %c0_57] : memref<9x32x1xf32, #tpu.memory_space<vmem>>, vector<1x32x1xf32>
    %124 = vector.shape_cast %123 : vector<1x32x1xf32> to vector<32x1xf32>
    %125 = vector.broadcast %124 : vector<32x1xf32> to vector<32x512xf32>
    %126 = arith.mulf %122, %125 : vector<32x512xf32>
    %127 = arith.addf %117, %126 : vector<32x512xf32>
    %c496_i32 = arith.constant 496 : i32
    %128 = tpu.dynamic_rotate %63 by %c496_i32 dim 1 : vector<32x512xf32>, i32 -> vector<32x512xf32>
    %c7 = arith.constant 7 : index
    %c0_58 = arith.constant 0 : index
    %c0_59 = arith.constant 0 : index
    %129 = vector.load %arg7[%c7, %c0_58, %c0_59] : memref<9x1x512xf32, #tpu.memory_space<vmem>>, vector<1x1x512xf32>
    %130 = vector.shape_cast %129 : vector<1x1x512xf32> to vector<1x512xf32>
    %131 = vector.broadcast %130 : vector<1x512xf32> to vector<32x512xf32>
    %132 = arith.mulf %128, %131 : vector<32x512xf32>
    %c7_60 = arith.constant 7 : index
    %c0_61 = arith.constant 0 : index
    %c0_62 = arith.constant 0 : index
    %133 = vector.load %arg6[%c7_60, %c0_61, %c0_62] : memref<9x32x1xf32, #tpu.memory_space<vmem>>, vector<1x32x1xf32>
    %134 = vector.shape_cast %133 : vector<1x32x1xf32> to vector<32x1xf32>
    %135 = vector.broadcast %134 : vector<32x1xf32> to vector<32x512xf32>
    %136 = arith.mulf %132, %135 : vector<32x512xf32>
    %137 = arith.addf %127, %136 : vector<32x512xf32>
    %c495_i32 = arith.constant 495 : i32
    %138 = tpu.dynamic_rotate %63 by %c495_i32 dim 1 : vector<32x512xf32>, i32 -> vector<32x512xf32>
    %c8 = arith.constant 8 : index
    %c0_63 = arith.constant 0 : index
    %c0_64 = arith.constant 0 : index
    %139 = vector.load %arg7[%c8, %c0_63, %c0_64] : memref<9x1x512xf32, #tpu.memory_space<vmem>>, vector<1x1x512xf32>
    %140 = vector.shape_cast %139 : vector<1x1x512xf32> to vector<1x512xf32>
    %141 = vector.broadcast %140 : vector<1x512xf32> to vector<32x512xf32>
    %142 = arith.mulf %138, %141 : vector<32x512xf32>
    %c8_65 = arith.constant 8 : index
    %c0_66 = arith.constant 0 : index
    %c0_67 = arith.constant 0 : index
    %143 = vector.load %arg6[%c8_65, %c0_66, %c0_67] : memref<9x32x1xf32, #tpu.memory_space<vmem>>, vector<1x32x1xf32>
    %144 = vector.shape_cast %143 : vector<1x32x1xf32> to vector<32x1xf32>
    %145 = vector.broadcast %144 : vector<32x1xf32> to vector<32x512xf32>
    %146 = arith.mulf %142, %145 : vector<32x512xf32>
    %147 = arith.addf %137, %146 : vector<32x512xf32>
    %c0_68 = arith.constant 0 : index
    %c0_69 = arith.constant 0 : index
    %148 = vector.load %arg8[%c0_68, %c0_69] : memref<32x1xf32, #tpu.memory_space<vmem>>, vector<32x1xf32>
    %c0_70 = arith.constant 0 : index
    %c0_71 = arith.constant 0 : index
    %149 = vector.load %arg9[%c0_70, %c0_71] : memref<32x1xf32, #tpu.memory_space<vmem>>, vector<32x1xf32>
    %cst_72 = arith.constant dense<0.000000e+00> : vector<32xf32>
    %150 = vector.multi_reduction <add>, %147, %cst_72 [1] : vector<32x512xf32> to vector<32xf32>
    %151 = vector.shape_cast %150 : vector<32xf32> to vector<32x1xf32>
    %cst_73 = arith.constant 0.001953125 : f32
    %152 = vector.broadcast %cst_73 : f32 to vector<32x1xf32>
    %153 = arith.mulf %151, %152 : vector<32x1xf32>
    %154 = arith.mulf %147, %147 : vector<32x512xf32>
    %cst_74 = arith.constant dense<0.000000e+00> : vector<32xf32>
    %155 = vector.multi_reduction <add>, %154, %cst_74 [1] : vector<32x512xf32> to vector<32xf32>
    %156 = vector.shape_cast %155 : vector<32xf32> to vector<32x1xf32>
    %cst_75 = arith.constant 0.001953125 : f32
    %157 = vector.broadcast %cst_75 : f32 to vector<32x1xf32>
    %158 = arith.mulf %156, %157 : vector<32x1xf32>
    %159 = arith.mulf %153, %153 : vector<32x1xf32>
    %160 = arith.subf %158, %159 : vector<32x1xf32>
    %161 = vector.broadcast %153 : vector<32x1xf32> to vector<32x512xf32>
    %162 = arith.subf %147, %161 : vector<32x512xf32>
    %cst_76 = arith.constant 9.99999974E-6 : f32
    %163 = vector.broadcast %cst_76 : f32 to vector<32x1xf32>
    %164 = arith.addf %160, %163 : vector<32x1xf32>
    %165 = math.rsqrt %164 : vector<32x1xf32>
    %166 = vector.broadcast %165 : vector<32x1xf32> to vector<32x512xf32>
    %167 = arith.mulf %162, %166 : vector<32x512xf32>
    %168 = vector.broadcast %148 : vector<32x1xf32> to vector<32x512xf32>
    %169 = arith.mulf %167, %168 : vector<32x512xf32>
    %170 = vector.broadcast %149 : vector<32x1xf32> to vector<32x512xf32>
    %171 = arith.addf %169, %170 : vector<32x512xf32>
    %cst_77 = arith.constant 5.000000e-01 : f32
    %172 = vector.broadcast %cst_77 : f32 to vector<32x512xf32>
    %173 = arith.mulf %172, %171 : vector<32x512xf32>
    %cst_78 = arith.constant 4.471500e-02 : f32
    %174 = vector.broadcast %cst_78 : f32 to vector<32x512xf32>
    %175 = arith.mulf %174, %171 : vector<32x512xf32>
    %176 = arith.mulf %175, %171 : vector<32x512xf32>
    %177 = arith.mulf %176, %171 : vector<32x512xf32>
    %178 = arith.addf %171, %177 : vector<32x512xf32>
    %cst_79 = arith.constant 0.797884583 : f32
    %179 = vector.broadcast %cst_79 : f32 to vector<32x512xf32>
    %180 = arith.mulf %179, %178 : vector<32x512xf32>
    %181 = math.tanh %180 : vector<32x512xf32>
    %cst_80 = arith.constant 1.000000e+00 : f32
    %182 = vector.broadcast %cst_80 : f32 to vector<32x512xf32>
    %183 = arith.addf %182, %181 : vector<32x512xf32>
    %184 = arith.mulf %173, %183 : vector<32x512xf32>
    %185 = vector.extract_strided_slice %184 {offsets = [0, 0], sizes = [32, 256], strides = [1, 1]} : vector<32x512xf32> to vector<32x256xf32>
    %cst_81 = arith.constant dense<0.000000e+00> : vector<32xf32>
    %186 = vector.multi_reduction <add>, %185, %cst_81 [1] : vector<32x256xf32> to vector<32xf32>
    %187 = vector.shape_cast %186 : vector<32xf32> to vector<32x1xf32>
    %cst_82 = arith.constant 3.906250e-03 : f32
    %188 = vector.broadcast %cst_82 : f32 to vector<32x1xf32>
    %189 = arith.mulf %187, %188 : vector<32x1xf32>
    %c0_83 = arith.constant 0 : index
    %c0_84 = arith.constant 0 : index
    %c0_85 = arith.constant 0 : index
    %190 = vector.load %arg10[%c0_83, %c0_84, %c0_85] : memref<2x32x1xf32, #tpu.memory_space<vmem>>, vector<1x32x1xf32>
    %191 = vector.shape_cast %190 : vector<1x32x1xf32> to vector<32x1xf32>
    %192 = arith.mulf %189, %191 : vector<32x1xf32>
    %cst_86 = arith.constant dense<0.000000e+00> : vector<1xf32>
    %193 = vector.multi_reduction <add>, %192, %cst_86 [0] : vector<32x1xf32> to vector<1xf32>
    %194 = vector.shape_cast %193 : vector<1xf32> to vector<1x1xf32>
    %cst_87 = arith.constant 5.000000e-01 : f32
    %195 = vector.broadcast %cst_87 : f32 to vector<1x1xf32>
    %196 = arith.mulf %195, %194 : vector<1x1xf32>
    %cst_88 = arith.constant 4.471500e-02 : f32
    %197 = vector.broadcast %cst_88 : f32 to vector<1x1xf32>
    %198 = arith.mulf %197, %194 : vector<1x1xf32>
    %199 = arith.mulf %198, %194 : vector<1x1xf32>
    %200 = arith.mulf %199, %194 : vector<1x1xf32>
    %201 = arith.addf %194, %200 : vector<1x1xf32>
    %cst_89 = arith.constant 0.797884583 : f32
    %202 = vector.broadcast %cst_89 : f32 to vector<1x1xf32>
    %203 = arith.mulf %202, %201 : vector<1x1xf32>
    %204 = math.tanh %203 : vector<1x1xf32>
    %cst_90 = arith.constant 1.000000e+00 : f32
    %205 = vector.broadcast %cst_90 : f32 to vector<1x1xf32>
    %206 = arith.addf %205, %204 : vector<1x1xf32>
    %207 = arith.mulf %196, %206 : vector<1x1xf32>
    %c1_91 = arith.constant 1 : index
    %c0_92 = arith.constant 0 : index
    %c0_93 = arith.constant 0 : index
    %208 = vector.load %arg10[%c1_91, %c0_92, %c0_93] : memref<2x32x1xf32, #tpu.memory_space<vmem>>, vector<1x32x1xf32>
    %209 = vector.shape_cast %208 : vector<1x32x1xf32> to vector<32x1xf32>
    %210 = arith.mulf %189, %209 : vector<32x1xf32>
    %cst_94 = arith.constant dense<0.000000e+00> : vector<1xf32>
    %211 = vector.multi_reduction <add>, %210, %cst_94 [0] : vector<32x1xf32> to vector<1xf32>
    %212 = vector.shape_cast %211 : vector<1xf32> to vector<1x1xf32>
    %cst_95 = arith.constant 5.000000e-01 : f32
    %213 = vector.broadcast %cst_95 : f32 to vector<1x1xf32>
    %214 = arith.mulf %213, %212 : vector<1x1xf32>
    %cst_96 = arith.constant 4.471500e-02 : f32
    %215 = vector.broadcast %cst_96 : f32 to vector<1x1xf32>
    %216 = arith.mulf %215, %212 : vector<1x1xf32>
    %217 = arith.mulf %216, %212 : vector<1x1xf32>
    %218 = arith.mulf %217, %212 : vector<1x1xf32>
    %219 = arith.addf %212, %218 : vector<1x1xf32>
    %cst_97 = arith.constant 0.797884583 : f32
    %220 = vector.broadcast %cst_97 : f32 to vector<1x1xf32>
    %221 = arith.mulf %220, %219 : vector<1x1xf32>
    %222 = math.tanh %221 : vector<1x1xf32>
    %cst_98 = arith.constant 1.000000e+00 : f32
    %223 = vector.broadcast %cst_98 : f32 to vector<1x1xf32>
    %224 = arith.addf %223, %222 : vector<1x1xf32>
    %225 = arith.mulf %214, %224 : vector<1x1xf32>
    %c0_99 = arith.constant 0 : index
    %c0_100 = arith.constant 0 : index
    %c0_101 = arith.constant 0 : index
    %226 = vector.load %arg11[%c0_99, %c0_100, %c0_101] : memref<2x32x1xf32, #tpu.memory_space<vmem>>, vector<1x32x1xf32>
    %227 = vector.shape_cast %226 : vector<1x32x1xf32> to vector<32x1xf32>
    %228 = vector.broadcast %207 : vector<1x1xf32> to vector<32x1xf32>
    %229 = arith.mulf %228, %227 : vector<32x1xf32>
    %c1_102 = arith.constant 1 : index
    %c0_103 = arith.constant 0 : index
    %c0_104 = arith.constant 0 : index
    %230 = vector.load %arg11[%c1_102, %c0_103, %c0_104] : memref<2x32x1xf32, #tpu.memory_space<vmem>>, vector<1x32x1xf32>
    %231 = vector.shape_cast %230 : vector<1x32x1xf32> to vector<32x1xf32>
    %232 = vector.broadcast %225 : vector<1x1xf32> to vector<32x1xf32>
    %233 = arith.mulf %232, %231 : vector<32x1xf32>
    %234 = arith.addf %229, %233 : vector<32x1xf32>
    %235 = arith.negf %234 : vector<32x1xf32>
    %236 = math.exp %235 : vector<32x1xf32>
    %cst_105 = arith.constant 1.000000e+00 : f32
    %237 = vector.broadcast %cst_105 : f32 to vector<32x1xf32>
    %238 = arith.addf %237, %236 : vector<32x1xf32>
    %239 = arith.divf %237, %238 : vector<32x1xf32>
    %240 = vector.broadcast %239 : vector<32x1xf32> to vector<32x256xf32>
    %241 = arith.mulf %185, %240 : vector<32x256xf32>
    %242 = vector.extract_strided_slice %184 {offsets = [0, 256], sizes = [32, 256], strides = [1, 1]} : vector<32x512xf32> to vector<32x256xf32>
    %cst_106 = arith.constant dense<0.000000e+00> : vector<32xf32>
    %243 = vector.multi_reduction <add>, %242, %cst_106 [1] : vector<32x256xf32> to vector<32xf32>
    %244 = vector.shape_cast %243 : vector<32xf32> to vector<32x1xf32>
    %cst_107 = arith.constant 3.906250e-03 : f32
    %245 = vector.broadcast %cst_107 : f32 to vector<32x1xf32>
    %246 = arith.mulf %244, %245 : vector<32x1xf32>
    %c0_108 = arith.constant 0 : index
    %c0_109 = arith.constant 0 : index
    %c0_110 = arith.constant 0 : index
    %247 = vector.load %arg10[%c0_108, %c0_109, %c0_110] : memref<2x32x1xf32, #tpu.memory_space<vmem>>, vector<1x32x1xf32>
    %248 = vector.shape_cast %247 : vector<1x32x1xf32> to vector<32x1xf32>
    %249 = arith.mulf %246, %248 : vector<32x1xf32>
    %cst_111 = arith.constant dense<0.000000e+00> : vector<1xf32>
    %250 = vector.multi_reduction <add>, %249, %cst_111 [0] : vector<32x1xf32> to vector<1xf32>
    %251 = vector.shape_cast %250 : vector<1xf32> to vector<1x1xf32>
    %cst_112 = arith.constant 5.000000e-01 : f32
    %252 = vector.broadcast %cst_112 : f32 to vector<1x1xf32>
    %253 = arith.mulf %252, %251 : vector<1x1xf32>
    %cst_113 = arith.constant 4.471500e-02 : f32
    %254 = vector.broadcast %cst_113 : f32 to vector<1x1xf32>
    %255 = arith.mulf %254, %251 : vector<1x1xf32>
    %256 = arith.mulf %255, %251 : vector<1x1xf32>
    %257 = arith.mulf %256, %251 : vector<1x1xf32>
    %258 = arith.addf %251, %257 : vector<1x1xf32>
    %cst_114 = arith.constant 0.797884583 : f32
    %259 = vector.broadcast %cst_114 : f32 to vector<1x1xf32>
    %260 = arith.mulf %259, %258 : vector<1x1xf32>
    %261 = math.tanh %260 : vector<1x1xf32>
    %cst_115 = arith.constant 1.000000e+00 : f32
    %262 = vector.broadcast %cst_115 : f32 to vector<1x1xf32>
    %263 = arith.addf %262, %261 : vector<1x1xf32>
    %264 = arith.mulf %253, %263 : vector<1x1xf32>
    %c1_116 = arith.constant 1 : index
    %c0_117 = arith.constant 0 : index
    %c0_118 = arith.constant 0 : index
    %265 = vector.load %arg10[%c1_116, %c0_117, %c0_118] : memref<2x32x1xf32, #tpu.memory_space<vmem>>, vector<1x32x1xf32>
    %266 = vector.shape_cast %265 : vector<1x32x1xf32> to vector<32x1xf32>
    %267 = arith.mulf %246, %266 : vector<32x1xf32>
    %cst_119 = arith.constant dense<0.000000e+00> : vector<1xf32>
    %268 = vector.multi_reduction <add>, %267, %cst_119 [0] : vector<32x1xf32> to vector<1xf32>
    %269 = vector.shape_cast %268 : vector<1xf32> to vector<1x1xf32>
    %cst_120 = arith.constant 5.000000e-01 : f32
    %270 = vector.broadcast %cst_120 : f32 to vector<1x1xf32>
    %271 = arith.mulf %270, %269 : vector<1x1xf32>
    %cst_121 = arith.constant 4.471500e-02 : f32
    %272 = vector.broadcast %cst_121 : f32 to vector<1x1xf32>
    %273 = arith.mulf %272, %269 : vector<1x1xf32>
    %274 = arith.mulf %273, %269 : vector<1x1xf32>
    %275 = arith.mulf %274, %269 : vector<1x1xf32>
    %276 = arith.addf %269, %275 : vector<1x1xf32>
    %cst_122 = arith.constant 0.797884583 : f32
    %277 = vector.broadcast %cst_122 : f32 to vector<1x1xf32>
    %278 = arith.mulf %277, %276 : vector<1x1xf32>
    %279 = math.tanh %278 : vector<1x1xf32>
    %cst_123 = arith.constant 1.000000e+00 : f32
    %280 = vector.broadcast %cst_123 : f32 to vector<1x1xf32>
    %281 = arith.addf %280, %279 : vector<1x1xf32>
    %282 = arith.mulf %271, %281 : vector<1x1xf32>
    %c0_124 = arith.constant 0 : index
    %c0_125 = arith.constant 0 : index
    %c0_126 = arith.constant 0 : index
    %283 = vector.load %arg11[%c0_124, %c0_125, %c0_126] : memref<2x32x1xf32, #tpu.memory_space<vmem>>, vector<1x32x1xf32>
    %284 = vector.shape_cast %283 : vector<1x32x1xf32> to vector<32x1xf32>
    %285 = vector.broadcast %264 : vector<1x1xf32> to vector<32x1xf32>
    %286 = arith.mulf %285, %284 : vector<32x1xf32>
    %c1_127 = arith.constant 1 : index
    %c0_128 = arith.constant 0 : index
    %c0_129 = arith.constant 0 : index
    %287 = vector.load %arg11[%c1_127, %c0_128, %c0_129] : memref<2x32x1xf32, #tpu.memory_space<vmem>>, vector<1x32x1xf32>
    %288 = vector.shape_cast %287 : vector<1x32x1xf32> to vector<32x1xf32>
    %289 = vector.broadcast %282 : vector<1x1xf32> to vector<32x1xf32>
    %290 = arith.mulf %289, %288 : vector<32x1xf32>
    %291 = arith.addf %286, %290 : vector<32x1xf32>
    %292 = arith.negf %291 : vector<32x1xf32>
    %293 = math.exp %292 : vector<32x1xf32>
    %cst_130 = arith.constant 1.000000e+00 : f32
    %294 = vector.broadcast %cst_130 : f32 to vector<32x1xf32>
    %295 = arith.addf %294, %293 : vector<32x1xf32>
    %296 = arith.divf %294, %295 : vector<32x1xf32>
    %297 = vector.broadcast %296 : vector<32x1xf32> to vector<32x256xf32>
    %298 = arith.mulf %242, %297 : vector<32x256xf32>
    %299 = tpu.concatenate %241, %298 in 1 : vector<32x256xf32>, vector<32x256xf32> -> vector<32x512xf32>
    %c0_131 = arith.constant 0 : index
    %c0_132 = arith.constant 0 : index
    %300 = vector.load %arg12[%c0_131, %c0_132] : memref<32x1xf32, #tpu.memory_space<vmem>>, vector<32x1xf32>
    %301 = vector.broadcast %300 : vector<32x1xf32> to vector<32x512xf32>
    %302 = arith.mulf %299, %301 : vector<32x512xf32>
    %cst_133 = arith.constant dense<0.000000e+00> : vector<512xf32>
    %303 = vector.multi_reduction <add>, %302, %cst_133 [0] : vector<32x512xf32> to vector<512xf32>
    %304 = vector.shape_cast %303 : vector<512xf32> to vector<1x512xf32>
    %c0_134 = arith.constant 0 : index
    %305 = memref.load %arg13[%c0_134] : memref<1xf32, #tpu.memory_space<smem>>
    %306 = vector.broadcast %305 : f32 to vector<1x512xf32>
    %307 = arith.addf %304, %306 : vector<1x512xf32>
    %308 = vector.extract_strided_slice %307 {offsets = [0, 0], sizes = [1, 256], strides = [1, 1]} : vector<1x512xf32> to vector<1x256xf32>
    %309 = vector.extract_strided_slice %307 {offsets = [0, 256], sizes = [1, 256], strides = [1, 1]} : vector<1x512xf32> to vector<1x256xf32>
    %310 = arith.maximumf %308, %309 : vector<1x256xf32>
    %311 = arith.subf %308, %310 : vector<1x256xf32>
    %312 = math.exp %311 : vector<1x256xf32>
    %313 = arith.subf %309, %310 : vector<1x256xf32>
    %314 = math.exp %313 : vector<1x256xf32>
    %315 = arith.addf %312, %314 : vector<1x256xf32>
    %316 = arith.divf %312, %315 : vector<1x256xf32>
    %317 = arith.divf %314, %315 : vector<1x256xf32>
    %cst_135 = arith.constant dense<0.000000e+00> : vector<512xf32>
    %318 = vector.multi_reduction <add>, %299, %cst_135 [0] : vector<32x512xf32> to vector<512xf32>
    %319 = vector.shape_cast %318 : vector<512xf32> to vector<1x512xf32>
    %cst_136 = arith.constant 3.125000e-02 : f32
    %320 = vector.broadcast %cst_136 : f32 to vector<1x512xf32>
    %321 = arith.mulf %319, %320 : vector<1x512xf32>
    %cst_137 = arith.constant dense<0xFF800000> : vector<512xf32>
    %322 = vector.multi_reduction <maximumf>, %299, %cst_137 [0] : vector<32x512xf32> to vector<512xf32>
    %323 = vector.shape_cast %322 : vector<512xf32> to vector<1x512xf32>
    %c0_138 = arith.constant 0 : index
    %c0_139 = arith.constant 0 : index
    %324 = vector.load %arg14[%c0_138, %c0_139] : memref<16x256xf32, #tpu.memory_space<vmem>>, vector<16x256xf32>
    %c0_140 = arith.constant 0 : index
    %c0_141 = arith.constant 0 : index
    %325 = vector.load %arg15[%c0_140, %c0_141] : memref<256x16xf32, #tpu.memory_space<vmem>>, vector<256x16xf32>
    %c0_142 = arith.constant 0 : index
    %c0_143 = arith.constant 0 : index
    %326 = vector.load %arg16[%c0_142, %c0_143] : memref<16x256xf32, #tpu.memory_space<vmem>>, vector<16x256xf32>
    %327 = vector.extract_strided_slice %321 {offsets = [0, 0], sizes = [1, 256], strides = [1, 1]} : vector<1x512xf32> to vector<1x256xf32>
    %328 = vector.broadcast %327 : vector<1x256xf32> to vector<16x256xf32>
    %329 = arith.mulf %324, %328 : vector<16x256xf32>
    %cst_144 = arith.constant dense<0.000000e+00> : vector<16x16xf32>
    %330 = tpu.matmul %329, %325, %cst_144 {dimension_numbers = #tpu.dot_dimension_numbers<[1], [0], [0], [1], [0, 0, 1, 1], [], []>} : vector<16x256xf32>, vector<256x16xf32>, vector<16x16xf32> -> vector<16x16xf32>
    %331 = vector.extract_strided_slice %323 {offsets = [0, 0], sizes = [1, 256], strides = [1, 1]} : vector<1x512xf32> to vector<1x256xf32>
    %332 = vector.broadcast %331 : vector<1x256xf32> to vector<16x256xf32>
    %333 = arith.mulf %324, %332 : vector<16x256xf32>
    %cst_145 = arith.constant dense<0.000000e+00> : vector<16x16xf32>
    %334 = tpu.matmul %333, %325, %cst_145 {dimension_numbers = #tpu.dot_dimension_numbers<[1], [0], [0], [1], [0, 0, 1, 1], [], []>} : vector<16x256xf32>, vector<256x16xf32>, vector<16x16xf32> -> vector<16x16xf32>
    %335 = vector.broadcast %316 : vector<1x256xf32> to vector<16x256xf32>
    %336 = arith.mulf %324, %335 : vector<16x256xf32>
    %cst_146 = arith.constant dense<0.000000e+00> : vector<16x16xf32>
    %337 = tpu.matmul %336, %325, %cst_146 {dimension_numbers = #tpu.dot_dimension_numbers<[1], [0], [0], [1], [0, 0, 1, 1], [], []>} : vector<16x256xf32>, vector<256x16xf32>, vector<16x16xf32> -> vector<16x16xf32>
    %338 = tpu.concatenate %330, %334 in 0 : vector<16x16xf32>, vector<16x16xf32> -> vector<32x16xf32>
    %cst_147 = arith.constant dense<0.000000e+00> : vector<32x16xf32>
    %339 = tpu.matmul %338, %337, %cst_147 {dimension_numbers = #tpu.dot_dimension_numbers<[1], [0], [0], [1], [0, 0, 1, 1], [], []>} : vector<32x16xf32>, vector<16x16xf32>, vector<32x16xf32> -> vector<32x16xf32>
    %c0_148 = arith.constant 0 : index
    %c0_149 = arith.constant 0 : index
    %c0_150 = arith.constant 0 : index
    %340 = vector.load %arg17[%c0_148, %c0_149, %c0_150] : memref<7x16x32xf32, #tpu.memory_space<vmem>>, vector<1x16x32xf32>
    %341 = vector.shape_cast %340 : vector<1x16x32xf32> to vector<16x32xf32>
    %cst_151 = arith.constant dense<0.000000e+00> : vector<16x16xf32>
    %342 = tpu.matmul %341, %339, %cst_151 {dimension_numbers = #tpu.dot_dimension_numbers<[1], [0], [0], [1], [0, 0, 1, 1], [], []>} : vector<16x32xf32>, vector<32x16xf32>, vector<16x16xf32> -> vector<16x16xf32>
    %c0_152 = arith.constant 0 : index
    %c0_153 = arith.constant 0 : index
    %c0_154 = arith.constant 0 : index
    %343 = vector.load %arg18[%c0_152, %c0_153, %c0_154] : memref<7x16x16xf32, #tpu.memory_space<vmem>>, vector<1x16x16xf32>
    %344 = vector.shape_cast %343 : vector<1x16x16xf32> to vector<16x16xf32>
    %cst_155 = arith.constant dense<0.000000e+00> : vector<16x16xf32>
    %345 = tpu.matmul %342, %344, %cst_155 {dimension_numbers = #tpu.dot_dimension_numbers<[1], [0], [0], [1], [0, 0, 1, 1], [], []>} : vector<16x16xf32>, vector<16x16xf32>, vector<16x16xf32> -> vector<16x16xf32>
    %c1_156 = arith.constant 1 : index
    %c0_157 = arith.constant 0 : index
    %c0_158 = arith.constant 0 : index
    %346 = vector.load %arg17[%c1_156, %c0_157, %c0_158] : memref<7x16x32xf32, #tpu.memory_space<vmem>>, vector<1x16x32xf32>
    %347 = vector.shape_cast %346 : vector<1x16x32xf32> to vector<16x32xf32>
    %cst_159 = arith.constant dense<0.000000e+00> : vector<16x16xf32>
    %348 = tpu.matmul %347, %339, %cst_159 {dimension_numbers = #tpu.dot_dimension_numbers<[1], [0], [0], [1], [0, 0, 1, 1], [], []>} : vector<16x32xf32>, vector<32x16xf32>, vector<16x16xf32> -> vector<16x16xf32>
    %c1_160 = arith.constant 1 : index
    %c0_161 = arith.constant 0 : index
    %c0_162 = arith.constant 0 : index
    %349 = vector.load %arg18[%c1_160, %c0_161, %c0_162] : memref<7x16x16xf32, #tpu.memory_space<vmem>>, vector<1x16x16xf32>
    %350 = vector.shape_cast %349 : vector<1x16x16xf32> to vector<16x16xf32>
    %cst_163 = arith.constant dense<0.000000e+00> : vector<16x16xf32>
    %351 = tpu.matmul %348, %350, %cst_163 {dimension_numbers = #tpu.dot_dimension_numbers<[1], [0], [0], [1], [0, 0, 1, 1], [], []>} : vector<16x16xf32>, vector<16x16xf32>, vector<16x16xf32> -> vector<16x16xf32>
    %352 = arith.addf %345, %351 : vector<16x16xf32>
    %c2_164 = arith.constant 2 : index
    %c0_165 = arith.constant 0 : index
    %c0_166 = arith.constant 0 : index
    %353 = vector.load %arg17[%c2_164, %c0_165, %c0_166] : memref<7x16x32xf32, #tpu.memory_space<vmem>>, vector<1x16x32xf32>
    %354 = vector.shape_cast %353 : vector<1x16x32xf32> to vector<16x32xf32>
    %cst_167 = arith.constant dense<0.000000e+00> : vector<16x16xf32>
    %355 = tpu.matmul %354, %339, %cst_167 {dimension_numbers = #tpu.dot_dimension_numbers<[1], [0], [0], [1], [0, 0, 1, 1], [], []>} : vector<16x32xf32>, vector<32x16xf32>, vector<16x16xf32> -> vector<16x16xf32>
    %c2_168 = arith.constant 2 : index
    %c0_169 = arith.constant 0 : index
    %c0_170 = arith.constant 0 : index
    %356 = vector.load %arg18[%c2_168, %c0_169, %c0_170] : memref<7x16x16xf32, #tpu.memory_space<vmem>>, vector<1x16x16xf32>
    %357 = vector.shape_cast %356 : vector<1x16x16xf32> to vector<16x16xf32>
    %cst_171 = arith.constant dense<0.000000e+00> : vector<16x16xf32>
    %358 = tpu.matmul %355, %357, %cst_171 {dimension_numbers = #tpu.dot_dimension_numbers<[1], [0], [0], [1], [0, 0, 1, 1], [], []>} : vector<16x16xf32>, vector<16x16xf32>, vector<16x16xf32> -> vector<16x16xf32>
    %359 = arith.addf %352, %358 : vector<16x16xf32>
    %c3_172 = arith.constant 3 : index
    %c0_173 = arith.constant 0 : index
    %c0_174 = arith.constant 0 : index
    %360 = vector.load %arg17[%c3_172, %c0_173, %c0_174] : memref<7x16x32xf32, #tpu.memory_space<vmem>>, vector<1x16x32xf32>
    %361 = vector.shape_cast %360 : vector<1x16x32xf32> to vector<16x32xf32>
    %cst_175 = arith.constant dense<0.000000e+00> : vector<16x16xf32>
    %362 = tpu.matmul %361, %339, %cst_175 {dimension_numbers = #tpu.dot_dimension_numbers<[1], [0], [0], [1], [0, 0, 1, 1], [], []>} : vector<16x32xf32>, vector<32x16xf32>, vector<16x16xf32> -> vector<16x16xf32>
    %c3_176 = arith.constant 3 : index
    %c0_177 = arith.constant 0 : index
    %c0_178 = arith.constant 0 : index
    %363 = vector.load %arg18[%c3_176, %c0_177, %c0_178] : memref<7x16x16xf32, #tpu.memory_space<vmem>>, vector<1x16x16xf32>
    %364 = vector.shape_cast %363 : vector<1x16x16xf32> to vector<16x16xf32>
    %cst_179 = arith.constant dense<0.000000e+00> : vector<16x16xf32>
    %365 = tpu.matmul %362, %364, %cst_179 {dimension_numbers = #tpu.dot_dimension_numbers<[1], [0], [0], [1], [0, 0, 1, 1], [], []>} : vector<16x16xf32>, vector<16x16xf32>, vector<16x16xf32> -> vector<16x16xf32>
    %366 = arith.addf %359, %365 : vector<16x16xf32>
    %c4_180 = arith.constant 4 : index
    %c0_181 = arith.constant 0 : index
    %c0_182 = arith.constant 0 : index
    %367 = vector.load %arg17[%c4_180, %c0_181, %c0_182] : memref<7x16x32xf32, #tpu.memory_space<vmem>>, vector<1x16x32xf32>
    %368 = vector.shape_cast %367 : vector<1x16x32xf32> to vector<16x32xf32>
    %cst_183 = arith.constant dense<0.000000e+00> : vector<16x16xf32>
    %369 = tpu.matmul %368, %339, %cst_183 {dimension_numbers = #tpu.dot_dimension_numbers<[1], [0], [0], [1], [0, 0, 1, 1], [], []>} : vector<16x32xf32>, vector<32x16xf32>, vector<16x16xf32> -> vector<16x16xf32>
    %c4_184 = arith.constant 4 : index
    %c0_185 = arith.constant 0 : index
    %c0_186 = arith.constant 0 : index
    %370 = vector.load %arg18[%c4_184, %c0_185, %c0_186] : memref<7x16x16xf32, #tpu.memory_space<vmem>>, vector<1x16x16xf32>
    %371 = vector.shape_cast %370 : vector<1x16x16xf32> to vector<16x16xf32>
    %cst_187 = arith.constant dense<0.000000e+00> : vector<16x16xf32>
    %372 = tpu.matmul %369, %371, %cst_187 {dimension_numbers = #tpu.dot_dimension_numbers<[1], [0], [0], [1], [0, 0, 1, 1], [], []>} : vector<16x16xf32>, vector<16x16xf32>, vector<16x16xf32> -> vector<16x16xf32>
    %373 = arith.addf %366, %372 : vector<16x16xf32>
    %c5_188 = arith.constant 5 : index
    %c0_189 = arith.constant 0 : index
    %c0_190 = arith.constant 0 : index
    %374 = vector.load %arg17[%c5_188, %c0_189, %c0_190] : memref<7x16x32xf32, #tpu.memory_space<vmem>>, vector<1x16x32xf32>
    %375 = vector.shape_cast %374 : vector<1x16x32xf32> to vector<16x32xf32>
    %cst_191 = arith.constant dense<0.000000e+00> : vector<16x16xf32>
    %376 = tpu.matmul %375, %339, %cst_191 {dimension_numbers = #tpu.dot_dimension_numbers<[1], [0], [0], [1], [0, 0, 1, 1], [], []>} : vector<16x32xf32>, vector<32x16xf32>, vector<16x16xf32> -> vector<16x16xf32>
    %c5_192 = arith.constant 5 : index
    %c0_193 = arith.constant 0 : index
    %c0_194 = arith.constant 0 : index
    %377 = vector.load %arg18[%c5_192, %c0_193, %c0_194] : memref<7x16x16xf32, #tpu.memory_space<vmem>>, vector<1x16x16xf32>
    %378 = vector.shape_cast %377 : vector<1x16x16xf32> to vector<16x16xf32>
    %cst_195 = arith.constant dense<0.000000e+00> : vector<16x16xf32>
    %379 = tpu.matmul %376, %378, %cst_195 {dimension_numbers = #tpu.dot_dimension_numbers<[1], [0], [0], [1], [0, 0, 1, 1], [], []>} : vector<16x16xf32>, vector<16x16xf32>, vector<16x16xf32> -> vector<16x16xf32>
    %380 = arith.addf %373, %379 : vector<16x16xf32>
    %c6_196 = arith.constant 6 : index
    %c0_197 = arith.constant 0 : index
    %c0_198 = arith.constant 0 : index
    %381 = vector.load %arg17[%c6_196, %c0_197, %c0_198] : memref<7x16x32xf32, #tpu.memory_space<vmem>>, vector<1x16x32xf32>
    %382 = vector.shape_cast %381 : vector<1x16x32xf32> to vector<16x32xf32>
    %cst_199 = arith.constant dense<0.000000e+00> : vector<16x16xf32>
    %383 = tpu.matmul %382, %339, %cst_199 {dimension_numbers = #tpu.dot_dimension_numbers<[1], [0], [0], [1], [0, 0, 1, 1], [], []>} : vector<16x32xf32>, vector<32x16xf32>, vector<16x16xf32> -> vector<16x16xf32>
    %c6_200 = arith.constant 6 : index
    %c0_201 = arith.constant 0 : index
    %c0_202 = arith.constant 0 : index
    %384 = vector.load %arg18[%c6_200, %c0_201, %c0_202] : memref<7x16x16xf32, #tpu.memory_space<vmem>>, vector<1x16x16xf32>
    %385 = vector.shape_cast %384 : vector<1x16x16xf32> to vector<16x16xf32>
    %cst_203 = arith.constant dense<0.000000e+00> : vector<16x16xf32>
    %386 = tpu.matmul %383, %385, %cst_203 {dimension_numbers = #tpu.dot_dimension_numbers<[1], [0], [0], [1], [0, 0, 1, 1], [], []>} : vector<16x16xf32>, vector<16x16xf32>, vector<16x16xf32> -> vector<16x16xf32>
    %387 = arith.addf %380, %386 : vector<16x16xf32>
    %c0_204 = arith.constant 0 : index
    %388 = memref.load %arg19[%c0_204] : memref<1xf32, #tpu.memory_space<smem>>
    %389 = vector.broadcast %388 : f32 to vector<16x16xf32>
    %390 = arith.addf %387, %389 : vector<16x16xf32>
    %391 = arith.negf %390 : vector<16x16xf32>
    %392 = math.exp %391 : vector<16x16xf32>
    %cst_205 = arith.constant 1.000000e+00 : f32
    %393 = vector.broadcast %cst_205 : f32 to vector<16x16xf32>
    %394 = arith.addf %393, %392 : vector<16x16xf32>
    %395 = arith.divf %393, %394 : vector<16x16xf32>
    %cst_206 = arith.constant dense<0.000000e+00> : vector<16x256xf32>
    %396 = tpu.matmul %395, %326, %cst_206 {dimension_numbers = #tpu.dot_dimension_numbers<[1], [0], [0], [1], [0, 0, 1, 1], [], []>} : vector<16x16xf32>, vector<16x256xf32>, vector<16x256xf32> -> vector<16x256xf32>
    %397 = arith.mulf %396, %324 : vector<16x256xf32>
    %cst_207 = arith.constant dense<0.000000e+00> : vector<256xf32>
    %398 = vector.multi_reduction <add>, %397, %cst_207 [0] : vector<16x256xf32> to vector<256xf32>
    %399 = vector.shape_cast %398 : vector<256xf32> to vector<1x256xf32>
    %400 = vector.extract_strided_slice %299 {offsets = [0, 0], sizes = [32, 256], strides = [1, 1]} : vector<32x512xf32> to vector<32x256xf32>
    %401 = vector.broadcast %399 : vector<1x256xf32> to vector<32x256xf32>
    %402 = arith.mulf %400, %401 : vector<32x256xf32>
    %403 = vector.extract_strided_slice %321 {offsets = [0, 256], sizes = [1, 256], strides = [1, 1]} : vector<1x512xf32> to vector<1x256xf32>
    %404 = vector.broadcast %403 : vector<1x256xf32> to vector<16x256xf32>
    %405 = arith.mulf %324, %404 : vector<16x256xf32>
    %cst_208 = arith.constant dense<0.000000e+00> : vector<16x16xf32>
    %406 = tpu.matmul %405, %325, %cst_208 {dimension_numbers = #tpu.dot_dimension_numbers<[1], [0], [0], [1], [0, 0, 1, 1], [], []>} : vector<16x256xf32>, vector<256x16xf32>, vector<16x16xf32> -> vector<16x16xf32>
    %407 = vector.extract_strided_slice %323 {offsets = [0, 256], sizes = [1, 256], strides = [1, 1]} : vector<1x512xf32> to vector<1x256xf32>
    %408 = vector.broadcast %407 : vector<1x256xf32> to vector<16x256xf32>
    %409 = arith.mulf %324, %408 : vector<16x256xf32>
    %cst_209 = arith.constant dense<0.000000e+00> : vector<16x16xf32>
    %410 = tpu.matmul %409, %325, %cst_209 {dimension_numbers = #tpu.dot_dimension_numbers<[1], [0], [0], [1], [0, 0, 1, 1], [], []>} : vector<16x256xf32>, vector<256x16xf32>, vector<16x16xf32> -> vector<16x16xf32>
    %411 = vector.broadcast %317 : vector<1x256xf32> to vector<16x256xf32>
    %412 = arith.mulf %324, %411 : vector<16x256xf32>
    %cst_210 = arith.constant dense<0.000000e+00> : vector<16x16xf32>
    %413 = tpu.matmul %412, %325, %cst_210 {dimension_numbers = #tpu.dot_dimension_numbers<[1], [0], [0], [1], [0, 0, 1, 1], [], []>} : vector<16x256xf32>, vector<256x16xf32>, vector<16x16xf32> -> vector<16x16xf32>
    %414 = tpu.concatenate %406, %410 in 0 : vector<16x16xf32>, vector<16x16xf32> -> vector<32x16xf32>
    %cst_211 = arith.constant dense<0.000000e+00> : vector<32x16xf32>
    %415 = tpu.matmul %414, %413, %cst_211 {dimension_numbers = #tpu.dot_dimension_numbers<[1], [0], [0], [1], [0, 0, 1, 1], [], []>} : vector<32x16xf32>, vector<16x16xf32>, vector<32x16xf32> -> vector<32x16xf32>
    %c0_212 = arith.constant 0 : index
    %c0_213 = arith.constant 0 : index
    %c0_214 = arith.constant 0 : index
    %416 = vector.load %arg17[%c0_212, %c0_213, %c0_214] : memref<7x16x32xf32, #tpu.memory_space<vmem>>, vector<1x16x32xf32>
    %417 = vector.shape_cast %416 : vector<1x16x32xf32> to vector<16x32xf32>
    %cst_215 = arith.constant dense<0.000000e+00> : vector<16x16xf32>
    %418 = tpu.matmul %417, %415, %cst_215 {dimension_numbers = #tpu.dot_dimension_numbers<[1], [0], [0], [1], [0, 0, 1, 1], [], []>} : vector<16x32xf32>, vector<32x16xf32>, vector<16x16xf32> -> vector<16x16xf32>
    %c0_216 = arith.constant 0 : index
    %c0_217 = arith.constant 0 : index
    %c0_218 = arith.constant 0 : index
    %419 = vector.load %arg18[%c0_216, %c0_217, %c0_218] : memref<7x16x16xf32, #tpu.memory_space<vmem>>, vector<1x16x16xf32>
    %420 = vector.shape_cast %419 : vector<1x16x16xf32> to vector<16x16xf32>
    %cst_219 = arith.constant dense<0.000000e+00> : vector<16x16xf32>
    %421 = tpu.matmul %418, %420, %cst_219 {dimension_numbers = #tpu.dot_dimension_numbers<[1], [0], [0], [1], [0, 0, 1, 1], [], []>} : vector<16x16xf32>, vector<16x16xf32>, vector<16x16xf32> -> vector<16x16xf32>
    %c1_220 = arith.constant 1 : index
    %c0_221 = arith.constant 0 : index
    %c0_222 = arith.constant 0 : index
    %422 = vector.load %arg17[%c1_220, %c0_221, %c0_222] : memref<7x16x32xf32, #tpu.memory_space<vmem>>, vector<1x16x32xf32>
    %423 = vector.shape_cast %422 : vector<1x16x32xf32> to vector<16x32xf32>
    %cst_223 = arith.constant dense<0.000000e+00> : vector<16x16xf32>
    %424 = tpu.matmul %423, %415, %cst_223 {dimension_numbers = #tpu.dot_dimension_numbers<[1], [0], [0], [1], [0, 0, 1, 1], [], []>} : vector<16x32xf32>, vector<32x16xf32>, vector<16x16xf32> -> vector<16x16xf32>
    %c1_224 = arith.constant 1 : index
    %c0_225 = arith.constant 0 : index
    %c0_226 = arith.constant 0 : index
    %425 = vector.load %arg18[%c1_224, %c0_225, %c0_226] : memref<7x16x16xf32, #tpu.memory_space<vmem>>, vector<1x16x16xf32>
    %426 = vector.shape_cast %425 : vector<1x16x16xf32> to vector<16x16xf32>
    %cst_227 = arith.constant dense<0.000000e+00> : vector<16x16xf32>
    %427 = tpu.matmul %424, %426, %cst_227 {dimension_numbers = #tpu.dot_dimension_numbers<[1], [0], [0], [1], [0, 0, 1, 1], [], []>} : vector<16x16xf32>, vector<16x16xf32>, vector<16x16xf32> -> vector<16x16xf32>
    %428 = arith.addf %421, %427 : vector<16x16xf32>
    %c2_228 = arith.constant 2 : index
    %c0_229 = arith.constant 0 : index
    %c0_230 = arith.constant 0 : index
    %429 = vector.load %arg17[%c2_228, %c0_229, %c0_230] : memref<7x16x32xf32, #tpu.memory_space<vmem>>, vector<1x16x32xf32>
    %430 = vector.shape_cast %429 : vector<1x16x32xf32> to vector<16x32xf32>
    %cst_231 = arith.constant dense<0.000000e+00> : vector<16x16xf32>
    %431 = tpu.matmul %430, %415, %cst_231 {dimension_numbers = #tpu.dot_dimension_numbers<[1], [0], [0], [1], [0, 0, 1, 1], [], []>} : vector<16x32xf32>, vector<32x16xf32>, vector<16x16xf32> -> vector<16x16xf32>
    %c2_232 = arith.constant 2 : index
    %c0_233 = arith.constant 0 : index
    %c0_234 = arith.constant 0 : index
    %432 = vector.load %arg18[%c2_232, %c0_233, %c0_234] : memref<7x16x16xf32, #tpu.memory_space<vmem>>, vector<1x16x16xf32>
    %433 = vector.shape_cast %432 : vector<1x16x16xf32> to vector<16x16xf32>
    %cst_235 = arith.constant dense<0.000000e+00> : vector<16x16xf32>
    %434 = tpu.matmul %431, %433, %cst_235 {dimension_numbers = #tpu.dot_dimension_numbers<[1], [0], [0], [1], [0, 0, 1, 1], [], []>} : vector<16x16xf32>, vector<16x16xf32>, vector<16x16xf32> -> vector<16x16xf32>
    %435 = arith.addf %428, %434 : vector<16x16xf32>
    %c3_236 = arith.constant 3 : index
    %c0_237 = arith.constant 0 : index
    %c0_238 = arith.constant 0 : index
    %436 = vector.load %arg17[%c3_236, %c0_237, %c0_238] : memref<7x16x32xf32, #tpu.memory_space<vmem>>, vector<1x16x32xf32>
    %437 = vector.shape_cast %436 : vector<1x16x32xf32> to vector<16x32xf32>
    %cst_239 = arith.constant dense<0.000000e+00> : vector<16x16xf32>
    %438 = tpu.matmul %437, %415, %cst_239 {dimension_numbers = #tpu.dot_dimension_numbers<[1], [0], [0], [1], [0, 0, 1, 1], [], []>} : vector<16x32xf32>, vector<32x16xf32>, vector<16x16xf32> -> vector<16x16xf32>
    %c3_240 = arith.constant 3 : index
    %c0_241 = arith.constant 0 : index
    %c0_242 = arith.constant 0 : index
    %439 = vector.load %arg18[%c3_240, %c0_241, %c0_242] : memref<7x16x16xf32, #tpu.memory_space<vmem>>, vector<1x16x16xf32>
    %440 = vector.shape_cast %439 : vector<1x16x16xf32> to vector<16x16xf32>
    %cst_243 = arith.constant dense<0.000000e+00> : vector<16x16xf32>
    %441 = tpu.matmul %438, %440, %cst_243 {dimension_numbers = #tpu.dot_dimension_numbers<[1], [0], [0], [1], [0, 0, 1, 1], [], []>} : vector<16x16xf32>, vector<16x16xf32>, vector<16x16xf32> -> vector<16x16xf32>
    %442 = arith.addf %435, %441 : vector<16x16xf32>
    %c4_244 = arith.constant 4 : index
    %c0_245 = arith.constant 0 : index
    %c0_246 = arith.constant 0 : index
    %443 = vector.load %arg17[%c4_244, %c0_245, %c0_246] : memref<7x16x32xf32, #tpu.memory_space<vmem>>, vector<1x16x32xf32>
    %444 = vector.shape_cast %443 : vector<1x16x32xf32> to vector<16x32xf32>
    %cst_247 = arith.constant dense<0.000000e+00> : vector<16x16xf32>
    %445 = tpu.matmul %444, %415, %cst_247 {dimension_numbers = #tpu.dot_dimension_numbers<[1], [0], [0], [1], [0, 0, 1, 1], [], []>} : vector<16x32xf32>, vector<32x16xf32>, vector<16x16xf32> -> vector<16x16xf32>
    %c4_248 = arith.constant 4 : index
    %c0_249 = arith.constant 0 : index
    %c0_250 = arith.constant 0 : index
    %446 = vector.load %arg18[%c4_248, %c0_249, %c0_250] : memref<7x16x16xf32, #tpu.memory_space<vmem>>, vector<1x16x16xf32>
    %447 = vector.shape_cast %446 : vector<1x16x16xf32> to vector<16x16xf32>
    %cst_251 = arith.constant dense<0.000000e+00> : vector<16x16xf32>
    %448 = tpu.matmul %445, %447, %cst_251 {dimension_numbers = #tpu.dot_dimension_numbers<[1], [0], [0], [1], [0, 0, 1, 1], [], []>} : vector<16x16xf32>, vector<16x16xf32>, vector<16x16xf32> -> vector<16x16xf32>
    %449 = arith.addf %442, %448 : vector<16x16xf32>
    %c5_252 = arith.constant 5 : index
    %c0_253 = arith.constant 0 : index
    %c0_254 = arith.constant 0 : index
    %450 = vector.load %arg17[%c5_252, %c0_253, %c0_254] : memref<7x16x32xf32, #tpu.memory_space<vmem>>, vector<1x16x32xf32>
    %451 = vector.shape_cast %450 : vector<1x16x32xf32> to vector<16x32xf32>
    %cst_255 = arith.constant dense<0.000000e+00> : vector<16x16xf32>
    %452 = tpu.matmul %451, %415, %cst_255 {dimension_numbers = #tpu.dot_dimension_numbers<[1], [0], [0], [1], [0, 0, 1, 1], [], []>} : vector<16x32xf32>, vector<32x16xf32>, vector<16x16xf32> -> vector<16x16xf32>
    %c5_256 = arith.constant 5 : index
    %c0_257 = arith.constant 0 : index
    %c0_258 = arith.constant 0 : index
    %453 = vector.load %arg18[%c5_256, %c0_257, %c0_258] : memref<7x16x16xf32, #tpu.memory_space<vmem>>, vector<1x16x16xf32>
    %454 = vector.shape_cast %453 : vector<1x16x16xf32> to vector<16x16xf32>
    %cst_259 = arith.constant dense<0.000000e+00> : vector<16x16xf32>
    %455 = tpu.matmul %452, %454, %cst_259 {dimension_numbers = #tpu.dot_dimension_numbers<[1], [0], [0], [1], [0, 0, 1, 1], [], []>} : vector<16x16xf32>, vector<16x16xf32>, vector<16x16xf32> -> vector<16x16xf32>
    %456 = arith.addf %449, %455 : vector<16x16xf32>
    %c6_260 = arith.constant 6 : index
    %c0_261 = arith.constant 0 : index
    %c0_262 = arith.constant 0 : index
    %457 = vector.load %arg17[%c6_260, %c0_261, %c0_262] : memref<7x16x32xf32, #tpu.memory_space<vmem>>, vector<1x16x32xf32>
    %458 = vector.shape_cast %457 : vector<1x16x32xf32> to vector<16x32xf32>
    %cst_263 = arith.constant dense<0.000000e+00> : vector<16x16xf32>
    %459 = tpu.matmul %458, %415, %cst_263 {dimension_numbers = #tpu.dot_dimension_numbers<[1], [0], [0], [1], [0, 0, 1, 1], [], []>} : vector<16x32xf32>, vector<32x16xf32>, vector<16x16xf32> -> vector<16x16xf32>
    %c6_264 = arith.constant 6 : index
    %c0_265 = arith.constant 0 : index
    %c0_266 = arith.constant 0 : index
    %460 = vector.load %arg18[%c6_264, %c0_265, %c0_266] : memref<7x16x16xf32, #tpu.memory_space<vmem>>, vector<1x16x16xf32>
    %461 = vector.shape_cast %460 : vector<1x16x16xf32> to vector<16x16xf32>
    %cst_267 = arith.constant dense<0.000000e+00> : vector<16x16xf32>
    %462 = tpu.matmul %459, %461, %cst_267 {dimension_numbers = #tpu.dot_dimension_numbers<[1], [0], [0], [1], [0, 0, 1, 1], [], []>} : vector<16x16xf32>, vector<16x16xf32>, vector<16x16xf32> -> vector<16x16xf32>
    %463 = arith.addf %456, %462 : vector<16x16xf32>
    %c0_268 = arith.constant 0 : index
    %464 = memref.load %arg19[%c0_268] : memref<1xf32, #tpu.memory_space<smem>>
    %465 = vector.broadcast %464 : f32 to vector<16x16xf32>
    %466 = arith.addf %463, %465 : vector<16x16xf32>
    %467 = arith.negf %466 : vector<16x16xf32>
    %468 = math.exp %467 : vector<16x16xf32>
    %cst_269 = arith.constant 1.000000e+00 : f32
    %469 = vector.broadcast %cst_269 : f32 to vector<16x16xf32>
    %470 = arith.addf %469, %468 : vector<16x16xf32>
    %471 = arith.divf %469, %470 : vector<16x16xf32>
    %cst_270 = arith.constant dense<0.000000e+00> : vector<16x256xf32>
    %472 = tpu.matmul %471, %326, %cst_270 {dimension_numbers = #tpu.dot_dimension_numbers<[1], [0], [0], [1], [0, 0, 1, 1], [], []>} : vector<16x16xf32>, vector<16x256xf32>, vector<16x256xf32> -> vector<16x256xf32>
    %473 = arith.mulf %472, %324 : vector<16x256xf32>
    %cst_271 = arith.constant dense<0.000000e+00> : vector<256xf32>
    %474 = vector.multi_reduction <add>, %473, %cst_271 [0] : vector<16x256xf32> to vector<256xf32>
    %475 = vector.shape_cast %474 : vector<256xf32> to vector<1x256xf32>
    %476 = vector.extract_strided_slice %299 {offsets = [0, 256], sizes = [32, 256], strides = [1, 1]} : vector<32x512xf32> to vector<32x256xf32>
    %477 = vector.broadcast %475 : vector<1x256xf32> to vector<32x256xf32>
    %478 = arith.mulf %476, %477 : vector<32x256xf32>
    %479 = tpu.concatenate %402, %478 in 1 : vector<32x256xf32>, vector<32x256xf32> -> vector<32x512xf32>
    %c0_272 = arith.constant 0 : index
    %c0_273 = arith.constant 0 : index
    %480 = vector.load %arg20[%c0_272, %c0_273] : memref<8x32xf32, #tpu.memory_space<vmem>>, vector<8x32xf32>
    %cst_274 = arith.constant dense<0.000000e+00> : vector<8x512xf32>
    %481 = tpu.matmul %480, %479, %cst_274 {dimension_numbers = #tpu.dot_dimension_numbers<[1], [0], [0], [1], [0, 0, 1, 1], [], []>} : vector<8x32xf32>, vector<32x512xf32>, vector<8x512xf32> -> vector<8x512xf32>
    %c0_275 = arith.constant 0 : index
    %c0_276 = arith.constant 0 : index
    %482 = vector.load %arg21[%c0_275, %c0_276] : memref<8x1xf32, #tpu.memory_space<vmem>>, vector<8x1xf32>
    %c0_277 = arith.constant 0 : index
    %c0_278 = arith.constant 0 : index
    %483 = vector.load %arg22[%c0_277, %c0_278] : memref<8x1xf32, #tpu.memory_space<vmem>>, vector<8x1xf32>
    %cst_279 = arith.constant dense<0.000000e+00> : vector<8xf32>
    %484 = vector.multi_reduction <add>, %481, %cst_279 [1] : vector<8x512xf32> to vector<8xf32>
    %485 = vector.shape_cast %484 : vector<8xf32> to vector<8x1xf32>
    %cst_280 = arith.constant 0.001953125 : f32
    %486 = vector.broadcast %cst_280 : f32 to vector<8x1xf32>
    %487 = arith.mulf %485, %486 : vector<8x1xf32>
    %488 = arith.mulf %481, %481 : vector<8x512xf32>
    %cst_281 = arith.constant dense<0.000000e+00> : vector<8xf32>
    %489 = vector.multi_reduction <add>, %488, %cst_281 [1] : vector<8x512xf32> to vector<8xf32>
    %490 = vector.shape_cast %489 : vector<8xf32> to vector<8x1xf32>
    %cst_282 = arith.constant 0.001953125 : f32
    %491 = vector.broadcast %cst_282 : f32 to vector<8x1xf32>
    %492 = arith.mulf %490, %491 : vector<8x1xf32>
    %493 = arith.mulf %487, %487 : vector<8x1xf32>
    %494 = arith.subf %492, %493 : vector<8x1xf32>
    %495 = vector.broadcast %487 : vector<8x1xf32> to vector<8x512xf32>
    %496 = arith.subf %481, %495 : vector<8x512xf32>
    %cst_283 = arith.constant 9.99999974E-6 : f32
    %497 = vector.broadcast %cst_283 : f32 to vector<8x1xf32>
    %498 = arith.addf %494, %497 : vector<8x1xf32>
    %499 = math.rsqrt %498 : vector<8x1xf32>
    %500 = vector.broadcast %499 : vector<8x1xf32> to vector<8x512xf32>
    %501 = arith.mulf %496, %500 : vector<8x512xf32>
    %502 = vector.broadcast %482 : vector<8x1xf32> to vector<8x512xf32>
    %503 = arith.mulf %501, %502 : vector<8x512xf32>
    %504 = vector.broadcast %483 : vector<8x1xf32> to vector<8x512xf32>
    %505 = arith.addf %503, %504 : vector<8x512xf32>
    %506 = arith.addf %0, %505 : vector<8x512xf32>
    %c0_284 = arith.constant 0 : index
    %c0_285 = arith.constant 0 : index
    %507 = vector.load %arg23[%c0_284, %c0_285] : memref<8x512xf32, #tpu.memory_space<vmem>>, vector<8x512xf32>
    tpu.vector_store %arg23[%c0_284, %c0_285], %506 {strides = array<i32>} : memref<8x512xf32, #tpu.memory_space<vmem>>, vector<8x512xf32>,
    return
  }
}

</mosaic_0001>

<llo_original>
// kernel: mbconv_forward.1
$region0: #{mbconv_forward.1}
  #allocation0 [shape = 'u32[]', space=smem, size = 0x4, offset = 0x4, fixed_abs, tag = 'smem constant byte address 0x4 - core index']
  #allocation1 [shape = 'u32[144,128]{1,0:T(1,128)}', space=vmem, size = 0x12000, scoped, tag = 'internal scratch']
  #allocation2 [shape = 'f32[1]{0:T(128)S(6)}', space=smem, size = 0x200, scoped, tag = 'scoped memory for mbconv_forward.1']
  #allocation3 [shape = 'f32[1]{0:T(128)S(6)}', space=smem, size = 0x200, scoped, tag = 'scoped memory for mbconv_forward.1']
  %s0 = inlined_call_operand.vmem [shape: f32[8,512], index: 0, kind: input, shape index: {}]
  %s1 = inlined_call_operand.vmem [shape: f32[8,1], index: 1, kind: input, shape index: {}]
  %s2 = inlined_call_operand.vmem [shape: f32[8,1], index: 2, kind: input, shape index: {}]
  %s3 = inlined_call_operand.vmem [shape: f32[32,8], index: 3, kind: input, shape index: {}]
  %s4 = inlined_call_operand.vmem [shape: f32[32,1], index: 4, kind: input, shape index: {}]
  %s5 = inlined_call_operand.vmem [shape: f32[32,1], index: 5, kind: input, shape index: {}]
  %s6 = inlined_call_operand.vmem [shape: f32[9,32,1], index: 6, kind: input, shape index: {}]
  %s7 = inlined_call_operand.vmem [shape: f32[9,1,512], index: 7, kind: input, shape index: {}]
  %s8 = inlined_call_operand.vmem [shape: f32[32,1], index: 8, kind: input, shape index: {}]
  %s9 = inlined_call_operand.vmem [shape: f32[32,1], index: 9, kind: input, shape index: {}]
  %s10 = inlined_call_operand.vmem [shape: f32[2,32,1], index: 10, kind: input, shape index: {}]
  %s11 = inlined_call_operand.vmem [shape: f32[2,32,1], index: 11, kind: input, shape index: {}]
  %s12 = inlined_call_operand.vmem [shape: f32[32,1], index: 12, kind: input, shape index: {}]
  %s13 = inlined_call_operand.<no memory space> [shape: f32[1], index: 13, kind: input, shape index: {}]
  %s14 = inlined_call_operand.vmem [shape: f32[16,256], index: 14, kind: input, shape index: {}]
  %s15 = inlined_call_operand.vmem [shape: f32[256,16], index: 15, kind: input, shape index: {}]
  %s16 = inlined_call_operand.vmem [shape: f32[16,256], index: 16, kind: input, shape index: {}]
  %s17 = inlined_call_operand.vmem [shape: f32[7,16,32], index: 17, kind: input, shape index: {}]
  %s18 = inlined_call_operand.vmem [shape: f32[7,16,16], index: 18, kind: input, shape index: {}]
  %s19 = inlined_call_operand.<no memory space> [shape: f32[1], index: 19, kind: input, shape index: {}]
  %s20 = inlined_call_operand.vmem [shape: f32[8,32], index: 20, kind: input, shape index: {}]
  %s21 = inlined_call_operand.vmem [shape: f32[8,1], index: 21, kind: input, shape index: {}]
  %s22 = inlined_call_operand.vmem [shape: f32[8,1], index: 22, kind: input, shape index: {}]
  %s23 = inlined_call_operand.vmem [shape: f32[8,512], index: 23, kind: output, shape index: {}]
  %s24 = sld [smem:[#allocation0]]
  $region102: #{mbconv_forward.1} parent=0
    _
  %s26 = ssub.s32 1, %s24
  %s27 = scalar_select 0, %s26, %s24
  %28 = sst [smem:[#allocation2]] %s13
  %29 = sst [smem:[#allocation3]] %s19
  // Predicated region
  $region2: #{mbconv_forward.1} parent=0 // pred_check
    _
  $region3: #{mbconv_forward.1} parent=0 // pred_check_branch
    %31 = sbr.rel (0) target = $region5
  $region4: #{mbconv_forward.1} parent=0 // pred_region
    _
  $region5: #{mbconv_forward.1} parent=0 // pred_fallthru
    _
  // Predicated region
  $region6: #{mbconv_forward.1} parent=0 // pred_check
    _
  $region7: #{mbconv_forward.1} parent=0 // pred_check_branch
    %33 = sbr.rel (0) target = $region9
  $region8: #{mbconv_forward.1} parent=0 // pred_region
    _
  $region9: #{mbconv_forward.1} parent=0 // pred_fallthru
    _
  // Predicated region
  $region10: #{mbconv_forward.1} parent=0 // pred_check
    _
  $region11: #{mbconv_forward.1} parent=0 // pred_check_branch
    %35 = sbr.rel (0) target = $region13
  $region12: #{mbconv_forward.1} parent=0 // pred_region
    _
  $region13: #{mbconv_forward.1} parent=0 // pred_fallthru
    _
  // Predicated region
  $region14: #{mbconv_forward.1} parent=0 // pred_check
    _
  $region15: #{mbconv_forward.1} parent=0 // pred_check_branch
    %37 = sbr.rel (0) target = $region17
  $region16: #{mbconv_forward.1} parent=0 // pred_region
    _
  $region17: #{mbconv_forward.1} parent=0 // pred_fallthru
    _
  // Predicated region
  $region18: #{mbconv_forward.1} parent=0 // pred_check
    _
  $region19: #{mbconv_forward.1} parent=0 // pred_check_branch
    %39 = sbr.rel (0) target = $region21
  $region20: #{mbconv_forward.1} parent=0 // pred_region
    _
  $region21: #{mbconv_forward.1} parent=0 // pred_fallthru
    _
  // Predicated region
  $region22: #{mbconv_forward.1} parent=0 // pred_check
    _
  $region23: #{mbconv_forward.1} parent=0 // pred_check_branch
    %41 = sbr.rel (0) target = $region25
  $region24: #{mbconv_forward.1} parent=0 // pred_region
    _
  $region25: #{mbconv_forward.1} parent=0 // pred_fallthru
    _
  // Predicated region
  $region26: #{mbconv_forward.1} parent=0 // pred_check
    _
  $region27: #{mbconv_forward.1} parent=0 // pred_check_branch
    %43 = sbr.rel (0) target = $region29
  $region28: #{mbconv_forward.1} parent=0 // pred_region
    _
  $region29: #{mbconv_forward.1} parent=0 // pred_fallthru
    _
  // Predicated region
  $region30: #{mbconv_forward.1} parent=0 // pred_check
    _
  $region31: #{mbconv_forward.1} parent=0 // pred_check_branch
    %45 = sbr.rel (0) target = $region33
  $region32: #{mbconv_forward.1} parent=0 // pred_region
    _
  $region33: #{mbconv_forward.1} parent=0 // pred_fallthru
    _
  // Predicated region
  $region34: #{mbconv_forward.1} parent=0 // pred_check
    _
  $region35: #{mbconv_forward.1} parent=0 // pred_check_branch
    %47 = sbr.rel (0) target = $region37
  $region36: #{mbconv_forward.1} parent=0 // pred_region
    _
  $region37: #{mbconv_forward.1} parent=0 // pred_fallthru
    _
  // Predicated region
  $region38: #{mbconv_forward.1} parent=0 // pred_check
    _
  $region39: #{mbconv_forward.1} parent=0 // pred_check_branch
    %49 = sbr.rel (0) target = $region41
  $region40: #{mbconv_forward.1} parent=0 // pred_region
    _
  $region41: #{mbconv_forward.1} parent=0 // pred_fallthru
    _
  // Predicated region
  $region42: #{mbconv_forward.1} parent=0 // pred_check
    _
  $region43: #{mbconv_forward.1} parent=0 // pred_check_branch
    %51 = sbr.rel (0) target = $region45
  $region44: #{mbconv_forward.1} parent=0 // pred_region
    _
  $region45: #{mbconv_forward.1} parent=0 // pred_fallthru
    _
  // Predicated region
  $region46: #{mbconv_forward.1} parent=0 // pred_check
    _
  $region47: #{mbconv_forward.1} parent=0 // pred_check_branch
    %53 = sbr.rel (0) target = $region49
  $region48: #{mbconv_forward.1} parent=0 // pred_region
    _
  $region49: #{mbconv_forward.1} parent=0 // pred_fallthru
    _
  // Predicated region
  $region50: #{mbconv_forward.1} parent=0 // pred_check
    _
  $region51: #{mbconv_forward.1} parent=0 // pred_check_branch
    %55 = sbr.rel (0) target = $region53
  $region52: #{mbconv_forward.1} parent=0 // pred_region
    _
  $region53: #{mbconv_forward.1} parent=0 // pred_fallthru
    _
  // Predicated region
  $region54: #{mbconv_forward.1} parent=0 // pred_check
    _
  $region55: #{mbconv_forward.1} parent=0 // pred_check_branch
    %57 = sbr.rel (0) target = $region57
  $region56: #{mbconv_forward.1} parent=0 // pred_region
    _
  $region57: #{mbconv_forward.1} parent=0 // pred_fallthru
    _
  // Predicated region
  $region58: #{mbconv_forward.1} parent=0 // pred_check
    _
  $region59: #{mbconv_forward.1} parent=0 // pred_check_branch
    %59 = sbr.rel (0) target = $region61
  $region60: #{mbconv_forward.1} parent=0 // pred_region
    _
  $region61: #{mbconv_forward.1} parent=0 // pred_fallthru
    _
  // Predicated region
  $region62: #{mbconv_forward.1} parent=0 // pred_check
    _
  $region63: #{mbconv_forward.1} parent=0 // pred_check_branch
    %61 = sbr.rel (0) target = $region65
  $region64: #{mbconv_forward.1} parent=0 // pred_region
    _
  $region65: #{mbconv_forward.1} parent=0 // pred_fallthru
    _
  // Predicated region
  $region66: #{mbconv_forward.1} parent=0 // pred_check
    _
  $region67: #{mbconv_forward.1} parent=0 // pred_check_branch
    %63 = sbr.rel (0) target = $region69
  $region68: #{mbconv_forward.1} parent=0 // pred_region
    _
  $region69: #{mbconv_forward.1} parent=0 // pred_fallthru
    _
  // Predicated region
  $region70: #{mbconv_forward.1} parent=0 // pred_check
    _
  $region71: #{mbconv_forward.1} parent=0 // pred_check_branch
    %65 = sbr.rel (0) target = $region73
  $region72: #{mbconv_forward.1} parent=0 // pred_region
    _
  $region73: #{mbconv_forward.1} parent=0 // pred_fallthru
    _
  // Predicated region
  $region74: #{mbconv_forward.1} parent=0 // pred_check
    _
  $region75: #{mbconv_forward.1} parent=0 // pred_check_branch
    %67 = sbr.rel (0) target = $region77
  $region76: #{mbconv_forward.1} parent=0 // pred_region
    _
  $region77: #{mbconv_forward.1} parent=0 // pred_fallthru
    _
  // Predicated region
  $region78: #{mbconv_forward.1} parent=0 // pred_check
    _
  $region79: #{mbconv_forward.1} parent=0 // pred_check_branch
    %69 = sbr.rel (0) target = $region81
  $region80: #{mbconv_forward.1} parent=0 // pred_region
    _
  $region81: #{mbconv_forward.1} parent=0 // pred_fallthru
    _
  // Predicated region
  $region82: #{mbconv_forward.1} parent=0 // pred_check
    _
  $region83: #{mbconv_forward.1} parent=0 // pred_check_branch
    %71 = sbr.rel (0) target = $region85
  $region84: #{mbconv_forward.1} parent=0 // pred_region
    _
  $region85: #{mbconv_forward.1} parent=0 // pred_fallthru
    _
  // Predicated region
  $region86: #{mbconv_forward.1} parent=0 // pred_check
    _
  $region87: #{mbconv_forward.1} parent=0 // pred_check_branch
    %73 = sbr.rel (0) target = $region89
  $region88: #{mbconv_forward.1} parent=0 // pred_region
    _
  $region89: #{mbconv_forward.1} parent=0 // pred_fallthru
    _
  // Predicated region
  $region90: #{mbconv_forward.1} parent=0 // pred_check
    _
  $region91: #{mbconv_forward.1} parent=0 // pred_check_branch
    %75 = sbr.rel (0) target = $region93
  $region92: #{mbconv_forward.1} parent=0 // pred_region
    _
  $region93: #{mbconv_forward.1} parent=0 // pred_fallthru
    _
  %v76 = vld [vmem:[%s0] sm:$0xff]
  %v77 = vld [vmem:[%s0 + $0x8] sm:$0xff]
  %v78 = vld [vmem:[%s0 + $0x10] sm:$0xff]
  %v79 = vld [vmem:[%s0 + $0x18] sm:$0xff]
  %v80 = vld [vmem:[%s1] sm:$0xff]
  %v81 = vld [vmem:[%s2] sm:$0xff]
  %v82 = vadd.f32 %v76, %v77
  %v83 = vadd.f32 %v82, %v78
  %v84 = vadd.f32 %v83, %v79
  %85 = vadd.xlane.f32.xlu0 %v84
  %v86 = vpop.xlane.xlu0 %85
  %v87 = vmul.f32 %v86, 0.001953125
  %v88 = vmul.f32 %v76, %v76
  %v89 = vmul.f32 %v77, %v77
  %v90 = vmul.f32 %v78, %v78
  %v91 = vmul.f32 %v79, %v79
  %v92 = vadd.f32 %v88, %v89
  %v93 = vadd.f32 %v92, %v90
  %v94 = vadd.f32 %v93, %v91
  %95 = vadd.xlane.f32.xlu0 %v94
  %v96 = vpop.xlane.xlu0 %95
  %v97 = vmul.f32 %v96, 0.001953125
  %v98 = vmul.f32 %v87, %v87
  %v99 = vsub.f32 %v97, %v98
  %v100 = vsub.f32 %v76, %v87
  %v101 = vsub.f32 %v77, %v87
  %v102 = vsub.f32 %v78, %v87
  %v103 = vsub.f32 %v79, %v87
  %v104 = vadd.f32 %v99, 1e-05
  %v105 = vrsqrt.pop %v104
  %v106 = vmul.f32 %v100, %v105
  %v107 = vmul.f32 %v101, %v105
  %v108 = vmul.f32 %v102, %v105
  %v109 = vmul.f32 %v103, %v105
  %111 = vset.pattern.permute.xlu0 0
  %112 = vperm.xlu0 %111, %v80
  %v113 = vpop.permute.xlu0 %112
  %v115 = vmul.f32 %v106, %v113
  %v116 = vmul.f32 %v107, %v113
  %v117 = vmul.f32 %v108, %v113
  %v118 = vmul.f32 %v109, %v113
  %120 = vset.pattern.permute.xlu0 0
  %121 = vperm.xlu0 %120, %v81
  %v122 = vpop.permute.xlu0 %121
  %v124 = vadd.f32 %v115, %v122
  %v125 = vadd.f32 %v116, %v122
  %v126 = vadd.f32 %v117, %v122
  %v127 = vadd.f32 %v118, %v122
  %v128 = vld [vmem:[%s3] sm:$0xff]
  %v129 = vld [vmem:[%s3 + $0x8] sm:$0xff]
  %v130 = vld [vmem:[%s3 + $0x10] sm:$0xff]
  %v131 = vld [vmem:[%s3 + $0x18] sm:$0xff]
  %vm132 = vcmask 64512
  %v134 = vsel %vm132, %v128, 0
  %v137 = vsel %vm132, %v129, 0
  %v140 = vsel %vm132, %v130, 0
  %v143 = vsel %vm132, %v131, 0
  %145 = vmatprep.subr.mxu0 0.0
  %146 = vmatpush1.msra.mxu0 0.0
  %147 = vmatprep.subr.mxu0 0.0
  %148 = vmatpush1.msra.mxu0 0.0
  %149 = vmatprep.subr.mxu0 0.0
  %150 = vmatpush1.msra.mxu0 0.0
  %151 = vmatprep.subr.mxu0 0.0
  %152 = vmatpush1.msra.mxu0 0.0
  %153 = vmatprep.subr.mxu0 0.0
  %154 = vmatpush1.msra.mxu0 0.0
  %155 = vmatprep.subr.mxu0 0.0
  %156 = vmatpush1.msra.mxu0 0.0
  %157 = vmatprep.subr.mxu0 0.0
  %158 = vmatpush1.msra.mxu0 0.0
  %159 = vmatprep.subr.mxu0 0.0
  %160 = vmatpush1.msra.mxu0 0.0
  %161 = vmatprep.subr.mxu0 0.0
  %162 = vmatpush1.msra.mxu0 0.0
  %163 = vmatprep.subr.mxu0 0.0
  %164 = vmatpush1.msra.mxu0 0.0
  %165 = vmatprep.subr.mxu0 0.0
  %166 = vmatpush1.msra.mxu0 0.0
  %167 = vmatprep.subr.mxu0 0.0
  %168 = vmatpush1.msra.mxu0 0.0
  %169 = vmatprep.subr.mxu0 0.0
  %170 = vmatpush1.msra.mxu0 0.0
  %171 = vmatprep.subr.mxu0 0.0
  %172 = vmatpush1.msra.mxu0 0.0
  %173 = vmatprep.subr.mxu0 0.0
  %174 = vmatpush1.msra.mxu0 0.0
  %175 = vmatprep.subr.mxu0 %v125
  %176 = vmatpush1.msra.mxu0 %v124
  %177 = vmatprep.subr.mxu0 0.0
  %178 = vmatpush2.msra.mxu0 0.0
  %179 = vmatprep.subr.mxu0 0.0
  %180 = vmatpush2.msra.mxu0 0.0
  %181 = vmatprep.subr.mxu0 0.0
  %182 = vmatpush2.msra.mxu0 0.0
  %183 = vmatprep.subr.mxu0 0.0
  %184 = vmatpush2.msra.mxu0 0.0
  %185 = vmatprep.subr.mxu0 0.0
  %186 = vmatpush2.msra.mxu0 0.0
  %187 = vmatprep.subr.mxu0 0.0
  %188 = vmatpush2.msra.mxu0 0.0
  %189 = vmatprep.subr.mxu0 0.0
  %190 = vmatpush2.msra.mxu0 0.0
  %191 = vmatprep.subr.mxu0 0.0
  %192 = vmatpush2.msra.mxu0 0.0
  %193 = vmatprep.subr.mxu0 0.0
  %194 = vmatpush2.msra.mxu0 0.0
  %195 = vmatprep.subr.mxu0 0.0
  %196 = vmatpush2.msra.mxu0 0.0
  %197 = vmatprep.subr.mxu0 0.0
  %198 = vmatpush2.msra.mxu0 0.0
  %199 = vmatprep.subr.mxu0 0.0
  %200 = vmatpush2.msra.mxu0 0.0
  %201 = vmatprep.subr.mxu0 0.0
  %202 = vmatpush2.msra.mxu0 0.0
  %203 = vmatprep.subr.mxu0 0.0
  %204 = vmatpush2.msra.mxu0 0.0
  %205 = vmatprep.subr.mxu0 0.0
  %206 = vmatpush2.msra.mxu0 0.0
  %207 = vmatprep.subr.mxu0 0.0
  %208 = vmatpush2.msra.mxu0 0.0
  %209 = vmatprep.mubr.f32.mxu0 0.0
  %210 = vmatmul.mubr.f32.gmra.mxu0 %v134
  %v211 = vpop.f32.mrf.mxu0
  %v212 = vadd.f32 0.0, %v211
  %v213 = vpop.f32.mrf.mxu0
  %v214 = vadd.f32 0.0, %v213
  %215 = vmatprep.mubr.f32.mxu0 0.0
  %216 = vmatmul.mubr.f32.gmra.mxu0 %v137
  %v217 = vpop.f32.mrf.mxu0
  %v218 = vadd.f32 0.0, %v217
  %v219 = vpop.f32.mrf.mxu0
  %v220 = vadd.f32 0.0, %v219
  %221 = vmatprep.mubr.f32.mxu0 0.0
  %222 = vmatmul.mubr.f32.gmra.mxu0 %v140
  %v223 = vpop.f32.mrf.mxu0
  %v224 = vadd.f32 0.0, %v223
  %v225 = vpop.f32.mrf.mxu0
  %v226 = vadd.f32 0.0, %v225
  %227 = vmatprep.mubr.f32.mxu0 0.0
  %228 = vmatmul.mubr.f32.gmra.mxu0 %v143
  %v229 = vpop.f32.mrf.mxu0
  %v230 = vadd.f32 0.0, %v229
  %v231 = vpop.f32.mrf.mxu0
  %v232 = vadd.f32 0.0, %v231
  %233 = vdwg.mxu0
  %234 = vmatprep.subr.mxu0 0.0
  %235 = vmatpush1.msra.mxu0 0.0
  %236 = vmatprep.subr.mxu0 0.0
  %237 = vmatpush1.msra.mxu0 0.0
  %238 = vmatprep.subr.mxu0 0.0
  %239 = vmatpush1.msra.mxu0 0.0
  %240 = vmatprep.subr.mxu0 0.0
  %241 = vmatpush1.msra.mxu0 0.0
  %242 = vmatprep.subr.mxu0 0.0
  %243 = vmatpush1.msra.mxu0 0.0
  %244 = vmatprep.subr.mxu0 0.0
  %245 = vmatpush1.msra.mxu0 0.0
  %246 = vmatprep.subr.mxu0 0.0
  %247 = vmatpush1.msra.mxu0 0.0
  %248 = vmatprep.subr.mxu0 0.0
  %249 = vmatpush1.msra.mxu0 0.0
  %250 = vmatprep.subr.mxu0 0.0
  %251 = vmatpush1.msra.mxu0 0.0
  %252 = vmatprep.subr.mxu0 0.0
  %253 = vmatpush1.msra.mxu0 0.0
  %254 = vmatprep.subr.mxu0 0.0
  %255 = vmatpush1.msra.mxu0 0.0
  %256 = vmatprep.subr.mxu0 0.0
  %257 = vmatpush1.msra.mxu0 0.0
  %258 = vmatprep.subr.mxu0 0.0
  %259 = vmatpush1.msra.mxu0 0.0
  %260 = vmatprep.subr.mxu0 0.0
  %261 = vmatpush1.msra.mxu0 0.0
  %262 = vmatprep.subr.mxu0 0.0
  %263 = vmatpush1.msra.mxu0 0.0
  %264 = vmatprep.subr.mxu0 %v127
  %265 = vmatpush1.msra.mxu0 %v126
  %266 = vmatprep.subr.mxu0 0.0
  %267 = vmatpush2.msra.mxu0 0.0
  %268 = vmatprep.subr.mxu0 0.0
  %269 = vmatpush2.msra.mxu0 0.0
  %270 = vmatprep.subr.mxu0 0.0
  %271 = vmatpush2.msra.mxu0 0.0
  %272 = vmatprep.subr.mxu0 0.0
  %273 = vmatpush2.msra.mxu0 0.0
  %274 = vmatprep.subr.mxu0 0.0
  %275 = vmatpush2.msra.mxu0 0.0
  %276 = vmatprep.subr.mxu0 0.0
  %277 = vmatpush2.msra.mxu0 0.0
  %278 = vmatprep.subr.mxu0 0.0
  %279 = vmatpush2.msra.mxu0 0.0
  %280 = vmatprep.subr.mxu0 0.0
  %281 = vmatpush2.msra.mxu0 0.0
  %282 = vmatprep.subr.mxu0 0.0
  %283 = vmatpush2.msra.mxu0 0.0
  %284 = vmatprep.subr.mxu0 0.0
  %285 = vmatpush2.msra.mxu0 0.0
  %286 = vmatprep.subr.mxu0 0.0
  %287 = vmatpush2.msra.mxu0 0.0
  %288 = vmatprep.subr.mxu0 0.0
  %289 = vmatpush2.msra.mxu0 0.0
  %290 = vmatprep.subr.mxu0 0.0
  %291 = vmatpush2.msra.mxu0 0.0
  %292 = vmatprep.subr.mxu0 0.0
  %293 = vmatpush2.msra.mxu0 0.0
  %294 = vmatprep.subr.mxu0 0.0
  %295 = vmatpush2.msra.mxu0 0.0
  %296 = vmatprep.subr.mxu0 0.0
  %297 = vmatpush2.msra.mxu0 0.0
  %298 = vmatprep.mubr.f32.mxu0 0.0
  %299 = vmatmul.mubr.f32.gmra.mxu0 %v134
  %v300 = vpop.f32.mrf.mxu0
  %v301 = vadd.f32 0.0, %v300
  %v302 = vpop.f32.mrf.mxu0
  %v303 = vadd.f32 0.0, %v302
  %304 = vmatprep.mubr.f32.mxu0 0.0
  %305 = vmatmul.mubr.f32.gmra.mxu0 %v137
  %v306 = vpop.f32.mrf.mxu0
  %v307 = vadd.f32 0.0, %v306
  %v308 = vpop.f32.mrf.mxu0
  %v309 = vadd.f32 0.0, %v308
  %310 = vmatprep.mubr.f32.mxu0 0.0
  %311 = vmatmul.mubr.f32.gmra.mxu0 %v140
  %v312 = vpop.f32.mrf.mxu0
  %v313 = vadd.f32 0.0, %v312
  %v314 = vpop.f32.mrf.mxu0
  %v315 = vadd.f32 0.0, %v314
  %316 = vmatprep.mubr.f32.mxu0 0.0
  %317 = vmatmul.mubr.f32.gmra.mxu0 %v143
  %v318 = vpop.f32.mrf.mxu0
  %v319 = vadd.f32 0.0, %v318
  %v320 = vpop.f32.mrf.mxu0
  %v321 = vadd.f32 0.0, %v320
  %322 = vdwg.mxu0
  %v323 = vld [vmem:[%s4] sm:$0xff]
  %v324 = vld [vmem:[%s4 + $0x8] sm:$0xff]
  %v325 = vld [vmem:[%s4 + $0x10] sm:$0xff]
  %v326 = vld [vmem:[%s4 + $0x18] sm:$0xff]
  %v327 = vld [vmem:[%s5] sm:$0xff]
  %v328 = vld [vmem:[%s5 + $0x8] sm:$0xff]
  %v329 = vld [vmem:[%s5 + $0x10] sm:$0xff]
  %v330 = vld [vmem:[%s5 + $0x18] sm:$0xff]
  %v331 = vadd.f32 %v212, %v214
  %v332 = vadd.f32 %v331, %v301
  %v333 = vadd.f32 %v332, %v303
  %334 = vadd.xlane.f32.xlu0 %v333
  %v335 = vpop.xlane.xlu0 %334
  %v336 = vadd.f32 %v218, %v220
  %v337 = vadd.f32 %v336, %v307
  %v338 = vadd.f32 %v337, %v309
  %339 = vadd.xlane.f32.xlu0 %v338
  %v340 = vpop.xlane.xlu0 %339
  %v341 = vadd.f32 %v224, %v226
  %v342 = vadd.f32 %v341, %v313
  %v343 = vadd.f32 %v342, %v315
  %344 = vadd.xlane.f32.xlu0 %v343
  %v345 = vpop.xlane.xlu0 %344
  %v346 = vadd.f32 %v230, %v232
  %v347 = vadd.f32 %v346, %v319
  %v348 = vadd.f32 %v347, %v321
  %349 = vadd.xlane.f32.xlu0 %v348
  %v350 = vpop.xlane.xlu0 %349
  %v351 = vmul.f32 %v335, 0.001953125
  %v352 = vmul.f32 %v340, 0.001953125
  %v353 = vmul.f32 %v345, 0.001953125
  %v354 = vmul.f32 %v350, 0.001953125
  %v355 = vmul.f32 %v212, %v212
  %v356 = vmul.f32 %v214, %v214
  %v357 = vmul.f32 %v301, %v301
  %v358 = vmul.f32 %v303, %v303
  %v359 = vmul.f32 %v218, %v218
  %v360 = vmul.f32 %v220, %v220
  %v361 = vmul.f32 %v307, %v307
  %v362 = vmul.f32 %v309, %v309
  %v363 = vmul.f32 %v224, %v224
  %v364 = vmul.f32 %v226, %v226
  %v365 = vmul.f32 %v313, %v313
  %v366 = vmul.f32 %v315, %v315
  %v367 = vmul.f32 %v230, %v230
  %v368 = vmul.f32 %v232, %v232
  %v369 = vmul.f32 %v319, %v319
  %v370 = vmul.f32 %v321, %v321
  %v371 = vadd.f32 %v355, %v356
  %v372 = vadd.f32 %v371, %v357
  %v373 = vadd.f32 %v372, %v358
  %374 = vadd.xlane.f32.xlu0 %v373
  %v375 = vpop.xlane.xlu0 %374
  %v376 = vadd.f32 %v359, %v360
  %v377 = vadd.f32 %v376, %v361
  %v378 = vadd.f32 %v377, %v362
  %379 = vadd.xlane.f32.xlu0 %v378
  %v380 = vpop.xlane.xlu0 %379
  %v381 = vadd.f32 %v363, %v364
  %v382 = vadd.f32 %v381, %v365
  %v383 = vadd.f32 %v382, %v366
  %384 = vadd.xlane.f32.xlu0 %v383
  %v385 = vpop.xlane.xlu0 %384
  %v386 = vadd.f32 %v367, %v368
  %v387 = vadd.f32 %v386, %v369
  %v388 = vadd.f32 %v387, %v370
  %389 = vadd.xlane.f32.xlu0 %v388
  %v390 = vpop.xlane.xlu0 %389
  %v391 = vmul.f32 %v375, 0.001953125
  %v392 = vmul.f32 %v380, 0.001953125
  %v393 = vmul.f32 %v385, 0.001953125
  %v394 = vmul.f32 %v390, 0.001953125
  %v395 = vmul.f32 %v351, %v351
  %v396 = vmul.f32 %v352, %v352
  %v397 = vmul.f32 %v353, %v353
  %v398 = vmul.f32 %v354, %v354
  %v399 = vsub.f32 %v391, %v395
  %v400 = vsub.f32 %v392, %v396
  %v401 = vsub.f32 %v393, %v397
  %v402 = vsub.f32 %v394, %v398
  %v403 = vsub.f32 %v212, %v351
  %v404 = vsub.f32 %v214, %v351
  %v405 = vsub.f32 %v301, %v351
  %v406 = vsub.f32 %v303, %v351
  %v407 = vsub.f32 %v218, %v352
  %v408 = vsub.f32 %v220, %v352
  %v409 = vsub.f32 %v307, %v352
  %v410 = vsub.f32 %v309, %v352
  %v411 = vsub.f32 %v224, %v353
  %v412 = vsub.f32 %v226, %v353
  %v413 = vsub.f32 %v313, %v353
  %v414 = vsub.f32 %v315, %v353
  %v415 = vsub.f32 %v230, %v354
  %v416 = vsub.f32 %v232, %v354
  %v417 = vsub.f32 %v319, %v354
  %v418 = vsub.f32 %v321, %v354
  %v419 = vadd.f32 %v399, 1e-05
  %v420 = vadd.f32 %v400, 1e-05
  %v421 = vadd.f32 %v401, 1e-05
  %v422 = vadd.f32 %v402, 1e-05
  %v423 = vrsqrt.pop %v419
  %v424 = vrsqrt.pop %v420
  %v425 = vrsqrt.pop %v421
  %v426 = vrsqrt.pop %v422
  %v427 = vmul.f32 %v403, %v423
  %v428 = vmul.f32 %v404, %v423
  %v429 = vmul.f32 %v405, %v423
  %v430 = vmul.f32 %v406, %v423
  %v431 = vmul.f32 %v407, %v424
  %v432 = vmul.f32 %v408, %v424
  %v433 = vmul.f32 %v409, %v424
  %v434 = vmul.f32 %v410, %v424
  %v435 = vmul.f32 %v411, %v425
  %v436 = vmul.f32 %v412, %v425
  %v437 = vmul.f32 %v413, %v425
  %v438 = vmul.f32 %v414, %v425
  %v439 = vmul.f32 %v415, %v426
  %v440 = vmul.f32 %v416, %v426
  %v441 = vmul.f32 %v417, %v426
  %v442 = vmul.f32 %v418, %v426
  %444 = vset.pattern.permute.xlu0 0
  %445 = vperm.xlu0 %444, %v323
  %v446 = vpop.permute.xlu0 %445
  %449 = vset.pattern.permute.xlu0 0
  %450 = vperm.xlu0 %449, %v324
  %v451 = vpop.permute.xlu0 %450
  %454 = vset.pattern.permute.xlu0 0
  %455 = vperm.xlu0 %454, %v325
  %v456 = vpop.permute.xlu0 %455
  %459 = vset.pattern.permute.xlu0 0
  %460 = vperm.xlu0 %459, %v326
  %v461 = vpop.permute.xlu0 %460
  %v463 = vmul.f32 %v427, %v446
  %v464 = vmul.f32 %v428, %v446
  %v465 = vmul.f32 %v429, %v446
  %v466 = vmul.f32 %v430, %v446
  %v467 = vmul.f32 %v431, %v451
  %v468 = vmul.f32 %v432, %v451
  %v469 = vmul.f32 %v433, %v451
  %v470 = vmul.f32 %v434, %v451
  %v471 = vmul.f32 %v435, %v456
  %v472 = vmul.f32 %v436, %v456
  %v473 = vmul.f32 %v437, %v456
  %v474 = vmul.f32 %v438, %v456
  %v475 = vmul.f32 %v439, %v461
  %v476 = vmul.f32 %v440, %v461
  %v477 = vmul.f32 %v441, %v461
  %v478 = vmul.f32 %v442, %v461
  %480 = vset.pattern.permute.xlu0 0
  %481 = vperm.xlu0 %480, %v327
  %v482 = vpop.permute.xlu0 %481
  %485 = vset.pattern.permute.xlu0 0
  %486 = vperm.xlu0 %485, %v328
  %v487 = vpop.permute.xlu0 %486
  %490 = vset.pattern.permute.xlu0 0
  %491 = vperm.xlu0 %490, %v329
  %v492 = vpop.permute.xlu0 %491
  %495 = vset.pattern.permute.xlu0 0
  %496 = vperm.xlu0 %495, %v330
  %v497 = vpop.permute.xlu0 %496
  %v499 = vadd.f32 %v463, %v482
  %v500 = vadd.f32 %v464, %v482
  %v501 = vadd.f32 %v465, %v482
  %v502 = vadd.f32 %v466, %v482
  %v503 = vadd.f32 %v467, %v487
  %v504 = vadd.f32 %v468, %v487
  %v505 = vadd.f32 %v469, %v487
  %v506 = vadd.f32 %v470, %v487
  %v507 = vadd.f32 %v471, %v492
  %v508 = vadd.f32 %v472, %v492
  %v509 = vadd.f32 %v473, %v492
  %v510 = vadd.f32 %v474, %v492
  %v511 = vadd.f32 %v475, %v497
  %v512 = vadd.f32 %v476, %v497
  %v513 = vadd.f32 %v477, %v497
  %v514 = vadd.f32 %v478, %v497
  %v515 = vmul.f32 %v499, 0.5
  %v516 = vmul.f32 %v500, 0.5
  %v517 = vmul.f32 %v501, 0.5
  %v518 = vmul.f32 %v502, 0.5
  %v519 = vmul.f32 %v503, 0.5
  %v520 = vmul.f32 %v504, 0.5
  %v521 = vmul.f32 %v505, 0.5
  %v522 = vmul.f32 %v506, 0.5
  %v523 = vmul.f32 %v507, 0.5
  %v524 = vmul.f32 %v508, 0.5
  %v525 = vmul.f32 %v509, 0.5
  %v526 = vmul.f32 %v510, 0.5
  %v527 = vmul.f32 %v511, 0.5
  %v528 = vmul.f32 %v512, 0.5
  %v529 = vmul.f32 %v513, 0.5
  %v530 = vmul.f32 %v514, 0.5
  %v531 = vmul.f32 %v499, 0.044715
  %v532 = vmul.f32 %v500, 0.044715
  %v533 = vmul.f32 %v501, 0.044715
  %v534 = vmul.f32 %v502, 0.044715
  %v535 = vmul.f32 %v503, 0.044715
  %v536 = vmul.f32 %v504, 0.044715
  %v537 = vmul.f32 %v505, 0.044715
  %v538 = vmul.f32 %v506, 0.044715
  %v539 = vmul.f32 %v507, 0.044715
  %v540 = vmul.f32 %v508, 0.044715
  %v541 = vmul.f32 %v509, 0.044715
  %v542 = vmul.f32 %v510, 0.044715
  %v543 = vmul.f32 %v511, 0.044715
  %v544 = vmul.f32 %v512, 0.044715
  %v545 = vmul.f32 %v513, 0.044715
  %v546 = vmul.f32 %v514, 0.044715
  %v547 = vmul.f32 %v531, %v499
  %v548 = vmul.f32 %v532, %v500
  %v549 = vmul.f32 %v533, %v501
  %v550 = vmul.f32 %v534, %v502
  %v551 = vmul.f32 %v535, %v503
  %v552 = vmul.f32 %v536, %v504
  %v553 = vmul.f32 %v537, %v505
  %v554 = vmul.f32 %v538, %v506
  %v555 = vmul.f32 %v539, %v507
  %v556 = vmul.f32 %v540, %v508
  %v557 = vmul.f32 %v541, %v509
  %v558 = vmul.f32 %v542, %v510
  %v559 = vmul.f32 %v543, %v511
  %v560 = vmul.f32 %v544, %v512
  %v561 = vmul.f32 %v545, %v513
  %v562 = vmul.f32 %v546, %v514
  %v563 = vmul.f32 %v547, %v499
  %v564 = vmul.f32 %v548, %v500
  %v565 = vmul.f32 %v549, %v501
  %v566 = vmul.f32 %v550, %v502
  %v567 = vmul.f32 %v551, %v503
  %v568 = vmul.f32 %v552, %v504
  %v569 = vmul.f32 %v553, %v505
  %v570 = vmul.f32 %v554, %v506
  %v571 = vmul.f32 %v555, %v507
  %v572 = vmul.f32 %v556, %v508
  %v573 = vmul.f32 %v557, %v509
  %v574 = vmul.f32 %v558, %v510
  %v575 = vmul.f32 %v559, %v511
  %v576 = vmul.f32 %v560, %v512
  %v577 = vmul.f32 %v561, %v513
  %v578 = vmul.f32 %v562, %v514
  %v579 = vadd.f32 %v499, %v563
  %v580 = vadd.f32 %v500, %v564
  %v581 = vadd.f32 %v501, %v565
  %v582 = vadd.f32 %v502, %v566
  %v583 = vadd.f32 %v503, %v567
  %v584 = vadd.f32 %v504, %v568
  %v585 = vadd.f32 %v505, %v569
  %v586 = vadd.f32 %v506, %v570
  %v587 = vadd.f32 %v507, %v571
  %v588 = vadd.f32 %v508, %v572
  %v589 = vadd.f32 %v509, %v573
  %v590 = vadd.f32 %v510, %v574
  %v591 = vadd.f32 %v511, %v575
  %v592 = vadd.f32 %v512, %v576
  %v593 = vadd.f32 %v513, %v577
  %v594 = vadd.f32 %v514, %v578
  %v595 = vmul.f32 %v579, 0.7978846
  %v596 = vmul.f32 %v580, 0.7978846
  %v597 = vmul.f32 %v581, 0.7978846
  %v598 = vmul.f32 %v582, 0.7978846
  %v599 = vmul.f32 %v583, 0.7978846
  %v600 = vmul.f32 %v584, 0.7978846
  %v601 = vmul.f32 %v585, 0.7978846
  %v602 = vmul.f32 %v586, 0.7978846
  %v603 = vmul.f32 %v587, 0.7978846
  %v604 = vmul.f32 %v588, 0.7978846
  %v605 = vmul.f32 %v589, 0.7978846
  %v606 = vmul.f32 %v590, 0.7978846
  %v607 = vmul.f32 %v591, 0.7978846
  %v608 = vmul.f32 %v592, 0.7978846
  %v609 = vmul.f32 %v593, 0.7978846
  %v610 = vmul.f32 %v594, 0.7978846
  %v611 = vtanh.pop %v595
  %v612 = vtanh.pop %v596
  %v613 = vtanh.pop %v597
  %v614 = vtanh.pop %v598
  %v615 = vtanh.pop %v599
  %v616 = vtanh.pop %v600
  %v617 = vtanh.pop %v601
  %v618 = vtanh.pop %v602
  %v619 = vtanh.pop %v603
  %v620 = vtanh.pop %v604
  %v621 = vtanh.pop %v605
  %v622 = vtanh.pop %v606
  %v623 = vtanh.pop %v607
  %v624 = vtanh.pop %v608
  %v625 = vtanh.pop %v609
  %v626 = vtanh.pop %v610
  %v627 = vadd.f32 %v611, 1.0
  %v628 = vadd.f32 %v612, 1.0
  %v629 = vadd.f32 %v613, 1.0
  %v630 = vadd.f32 %v614, 1.0
  %v631 = vadd.f32 %v615, 1.0
  %v632 = vadd.f32 %v616, 1.0
  %v633 = vadd.f32 %v617, 1.0
  %v634 = vadd.f32 %v618, 1.0
  %v635 = vadd.f32 %v619, 1.0
  %v636 = vadd.f32 %v620, 1.0
  %v637 = vadd.f32 %v621, 1.0
  %v638 = vadd.f32 %v622, 1.0
  %v639 = vadd.f32 %v623, 1.0
  %v640 = vadd.f32 %v624, 1.0
  %v641 = vadd.f32 %v625, 1.0
  %v642 = vadd.f32 %v626, 1.0
  %v643 = vmul.f32 %v515, %v627
  %v644 = vmul.f32 %v516, %v628
  %v645 = vmul.f32 %v517, %v629
  %v646 = vmul.f32 %v518, %v630
  %v647 = vmul.f32 %v519, %v631
  %v648 = vmul.f32 %v520, %v632
  %v649 = vmul.f32 %v521, %v633
  %v650 = vmul.f32 %v522, %v634
  %v651 = vmul.f32 %v523, %v635
  %v652 = vmul.f32 %v524, %v636
  %v653 = vmul.f32 %v525, %v637
  %v654 = vmul.f32 %v526, %v638
  %v655 = vmul.f32 %v527, %v639
  %v656 = vmul.f32 %v528, %v640
  %v657 = vmul.f32 %v529, %v641
  %v658 = vmul.f32 %v530, %v642
  %s659 = scalar_lea.vmem %s6, 128
  %v660 = vld [vmem:[%s659] sm:$0xff]
  %v661 = vld [vmem:[%s659 + $0x8] sm:$0xff]
  %v662 = vld [vmem:[%s659 + $0x10] sm:$0xff]
  %v663 = vld [vmem:[%s659 + $0x18] sm:$0xff]
  %665 = vset.pattern.permute.xlu0 0
  %666 = vperm.xlu0 %665, %v660
  %v667 = vpop.permute.xlu0 %666
  %670 = vset.pattern.permute.xlu0 0
  %671 = vperm.xlu0 %670, %v661
  %v672 = vpop.permute.xlu0 %671
  %675 = vset.pattern.permute.xlu0 0
  %676 = vperm.xlu0 %675, %v662
  %v677 = vpop.permute.xlu0 %676
  %680 = vset.pattern.permute.xlu0 0
  %681 = vperm.xlu0 %680, %v663
  %v682 = vpop.permute.xlu0 %681
  %v684 = vmul.f32 %v643, %v667
  %v685 = vmul.f32 %v644, %v667
  %v686 = vmul.f32 %v645, %v667
  %v687 = vmul.f32 %v646, %v667
  %v688 = vmul.f32 %v647, %v672
  %v689 = vmul.f32 %v648, %v672
  %v690 = vmul.f32 %v649, %v672
  %v691 = vmul.f32 %v650, %v672
  %v692 = vmul.f32 %v651, %v677
  %v693 = vmul.f32 %v652, %v677
  %v694 = vmul.f32 %v653, %v677
  %v695 = vmul.f32 %v654, %v677
  %v696 = vmul.f32 %v655, %v682
  %v697 = vmul.f32 %v656, %v682
  %v698 = vmul.f32 %v657, %v682
  %v699 = vmul.f32 %v658, %v682
  %700 = vrot.lane.b32.xlu0 %v643, 17
  %v701 = vpop.permute.xlu0 %700
  %702 = vrot.lane.b32.xlu0 %v647, 17
  %v703 = vpop.permute.xlu0 %702
  %704 = vrot.lane.b32.xlu0 %v651, 17
  %v705 = vpop.permute.xlu0 %704
  %706 = vrot.lane.b32.xlu0 %v655, 17
  %v707 = vpop.permute.xlu0 %706
  %708 = vrot.lane.b32.xlu0 %v644, 17
  %v709 = vpop.permute.xlu0 %708
  %710 = vrot.lane.b32.xlu0 %v648, 17
  %v711 = vpop.permute.xlu0 %710
  %712 = vrot.lane.b32.xlu0 %v652, 17
  %v713 = vpop.permute.xlu0 %712
  %714 = vrot.lane.b32.xlu0 %v656, 17
  %v715 = vpop.permute.xlu0 %714
  %716 = vrot.lane.b32.xlu0 %v645, 17
  %v717 = vpop.permute.xlu0 %716
  %718 = vrot.lane.b32.xlu0 %v649, 17
  %v719 = vpop.permute.xlu0 %718
  %720 = vrot.lane.b32.xlu0 %v653, 17
  %v721 = vpop.permute.xlu0 %720
  %722 = vrot.lane.b32.xlu0 %v657, 17
  %v723 = vpop.permute.xlu0 %722
  %724 = vrot.lane.b32.xlu0 %v646, 17
  %v725 = vpop.permute.xlu0 %724
  %726 = vrot.lane.b32.xlu0 %v650, 17
  %v727 = vpop.permute.xlu0 %726
  %728 = vrot.lane.b32.xlu0 %v654, 17
  %v729 = vpop.permute.xlu0 %728
  %730 = vrot.lane.b32.xlu0 %v658, 17
  %v731 = vpop.permute.xlu0 %730
  %v732 = vlaneseq
  %v733 = vand.u32 %v732, 127
  %vm734 = vcmp.lt.s32.totalorder %v733, 17
  %v735 = vsel %vm734, %v717, %v725
  %v736 = vsel %vm734, %v719, %v727
  %v737 = vsel %vm734, %v721, %v729
  %v738 = vsel %vm734, %v723, %v731
  %v739 = vsel %vm734, %v709, %v717
  %v740 = vsel %vm734, %v711, %v719
  %v741 = vsel %vm734, %v713, %v721
  %v742 = vsel %vm734, %v715, %v723
  %v743 = vsel %vm734, %v701, %v709
  %v744 = vsel %vm734, %v703, %v711
  %v745 = vsel %vm734, %v705, %v713
  %v746 = vsel %vm734, %v707, %v715
  %v747 = vsel %vm734, %v725, %v701
  %v748 = vsel %vm734, %v727, %v703
  %v749 = vsel %vm734, %v729, %v705
  %v750 = vsel %vm734, %v731, %v707
  %v751 = vld [vmem:[%s7] sm:$0xf]
  %v753 = vlaneseq
  %v754 = vshrl.u32 %v753, 7
  %v755 = vsub.s32 0, %v754
  %v756 = vrot.slane %v751, %v755
  %v757 = vlaneseq
  %v758 = vshrl.u32 %v757, 7
  %v759 = vsub.s32 1, %v758
  %v760 = vrot.slane %v751, %v759
  %v761 = vlaneseq
  %v762 = vshrl.u32 %v761, 7
  %v763 = vsub.s32 2, %v762
  %v764 = vrot.slane %v751, %v763
  %v765 = vlaneseq
  %v766 = vshrl.u32 %v765, 7
  %v767 = vsub.s32 3, %v766
  %v768 = vrot.slane %v751, %v767
  %v773 = vmul.f32 %v747, %v756
  %v774 = vmul.f32 %v743, %v760
  %v775 = vmul.f32 %v739, %v764
  %v776 = vmul.f32 %v735, %v768
  %v777 = vmul.f32 %v748, %v756
  %v778 = vmul.f32 %v744, %v760
  %v779 = vmul.f32 %v740, %v764
  %v780 = vmul.f32 %v736, %v768
  %v781 = vmul.f32 %v749, %v756
  %v782 = vmul.f32 %v745, %v760
  %v783 = vmul.f32 %v741, %v764
  %v784 = vmul.f32 %v737, %v768
  %v785 = vmul.f32 %v750, %v756
  %v786 = vmul.f32 %v746, %v760
  %v787 = vmul.f32 %v742, %v764
  %v788 = vmul.f32 %v738, %v768
  %v789 = vld [vmem:[%s6] sm:$0xff]
  %v790 = vld [vmem:[%s6 + $0x8] sm:$0xff]
  %v791 = vld [vmem:[%s6 + $0x10] sm:$0xff]
  %v792 = vld [vmem:[%s6 + $0x18] sm:$0xff]
  %794 = vset.pattern.permute.xlu0 0
  %795 = vperm.xlu0 %794, %v789
  %v796 = vpop.permute.xlu0 %795
  %799 = vset.pattern.permute.xlu0 0
  %800 = vperm.xlu0 %799, %v790
  %v801 = vpop.permute.xlu0 %800
  %804 = vset.pattern.permute.xlu0 0
  %805 = vperm.xlu0 %804, %v791
  %v806 = vpop.permute.xlu0 %805
  %809 = vset.pattern.permute.xlu0 0
  %810 = vperm.xlu0 %809, %v792
  %v811 = vpop.permute.xlu0 %810
  %v813 = vmul.f32 %v773, %v796
  %v814 = vmul.f32 %v774, %v796
  %v815 = vmul.f32 %v775, %v796
  %v816 = vmul.f32 %v776, %v796
  %v817 = vmul.f32 %v777, %v801
  %v818 = vmul.f32 %v778, %v801
  %v819 = vmul.f32 %v779, %v801
  %v820 = vmul.f32 %v780, %v801
  %v821 = vmul.f32 %v781, %v806
  %v822 = vmul.f32 %v782, %v806
  %v823 = vmul.f32 %v783, %v806
  %v824 = vmul.f32 %v784, %v806
  %v825 = vmul.f32 %v785, %v811
  %v826 = vmul.f32 %v786, %v811
  %v827 = vmul.f32 %v787, %v811
  %v828 = vmul.f32 %v788, %v811
  %v829 = vadd.f32 %v684, %v813
  %v830 = vadd.f32 %v685, %v814
  %v831 = vadd.f32 %v686, %v815
  %v832 = vadd.f32 %v687, %v816
  %v833 = vadd.f32 %v688, %v817
  %v834 = vadd.f32 %v689, %v818
  %v835 = vadd.f32 %v690, %v819
  %v836 = vadd.f32 %v691, %v820
  %v837 = vadd.f32 %v692, %v821
  %v838 = vadd.f32 %v693, %v822
  %v839 = vadd.f32 %v694, %v823
  %v840 = vadd.f32 %v695, %v824
  %v841 = vadd.f32 %v696, %v825
  %v842 = vadd.f32 %v697, %v826
  %v843 = vadd.f32 %v698, %v827
  %v844 = vadd.f32 %v699, %v828
  %845 = vrot.lane.b32.xlu0 %v643, 16
  %v846 = vpop.permute.xlu0 %845
  %847 = vrot.lane.b32.xlu0 %v647, 16
  %v848 = vpop.permute.xlu0 %847
  %849 = vrot.lane.b32.xlu0 %v651, 16
  %v850 = vpop.permute.xlu0 %849
  %851 = vrot.lane.b32.xlu0 %v655, 16
  %v852 = vpop.permute.xlu0 %851
  %853 = vrot.lane.b32.xlu0 %v644, 16
  %v854 = vpop.permute.xlu0 %853
  %855 = vrot.lane.b32.xlu0 %v648, 16
  %v856 = vpop.permute.xlu0 %855
  %857 = vrot.lane.b32.xlu0 %v652, 16
  %v858 = vpop.permute.xlu0 %857
  %859 = vrot.lane.b32.xlu0 %v656, 16
  %v860 = vpop.permute.xlu0 %859
  %861 = vrot.lane.b32.xlu0 %v645, 16
  %v862 = vpop.permute.xlu0 %861
  %863 = vrot.lane.b32.xlu0 %v649, 16
  %v864 = vpop.permute.xlu0 %863
  %865 = vrot.lane.b32.xlu0 %v653, 16
  %v866 = vpop.permute.xlu0 %865
  %867 = vrot.lane.b32.xlu0 %v657, 16
  %v868 = vpop.permute.xlu0 %867
  %869 = vrot.lane.b32.xlu0 %v646, 16
  %v870 = vpop.permute.xlu0 %869
  %871 = vrot.lane.b32.xlu0 %v650, 16
  %v872 = vpop.permute.xlu0 %871
  %873 = vrot.lane.b32.xlu0 %v654, 16
  %v874 = vpop.permute.xlu0 %873
  %875 = vrot.lane.b32.xlu0 %v658, 16
  %v876 = vpop.permute.xlu0 %875
  %vm877 = vcmp.lt.s32.totalorder %v733, 16
  %v878 = vsel %vm877, %v862, %v870
  %v879 = vsel %vm877, %v864, %v872
  %v880 = vsel %vm877, %v866, %v874
  %v881 = vsel %vm877, %v868, %v876
  %v882 = vsel %vm877, %v854, %v862
  %v883 = vsel %vm877, %v856, %v864
  %v884 = vsel %vm877, %v858, %v866
  %v885 = vsel %vm877, %v860, %v868
  %v886 = vsel %vm877, %v846, %v854
  %v887 = vsel %vm877, %v848, %v856
  %v888 = vsel %vm877, %v850, %v858
  %v889 = vsel %vm877, %v852, %v860
  %v890 = vsel %vm877, %v870, %v846
  %v891 = vsel %vm877, %v872, %v848
  %v892 = vsel %vm877, %v874, %v850
  %v893 = vsel %vm877, %v876, %v852
  %s894 = scalar_lea.vmem %s7, 4
  %v895 = vld [vmem:[%s894] sm:$0xf]
  %v897 = vlaneseq
  %v898 = vshrl.u32 %v897, 7
  %v899 = vsub.s32 0, %v898
  %v900 = vrot.slane %v895, %v899
  %v901 = vlaneseq
  %v902 = vshrl.u32 %v901, 7
  %v903 = vsub.s32 1, %v902
  %v904 = vrot.slane %v895, %v903
  %v905 = vlaneseq
  %v906 = vshrl.u32 %v905, 7
  %v907 = vsub.s32 2, %v906
  %v908 = vrot.slane %v895, %v907
  %v909 = vlaneseq
  %v910 = vshrl.u32 %v909, 7
  %v911 = vsub.s32 3, %v910
  %v912 = vrot.slane %v895, %v911
  %v917 = vmul.f32 %v890, %v900
  %v918 = vmul.f32 %v886, %v904
  %v919 = vmul.f32 %v882, %v908
  %v920 = vmul.f32 %v878, %v912
  %v921 = vmul.f32 %v891, %v900
  %v922 = vmul.f32 %v887, %v904
  %v923 = vmul.f32 %v883, %v908
  %v924 = vmul.f32 %v879, %v912
  %v925 = vmul.f32 %v892, %v900
  %v926 = vmul.f32 %v888, %v904
  %v927 = vmul.f32 %v884, %v908
  %v928 = vmul.f32 %v880, %v912
  %v929 = vmul.f32 %v893, %v900
  %v930 = vmul.f32 %v889, %v904
  %v931 = vmul.f32 %v885, %v908
  %v932 = vmul.f32 %v881, %v912
  %s933 = scalar_lea.vmem %s6, 32
  %v934 = vld [vmem:[%s933] sm:$0xff]
  %v935 = vld [vmem:[%s933 + $0x8] sm:$0xff]
  %v936 = vld [vmem:[%s933 + $0x10] sm:$0xff]
  %v937 = vld [vmem:[%s933 + $0x18] sm:$0xff]
  %939 = vset.pattern.permute.xlu0 0
  %940 = vperm.xlu0 %939, %v934
  %v941 = vpop.permute.xlu0 %940
  %944 = vset.pattern.permute.xlu0 0
  %945 = vperm.xlu0 %944, %v935
  %v946 = vpop.permute.xlu0 %945
  %949 = vset.pattern.permute.xlu0 0
  %950 = vperm.xlu0 %949, %v936
  %v951 = vpop.permute.xlu0 %950
  %954 = vset.pattern.permute.xlu0 0
  %955 = vperm.xlu0 %954, %v937
  %v956 = vpop.permute.xlu0 %955
  %v958 = vmul.f32 %v917, %v941
  %v959 = vmul.f32 %v918, %v941
  %v960 = vmul.f32 %v919, %v941
  %v961 = vmul.f32 %v920, %v941
  %v962 = vmul.f32 %v921, %v946
  %v963 = vmul.f32 %v922, %v946
  %v964 = vmul.f32 %v923, %v946
  %v965 = vmul.f32 %v924, %v946
  %v966 = vmul.f32 %v925, %v951
  %v967 = vmul.f32 %v926, %v951
  %v968 = vmul.f32 %v927, %v951
  %v969 = vmul.f32 %v928, %v951
  %v970 = vmul.f32 %v929, %v956
  %v971 = vmul.f32 %v930, %v956
  %v972 = vmul.f32 %v931, %v956
  %v973 = vmul.f32 %v932, %v956
  %v974 = vadd.f32 %v829, %v958
  %v975 = vadd.f32 %v830, %v959
  %v976 = vadd.f32 %v831, %v960
  %v977 = vadd.f32 %v832, %v961
  %v978 = vadd.f32 %v833, %v962
  %v979 = vadd.f32 %v834, %v963
  %v980 = vadd.f32 %v835, %v964
  %v981 = vadd.f32 %v836, %v965
  %v982 = vadd.f32 %v837, %v966
  %v983 = vadd.f32 %v838, %v967
  %v984 = vadd.f32 %v839, %v968
  %v985 = vadd.f32 %v840, %v969
  %v986 = vadd.f32 %v841, %v970
  %v987 = vadd.f32 %v842, %v971
  %v988 = vadd.f32 %v843, %v972
  %v989 = vadd.f32 %v844, %v973
  %990 = vrot.lane.b32.xlu0 %v643, 15
  %v991 = vpop.permute.xlu0 %990
  %992 = vrot.lane.b32.xlu0 %v647, 15
  %v993 = vpop.permute.xlu0 %992
  %994 = vrot.lane.b32.xlu0 %v651, 15
  %v995 = vpop.permute.xlu0 %994
  %996 = vrot.lane.b32.xlu0 %v655, 15
  %v997 = vpop.permute.xlu0 %996
  %998 = vrot.lane.b32.xlu0 %v644, 15
  %v999 = vpop.permute.xlu0 %998
  %1000 = vrot.lane.b32.xlu0 %v648, 15
  %v1001 = vpop.permute.xlu0 %1000
  %1002 = vrot.lane.b32.xlu0 %v652, 15
  %v1003 = vpop.permute.xlu0 %1002
  %1004 = vrot.lane.b32.xlu0 %v656, 15
  %v1005 = vpop.permute.xlu0 %1004
  %1006 = vrot.lane.b32.xlu0 %v645, 15
  %v1007 = vpop.permute.xlu0 %1006
  %1008 = vrot.lane.b32.xlu0 %v649, 15
  %v1009 = vpop.permute.xlu0 %1008
  %1010 = vrot.lane.b32.xlu0 %v653, 15
  %v1011 = vpop.permute.xlu0 %1010
  %1012 = vrot.lane.b32.xlu0 %v657, 15
  %v1013 = vpop.permute.xlu0 %1012
  %1014 = vrot.lane.b32.xlu0 %v646, 15
  %v1015 = vpop.permute.xlu0 %1014
  %1016 = vrot.lane.b32.xlu0 %v650, 15
  %v1017 = vpop.permute.xlu0 %1016
  %1018 = vrot.lane.b32.xlu0 %v654, 15
  %v1019 = vpop.permute.xlu0 %1018
  %1020 = vrot.lane.b32.xlu0 %v658, 15
  %v1021 = vpop.permute.xlu0 %1020
  %vm1022 = vcmp.lt.s32.totalorder %v733, 15
  %v1023 = vsel %vm1022, %v1007, %v1015
  %v1024 = vsel %vm1022, %v1009, %v1017
  %v1025 = vsel %vm1022, %v1011, %v1019
  %v1026 = vsel %vm1022, %v1013, %v1021
  %v1027 = vsel %vm1022, %v999, %v1007
  %v1028 = vsel %vm1022, %v1001, %v1009
  %v1029 = vsel %vm1022, %v1003, %v1011
  %v1030 = vsel %vm1022, %v1005, %v1013
  %v1031 = vsel %vm1022, %v991, %v999
  %v1032 = vsel %vm1022, %v993, %v1001
  %v1033 = vsel %vm1022, %v995, %v1003
  %v1034 = vsel %vm1022, %v997, %v1005
  %v1035 = vsel %vm1022, %v1015, %v991
  %v1036 = vsel %vm1022, %v1017, %v993
  %v1037 = vsel %vm1022, %v1019, %v995
  %v1038 = vsel %vm1022, %v1021, %v997
  %s1039 = scalar_lea.vmem %s7, 8
  %v1040 = vld [vmem:[%s1039] sm:$0xf]
  %v1042 = vlaneseq
  %v1043 = vshrl.u32 %v1042, 7
  %v1044 = vsub.s32 0, %v1043
  %v1045 = vrot.slane %v1040, %v1044
  %v1046 = vlaneseq
  %v1047 = vshrl.u32 %v1046, 7
  %v1048 = vsub.s32 1, %v1047
  %v1049 = vrot.slane %v1040, %v1048
  %v1050 = vlaneseq
  %v1051 = vshrl.u32 %v1050, 7
  %v1052 = vsub.s32 2, %v1051
  %v1053 = vrot.slane %v1040, %v1052
  %v1054 = vlaneseq
  %v1055 = vshrl.u32 %v1054, 7
  %v1056 = vsub.s32 3, %v1055
  %v1057 = vrot.slane %v1040, %v1056
  %v1062 = vmul.f32 %v1035, %v1045
  %v1063 = vmul.f32 %v1031, %v1049
  %v1064 = vmul.f32 %v1027, %v1053
  %v1065 = vmul.f32 %v1023, %v1057
  %v1066 = vmul.f32 %v1036, %v1045
  %v1067 = vmul.f32 %v1032, %v1049
  %v1068 = vmul.f32 %v1028, %v1053
  %v1069 = vmul.f32 %v1024, %v1057
  %v1070 = vmul.f32 %v1037, %v1045
  %v1071 = vmul.f32 %v1033, %v1049
  %v1072 = vmul.f32 %v1029, %v1053
  %v1073 = vmul.f32 %v1025, %v1057
  %v1074 = vmul.f32 %v1038, %v1045
  %v1075 = vmul.f32 %v1034, %v1049
  %v1076 = vmul.f32 %v1030, %v1053
  %v1077 = vmul.f32 %v1026, %v1057
  %s1078 = scalar_lea.vmem %s6, 64
  %v1079 = vld [vmem:[%s1078] sm:$0xff]
  %v1080 = vld [vmem:[%s1078 + $0x8] sm:$0xff]
  %v1081 = vld [vmem:[%s1078 + $0x10] sm:$0xff]
  %v1082 = vld [vmem:[%s1078 + $0x18] sm:$0xff]
  %1084 = vset.pattern.permute.xlu0 0
  %1085 = vperm.xlu0 %1084, %v1079
  %v1086 = vpop.permute.xlu0 %1085
  %1089 = vset.pattern.permute.xlu0 0
  %1090 = vperm.xlu0 %1089, %v1080
  %v1091 = vpop.permute.xlu0 %1090
  %1094 = vset.pattern.permute.xlu0 0
  %1095 = vperm.xlu0 %1094, %v1081
  %v1096 = vpop.permute.xlu0 %1095
  %1099 = vset.pattern.permute.xlu0 0
  %1100 = vperm.xlu0 %1099, %v1082
  %v1101 = vpop.permute.xlu0 %1100
  %v1103 = vmul.f32 %v1062, %v1086
  %v1104 = vmul.f32 %v1063, %v1086
  %v1105 = vmul.f32 %v1064, %v1086
  %v1106 = vmul.f32 %v1065, %v1086
  %v1107 = vmul.f32 %v1066, %v1091
  %v1108 = vmul.f32 %v1067, %v1091
  %v1109 = vmul.f32 %v1068, %v1091
  %v1110 = vmul.f32 %v1069, %v1091
  %v1111 = vmul.f32 %v1070, %v1096
  %v1112 = vmul.f32 %v1071, %v1096
  %v1113 = vmul.f32 %v1072, %v1096
  %v1114 = vmul.f32 %v1073, %v1096
  %v1115 = vmul.f32 %v1074, %v1101
  %v1116 = vmul.f32 %v1075, %v1101
  %v1117 = vmul.f32 %v1076, %v1101
  %v1118 = vmul.f32 %v1077, %v1101
  %v1119 = vadd.f32 %v974, %v1103
  %v1120 = vadd.f32 %v975, %v1104
  %v1121 = vadd.f32 %v976, %v1105
  %v1122 = vadd.f32 %v977, %v1106
  %v1123 = vadd.f32 %v978, %v1107
  %v1124 = vadd.f32 %v979, %v1108
  %v1125 = vadd.f32 %v980, %v1109
  %v1126 = vadd.f32 %v981, %v1110
  %v1127 = vadd.f32 %v982, %v1111
  %v1128 = vadd.f32 %v983, %v1112
  %v1129 = vadd.f32 %v984, %v1113
  %v1130 = vadd.f32 %v985, %v1114
  %v1131 = vadd.f32 %v986, %v1115
  %v1132 = vadd.f32 %v987, %v1116
  %v1133 = vadd.f32 %v988, %v1117
  %v1134 = vadd.f32 %v989, %v1118
  %1135 = vrot.lane.b32.xlu0 %v643, 1
  %v1136 = vpop.permute.xlu0 %1135
  %1137 = vrot.lane.b32.xlu0 %v647, 1
  %v1138 = vpop.permute.xlu0 %1137
  %1139 = vrot.lane.b32.xlu0 %v651, 1
  %v1140 = vpop.permute.xlu0 %1139
  %1141 = vrot.lane.b32.xlu0 %v655, 1
  %v1142 = vpop.permute.xlu0 %1141
  %1143 = vrot.lane.b32.xlu0 %v644, 1
  %v1144 = vpop.permute.xlu0 %1143
  %1145 = vrot.lane.b32.xlu0 %v648, 1
  %v1146 = vpop.permute.xlu0 %1145
  %1147 = vrot.lane.b32.xlu0 %v652, 1
  %v1148 = vpop.permute.xlu0 %1147
  %1149 = vrot.lane.b32.xlu0 %v656, 1
  %v1150 = vpop.permute.xlu0 %1149
  %1151 = vrot.lane.b32.xlu0 %v645, 1
  %v1152 = vpop.permute.xlu0 %1151
  %1153 = vrot.lane.b32.xlu0 %v649, 1
  %v1154 = vpop.permute.xlu0 %1153
  %1155 = vrot.lane.b32.xlu0 %v653, 1
  %v1156 = vpop.permute.xlu0 %1155
  %1157 = vrot.lane.b32.xlu0 %v657, 1
  %v1158 = vpop.permute.xlu0 %1157
  %1159 = vrot.lane.b32.xlu0 %v646, 1
  %v1160 = vpop.permute.xlu0 %1159
  %1161 = vrot.lane.b32.xlu0 %v650, 1
  %v1162 = vpop.permute.xlu0 %1161
  %1163 = vrot.lane.b32.xlu0 %v654, 1
  %v1164 = vpop.permute.xlu0 %1163
  %1165 = vrot.lane.b32.xlu0 %v658, 1
  %v1166 = vpop.permute.xlu0 %1165
  %vm1167 = vcmp.lt.s32.totalorder %v733, 1
  %v1168 = vsel %vm1167, %v1152, %v1160
  %v1169 = vsel %vm1167, %v1154, %v1162
  %v1170 = vsel %vm1167, %v1156, %v1164
  %v1171 = vsel %vm1167, %v1158, %v1166
  %v1172 = vsel %vm1167, %v1144, %v1152
  %v1173 = vsel %vm1167, %v1146, %v1154
  %v1174 = vsel %vm1167, %v1148, %v1156
  %v1175 = vsel %vm1167, %v1150, %v1158
  %v1176 = vsel %vm1167, %v1136, %v1144
  %v1177 = vsel %vm1167, %v1138, %v1146
  %v1178 = vsel %vm1167, %v1140, %v1148
  %v1179 = vsel %vm1167, %v1142, %v1150
  %v1180 = vsel %vm1167, %v1160, %v1136
  %v1181 = vsel %vm1167, %v1162, %v1138
  %v1182 = vsel %vm1167, %v1164, %v1140
  %v1183 = vsel %vm1167, %v1166, %v1142
  %s1184 = scalar_lea.vmem %s7, 12
  %v1185 = vld [vmem:[%s1184] sm:$0xf]
  %v1187 = vlaneseq
  %v1188 = vshrl.u32 %v1187, 7
  %v1189 = vsub.s32 0, %v1188
  %v1190 = vrot.slane %v1185, %v1189
  %v1191 = vlaneseq
  %v1192 = vshrl.u32 %v1191, 7
  %v1193 = vsub.s32 1, %v1192
  %v1194 = vrot.slane %v1185, %v1193
  %v1195 = vlaneseq
  %v1196 = vshrl.u32 %v1195, 7
  %v1197 = vsub.s32 2, %v1196
  %v1198 = vrot.slane %v1185, %v1197
  %v1199 = vlaneseq
  %v1200 = vshrl.u32 %v1199, 7
  %v1201 = vsub.s32 3, %v1200
  %v1202 = vrot.slane %v1185, %v1201
  %v1207 = vmul.f32 %v1180, %v1190
  %v1208 = vmul.f32 %v1176, %v1194
  %v1209 = vmul.f32 %v1172, %v1198
  %v1210 = vmul.f32 %v1168, %v1202
  %v1211 = vmul.f32 %v1181, %v1190
  %v1212 = vmul.f32 %v1177, %v1194
  %v1213 = vmul.f32 %v1173, %v1198
  %v1214 = vmul.f32 %v1169, %v1202
  %v1215 = vmul.f32 %v1182, %v1190
  %v1216 = vmul.f32 %v1178, %v1194
  %v1217 = vmul.f32 %v1174, %v1198
  %v1218 = vmul.f32 %v1170, %v1202
  %v1219 = vmul.f32 %v1183, %v1190
  %v1220 = vmul.f32 %v1179, %v1194
  %v1221 = vmul.f32 %v1175, %v1198
  %v1222 = vmul.f32 %v1171, %v1202
  %s1223 = scalar_lea.vmem %s6, 96
  %v1224 = vld [vmem:[%s1223] sm:$0xff]
  %v1225 = vld [vmem:[%s1223 + $0x8] sm:$0xff]
  %v1226 = vld [vmem:[%s1223 + $0x10] sm:$0xff]
  %v1227 = vld [vmem:[%s1223 + $0x18] sm:$0xff]
  %1229 = vset.pattern.permute.xlu0 0
  %1230 = vperm.xlu0 %1229, %v1224
  %v1231 = vpop.permute.xlu0 %1230
  %1234 = vset.pattern.permute.xlu0 0
  %1235 = vperm.xlu0 %1234, %v1225
  %v1236 = vpop.permute.xlu0 %1235
  %1239 = vset.pattern.permute.xlu0 0
  %1240 = vperm.xlu0 %1239, %v1226
  %v1241 = vpop.permute.xlu0 %1240
  %1244 = vset.pattern.permute.xlu0 0
  %1245 = vperm.xlu0 %1244, %v1227
  %v1246 = vpop.permute.xlu0 %1245
  %v1248 = vmul.f32 %v1207, %v1231
  %v1249 = vmul.f32 %v1208, %v1231
  %v1250 = vmul.f32 %v1209, %v1231
  %v1251 = vmul.f32 %v1210, %v1231
  %v1252 = vmul.f32 %v1211, %v1236
  %v1253 = vmul.f32 %v1212, %v1236
  %v1254 = vmul.f32 %v1213, %v1236
  %v1255 = vmul.f32 %v1214, %v1236
  %v1256 = vmul.f32 %v1215, %v1241
  %v1257 = vmul.f32 %v1216, %v1241
  %v1258 = vmul.f32 %v1217, %v1241
  %v1259 = vmul.f32 %v1218, %v1241
  %v1260 = vmul.f32 %v1219, %v1246
  %v1261 = vmul.f32 %v1220, %v1246
  %v1262 = vmul.f32 %v1221, %v1246
  %v1263 = vmul.f32 %v1222, %v1246
  %v1264 = vadd.f32 %v1119, %v1248
  %v1265 = vadd.f32 %v1120, %v1249
  %v1266 = vadd.f32 %v1121, %v1250
  %v1267 = vadd.f32 %v1122, %v1251
  %v1268 = vadd.f32 %v1123, %v1252
  %v1269 = vadd.f32 %v1124, %v1253
  %v1270 = vadd.f32 %v1125, %v1254
  %v1271 = vadd.f32 %v1126, %v1255
  %v1272 = vadd.f32 %v1127, %v1256
  %v1273 = vadd.f32 %v1128, %v1257
  %v1274 = vadd.f32 %v1129, %v1258
  %v1275 = vadd.f32 %v1130, %v1259
  %v1276 = vadd.f32 %v1131, %v1260
  %v1277 = vadd.f32 %v1132, %v1261
  %v1278 = vadd.f32 %v1133, %v1262
  %v1279 = vadd.f32 %v1134, %v1263
  %1280 = vrot.lane.b32.xlu0 %v643, 127
  %v1281 = vpop.permute.xlu0 %1280
  %1282 = vrot.lane.b32.xlu0 %v647, 127
  %v1283 = vpop.permute.xlu0 %1282
  %1284 = vrot.lane.b32.xlu0 %v651, 127
  %v1285 = vpop.permute.xlu0 %1284
  %1286 = vrot.lane.b32.xlu0 %v655, 127
  %v1287 = vpop.permute.xlu0 %1286
  %1288 = vrot.lane.b32.xlu0 %v644, 127
  %v1289 = vpop.permute.xlu0 %1288
  %1290 = vrot.lane.b32.xlu0 %v648, 127
  %v1291 = vpop.permute.xlu0 %1290
  %1292 = vrot.lane.b32.xlu0 %v652, 127
  %v1293 = vpop.permute.xlu0 %1292
  %1294 = vrot.lane.b32.xlu0 %v656, 127
  %v1295 = vpop.permute.xlu0 %1294
  %1296 = vrot.lane.b32.xlu0 %v645, 127
  %v1297 = vpop.permute.xlu0 %1296
  %1298 = vrot.lane.b32.xlu0 %v649, 127
  %v1299 = vpop.permute.xlu0 %1298
  %1300 = vrot.lane.b32.xlu0 %v653, 127
  %v1301 = vpop.permute.xlu0 %1300
  %1302 = vrot.lane.b32.xlu0 %v657, 127
  %v1303 = vpop.permute.xlu0 %1302
  %1304 = vrot.lane.b32.xlu0 %v646, 127
  %v1305 = vpop.permute.xlu0 %1304
  %1306 = vrot.lane.b32.xlu0 %v650, 127
  %v1307 = vpop.permute.xlu0 %1306
  %1308 = vrot.lane.b32.xlu0 %v654, 127
  %v1309 = vpop.permute.xlu0 %1308
  %1310 = vrot.lane.b32.xlu0 %v658, 127
  %v1311 = vpop.permute.xlu0 %1310
  %vm1312 = vcmp.lt.s32.totalorder %v733, 127
  %v1313 = vsel %vm1312, %v1297, %v1305
  %v1314 = vsel %vm1312, %v1299, %v1307
  %v1315 = vsel %vm1312, %v1301, %v1309
  %v1316 = vsel %vm1312, %v1303, %v1311
  %v1317 = vsel %vm1312, %v1289, %v1297
  %v1318 = vsel %vm1312, %v1291, %v1299
  %v1319 = vsel %vm1312, %v1293, %v1301
  %v1320 = vsel %vm1312, %v1295, %v1303
  %v1321 = vsel %vm1312, %v1281, %v1289
  %v1322 = vsel %vm1312, %v1283, %v1291
  %v1323 = vsel %vm1312, %v1285, %v1293
  %v1324 = vsel %vm1312, %v1287, %v1295
  %v1325 = vsel %vm1312, %v1305, %v1281
  %v1326 = vsel %vm1312, %v1307, %v1283
  %v1327 = vsel %vm1312, %v1309, %v1285
  %v1328 = vsel %vm1312, %v1311, %v1287
  %s1329 = scalar_lea.vmem %s7, 20
  %v1330 = vld [vmem:[%s1329] sm:$0xf]
  %v1332 = vlaneseq
  %v1333 = vshrl.u32 %v1332, 7
  %v1334 = vsub.s32 0, %v1333
  %v1335 = vrot.slane %v1330, %v1334
  %v1336 = vlaneseq
  %v1337 = vshrl.u32 %v1336, 7
  %v1338 = vsub.s32 1, %v1337
  %v1339 = vrot.slane %v1330, %v1338
  %v1340 = vlaneseq
  %v1341 = vshrl.u32 %v1340, 7
  %v1342 = vsub.s32 2, %v1341
  %v1343 = vrot.slane %v1330, %v1342
  %v1344 = vlaneseq
  %v1345 = vshrl.u32 %v1344, 7
  %v1346 = vsub.s32 3, %v1345
  %v1347 = vrot.slane %v1330, %v1346
  %v1352 = vmul.f32 %v1321, %v1335
  %v1353 = vmul.f32 %v1317, %v1339
  %v1354 = vmul.f32 %v1313, %v1343
  %v1355 = vmul.f32 %v1325, %v1347
  %v1356 = vmul.f32 %v1322, %v1335
  %v1357 = vmul.f32 %v1318, %v1339
  %v1358 = vmul.f32 %v1314, %v1343
  %v1359 = vmul.f32 %v1326, %v1347
  %v1360 = vmul.f32 %v1323, %v1335
  %v1361 = vmul.f32 %v1319, %v1339
  %v1362 = vmul.f32 %v1315, %v1343
  %v1363 = vmul.f32 %v1327, %v1347
  %v1364 = vmul.f32 %v1324, %v1335
  %v1365 = vmul.f32 %v1320, %v1339
  %v1366 = vmul.f32 %v1316, %v1343
  %v1367 = vmul.f32 %v1328, %v1347
  %s1368 = scalar_lea.vmem %s6, 160
  %v1369 = vld [vmem:[%s1368] sm:$0xff]
  %v1370 = vld [vmem:[%s1368 + $0x8] sm:$0xff]
  %v1371 = vld [vmem:[%s1368 + $0x10] sm:$0xff]
  %v1372 = vld [vmem:[%s1368 + $0x18] sm:$0xff]
  %1374 = vset.pattern.permute.xlu0 0
  %1375 = vperm.xlu0 %1374, %v1369
  %v1376 = vpop.permute.xlu0 %1375
  %1379 = vset.pattern.permute.xlu0 0
  %1380 = vperm.xlu0 %1379, %v1370
  %v1381 = vpop.permute.xlu0 %1380
  %1384 = vset.pattern.permute.xlu0 0
  %1385 = vperm.xlu0 %1384, %v1371
  %v1386 = vpop.permute.xlu0 %1385
  %1389 = vset.pattern.permute.xlu0 0
  %1390 = vperm.xlu0 %1389, %v1372
  %v1391 = vpop.permute.xlu0 %1390
  %v1393 = vmul.f32 %v1352, %v1376
  %v1394 = vmul.f32 %v1353, %v1376
  %v1395 = vmul.f32 %v1354, %v1376
  %v1396 = vmul.f32 %v1355, %v1376
  %v1397 = vmul.f32 %v1356, %v1381
  %v1398 = vmul.f32 %v1357, %v1381
  %v1399 = vmul.f32 %v1358, %v1381
  %v1400 = vmul.f32 %v1359, %v1381
  %v1401 = vmul.f32 %v1360, %v1386
  %v1402 = vmul.f32 %v1361, %v1386
  %v1403 = vmul.f32 %v1362, %v1386
  %v1404 = vmul.f32 %v1363, %v1386
  %v1405 = vmul.f32 %v1364, %v1391
  %v1406 = vmul.f32 %v1365, %v1391
  %v1407 = vmul.f32 %v1366, %v1391
  %v1408 = vmul.f32 %v1367, %v1391
  %v1409 = vadd.f32 %v1264, %v1393
  %v1410 = vadd.f32 %v1265, %v1394
  %v1411 = vadd.f32 %v1266, %v1395
  %v1412 = vadd.f32 %v1267, %v1396
  %v1413 = vadd.f32 %v1268, %v1397
  %v1414 = vadd.f32 %v1269, %v1398
  %v1415 = vadd.f32 %v1270, %v1399
  %v1416 = vadd.f32 %v1271, %v1400
  %v1417 = vadd.f32 %v1272, %v1401
  %v1418 = vadd.f32 %v1273, %v1402
  %v1419 = vadd.f32 %v1274, %v1403
  %v1420 = vadd.f32 %v1275, %v1404
  %v1421 = vadd.f32 %v1276, %v1405
  %v1422 = vadd.f32 %v1277, %v1406
  %v1423 = vadd.f32 %v1278, %v1407
  %v1424 = vadd.f32 %v1279, %v1408
  %1425 = vrot.lane.b32.xlu0 %v643, 113
  %v1426 = vpop.permute.xlu0 %1425
  %1427 = vrot.lane.b32.xlu0 %v647, 113
  %v1428 = vpop.permute.xlu0 %1427
  %1429 = vrot.lane.b32.xlu0 %v651, 113
  %v1430 = vpop.permute.xlu0 %1429
  %1431 = vrot.lane.b32.xlu0 %v655, 113
  %v1432 = vpop.permute.xlu0 %1431
  %1433 = vrot.lane.b32.xlu0 %v644, 113
  %v1434 = vpop.permute.xlu0 %1433
  %1435 = vrot.lane.b32.xlu0 %v648, 113
  %v1436 = vpop.permute.xlu0 %1435
  %1437 = vrot.lane.b32.xlu0 %v652, 113
  %v1438 = vpop.permute.xlu0 %1437
  %1439 = vrot.lane.b32.xlu0 %v656, 113
  %v1440 = vpop.permute.xlu0 %1439
  %1441 = vrot.lane.b32.xlu0 %v645, 113
  %v1442 = vpop.permute.xlu0 %1441
  %1443 = vrot.lane.b32.xlu0 %v649, 113
  %v1444 = vpop.permute.xlu0 %1443
  %1445 = vrot.lane.b32.xlu0 %v653, 113
  %v1446 = vpop.permute.xlu0 %1445
  %1447 = vrot.lane.b32.xlu0 %v657, 113
  %v1448 = vpop.permute.xlu0 %1447
  %1449 = vrot.lane.b32.xlu0 %v646, 113
  %v1450 = vpop.permute.xlu0 %1449
  %1451 = vrot.lane.b32.xlu0 %v650, 113
  %v1452 = vpop.permute.xlu0 %1451
  %1453 = vrot.lane.b32.xlu0 %v654, 113
  %v1454 = vpop.permute.xlu0 %1453
  %1455 = vrot.lane.b32.xlu0 %v658, 113
  %v1456 = vpop.permute.xlu0 %1455
  %vm1457 = vcmp.lt.s32.totalorder %v733, 113
  %v1458 = vsel %vm1457, %v1442, %v1450
  %v1459 = vsel %vm1457, %v1444, %v1452
  %v1460 = vsel %vm1457, %v1446, %v1454
  %v1461 = vsel %vm1457, %v1448, %v1456
  %v1462 = vsel %vm1457, %v1434, %v1442
  %v1463 = vsel %vm1457, %v1436, %v1444
  %v1464 = vsel %vm1457, %v1438, %v1446
  %v1465 = vsel %vm1457, %v1440, %v1448
  %v1466 = vsel %vm1457, %v1426, %v1434
  %v1467 = vsel %vm1457, %v1428, %v1436
  %v1468 = vsel %vm1457, %v1430, %v1438
  %v1469 = vsel %vm1457, %v1432, %v1440
  %v1470 = vsel %vm1457, %v1450, %v1426
  %v1471 = vsel %vm1457, %v1452, %v1428
  %v1472 = vsel %vm1457, %v1454, %v1430
  %v1473 = vsel %vm1457, %v1456, %v1432
  %s1474 = scalar_lea.vmem %s7, 24
  %v1475 = vld [vmem:[%s1474] sm:$0xf]
  %v1477 = vlaneseq
  %v1478 = vshrl.u32 %v1477, 7
  %v1479 = vsub.s32 0, %v1478
  %v1480 = vrot.slane %v1475, %v1479
  %v1481 = vlaneseq
  %v1482 = vshrl.u32 %v1481, 7
  %v1483 = vsub.s32 1, %v1482
  %v1484 = vrot.slane %v1475, %v1483
  %v1485 = vlaneseq
  %v1486 = vshrl.u32 %v1485, 7
  %v1487 = vsub.s32 2, %v1486
  %v1488 = vrot.slane %v1475, %v1487
  %v1489 = vlaneseq
  %v1490 = vshrl.u32 %v1489, 7
  %v1491 = vsub.s32 3, %v1490
  %v1492 = vrot.slane %v1475, %v1491
  %v1497 = vmul.f32 %v1466, %v1480
  %v1498 = vmul.f32 %v1462, %v1484
  %v1499 = vmul.f32 %v1458, %v1488
  %v1500 = vmul.f32 %v1470, %v1492
  %v1501 = vmul.f32 %v1467, %v1480
  %v1502 = vmul.f32 %v1463, %v1484
  %v1503 = vmul.f32 %v1459, %v1488
  %v1504 = vmul.f32 %v1471, %v1492
  %v1505 = vmul.f32 %v1468, %v1480
  %v1506 = vmul.f32 %v1464, %v1484
  %v1507 = vmul.f32 %v1460, %v1488
  %v1508 = vmul.f32 %v1472, %v1492
  %v1509 = vmul.f32 %v1469, %v1480
  %v1510 = vmul.f32 %v1465, %v1484
  %v1511 = vmul.f32 %v1461, %v1488
  %v1512 = vmul.f32 %v1473, %v1492
  %s1513 = scalar_lea.vmem %s6, 192
  %v1514 = vld [vmem:[%s1513] sm:$0xff]
  %v1515 = vld [vmem:[%s1513 + $0x8] sm:$0xff]
  %v1516 = vld [vmem:[%s1513 + $0x10] sm:$0xff]
  %v1517 = vld [vmem:[%s1513 + $0x18] sm:$0xff]
  %1519 = vset.pattern.permute.xlu0 0
  %1520 = vperm.xlu0 %1519, %v1514
  %v1521 = vpop.permute.xlu0 %1520
  %1524 = vset.pattern.permute.xlu0 0
  %1525 = vperm.xlu0 %1524, %v1515
  %v1526 = vpop.permute.xlu0 %1525
  %1529 = vset.pattern.permute.xlu0 0
  %1530 = vperm.xlu0 %1529, %v1516
  %v1531 = vpop.permute.xlu0 %1530
  %1534 = vset.pattern.permute.xlu0 0
  %1535 = vperm.xlu0 %1534, %v1517
  %v1536 = vpop.permute.xlu0 %1535
  %v1538 = vmul.f32 %v1497, %v1521
  %v1539 = vmul.f32 %v1498, %v1521
  %v1540 = vmul.f32 %v1499, %v1521
  %v1541 = vmul.f32 %v1500, %v1521
  %v1542 = vmul.f32 %v1501, %v1526
  %v1543 = vmul.f32 %v1502, %v1526
  %v1544 = vmul.f32 %v1503, %v1526
  %v1545 = vmul.f32 %v1504, %v1526
  %v1546 = vmul.f32 %v1505, %v1531
  %v1547 = vmul.f32 %v1506, %v1531
  %v1548 = vmul.f32 %v1507, %v1531
  %v1549 = vmul.f32 %v1508, %v1531
  %v1550 = vmul.f32 %v1509, %v1536
  %v1551 = vmul.f32 %v1510, %v1536
  %v1552 = vmul.f32 %v1511, %v1536
  %v1553 = vmul.f32 %v1512, %v1536
  %v1554 = vadd.f32 %v1409, %v1538
  %v1555 = vadd.f32 %v1410, %v1539
  %v1556 = vadd.f32 %v1411, %v1540
  %v1557 = vadd.f32 %v1412, %v1541
  %v1558 = vadd.f32 %v1413, %v1542
  %v1559 = vadd.f32 %v1414, %v1543
  %v1560 = vadd.f32 %v1415, %v1544
  %v1561 = vadd.f32 %v1416, %v1545
  %v1562 = vadd.f32 %v1417, %v1546
  %v1563 = vadd.f32 %v1418, %v1547
  %v1564 = vadd.f32 %v1419, %v1548
  %v1565 = vadd.f32 %v1420, %v1549
  %v1566 = vadd.f32 %v1421, %v1550
  %v1567 = vadd.f32 %v1422, %v1551
  %v1568 = vadd.f32 %v1423, %v1552
  %v1569 = vadd.f32 %v1424, %v1553
  %1570 = vrot.lane.b32.xlu0 %v643, 112
  %v1571 = vpop.permute.xlu0 %1570
  %1572 = vrot.lane.b32.xlu0 %v647, 112
  %v1573 = vpop.permute.xlu0 %1572
  %1574 = vrot.lane.b32.xlu0 %v651, 112
  %v1575 = vpop.permute.xlu0 %1574
  %1576 = vrot.lane.b32.xlu0 %v655, 112
  %v1577 = vpop.permute.xlu0 %1576
  %1578 = vrot.lane.b32.xlu0 %v644, 112
  %v1579 = vpop.permute.xlu0 %1578
  %1580 = vrot.lane.b32.xlu0 %v648, 112
  %v1581 = vpop.permute.xlu0 %1580
  %1582 = vrot.lane.b32.xlu0 %v652, 112
  %v1583 = vpop.permute.xlu0 %1582
  %1584 = vrot.lane.b32.xlu0 %v656, 112
  %v1585 = vpop.permute.xlu0 %1584
  %1586 = vrot.lane.b32.xlu0 %v645, 112
  %v1587 = vpop.permute.xlu0 %1586
  %1588 = vrot.lane.b32.xlu0 %v649, 112
  %v1589 = vpop.permute.xlu0 %1588
  %1590 = vrot.lane.b32.xlu0 %v653, 112
  %v1591 = vpop.permute.xlu0 %1590
  %1592 = vrot.lane.b32.xlu0 %v657, 112
  %v1593 = vpop.permute.xlu0 %1592
  %1594 = vrot.lane.b32.xlu0 %v646, 112
  %v1595 = vpop.permute.xlu0 %1594
  %1596 = vrot.lane.b32.xlu0 %v650, 112
  %v1597 = vpop.permute.xlu0 %1596
  %1598 = vrot.lane.b32.xlu0 %v654, 112
  %v1599 = vpop.permute.xlu0 %1598
  %1600 = vrot.lane.b32.xlu0 %v658, 112
  %v1601 = vpop.permute.xlu0 %1600
  %vm1602 = vcmp.lt.s32.totalorder %v733, 112
  %v1603 = vsel %vm1602, %v1587, %v1595
  %v1604 = vsel %vm1602, %v1589, %v1597
  %v1605 = vsel %vm1602, %v1591, %v1599
  %v1606 = vsel %vm1602, %v1593, %v1601
  %v1607 = vsel %vm1602, %v1579, %v1587
  %v1608 = vsel %vm1602, %v1581, %v1589
  %v1609 = vsel %vm1602, %v1583, %v1591
  %v1610 = vsel %vm1602, %v1585, %v1593
  %v1611 = vsel %vm1602, %v1571, %v1579
  %v1612 = vsel %vm1602, %v1573, %v1581
  %v1613 = vsel %vm1602, %v1575, %v1583
  %v1614 = vsel %vm1602, %v1577, %v1585
  %v1615 = vsel %vm1602, %v1595, %v1571
  %v1616 = vsel %vm1602, %v1597, %v1573
  %v1617 = vsel %vm1602, %v1599, %v1575
  %v1618 = vsel %vm1602, %v1601, %v1577
  %s1619 = scalar_lea.vmem %s7, 28
  %v1620 = vld [vmem:[%s1619] sm:$0xf]
  %v1622 = vlaneseq
  %v1623 = vshrl.u32 %v1622, 7
  %v1624 = vsub.s32 0, %v1623
  %v1625 = vrot.slane %v1620, %v1624
  %v1626 = vlaneseq
  %v1627 = vshrl.u32 %v1626, 7
  %v1628 = vsub.s32 1, %v1627
  %v1629 = vrot.slane %v1620, %v1628
  %v1630 = vlaneseq
  %v1631 = vshrl.u32 %v1630, 7
  %v1632 = vsub.s32 2, %v1631
  %v1633 = vrot.slane %v1620, %v1632
  %v1634 = vlaneseq
  %v1635 = vshrl.u32 %v1634, 7
  %v1636 = vsub.s32 3, %v1635
  %v1637 = vrot.slane %v1620, %v1636
  %v1642 = vmul.f32 %v1611, %v1625
  %v1643 = vmul.f32 %v1607, %v1629
  %v1644 = vmul.f32 %v1603, %v1633
  %v1645 = vmul.f32 %v1615, %v1637
  %v1646 = vmul.f32 %v1612, %v1625
  %v1647 = vmul.f32 %v1608, %v1629
  %v1648 = vmul.f32 %v1604, %v1633
  %v1649 = vmul.f32 %v1616, %v1637
  %v1650 = vmul.f32 %v1613, %v1625
  %v1651 = vmul.f32 %v1609, %v1629
  %v1652 = vmul.f32 %v1605, %v1633
  %v1653 = vmul.f32 %v1617, %v1637
  %v1654 = vmul.f32 %v1614, %v1625
  %v1655 = vmul.f32 %v1610, %v1629
  %v1656 = vmul.f32 %v1606, %v1633
  %v1657 = vmul.f32 %v1618, %v1637
  %s1658 = scalar_lea.vmem %s6, 224
  %v1659 = vld [vmem:[%s1658] sm:$0xff]
  %v1660 = vld [vmem:[%s1658 + $0x8] sm:$0xff]
  %v1661 = vld [vmem:[%s1658 + $0x10] sm:$0xff]
  %v1662 = vld [vmem:[%s1658 + $0x18] sm:$0xff]
  %1664 = vset.pattern.permute.xlu0 0
  %1665 = vperm.xlu0 %1664, %v1659
  %v1666 = vpop.permute.xlu0 %1665
  %1669 = vset.pattern.permute.xlu0 0
  %1670 = vperm.xlu0 %1669, %v1660
  %v1671 = vpop.permute.xlu0 %1670
  %1674 = vset.pattern.permute.xlu0 0
  %1675 = vperm.xlu0 %1674, %v1661
  %v1676 = vpop.permute.xlu0 %1675
  %1679 = vset.pattern.permute.xlu0 0
  %1680 = vperm.xlu0 %1679, %v1662
  %v1681 = vpop.permute.xlu0 %1680
  %v1683 = vmul.f32 %v1642, %v1666
  %v1684 = vmul.f32 %v1643, %v1666
  %v1685 = vmul.f32 %v1644, %v1666
  %v1686 = vmul.f32 %v1645, %v1666
  %v1687 = vmul.f32 %v1646, %v1671
  %v1688 = vmul.f32 %v1647, %v1671
  %v1689 = vmul.f32 %v1648, %v1671
  %v1690 = vmul.f32 %v1649, %v1671
  %v1691 = vmul.f32 %v1650, %v1676
  %v1692 = vmul.f32 %v1651, %v1676
  %v1693 = vmul.f32 %v1652, %v1676
  %v1694 = vmul.f32 %v1653, %v1676
  %v1695 = vmul.f32 %v1654, %v1681
  %v1696 = vmul.f32 %v1655, %v1681
  %v1697 = vmul.f32 %v1656, %v1681
  %v1698 = vmul.f32 %v1657, %v1681
  %v1699 = vadd.f32 %v1554, %v1683
  %v1700 = vadd.f32 %v1555, %v1684
  %v1701 = vadd.f32 %v1556, %v1685
  %v1702 = vadd.f32 %v1557, %v1686
  %v1703 = vadd.f32 %v1558, %v1687
  %v1704 = vadd.f32 %v1559, %v1688
  %v1705 = vadd.f32 %v1560, %v1689
  %v1706 = vadd.f32 %v1561, %v1690
  %v1707 = vadd.f32 %v1562, %v1691
  %v1708 = vadd.f32 %v1563, %v1692
  %v1709 = vadd.f32 %v1564, %v1693
  %v1710 = vadd.f32 %v1565, %v1694
  %v1711 = vadd.f32 %v1566, %v1695
  %v1712 = vadd.f32 %v1567, %v1696
  %v1713 = vadd.f32 %v1568, %v1697
  %v1714 = vadd.f32 %v1569, %v1698
  %1715 = vrot.lane.b32.xlu0 %v643, 111
  %v1716 = vpop.permute.xlu0 %1715
  %1717 = vrot.lane.b32.xlu0 %v647, 111
  %v1718 = vpop.permute.xlu0 %1717
  %1719 = vrot.lane.b32.xlu0 %v651, 111
  %v1720 = vpop.permute.xlu0 %1719
  %1721 = vrot.lane.b32.xlu0 %v655, 111
  %v1722 = vpop.permute.xlu0 %1721
  %1723 = vrot.lane.b32.xlu0 %v644, 111
  %v1724 = vpop.permute.xlu0 %1723
  %1725 = vrot.lane.b32.xlu0 %v648, 111
  %v1726 = vpop.permute.xlu0 %1725
  %1727 = vrot.lane.b32.xlu0 %v652, 111
  %v1728 = vpop.permute.xlu0 %1727
  %1729 = vrot.lane.b32.xlu0 %v656, 111
  %v1730 = vpop.permute.xlu0 %1729
  %1731 = vrot.lane.b32.xlu0 %v645, 111
  %v1732 = vpop.permute.xlu0 %1731
  %1733 = vrot.lane.b32.xlu0 %v649, 111
  %v1734 = vpop.permute.xlu0 %1733
  %1735 = vrot.lane.b32.xlu0 %v653, 111
  %v1736 = vpop.permute.xlu0 %1735
  %1737 = vrot.lane.b32.xlu0 %v657, 111
  %v1738 = vpop.permute.xlu0 %1737
  %1739 = vrot.lane.b32.xlu0 %v646, 111
  %v1740 = vpop.permute.xlu0 %1739
  %1741 = vrot.lane.b32.xlu0 %v650, 111
  %v1742 = vpop.permute.xlu0 %1741
  %1743 = vrot.lane.b32.xlu0 %v654, 111
  %v1744 = vpop.permute.xlu0 %1743
  %1745 = vrot.lane.b32.xlu0 %v658, 111
  %v1746 = vpop.permute.xlu0 %1745
  %vm1747 = vcmp.lt.s32.totalorder %v733, 111
  %v1748 = vsel %vm1747, %v1732, %v1740
  %v1749 = vsel %vm1747, %v1734, %v1742
  %v1750 = vsel %vm1747, %v1736, %v1744
  %v1751 = vsel %vm1747, %v1738, %v1746
  %v1752 = vsel %vm1747, %v1724, %v1732
  %v1753 = vsel %vm1747, %v1726, %v1734
  %v1754 = vsel %vm1747, %v1728, %v1736
  %v1755 = vsel %vm1747, %v1730, %v1738
  %v1756 = vsel %vm1747, %v1716, %v1724
  %v1757 = vsel %vm1747, %v1718, %v1726
  %v1758 = vsel %vm1747, %v1720, %v1728
  %v1759 = vsel %vm1747, %v1722, %v1730
  %v1760 = vsel %vm1747, %v1740, %v1716
  %v1761 = vsel %vm1747, %v1742, %v1718
  %v1762 = vsel %vm1747, %v1744, %v1720
  %v1763 = vsel %vm1747, %v1746, %v1722
  %s1764 = scalar_lea.vmem %s7, 32
  %v1765 = vld [vmem:[%s1764] sm:$0xf]
  %v1767 = vlaneseq
  %v1768 = vshrl.u32 %v1767, 7
  %v1769 = vsub.s32 0, %v1768
  %v1770 = vrot.slane %v1765, %v1769
  %v1771 = vlaneseq
  %v1772 = vshrl.u32 %v1771, 7
  %v1773 = vsub.s32 1, %v1772
  %v1774 = vrot.slane %v1765, %v1773
  %v1775 = vlaneseq
  %v1776 = vshrl.u32 %v1775, 7
  %v1777 = vsub.s32 2, %v1776
  %v1778 = vrot.slane %v1765, %v1777
  %v1779 = vlaneseq
  %v1780 = vshrl.u32 %v1779, 7
  %v1781 = vsub.s32 3, %v1780
  %v1782 = vrot.slane %v1765, %v1781
  %v1787 = vmul.f32 %v1756, %v1770
  %v1788 = vmul.f32 %v1752, %v1774
  %v1789 = vmul.f32 %v1748, %v1778
  %v1790 = vmul.f32 %v1760, %v1782
  %v1791 = vmul.f32 %v1757, %v1770
  %v1792 = vmul.f32 %v1753, %v1774
  %v1793 = vmul.f32 %v1749, %v1778
  %v1794 = vmul.f32 %v1761, %v1782
  %v1795 = vmul.f32 %v1758, %v1770
  %v1796 = vmul.f32 %v1754, %v1774
  %v1797 = vmul.f32 %v1750, %v1778
  %v1798 = vmul.f32 %v1762, %v1782
  %v1799 = vmul.f32 %v1759, %v1770
  %v1800 = vmul.f32 %v1755, %v1774
  %v1801 = vmul.f32 %v1751, %v1778
  %v1802 = vmul.f32 %v1763, %v1782
  %s1803 = scalar_lea.vmem %s6, 256
  %v1804 = vld [vmem:[%s1803] sm:$0xff]
  %v1805 = vld [vmem:[%s1803 + $0x8] sm:$0xff]
  %v1806 = vld [vmem:[%s1803 + $0x10] sm:$0xff]
  %v1807 = vld [vmem:[%s1803 + $0x18] sm:$0xff]
  %1809 = vset.pattern.permute.xlu0 0
  %1810 = vperm.xlu0 %1809, %v1804
  %v1811 = vpop.permute.xlu0 %1810
  %1814 = vset.pattern.permute.xlu0 0
  %1815 = vperm.xlu0 %1814, %v1805
  %v1816 = vpop.permute.xlu0 %1815
  %1819 = vset.pattern.permute.xlu0 0
  %1820 = vperm.xlu0 %1819, %v1806
  %v1821 = vpop.permute.xlu0 %1820
  %1824 = vset.pattern.permute.xlu0 0
  %1825 = vperm.xlu0 %1824, %v1807
  %v1826 = vpop.permute.xlu0 %1825
  %v1828 = vmul.f32 %v1787, %v1811
  %v1829 = vmul.f32 %v1788, %v1811
  %v1830 = vmul.f32 %v1789, %v1811
  %v1831 = vmul.f32 %v1790, %v1811
  %v1832 = vmul.f32 %v1791, %v1816
  %v1833 = vmul.f32 %v1792, %v1816
  %v1834 = vmul.f32 %v1793, %v1816
  %v1835 = vmul.f32 %v1794, %v1816
  %v1836 = vmul.f32 %v1795, %v1821
  %v1837 = vmul.f32 %v1796, %v1821
  %v1838 = vmul.f32 %v1797, %v1821
  %v1839 = vmul.f32 %v1798, %v1821
  %v1840 = vmul.f32 %v1799, %v1826
  %v1841 = vmul.f32 %v1800, %v1826
  %v1842 = vmul.f32 %v1801, %v1826
  %v1843 = vmul.f32 %v1802, %v1826
  %v1844 = vadd.f32 %v1699, %v1828
  %v1845 = vadd.f32 %v1700, %v1829
  %v1846 = vadd.f32 %v1701, %v1830
  %v1847 = vadd.f32 %v1702, %v1831
  %v1848 = vadd.f32 %v1703, %v1832
  %v1849 = vadd.f32 %v1704, %v1833
  %v1850 = vadd.f32 %v1705, %v1834
  %v1851 = vadd.f32 %v1706, %v1835
  %v1852 = vadd.f32 %v1707, %v1836
  %v1853 = vadd.f32 %v1708, %v1837
  %v1854 = vadd.f32 %v1709, %v1838
  %v1855 = vadd.f32 %v1710, %v1839
  %v1856 = vadd.f32 %v1711, %v1840
  %v1857 = vadd.f32 %v1712, %v1841
  %v1858 = vadd.f32 %v1713, %v1842
  %v1859 = vadd.f32 %v1714, %v1843
  %v1860 = vld [vmem:[%s8] sm:$0xff]
  %v1861 = vld [vmem:[%s8 + $0x8] sm:$0xff]
  %v1862 = vld [vmem:[%s8 + $0x10] sm:$0xff]
  %v1863 = vld [vmem:[%s8 + $0x18] sm:$0xff]
  %v1864 = vld [vmem:[%s9] sm:$0xff]
  %v1865 = vld [vmem:[%s9 + $0x8] sm:$0xff]
  %v1866 = vld [vmem:[%s9 + $0x10] sm:$0xff]
  %v1867 = vld [vmem:[%s9 + $0x18] sm:$0xff]
  %v1868 = vadd.f32 %v1844, %v1845
  %v1869 = vadd.f32 %v1868, %v1846
  %v1870 = vadd.f32 %v1869, %v1847
  %1871 = vadd.xlane.f32.xlu0 %v1870
  %v1872 = vpop.xlane.xlu0 %1871
  %v1873 = vadd.f32 %v1848, %v1849
  %v1874 = vadd.f32 %v1873, %v1850
  %v1875 = vadd.f32 %v1874, %v1851
  %1876 = vadd.xlane.f32.xlu0 %v1875
  %v1877 = vpop.xlane.xlu0 %1876
  %v1878 = vadd.f32 %v1852, %v1853
  %v1879 = vadd.f32 %v1878, %v1854
  %v1880 = vadd.f32 %v1879, %v1855
  %1881 = vadd.xlane.f32.xlu0 %v1880
  %v1882 = vpop.xlane.xlu0 %1881
  %v1883 = vadd.f32 %v1856, %v1857
  %v1884 = vadd.f32 %v1883, %v1858
  %v1885 = vadd.f32 %v1884, %v1859
  %1886 = vadd.xlane.f32.xlu0 %v1885
  %v1887 = vpop.xlane.xlu0 %1886
  %v1888 = vmul.f32 %v1872, 0.001953125
  %v1889 = vmul.f32 %v1877, 0.001953125
  %v1890 = vmul.f32 %v1882, 0.001953125
  %v1891 = vmul.f32 %v1887, 0.001953125
  %v1892 = vmul.f32 %v1844, %v1844
  %v1893 = vmul.f32 %v1845, %v1845
  %v1894 = vmul.f32 %v1846, %v1846
  %v1895 = vmul.f32 %v1847, %v1847
  %v1896 = vmul.f32 %v1848, %v1848
  %v1897 = vmul.f32 %v1849, %v1849
  %v1898 = vmul.f32 %v1850, %v1850
  %v1899 = vmul.f32 %v1851, %v1851
  %v1900 = vmul.f32 %v1852, %v1852
  %v1901 = vmul.f32 %v1853, %v1853
  %v1902 = vmul.f32 %v1854, %v1854
  %v1903 = vmul.f32 %v1855, %v1855
  %v1904 = vmul.f32 %v1856, %v1856
  %v1905 = vmul.f32 %v1857, %v1857
  %v1906 = vmul.f32 %v1858, %v1858
  %v1907 = vmul.f32 %v1859, %v1859
  %v1908 = vadd.f32 %v1892, %v1893
  %v1909 = vadd.f32 %v1908, %v1894
  %v1910 = vadd.f32 %v1909, %v1895
  %1911 = vadd.xlane.f32.xlu0 %v1910
  %v1912 = vpop.xlane.xlu0 %1911
  %v1913 = vadd.f32 %v1896, %v1897
  %v1914 = vadd.f32 %v1913, %v1898
  %v1915 = vadd.f32 %v1914, %v1899
  %1916 = vadd.xlane.f32.xlu0 %v1915
  %v1917 = vpop.xlane.xlu0 %1916
  %v1918 = vadd.f32 %v1900, %v1901
  %v1919 = vadd.f32 %v1918, %v1902
  %v1920 = vadd.f32 %v1919, %v1903
  %1921 = vadd.xlane.f32.xlu0 %v1920
  %v1922 = vpop.xlane.xlu0 %1921
  %v1923 = vadd.f32 %v1904, %v1905
  %v1924 = vadd.f32 %v1923, %v1906
  %v1925 = vadd.f32 %v1924, %v1907
  %1926 = vadd.xlane.f32.xlu0 %v1925
  %v1927 = vpop.xlane.xlu0 %1926
  %v1928 = vmul.f32 %v1912, 0.001953125
  %v1929 = vmul.f32 %v1917, 0.001953125
  %v1930 = vmul.f32 %v1922, 0.001953125
  %v1931 = vmul.f32 %v1927, 0.001953125
  %v1932 = vmul.f32 %v1888, %v1888
  %v1933 = vmul.f32 %v1889, %v1889
  %v1934 = vmul.f32 %v1890, %v1890
  %v1935 = vmul.f32 %v1891, %v1891
  %v1936 = vsub.f32 %v1928, %v1932
  %v1937 = vsub.f32 %v1929, %v1933
  %v1938 = vsub.f32 %v1930, %v1934
  %v1939 = vsub.f32 %v1931, %v1935
  %v1940 = vsub.f32 %v1844, %v1888
  %v1941 = vsub.f32 %v1845, %v1888
  %v1942 = vsub.f32 %v1846, %v1888
  %v1943 = vsub.f32 %v1847, %v1888
  %v1944 = vsub.f32 %v1848, %v1889
  %v1945 = vsub.f32 %v1849, %v1889
  %v1946 = vsub.f32 %v1850, %v1889
  %v1947 = vsub.f32 %v1851, %v1889
  %v1948 = vsub.f32 %v1852, %v1890
  %v1949 = vsub.f32 %v1853, %v1890
  %v1950 = vsub.f32 %v1854, %v1890
  %v1951 = vsub.f32 %v1855, %v1890
  %v1952 = vsub.f32 %v1856, %v1891
  %v1953 = vsub.f32 %v1857, %v1891
  %v1954 = vsub.f32 %v1858, %v1891
  %v1955 = vsub.f32 %v1859, %v1891
  %v1956 = vadd.f32 %v1936, 1e-05
  %v1957 = vadd.f32 %v1937, 1e-05
  %v1958 = vadd.f32 %v1938, 1e-05
  %v1959 = vadd.f32 %v1939, 1e-05
  %v1960 = vrsqrt.pop %v1956
  %v1961 = vrsqrt.pop %v1957
  %v1962 = vrsqrt.pop %v1958
  %v1963 = vrsqrt.pop %v1959
  %v1964 = vmul.f32 %v1940, %v1960
  %v1965 = vmul.f32 %v1941, %v1960
  %v1966 = vmul.f32 %v1942, %v1960
  %v1967 = vmul.f32 %v1943, %v1960
  %v1968 = vmul.f32 %v1944, %v1961
  %v1969 = vmul.f32 %v1945, %v1961
  %v1970 = vmul.f32 %v1946, %v1961
  %v1971 = vmul.f32 %v1947, %v1961
  %v1972 = vmul.f32 %v1948, %v1962
  %v1973 = vmul.f32 %v1949, %v1962
  %v1974 = vmul.f32 %v1950, %v1962
  %v1975 = vmul.f32 %v1951, %v1962
  %v1976 = vmul.f32 %v1952, %v1963
  %v1977 = vmul.f32 %v1953, %v1963
  %v1978 = vmul.f32 %v1954, %v1963
  %v1979 = vmul.f32 %v1955, %v1963
  %1981 = vset.pattern.permute.xlu0 0
  %1982 = vperm.xlu0 %1981, %v1860
  %v1983 = vpop.permute.xlu0 %1982
  %1986 = vset.pattern.permute.xlu0 0
  %1987 = vperm.xlu0 %1986, %v1861
  %v1988 = vpop.permute.xlu0 %1987
  %1991 = vset.pattern.permute.xlu0 0
  %1992 = vperm.xlu0 %1991, %v1862
  %v1993 = vpop.permute.xlu0 %1992
  %1996 = vset.pattern.permute.xlu0 0
  %1997 = vperm.xlu0 %1996, %v1863
  %v1998 = vpop.permute.xlu0 %1997
  %v2000 = vmul.f32 %v1964, %v1983
  %v2001 = vmul.f32 %v1965, %v1983
  %v2002 = vmul.f32 %v1966, %v1983
  %v2003 = vmul.f32 %v1967, %v1983
  %v2004 = vmul.f32 %v1968, %v1988
  %v2005 = vmul.f32 %v1969, %v1988
  %v2006 = vmul.f32 %v1970, %v1988
  %v2007 = vmul.f32 %v1971, %v1988
  %v2008 = vmul.f32 %v1972, %v1993
  %v2009 = vmul.f32 %v1973, %v1993
  %v2010 = vmul.f32 %v1974, %v1993
  %v2011 = vmul.f32 %v1975, %v1993
  %v2012 = vmul.f32 %v1976, %v1998
  %v2013 = vmul.f32 %v1977, %v1998
  %v2014 = vmul.f32 %v1978, %v1998
  %v2015 = vmul.f32 %v1979, %v1998
  %2017 = vset.pattern.permute.xlu0 0
  %2018 = vperm.xlu0 %2017, %v1864
  %v2019 = vpop.permute.xlu0 %2018
  %2022 = vset.pattern.permute.xlu0 0
  %2023 = vperm.xlu0 %2022, %v1865
  %v2024 = vpop.permute.xlu0 %2023
  %2027 = vset.pattern.permute.xlu0 0
  %2028 = vperm.xlu0 %2027, %v1866
  %v2029 = vpop.permute.xlu0 %2028
  %2032 = vset.pattern.permute.xlu0 0
  %2033 = vperm.xlu0 %2032, %v1867
  %v2034 = vpop.permute.xlu0 %2033
  %v2036 = vadd.f32 %v2000, %v2019
  %v2037 = vadd.f32 %v2001, %v2019
  %v2038 = vadd.f32 %v2002, %v2019
  %v2039 = vadd.f32 %v2003, %v2019
  %v2040 = vadd.f32 %v2004, %v2024
  %v2041 = vadd.f32 %v2005, %v2024
  %v2042 = vadd.f32 %v2006, %v2024
  %v2043 = vadd.f32 %v2007, %v2024
  %v2044 = vadd.f32 %v2008, %v2029
  %v2045 = vadd.f32 %v2009, %v2029
  %v2046 = vadd.f32 %v2010, %v2029
  %v2047 = vadd.f32 %v2011, %v2029
  %v2048 = vadd.f32 %v2012, %v2034
  %v2049 = vadd.f32 %v2013, %v2034
  %v2050 = vadd.f32 %v2014, %v2034
  %v2051 = vadd.f32 %v2015, %v2034
  %v2052 = vmul.f32 %v2036, 0.5
  %v2053 = vmul.f32 %v2037, 0.5
  %v2054 = vmul.f32 %v2038, 0.5
  %v2055 = vmul.f32 %v2039, 0.5
  %v2056 = vmul.f32 %v2040, 0.5
  %v2057 = vmul.f32 %v2041, 0.5
  %v2058 = vmul.f32 %v2042, 0.5
  %v2059 = vmul.f32 %v2043, 0.5
  %v2060 = vmul.f32 %v2044, 0.5
  %v2061 = vmul.f32 %v2045, 0.5
  %v2062 = vmul.f32 %v2046, 0.5
  %v2063 = vmul.f32 %v2047, 0.5
  %v2064 = vmul.f32 %v2048, 0.5
  %v2065 = vmul.f32 %v2049, 0.5
  %v2066 = vmul.f32 %v2050, 0.5
  %v2067 = vmul.f32 %v2051, 0.5
  %v2068 = vmul.f32 %v2036, 0.044715
  %v2069 = vmul.f32 %v2037, 0.044715
  %v2070 = vmul.f32 %v2038, 0.044715
  %v2071 = vmul.f32 %v2039, 0.044715
  %v2072 = vmul.f32 %v2040, 0.044715
  %v2073 = vmul.f32 %v2041, 0.044715
  %v2074 = vmul.f32 %v2042, 0.044715
  %v2075 = vmul.f32 %v2043, 0.044715
  %v2076 = vmul.f32 %v2044, 0.044715
  %v2077 = vmul.f32 %v2045, 0.044715
  %v2078 = vmul.f32 %v2046, 0.044715
  %v2079 = vmul.f32 %v2047, 0.044715
  %v2080 = vmul.f32 %v2048, 0.044715
  %v2081 = vmul.f32 %v2049, 0.044715
  %v2082 = vmul.f32 %v2050, 0.044715
  %v2083 = vmul.f32 %v2051, 0.044715
  %v2084 = vmul.f32 %v2068, %v2036
  %v2085 = vmul.f32 %v2069, %v2037
  %v2086 = vmul.f32 %v2070, %v2038
  %v2087 = vmul.f32 %v2071, %v2039
  %v2088 = vmul.f32 %v2072, %v2040
  %v2089 = vmul.f32 %v2073, %v2041
  %v2090 = vmul.f32 %v2074, %v2042
  %v2091 = vmul.f32 %v2075, %v2043
  %v2092 = vmul.f32 %v2076, %v2044
  %v2093 = vmul.f32 %v2077, %v2045
  %v2094 = vmul.f32 %v2078, %v2046
  %v2095 = vmul.f32 %v2079, %v2047
  %v2096 = vmul.f32 %v2080, %v2048
  %v2097 = vmul.f32 %v2081, %v2049
  %v2098 = vmul.f32 %v2082, %v2050
  %v2099 = vmul.f32 %v2083, %v2051
  %v2100 = vmul.f32 %v2084, %v2036
  %v2101 = vmul.f32 %v2085, %v2037
  %v2102 = vmul.f32 %v2086, %v2038
  %v2103 = vmul.f32 %v2087, %v2039
  %v2104 = vmul.f32 %v2088, %v2040
  %v2105 = vmul.f32 %v2089, %v2041
  %v2106 = vmul.f32 %v2090, %v2042
  %v2107 = vmul.f32 %v2091, %v2043
  %v2108 = vmul.f32 %v2092, %v2044
  %v2109 = vmul.f32 %v2093, %v2045
  %v2110 = vmul.f32 %v2094, %v2046
  %v2111 = vmul.f32 %v2095, %v2047
  %v2112 = vmul.f32 %v2096, %v2048
  %v2113 = vmul.f32 %v2097, %v2049
  %v2114 = vmul.f32 %v2098, %v2050
  %v2115 = vmul.f32 %v2099, %v2051
  %v2116 = vadd.f32 %v2036, %v2100
  %v2117 = vadd.f32 %v2037, %v2101
  %v2118 = vadd.f32 %v2038, %v2102
  %v2119 = vadd.f32 %v2039, %v2103
  %v2120 = vadd.f32 %v2040, %v2104
  %v2121 = vadd.f32 %v2041, %v2105
  %v2122 = vadd.f32 %v2042, %v2106
  %v2123 = vadd.f32 %v2043, %v2107
  %v2124 = vadd.f32 %v2044, %v2108
  %v2125 = vadd.f32 %v2045, %v2109
  %v2126 = vadd.f32 %v2046, %v2110
  %v2127 = vadd.f32 %v2047, %v2111
  %v2128 = vadd.f32 %v2048, %v2112
  %v2129 = vadd.f32 %v2049, %v2113
  %v2130 = vadd.f32 %v2050, %v2114
  %v2131 = vadd.f32 %v2051, %v2115
  %v2132 = vmul.f32 %v2116, 0.7978846
  %v2133 = vmul.f32 %v2117, 0.7978846
  %v2134 = vmul.f32 %v2118, 0.7978846
  %v2135 = vmul.f32 %v2119, 0.7978846
  %v2136 = vmul.f32 %v2120, 0.7978846
  %v2137 = vmul.f32 %v2121, 0.7978846
  %v2138 = vmul.f32 %v2122, 0.7978846
  %v2139 = vmul.f32 %v2123, 0.7978846
  %v2140 = vmul.f32 %v2124, 0.7978846
  %v2141 = vmul.f32 %v2125, 0.7978846
  %v2142 = vmul.f32 %v2126, 0.7978846
  %v2143 = vmul.f32 %v2127, 0.7978846
  %v2144 = vmul.f32 %v2128, 0.7978846
  %v2145 = vmul.f32 %v2129, 0.7978846
  %v2146 = vmul.f32 %v2130, 0.7978846
  %v2147 = vmul.f32 %v2131, 0.7978846
  %v2148 = vtanh.pop %v2132
  %v2149 = vtanh.pop %v2133
  %v2150 = vtanh.pop %v2134
  %v2151 = vtanh.pop %v2135
  %v2152 = vtanh.pop %v2136
  %v2153 = vtanh.pop %v2137
  %v2154 = vtanh.pop %v2138
  %v2155 = vtanh.pop %v2139
  %v2156 = vtanh.pop %v2140
  %v2157 = vtanh.pop %v2141
  %v2158 = vtanh.pop %v2142
  %v2159 = vtanh.pop %v2143
  %v2160 = vtanh.pop %v2144
  %v2161 = vtanh.pop %v2145
  %v2162 = vtanh.pop %v2146
  %v2163 = vtanh.pop %v2147
  %v2164 = vadd.f32 %v2148, 1.0
  %v2165 = vadd.f32 %v2149, 1.0
  %v2166 = vadd.f32 %v2150, 1.0
  %v2167 = vadd.f32 %v2151, 1.0
  %v2168 = vadd.f32 %v2152, 1.0
  %v2169 = vadd.f32 %v2153, 1.0
  %v2170 = vadd.f32 %v2154, 1.0
  %v2171 = vadd.f32 %v2155, 1.0
  %v2172 = vadd.f32 %v2156, 1.0
  %v2173 = vadd.f32 %v2157, 1.0
  %v2174 = vadd.f32 %v2158, 1.0
  %v2175 = vadd.f32 %v2159, 1.0
  %v2176 = vadd.f32 %v2160, 1.0
  %v2177 = vadd.f32 %v2161, 1.0
  %v2178 = vadd.f32 %v2162, 1.0
  %v2179 = vadd.f32 %v2163, 1.0
  %v2180 = vmul.f32 %v2052, %v2164
  %v2181 = vmul.f32 %v2053, %v2165
  %v2182 = vmul.f32 %v2054, %v2166
  %v2183 = vmul.f32 %v2055, %v2167
  %v2184 = vmul.f32 %v2056, %v2168
  %v2185 = vmul.f32 %v2057, %v2169
  %v2186 = vmul.f32 %v2058, %v2170
  %v2187 = vmul.f32 %v2059, %v2171
  %v2188 = vmul.f32 %v2060, %v2172
  %v2189 = vmul.f32 %v2061, %v2173
  %v2190 = vmul.f32 %v2062, %v2174
  %v2191 = vmul.f32 %v2063, %v2175
  %v2192 = vmul.f32 %v2064, %v2176
  %v2193 = vmul.f32 %v2065, %v2177
  %v2194 = vmul.f32 %v2066, %v2178
  %v2195 = vmul.f32 %v2067, %v2179
  %v2196 = vadd.f32 %v2180, %v2181
  %2197 = vadd.xlane.f32.xlu0 %v2196
  %v2198 = vpop.xlane.xlu0 %2197
  %v2199 = vadd.f32 %v2184, %v2185
  %2200 = vadd.xlane.f32.xlu0 %v2199
  %v2201 = vpop.xlane.xlu0 %2200
  %v2202 = vadd.f32 %v2188, %v2189
  %2203 = vadd.xlane.f32.xlu0 %v2202
  %v2204 = vpop.xlane.xlu0 %2203
  %v2205 = vadd.f32 %v2192, %v2193
  %2206 = vadd.xlane.f32.xlu0 %v2205
  %v2207 = vpop.xlane.xlu0 %2206
  %v2208 = vmul.f32 %v2198, 0.00390625
  %v2209 = vmul.f32 %v2201, 0.00390625
  %v2210 = vmul.f32 %v2204, 0.00390625
  %v2211 = vmul.f32 %v2207, 0.00390625
  %v2212 = vld [vmem:[%s10] sm:$0xff]
  %v2213 = vld [vmem:[%s10 + $0x8] sm:$0xff]
  %v2214 = vld [vmem:[%s10 + $0x10] sm:$0xff]
  %v2215 = vld [vmem:[%s10 + $0x18] sm:$0xff]
  %v2216 = vmul.f32 %v2208, %v2212
  %v2217 = vmul.f32 %v2209, %v2213
  %v2218 = vmul.f32 %v2210, %v2214
  %v2219 = vmul.f32 %v2211, %v2215
  %vm2220 = vcmask 7168
  %v2221 = vsel %vm2220, %v2216, 0.0
  %v2222 = vsel %vm2220, %v2217, 0.0
  %v2223 = vadd.f32 %v2221, %v2222
  %v2224 = vsel %vm2220, %v2218, 0.0
  %v2225 = vadd.f32 %v2223, %v2224
  %v2226 = vsel %vm2220, %v2219, 0.0
  %v2227 = vadd.f32 %v2225, %v2226
  %v2228 = vrot.slane %v2227, 4
  %v2229 = vadd.f32 %v2227, %v2228
  %v2230 = vrot.slane %v2229, 2
  %v2231 = vadd.f32 %v2229, %v2230
  %v2232 = vrot.slane %v2231, 1
  %v2233 = vadd.f32 %v2231, %v2232
  %v2234 = vmul.f32 %v2233, 0.5
  %v2235 = vmul.f32 %v2233, 0.044715
  %v2236 = vmul.f32 %v2235, %v2233
  %v2237 = vmul.f32 %v2236, %v2233
  %v2238 = vadd.f32 %v2233, %v2237
  %v2239 = vmul.f32 %v2238, 0.7978846
  %v2240 = vtanh.pop %v2239
  %v2241 = vadd.f32 %v2240, 1.0
  %v2242 = vmul.f32 %v2234, %v2241
  %s2243 = scalar_lea.vmem %s10, 32
  %v2244 = vld [vmem:[%s2243] sm:$0xff]
  %v2245 = vld [vmem:[%s2243 + $0x8] sm:$0xff]
  %v2246 = vld [vmem:[%s2243 + $0x10] sm:$0xff]
  %v2247 = vld [vmem:[%s2243 + $0x18] sm:$0xff]
  %v2248 = vmul.f32 %v2208, %v2244
  %v2249 = vmul.f32 %v2209, %v2245
  %v2250 = vmul.f32 %v2210, %v2246
  %v2251 = vmul.f32 %v2211, %v2247
  %v2252 = vsel %vm2220, %v2248, 0.0
  %v2253 = vsel %vm2220, %v2249, 0.0
  %v2254 = vadd.f32 %v2252, %v2253
  %v2255 = vsel %vm2220, %v2250, 0.0
  %v2256 = vadd.f32 %v2254, %v2255
  %v2257 = vsel %vm2220, %v2251, 0.0
  %v2258 = vadd.f32 %v2256, %v2257
  %v2259 = vrot.slane %v2258, 4
  %v2260 = vadd.f32 %v2258, %v2259
  %v2261 = vrot.slane %v2260, 2
  %v2262 = vadd.f32 %v2260, %v2261
  %v2263 = vrot.slane %v2262, 1
  %v2264 = vadd.f32 %v2262, %v2263
  %v2265 = vmul.f32 %v2264, 0.5
  %v2266 = vmul.f32 %v2264, 0.044715
  %v2267 = vmul.f32 %v2266, %v2264
  %v2268 = vmul.f32 %v2267, %v2264
  %v2269 = vadd.f32 %v2264, %v2268
  %v2270 = vmul.f32 %v2269, 0.7978846
  %v2271 = vtanh.pop %v2270
  %v2272 = vadd.f32 %v2271, 1.0
  %v2273 = vmul.f32 %v2265, %v2272
  %v2274 = vld [vmem:[%s11] sm:$0xff]
  %v2275 = vld [vmem:[%s11 + $0x8] sm:$0xff]
  %v2276 = vld [vmem:[%s11 + $0x10] sm:$0xff]
  %v2277 = vld [vmem:[%s11 + $0x18] sm:$0xff]
  %v2278 = vmul.f32 %v2242, %v2274
  %v2279 = vmul.f32 %v2242, %v2275
  %v2280 = vmul.f32 %v2242, %v2276
  %v2281 = vmul.f32 %v2242, %v2277
  %s2282 = scalar_lea.vmem %s11, 32
  %v2283 = vld [vmem:[%s2282] sm:$0xff]
  %v2284 = vld [vmem:[%s2282 + $0x8] sm:$0xff]
  %v2285 = vld [vmem:[%s2282 + $0x10] sm:$0xff]
  %v2286 = vld [vmem:[%s2282 + $0x18] sm:$0xff]
  %v2287 = vmul.f32 %v2273, %v2283
  %v2288 = vmul.f32 %v2273, %v2284
  %v2289 = vmul.f32 %v2273, %v2285
  %v2290 = vmul.f32 %v2273, %v2286
  %v2291 = vadd.f32 %v2278, %v2287
  %v2292 = vadd.f32 %v2279, %v2288
  %v2293 = vadd.f32 %v2280, %v2289
  %v2294 = vadd.f32 %v2281, %v2290
  %v2295 = vxor.u32 %v2291, 2147483648
  %v2296 = vxor.u32 %v2292, 2147483648
  %v2297 = vxor.u32 %v2293, 2147483648
  %v2298 = vxor.u32 %v2294, 2147483648
  %v2299 = vmul.f32 %v2295, 1.442695
  %v2300 = vpow.pop %v2299
  %v2301 = vmul.f32 %v2296, 1.442695
  %v2302 = vpow.pop %v2301
  %v2303 = vmul.f32 %v2297, 1.442695
  %v2304 = vpow.pop %v2303
  %v2305 = vmul.f32 %v2298, 1.442695
  %v2306 = vpow.pop %v2305
  %v2307 = vadd.f32 %v2300, 1.0
  %v2308 = vadd.f32 %v2302, 1.0
  %v2309 = vadd.f32 %v2304, 1.0
  %v2310 = vadd.f32 %v2306, 1.0
  %v2311 = vrcp.pop %v2307
  %v2312 = vmul.f32 1.0, %v2311
  %v2313 = vrcp.pop %v2308
  %v2314 = vmul.f32 1.0, %v2313
  %v2315 = vrcp.pop %v2309
  %v2316 = vmul.f32 1.0, %v2315
  %v2317 = vrcp.pop %v2310
  %v2318 = vmul.f32 1.0, %v2317
  %2320 = vset.pattern.permute.xlu0 0
  %2321 = vperm.xlu0 %2320, %v2312
  %v2322 = vpop.permute.xlu0 %2321
  %2325 = vset.pattern.permute.xlu0 0
  %2326 = vperm.xlu0 %2325, %v2314
  %v2327 = vpop.permute.xlu0 %2326
  %2330 = vset.pattern.permute.xlu0 0
  %2331 = vperm.xlu0 %2330, %v2316
  %v2332 = vpop.permute.xlu0 %2331
  %2335 = vset.pattern.permute.xlu0 0
  %2336 = vperm.xlu0 %2335, %v2318
  %v2337 = vpop.permute.xlu0 %2336
  %v2339 = vmul.f32 %v2180, %v2322
  %v2340 = vmul.f32 %v2181, %v2322
  %v2341 = vmul.f32 %v2184, %v2327
  %v2342 = vmul.f32 %v2185, %v2327
  %v2343 = vmul.f32 %v2188, %v2332
  %v2344 = vmul.f32 %v2189, %v2332
  %v2345 = vmul.f32 %v2192, %v2337
  %v2346 = vmul.f32 %v2193, %v2337
  %v2347 = vadd.f32 %v2182, %v2183
  %2348 = vadd.xlane.f32.xlu0 %v2347
  %v2349 = vpop.xlane.xlu0 %2348
  %v2350 = vadd.f32 %v2186, %v2187
  %2351 = vadd.xlane.f32.xlu0 %v2350
  %v2352 = vpop.xlane.xlu0 %2351
  %v2353 = vadd.f32 %v2190, %v2191
  %2354 = vadd.xlane.f32.xlu0 %v2353
  %v2355 = vpop.xlane.xlu0 %2354
  %v2356 = vadd.f32 %v2194, %v2195
  %2357 = vadd.xlane.f32.xlu0 %v2356
  %v2358 = vpop.xlane.xlu0 %2357
  %v2359 = vmul.f32 %v2349, 0.00390625
  %v2360 = vmul.f32 %v2352, 0.00390625
  %v2361 = vmul.f32 %v2355, 0.00390625
  %v2362 = vmul.f32 %v2358, 0.00390625
  %v2363 = vmul.f32 %v2359, %v2212
  %v2364 = vmul.f32 %v2360, %v2213
  %v2365 = vmul.f32 %v2361, %v2214
  %v2366 = vmul.f32 %v2362, %v2215
  %v2367 = vsel %vm2220, %v2363, 0.0
  %v2368 = vsel %vm2220, %v2364, 0.0
  %v2369 = vadd.f32 %v2367, %v2368
  %v2370 = vsel %vm2220, %v2365, 0.0
  %v2371 = vadd.f32 %v2369, %v2370
  %v2372 = vsel %vm2220, %v2366, 0.0
  %v2373 = vadd.f32 %v2371, %v2372
  %v2374 = vrot.slane %v2373, 4
  %v2375 = vadd.f32 %v2373, %v2374
  %v2376 = vrot.slane %v2375, 2
  %v2377 = vadd.f32 %v2375, %v2376
  %v2378 = vrot.slane %v2377, 1
  %v2379 = vadd.f32 %v2377, %v2378
  %v2380 = vmul.f32 %v2379, 0.5
  %v2381 = vmul.f32 %v2379, 0.044715
  %v2382 = vmul.f32 %v2381, %v2379
  %v2383 = vmul.f32 %v2382, %v2379
  %v2384 = vadd.f32 %v2379, %v2383
  %v2385 = vmul.f32 %v2384, 0.7978846
  %v2386 = vtanh.pop %v2385
  %v2387 = vadd.f32 %v2386, 1.0
  %v2388 = vmul.f32 %v2380, %v2387
  %v2389 = vmul.f32 %v2359, %v2244
  %v2390 = vmul.f32 %v2360, %v2245
  %v2391 = vmul.f32 %v2361, %v2246
  %v2392 = vmul.f32 %v2362, %v2247
  %v2393 = vsel %vm2220, %v2389, 0.0
  %v2394 = vsel %vm2220, %v2390, 0.0
  %v2395 = vadd.f32 %v2393, %v2394
  %v2396 = vsel %vm2220, %v2391, 0.0
  %v2397 = vadd.f32 %v2395, %v2396
  %v2398 = vsel %vm2220, %v2392, 0.0
  %v2399 = vadd.f32 %v2397, %v2398
  %v2400 = vrot.slane %v2399, 4
  %v2401 = vadd.f32 %v2399, %v2400
  %v2402 = vrot.slane %v2401, 2
  %v2403 = vadd.f32 %v2401, %v2402
  %v2404 = vrot.slane %v2403, 1
  %v2405 = vadd.f32 %v2403, %v2404
  %v2406 = vmul.f32 %v2405, 0.5
  %v2407 = vmul.f32 %v2405, 0.044715
  %v2408 = vmul.f32 %v2407, %v2405
  %v2409 = vmul.f32 %v2408, %v2405
  %v2410 = vadd.f32 %v2405, %v2409
  %v2411 = vmul.f32 %v2410, 0.7978846
  %v2412 = vtanh.pop %v2411
  %v2413 = vadd.f32 %v2412, 1.0
  %v2414 = vmul.f32 %v2406, %v2413
  %v2415 = vmul.f32 %v2388, %v2274
  %v2416 = vmul.f32 %v2388, %v2275
  %v2417 = vmul.f32 %v2388, %v2276
  %v2418 = vmul.f32 %v2388, %v2277
  %v2419 = vmul.f32 %v2414, %v2283
  %v2420 = vmul.f32 %v2414, %v2284
  %v2421 = vmul.f32 %v2414, %v2285
  %v2422 = vmul.f32 %v2414, %v2286
  %v2423 = vadd.f32 %v2415, %v2419
  %v2424 = vadd.f32 %v2416, %v2420
  %v2425 = vadd.f32 %v2417, %v2421
  %v2426 = vadd.f32 %v2418, %v2422
  %v2427 = vxor.u32 %v2423, 2147483648
  %v2428 = vxor.u32 %v2424, 2147483648
  %v2429 = vxor.u32 %v2425, 2147483648
  %v2430 = vxor.u32 %v2426, 2147483648
  %v2431 = vmul.f32 %v2427, 1.442695
  %v2432 = vpow.pop %v2431
  %v2433 = vmul.f32 %v2428, 1.442695
  %v2434 = vpow.pop %v2433
  %v2435 = vmul.f32 %v2429, 1.442695
  %v2436 = vpow.pop %v2435
  %v2437 = vmul.f32 %v2430, 1.442695
  %v2438 = vpow.pop %v2437
  %v2439 = vadd.f32 %v2432, 1.0
  %v2440 = vadd.f32 %v2434, 1.0
  %v2441 = vadd.f32 %v2436, 1.0
  %v2442 = vadd.f32 %v2438, 1.0
  %v2443 = vrcp.pop %v2439
  %v2444 = vmul.f32 1.0, %v2443
  %v2445 = vrcp.pop %v2440
  %v2446 = vmul.f32 1.0, %v2445
  %v2447 = vrcp.pop %v2441
  %v2448 = vmul.f32 1.0, %v2447
  %v2449 = vrcp.pop %v2442
  %v2450 = vmul.f32 1.0, %v2449
  %2452 = vset.pattern.permute.xlu0 0
  %2453 = vperm.xlu0 %2452, %v2444
  %v2454 = vpop.permute.xlu0 %2453
  %2457 = vset.pattern.permute.xlu0 0
  %2458 = vperm.xlu0 %2457, %v2446
  %v2459 = vpop.permute.xlu0 %2458
  %2462 = vset.pattern.permute.xlu0 0
  %2463 = vperm.xlu0 %2462, %v2448
  %v2464 = vpop.permute.xlu0 %2463
  %2467 = vset.pattern.permute.xlu0 0
  %2468 = vperm.xlu0 %2467, %v2450
  %v2469 = vpop.permute.xlu0 %2468
  %v2471 = vmul.f32 %v2182, %v2454
  %v2472 = vmul.f32 %v2183, %v2454
  %v2473 = vmul.f32 %v2186, %v2459
  %v2474 = vmul.f32 %v2187, %v2459
  %v2475 = vmul.f32 %v2190, %v2464
  %v2476 = vmul.f32 %v2191, %v2464
  %v2477 = vmul.f32 %v2194, %v2469
  %v2478 = vmul.f32 %v2195, %v2469
  %v2479 = vld [vmem:[%s12] sm:$0xff]
  %v2480 = vld [vmem:[%s12 + $0x8] sm:$0xff]
  %v2481 = vld [vmem:[%s12 + $0x10] sm:$0xff]
  %v2482 = vld [vmem:[%s12 + $0x18] sm:$0xff]
  %2484 = vset.pattern.permute.xlu0 0
  %2485 = vperm.xlu0 %2484, %v2479
  %v2486 = vpop.permute.xlu0 %2485
  %2489 = vset.pattern.permute.xlu0 0
  %2490 = vperm.xlu0 %2489, %v2480
  %v2491 = vpop.permute.xlu0 %2490
  %2494 = vset.pattern.permute.xlu0 0
  %2495 = vperm.xlu0 %2494, %v2481
  %v2496 = vpop.permute.xlu0 %2495
  %2499 = vset.pattern.permute.xlu0 0
  %2500 = vperm.xlu0 %2499, %v2482
  %v2501 = vpop.permute.xlu0 %2500
  %v2503 = vmul.f32 %v2339, %v2486
  %v2504 = vmul.f32 %v2340, %v2486
  %v2505 = vmul.f32 %v2471, %v2486
  %v2506 = vmul.f32 %v2472, %v2486
  %v2507 = vmul.f32 %v2341, %v2491
  %v2508 = vmul.f32 %v2342, %v2491
  %v2509 = vmul.f32 %v2473, %v2491
  %v2510 = vmul.f32 %v2474, %v2491
  %v2511 = vmul.f32 %v2343, %v2496
  %v2512 = vmul.f32 %v2344, %v2496
  %v2513 = vmul.f32 %v2475, %v2496
  %v2514 = vmul.f32 %v2476, %v2496
  %v2515 = vmul.f32 %v2345, %v2501
  %v2516 = vmul.f32 %v2346, %v2501
  %v2517 = vmul.f32 %v2477, %v2501
  %v2518 = vmul.f32 %v2478, %v2501
  %v2519 = vadd.f32 %v2503, %v2507
  %v2520 = vadd.f32 %v2519, %v2511
  %v2521 = vadd.f32 %v2520, %v2515
  %v2522 = vrot.slane %v2521, 4
  %v2523 = vadd.f32 %v2521, %v2522
  %v2524 = vrot.slane %v2523, 2
  %v2525 = vadd.f32 %v2523, %v2524
  %v2526 = vrot.slane %v2525, 1
  %v2527 = vadd.f32 %v2525, %v2526
  %v2528 = vadd.f32 %v2504, %v2508
  %v2529 = vadd.f32 %v2528, %v2512
  %v2530 = vadd.f32 %v2529, %v2516
  %v2531 = vrot.slane %v2530, 4
  %v2532 = vadd.f32 %v2530, %v2531
  %v2533 = vrot.slane %v2532, 2
  %v2534 = vadd.f32 %v2532, %v2533
  %v2535 = vrot.slane %v2534, 1
  %v2536 = vadd.f32 %v2534, %v2535
  %v2537 = vadd.f32 %v2505, %v2509
  %v2538 = vadd.f32 %v2537, %v2513
  %v2539 = vadd.f32 %v2538, %v2517
  %v2540 = vrot.slane %v2539, 4
  %v2541 = vadd.f32 %v2539, %v2540
  %v2542 = vrot.slane %v2541, 2
  %v2543 = vadd.f32 %v2541, %v2542
  %v2544 = vrot.slane %v2543, 1
  %v2545 = vadd.f32 %v2543, %v2544
  %v2546 = vadd.f32 %v2506, %v2510
  %v2547 = vadd.f32 %v2546, %v2514
  %v2548 = vadd.f32 %v2547, %v2518
  %v2549 = vrot.slane %v2548, 4
  %v2550 = vadd.f32 %v2548, %v2549
  %v2551 = vrot.slane %v2550, 2
  %v2552 = vadd.f32 %v2550, %v2551
  %v2553 = vrot.slane %v2552, 1
  %v2554 = vadd.f32 %v2552, %v2553
  %s2555 = sld [smem:[#allocation2]]
  %v2556 = vstv %s2555
  %v2557 = vadd.f32 %v2527, %v2556
  %v2558 = vadd.f32 %v2536, %v2556
  %v2559 = vadd.f32 %v2545, %v2556
  %v2560 = vadd.f32 %v2554, %v2556
  %v2561 = vmax.f32 %v2557, %v2559
  %v2562 = vmax.f32 %v2558, %v2560
  %v2563 = vsub.f32 %v2557, %v2561
  %v2564 = vsub.f32 %v2558, %v2562
  %v2565 = vmul.f32 %v2563, 1.442695
  %v2566 = vpow.pop %v2565
  %v2567 = vmul.f32 %v2564, 1.442695
  %v2568 = vpow.pop %v2567
  %v2569 = vsub.f32 %v2559, %v2561
  %v2570 = vsub.f32 %v2560, %v2562
  %v2571 = vmul.f32 %v2569, 1.442695
  %v2572 = vpow.pop %v2571
  %v2573 = vmul.f32 %v2570, 1.442695
  %v2574 = vpow.pop %v2573
  %v2575 = vadd.f32 %v2566, %v2572
  %v2576 = vadd.f32 %v2568, %v2574
  %v2577 = vrcp.pop %v2575
  %v2578 = vmul.f32 %v2566, %v2577
  %v2579 = vrcp.pop %v2576
  %v2580 = vmul.f32 %v2568, %v2579
  %v2581 = vmul.f32 %v2572, %v2577
  %v2582 = vmul.f32 %v2574, %v2579
  %v2583 = vadd.f32 %v2339, %v2341
  %v2584 = vadd.f32 %v2583, %v2343
  %v2585 = vadd.f32 %v2584, %v2345
  %v2586 = vrot.slane %v2585, 4
  %v2587 = vadd.f32 %v2585, %v2586
  %v2588 = vrot.slane %v2587, 2
  %v2589 = vadd.f32 %v2587, %v2588
  %v2590 = vrot.slane %v2589, 1
  %v2591 = vadd.f32 %v2589, %v2590
  %v2592 = vadd.f32 %v2340, %v2342
  %v2593 = vadd.f32 %v2592, %v2344
  %v2594 = vadd.f32 %v2593, %v2346
  %v2595 = vrot.slane %v2594, 4
  %v2596 = vadd.f32 %v2594, %v2595
  %v2597 = vrot.slane %v2596, 2
  %v2598 = vadd.f32 %v2596, %v2597
  %v2599 = vrot.slane %v2598, 1
  %v2600 = vadd.f32 %v2598, %v2599
  %v2601 = vadd.f32 %v2471, %v2473
  %v2602 = vadd.f32 %v2601, %v2475
  %v2603 = vadd.f32 %v2602, %v2477
  %v2604 = vrot.slane %v2603, 4
  %v2605 = vadd.f32 %v2603, %v2604
  %v2606 = vrot.slane %v2605, 2
  %v2607 = vadd.f32 %v2605, %v2606
  %v2608 = vrot.slane %v2607, 1
  %v2609 = vadd.f32 %v2607, %v2608
  %v2610 = vadd.f32 %v2472, %v2474
  %v2611 = vadd.f32 %v2610, %v2476
  %v2612 = vadd.f32 %v2611, %v2478
  %v2613 = vrot.slane %v2612, 4
  %v2614 = vadd.f32 %v2612, %v2613
  %v2615 = vrot.slane %v2614, 2
  %v2616 = vadd.f32 %v2614, %v2615
  %v2617 = vrot.slane %v2616, 1
  %v2618 = vadd.f32 %v2616, %v2617
  %v2619 = vmul.f32 %v2591, 0.03125
  %v2620 = vmul.f32 %v2600, 0.03125
  %v2621 = vmul.f32 %v2609, 0.03125
  %v2622 = vmul.f32 %v2618, 0.03125
  %v2623 = vmax.f32 %v2339, %v2341
  %v2624 = vmax.f32 %v2623, %v2343
  %v2625 = vmax.f32 %v2624, %v2345
  %v2626 = vrot.slane %v2625, 4
  %v2627 = vmax.f32 %v2625, %v2626
  %v2628 = vrot.slane %v2627, 2
  %v2629 = vmax.f32 %v2627, %v2628
  %v2630 = vrot.slane %v2629, 1
  %v2631 = vmax.f32 %v2629, %v2630
  %v2632 = vmax.f32 %v2340, %v2342
  %v2633 = vmax.f32 %v2632, %v2344
  %v2634 = vmax.f32 %v2633, %v2346
  %v2635 = vrot.slane %v2634, 4
  %v2636 = vmax.f32 %v2634, %v2635
  %v2637 = vrot.slane %v2636, 2
  %v2638 = vmax.f32 %v2636, %v2637
  %v2639 = vrot.slane %v2638, 1
  %v2640 = vmax.f32 %v2638, %v2639
  %v2641 = vmax.f32 %v2471, %v2473
  %v2642 = vmax.f32 %v2641, %v2475
  %v2643 = vmax.f32 %v2642, %v2477
  %v2644 = vrot.slane %v2643, 4
  %v2645 = vmax.f32 %v2643, %v2644
  %v2646 = vrot.slane %v2645, 2
  %v2647 = vmax.f32 %v2645, %v2646
  %v2648 = vrot.slane %v2647, 1
  %v2649 = vmax.f32 %v2647, %v2648
  %v2650 = vmax.f32 %v2472, %v2474
  %v2651 = vmax.f32 %v2650, %v2476
  %v2652 = vmax.f32 %v2651, %v2478
  %v2653 = vrot.slane %v2652, 4
  %v2654 = vmax.f32 %v2652, %v2653
  %v2655 = vrot.slane %v2654, 2
  %v2656 = vmax.f32 %v2654, %v2655
  %v2657 = vrot.slane %v2656, 1
  %v2658 = vmax.f32 %v2656, %v2657
  %v2659 = vld [vmem:[%s14] sm:$0xff]
  %v2660 = vld [vmem:[%s14 + $0x8] sm:$0xff]
  %v2661 = vld [vmem:[%s14 + $0x10] sm:$0xff]
  %v2662 = vld [vmem:[%s14 + $0x18] sm:$0xff]
  %v2663 = vld [vmem:[%s15] sm:$0xff]
  %v2664 = vld [vmem:[%s15 + $0x8] sm:$0xff]
  %v2665 = vld [vmem:[%s15 + $0x10] sm:$0xff]
  %v2666 = vld [vmem:[%s15 + $0x18] sm:$0xff]
  %v2667 = vld [vmem:[%s15 + $0x20] sm:$0xff]
  %v2668 = vld [vmem:[%s15 + $0x28] sm:$0xff]
  %v2669 = vld [vmem:[%s15 + $0x30] sm:$0xff]
  %v2670 = vld [vmem:[%s15 + $0x38] sm:$0xff]
  %v2671 = vld [vmem:[%s15 + $0x40] sm:$0xff]
  %v2672 = vld [vmem:[%s15 + $0x48] sm:$0xff]
  %v2673 = vld [vmem:[%s15 + $0x50] sm:$0xff]
  %v2674 = vld [vmem:[%s15 + $0x58] sm:$0xff]
  %v2675 = vld [vmem:[%s15 + $0x60] sm:$0xff]
  %v2676 = vld [vmem:[%s15 + $0x68] sm:$0xff]
  %v2677 = vld [vmem:[%s15 + $0x70] sm:$0xff]
  %v2678 = vld [vmem:[%s15 + $0x78] sm:$0xff]
  %v2679 = vld [vmem:[%s15 + $0x80] sm:$0xff]
  %v2680 = vld [vmem:[%s15 + $0x88] sm:$0xff]
  %v2681 = vld [vmem:[%s15 + $0x90] sm:$0xff]
  %v2682 = vld [vmem:[%s15 + $0x98] sm:$0xff]
  %v2683 = vld [vmem:[%s15 + $0xa0] sm:$0xff]
  %v2684 = vld [vmem:[%s15 + $0xa8] sm:$0xff]
  %v2685 = vld [vmem:[%s15 + $0xb0] sm:$0xff]
  %v2686 = vld [vmem:[%s15 + $0xb8] sm:$0xff]
  %v2687 = vld [vmem:[%s15 + $0xc0] sm:$0xff]
  %v2688 = vld [vmem:[%s15 + $0xc8] sm:$0xff]
  %v2689 = vld [vmem:[%s15 + $0xd0] sm:$0xff]
  %v2690 = vld [vmem:[%s15 + $0xd8] sm:$0xff]
  %v2691 = vld [vmem:[%s15 + $0xe0] sm:$0xff]
  %v2692 = vld [vmem:[%s15 + $0xe8] sm:$0xff]
  %v2693 = vld [vmem:[%s15 + $0xf0] sm:$0xff]
  %v2694 = vld [vmem:[%s15 + $0xf8] sm:$0xff]
  %v2695 = vld [vmem:[%s16] sm:$0xff]
  %v2696 = vld [vmem:[%s16 + $0x8] sm:$0xff]
  %v2697 = vld [vmem:[%s16 + $0x10] sm:$0xff]
  %v2698 = vld [vmem:[%s16 + $0x18] sm:$0xff]
  %v2699 = vmul.f32 %v2659, %v2619
  %v2700 = vmul.f32 %v2660, %v2620
  %v2701 = vmul.f32 %v2661, %v2619
  %v2702 = vmul.f32 %v2662, %v2620
  %2703 = vmatprep.subr.mxu0 0.0
  %2704 = vmatpush1.msra.mxu0 %v2678
  %2705 = vmatprep.subr.mxu0 0.0
  %2706 = vmatpush1.msra.mxu0 %v2677
  %2707 = vmatprep.subr.mxu0 0.0
  %2708 = vmatpush1.msra.mxu0 %v2676
  %2709 = vmatprep.subr.mxu0 0.0
  %2710 = vmatpush1.msra.mxu0 %v2675
  %2711 = vmatprep.subr.mxu0 0.0
  %2712 = vmatpush1.msra.mxu0 %v2674
  %2713 = vmatprep.subr.mxu0 0.0
  %2714 = vmatpush1.msra.mxu0 %v2673
  %2715 = vmatprep.subr.mxu0 0.0
  %2716 = vmatpush1.msra.mxu0 %v2672
  %2717 = vmatprep.subr.mxu0 0.0
  %2718 = vmatpush1.msra.mxu0 %v2671
  %2719 = vmatprep.subr.mxu0 0.0
  %2720 = vmatpush1.msra.mxu0 %v2670
  %2721 = vmatprep.subr.mxu0 0.0
  %2722 = vmatpush1.msra.mxu0 %v2669
  %2723 = vmatprep.subr.mxu0 0.0
  %2724 = vmatpush1.msra.mxu0 %v2668
  %2725 = vmatprep.subr.mxu0 0.0
  %2726 = vmatpush1.msra.mxu0 %v2667
  %2727 = vmatprep.subr.mxu0 0.0
  %2728 = vmatpush1.msra.mxu0 %v2666
  %2729 = vmatprep.subr.mxu0 0.0
  %2730 = vmatpush1.msra.mxu0 %v2665
  %2731 = vmatprep.subr.mxu0 0.0
  %2732 = vmatpush1.msra.mxu0 %v2664
  %2733 = vmatprep.subr.mxu0 0.0
  %2734 = vmatpush1.msra.mxu0 %v2663
  %2735 = vmatprep.subr.mxu0 0.0
  %2736 = vmatpush2.msra.mxu0 %v2694
  %2737 = vmatprep.subr.mxu0 0.0
  %2738 = vmatpush2.msra.mxu0 %v2693
  %2739 = vmatprep.subr.mxu0 0.0
  %2740 = vmatpush2.msra.mxu0 %v2692
  %2741 = vmatprep.subr.mxu0 0.0
  %2742 = vmatpush2.msra.mxu0 %v2691
  %2743 = vmatprep.subr.mxu0 0.0
  %2744 = vmatpush2.msra.mxu0 %v2690
  %2745 = vmatprep.subr.mxu0 0.0
  %2746 = vmatpush2.msra.mxu0 %v2689
  %2747 = vmatprep.subr.mxu0 0.0
  %2748 = vmatpush2.msra.mxu0 %v2688
  %2749 = vmatprep.subr.mxu0 0.0
  %2750 = vmatpush2.msra.mxu0 %v2687
  %2751 = vmatprep.subr.mxu0 0.0
  %2752 = vmatpush2.msra.mxu0 %v2686
  %2753 = vmatprep.subr.mxu0 0.0
  %2754 = vmatpush2.msra.mxu0 %v2685
  %2755 = vmatprep.subr.mxu0 0.0
  %2756 = vmatpush2.msra.mxu0 %v2684
  %2757 = vmatprep.subr.mxu0 0.0
  %2758 = vmatpush2.msra.mxu0 %v2683
  %2759 = vmatprep.subr.mxu0 0.0
  %2760 = vmatpush2.msra.mxu0 %v2682
  %2761 = vmatprep.subr.mxu0 0.0
  %2762 = vmatpush2.msra.mxu0 %v2681
  %2763 = vmatprep.subr.mxu0 0.0
  %2764 = vmatpush2.msra.mxu0 %v2680
  %2765 = vmatprep.subr.mxu0 0.0
  %2766 = vmatpush2.msra.mxu0 %v2679
  %2767 = vmatprep.mubr.f32.mxu0 %v2700
  %2768 = vmatmul.mubr.f32.gmra.mxu0 %v2699
  %v2769 = vpop.f32.mrf.mxu0
  %v2770 = vadd.f32 0.0, %v2769
  %v2771 = vpop.f32.mrf.mxu0
  %2772 = vmatprep.mubr.f32.mxu0 %v2702
  %2773 = vmatmul.mubr.f32.gmra.mxu0 %v2701
  %v2774 = vpop.f32.mrf.mxu0
  %v2775 = vadd.f32 0.0, %v2774
  %v2776 = vpop.f32.mrf.mxu0
  %2777 = vdwg.mxu0
  %v2778 = vmul.f32 %v2659, %v2631
  %v2779 = vmul.f32 %v2660, %v2640
  %v2780 = vmul.f32 %v2661, %v2631
  %v2781 = vmul.f32 %v2662, %v2640
  %2782 = vmatprep.subr.mxu0 0.0
  %2783 = vmatpush1.msra.mxu0 %v2678
  %2784 = vmatprep.subr.mxu0 0.0
  %2785 = vmatpush1.msra.mxu0 %v2677
  %2786 = vmatprep.subr.mxu0 0.0
  %2787 = vmatpush1.msra.mxu0 %v2676
  %2788 = vmatprep.subr.mxu0 0.0
  %2789 = vmatpush1.msra.mxu0 %v2675
  %2790 = vmatprep.subr.mxu0 0.0
  %2791 = vmatpush1.msra.mxu0 %v2674
  %2792 = vmatprep.subr.mxu0 0.0
  %2793 = vmatpush1.msra.mxu0 %v2673
  %2794 = vmatprep.subr.mxu0 0.0
  %2795 = vmatpush1.msra.mxu0 %v2672
  %2796 = vmatprep.subr.mxu0 0.0
  %2797 = vmatpush1.msra.mxu0 %v2671
  %2798 = vmatprep.subr.mxu0 0.0
  %2799 = vmatpush1.msra.mxu0 %v2670
  %2800 = vmatprep.subr.mxu0 0.0
  %2801 = vmatpush1.msra.mxu0 %v2669
  %2802 = vmatprep.subr.mxu0 0.0
  %2803 = vmatpush1.msra.mxu0 %v2668
  %2804 = vmatprep.subr.mxu0 0.0
  %2805 = vmatpush1.msra.mxu0 %v2667
  %2806 = vmatprep.subr.mxu0 0.0
  %2807 = vmatpush1.msra.mxu0 %v2666
  %2808 = vmatprep.subr.mxu0 0.0
  %2809 = vmatpush1.msra.mxu0 %v2665
  %2810 = vmatprep.subr.mxu0 0.0
  %2811 = vmatpush1.msra.mxu0 %v2664
  %2812 = vmatprep.subr.mxu0 0.0
  %2813 = vmatpush1.msra.mxu0 %v2663
  %2814 = vmatprep.subr.mxu0 0.0
  %2815 = vmatpush2.msra.mxu0 %v2694
  %2816 = vmatprep.subr.mxu0 0.0
  %2817 = vmatpush2.msra.mxu0 %v2693
  %2818 = vmatprep.subr.mxu0 0.0
  %2819 = vmatpush2.msra.mxu0 %v2692
  %2820 = vmatprep.subr.mxu0 0.0
  %2821 = vmatpush2.msra.mxu0 %v2691
  %2822 = vmatprep.subr.mxu0 0.0
  %2823 = vmatpush2.msra.mxu0 %v2690
  %2824 = vmatprep.subr.mxu0 0.0
  %2825 = vmatpush2.msra.mxu0 %v2689
  %2826 = vmatprep.subr.mxu0 0.0
  %2827 = vmatpush2.msra.mxu0 %v2688
  %2828 = vmatprep.subr.mxu0 0.0
  %2829 = vmatpush2.msra.mxu0 %v2687
  %2830 = vmatprep.subr.mxu0 0.0
  %2831 = vmatpush2.msra.mxu0 %v2686
  %2832 = vmatprep.subr.mxu0 0.0
  %2833 = vmatpush2.msra.mxu0 %v2685
  %2834 = vmatprep.subr.mxu0 0.0
  %2835 = vmatpush2.msra.mxu0 %v2684
  %2836 = vmatprep.subr.mxu0 0.0
  %2837 = vmatpush2.msra.mxu0 %v2683
  %2838 = vmatprep.subr.mxu0 0.0
  %2839 = vmatpush2.msra.mxu0 %v2682
  %2840 = vmatprep.subr.mxu0 0.0
  %2841 = vmatpush2.msra.mxu0 %v2681
  %2842 = vmatprep.subr.mxu0 0.0
  %2843 = vmatpush2.msra.mxu0 %v2680
  %2844 = vmatprep.subr.mxu0 0.0
  %2845 = vmatpush2.msra.mxu0 %v2679
  %2846 = vmatprep.mubr.f32.mxu0 %v2779
  %2847 = vmatmul.mubr.f32.gmra.mxu0 %v2778
  %v2848 = vpop.f32.mrf.mxu0
  %v2849 = vadd.f32 0.0, %v2848
  %v2850 = vpop.f32.mrf.mxu0
  %2851 = vmatprep.mubr.f32.mxu0 %v2781
  %2852 = vmatmul.mubr.f32.gmra.mxu0 %v2780
  %v2853 = vpop.f32.mrf.mxu0
  %v2854 = vadd.f32 0.0, %v2853
  %v2855 = vpop.f32.mrf.mxu0
  %2856 = vdwg.mxu0
  %v2857 = vmul.f32 %v2659, %v2578
  %v2858 = vmul.f32 %v2660, %v2580
  %v2859 = vmul.f32 %v2661, %v2578
  %v2860 = vmul.f32 %v2662, %v2580
  %2861 = vmatprep.subr.mxu0 0.0
  %2862 = vmatpush1.msra.mxu0 %v2678
  %2863 = vmatprep.subr.mxu0 0.0
  %2864 = vmatpush1.msra.mxu0 %v2677
  %2865 = vmatprep.subr.mxu0 0.0
  %2866 = vmatpush1.msra.mxu0 %v2676
  %2867 = vmatprep.subr.mxu0 0.0
  %2868 = vmatpush1.msra.mxu0 %v2675
  %2869 = vmatprep.subr.mxu0 0.0
  %2870 = vmatpush1.msra.mxu0 %v2674
  %2871 = vmatprep.subr.mxu0 0.0
  %2872 = vmatpush1.msra.mxu0 %v2673
  %2873 = vmatprep.subr.mxu0 0.0
  %2874 = vmatpush1.msra.mxu0 %v2672
  %2875 = vmatprep.subr.mxu0 0.0
  %2876 = vmatpush1.msra.mxu0 %v2671
  %2877 = vmatprep.subr.mxu0 0.0
  %2878 = vmatpush1.msra.mxu0 %v2670
  %2879 = vmatprep.subr.mxu0 0.0
  %2880 = vmatpush1.msra.mxu0 %v2669
  %2881 = vmatprep.subr.mxu0 0.0
  %2882 = vmatpush1.msra.mxu0 %v2668
  %2883 = vmatprep.subr.mxu0 0.0
  %2884 = vmatpush1.msra.mxu0 %v2667
  %2885 = vmatprep.subr.mxu0 0.0
  %2886 = vmatpush1.msra.mxu0 %v2666
  %2887 = vmatprep.subr.mxu0 0.0
  %2888 = vmatpush1.msra.mxu0 %v2665
  %2889 = vmatprep.subr.mxu0 0.0
  %2890 = vmatpush1.msra.mxu0 %v2664
  %2891 = vmatprep.subr.mxu0 0.0
  %2892 = vmatpush1.msra.mxu0 %v2663
  %2893 = vmatprep.subr.mxu0 0.0
  %2894 = vmatpush2.msra.mxu0 %v2694
  %2895 = vmatprep.subr.mxu0 0.0
  %2896 = vmatpush2.msra.mxu0 %v2693
  %2897 = vmatprep.subr.mxu0 0.0
  %2898 = vmatpush2.msra.mxu0 %v2692
  %2899 = vmatprep.subr.mxu0 0.0
  %2900 = vmatpush2.msra.mxu0 %v2691
  %2901 = vmatprep.subr.mxu0 0.0
  %2902 = vmatpush2.msra.mxu0 %v2690
  %2903 = vmatprep.subr.mxu0 0.0
  %2904 = vmatpush2.msra.mxu0 %v2689
  %2905 = vmatprep.subr.mxu0 0.0
  %2906 = vmatpush2.msra.mxu0 %v2688
  %2907 = vmatprep.subr.mxu0 0.0
  %2908 = vmatpush2.msra.mxu0 %v2687
  %2909 = vmatprep.subr.mxu0 0.0
  %2910 = vmatpush2.msra.mxu0 %v2686
  %2911 = vmatprep.subr.mxu0 0.0
  %2912 = vmatpush2.msra.mxu0 %v2685
  %2913 = vmatprep.subr.mxu0 0.0
  %2914 = vmatpush2.msra.mxu0 %v2684
  %2915 = vmatprep.subr.mxu0 0.0
  %2916 = vmatpush2.msra.mxu0 %v2683
  %2917 = vmatprep.subr.mxu0 0.0
  %2918 = vmatpush2.msra.mxu0 %v2682
  %2919 = vmatprep.subr.mxu0 0.0
  %2920 = vmatpush2.msra.mxu0 %v2681
  %2921 = vmatprep.subr.mxu0 0.0
  %2922 = vmatpush2.msra.mxu0 %v2680
  %2923 = vmatprep.subr.mxu0 0.0
  %2924 = vmatpush2.msra.mxu0 %v2679
  %2925 = vmatprep.mubr.f32.mxu0 %v2858
  %2926 = vmatmul.mubr.f32.gmra.mxu0 %v2857
  %v2927 = vpop.f32.mrf.mxu0
  %v2928 = vadd.f32 0.0, %v2927
  %v2929 = vpop.f32.mrf.mxu0
  %2930 = vmatprep.mubr.f32.mxu0 %v2860
  %2931 = vmatmul.mubr.f32.gmra.mxu0 %v2859
  %v2932 = vpop.f32.mrf.mxu0
  %v2933 = vadd.f32 0.0, %v2932
  %v2934 = vpop.f32.mrf.mxu0
  %2935 = vdwg.mxu0
  %vm2936 = vcmask 130048
  %v2938 = vsel %vm2936, %v2770, 0
  %v2941 = vsel %vm2936, %v2775, 0
  %v2944 = vsel %vm2936, %v2849, 0
  %v2947 = vsel %vm2936, %v2854, 0
  %2949 = vmatprep.subr.mxu0 0.0
  %2950 = vmatpush1.msra.mxu0 0.0
  %2951 = vmatprep.subr.mxu0 0.0
  %2952 = vmatpush1.msra.mxu0 0.0
  %2953 = vmatprep.subr.mxu0 0.0
  %2954 = vmatpush1.msra.mxu0 0.0
  %2955 = vmatprep.subr.mxu0 0.0
  %2956 = vmatpush1.msra.mxu0 0.0
  %2957 = vmatprep.subr.mxu0 0.0
  %2958 = vmatpush1.msra.mxu0 0.0
  %2959 = vmatprep.subr.mxu0 0.0
  %2960 = vmatpush1.msra.mxu0 0.0
  %2961 = vmatprep.subr.mxu0 0.0
  %2962 = vmatpush1.msra.mxu0 0.0
  %2963 = vmatprep.subr.mxu0 0.0
  %2964 = vmatpush1.msra.mxu0 0.0
  %2965 = vmatprep.subr.mxu0 0.0
  %2966 = vmatpush1.msra.mxu0 0.0
  %2967 = vmatprep.subr.mxu0 0.0
  %2968 = vmatpush1.msra.mxu0 0.0
  %2969 = vmatprep.subr.mxu0 0.0
  %2970 = vmatpush1.msra.mxu0 0.0
  %2971 = vmatprep.subr.mxu0 0.0
  %2972 = vmatpush1.msra.mxu0 0.0
  %2973 = vmatprep.subr.mxu0 0.0
  %2974 = vmatpush1.msra.mxu0 0.0
  %2975 = vmatprep.subr.mxu0 0.0
  %2976 = vmatpush1.msra.mxu0 0.0
  %2977 = vmatprep.subr.mxu0 0.0
  %2978 = vmatpush1.msra.mxu0 %v2933
  %2979 = vmatprep.subr.mxu0 0.0
  %2980 = vmatpush1.msra.mxu0 %v2928
  %2981 = vmatprep.subr.mxu0 0.0
  %2982 = vmatpush2.msra.mxu0 0.0
  %2983 = vmatprep.subr.mxu0 0.0
  %2984 = vmatpush2.msra.mxu0 0.0
  %2985 = vmatprep.subr.mxu0 0.0
  %2986 = vmatpush2.msra.mxu0 0.0
  %2987 = vmatprep.subr.mxu0 0.0
  %2988 = vmatpush2.msra.mxu0 0.0
  %2989 = vmatprep.subr.mxu0 0.0
  %2990 = vmatpush2.msra.mxu0 0.0
  %2991 = vmatprep.subr.mxu0 0.0
  %2992 = vmatpush2.msra.mxu0 0.0
  %2993 = vmatprep.subr.mxu0 0.0
  %2994 = vmatpush2.msra.mxu0 0.0
  %2995 = vmatprep.subr.mxu0 0.0
  %2996 = vmatpush2.msra.mxu0 0.0
  %2997 = vmatprep.subr.mxu0 0.0
  %2998 = vmatpush2.msra.mxu0 0.0
  %2999 = vmatprep.subr.mxu0 0.0
  %3000 = vmatpush2.msra.mxu0 0.0
  %3001 = vmatprep.subr.mxu0 0.0
  %3002 = vmatpush2.msra.mxu0 0.0
  %3003 = vmatprep.subr.mxu0 0.0
  %3004 = vmatpush2.msra.mxu0 0.0
  %3005 = vmatprep.subr.mxu0 0.0
  %3006 = vmatpush2.msra.mxu0 0.0
  %3007 = vmatprep.subr.mxu0 0.0
  %3008 = vmatpush2.msra.mxu0 0.0
  %3009 = vmatprep.subr.mxu0 0.0
  %3010 = vmatpush2.msra.mxu0 0.0
  %3011 = vmatprep.subr.mxu0 0.0
  %3012 = vmatpush2.msra.mxu0 0.0
  %3013 = vmatprep.mubr.f32.mxu0 0.0
  %3014 = vmatmul.mubr.f32.gmra.mxu0 %v2938
  %v3015 = vpop.f32.mrf.mxu0
  %v3016 = vadd.f32 0.0, %v3015
  %v3017 = vpop.f32.mrf.mxu0
  %3018 = vmatprep.mubr.f32.mxu0 0.0
  %3019 = vmatmul.mubr.f32.gmra.mxu0 %v2941
  %v3020 = vpop.f32.mrf.mxu0
  %v3021 = vadd.f32 0.0, %v3020
  %v3022 = vpop.f32.mrf.mxu0
  %3023 = vmatprep.mubr.f32.mxu0 0.0
  %3024 = vmatmul.mubr.f32.gmra.mxu0 %v2944
  %v3025 = vpop.f32.mrf.mxu0
  %v3026 = vadd.f32 0.0, %v3025
  %v3027 = vpop.f32.mrf.mxu0
  %3028 = vmatprep.mubr.f32.mxu0 0.0
  %3029 = vmatmul.mubr.f32.gmra.mxu0 %v2947
  %v3030 = vpop.f32.mrf.mxu0
  %v3031 = vadd.f32 0.0, %v3030
  %v3032 = vpop.f32.mrf.mxu0
  %3033 = vdwg.mxu0
  %v3034 = vld [vmem:[%s17] sm:$0xff]
  %v3035 = vld [vmem:[%s17 + $0x8] sm:$0xff]
  %vm3036 = vcmask 261120
  %v3038 = vsel %vm3036, %v3034, 0
  %v3041 = vsel %vm3036, %v3035, 0
  %3043 = vmatprep.subr.mxu0 0.0
  %3044 = vmatpush1.msra.mxu0 0.0
  %3045 = vmatprep.subr.mxu0 0.0
  %3046 = vmatpush1.msra.mxu0 0.0
  %3047 = vmatprep.subr.mxu0 0.0
  %3048 = vmatpush1.msra.mxu0 0.0
  %3049 = vmatprep.subr.mxu0 0.0
  %3050 = vmatpush1.msra.mxu0 0.0
  %3051 = vmatprep.subr.mxu0 0.0
  %3052 = vmatpush1.msra.mxu0 0.0
  %3053 = vmatprep.subr.mxu0 0.0
  %3054 = vmatpush1.msra.mxu0 0.0
  %3055 = vmatprep.subr.mxu0 0.0
  %3056 = vmatpush1.msra.mxu0 0.0
  %3057 = vmatprep.subr.mxu0 0.0
  %3058 = vmatpush1.msra.mxu0 0.0
  %3059 = vmatprep.subr.mxu0 0.0
  %3060 = vmatpush1.msra.mxu0 0.0
  %3061 = vmatprep.subr.mxu0 0.0
  %3062 = vmatpush1.msra.mxu0 0.0
  %3063 = vmatprep.subr.mxu0 0.0
  %3064 = vmatpush1.msra.mxu0 0.0
  %3065 = vmatprep.subr.mxu0 0.0
  %3066 = vmatpush1.msra.mxu0 0.0
  %3067 = vmatprep.subr.mxu0 0.0
  %3068 = vmatpush1.msra.mxu0 %v3031
  %3069 = vmatprep.subr.mxu0 0.0
  %3070 = vmatpush1.msra.mxu0 %v3026
  %3071 = vmatprep.subr.mxu0 0.0
  %3072 = vmatpush1.msra.mxu0 %v3021
  %3073 = vmatprep.subr.mxu0 0.0
  %3074 = vmatpush1.msra.mxu0 %v3016
  %3075 = vmatprep.subr.mxu0 0.0
  %3076 = vmatpush2.msra.mxu0 0.0
  %3077 = vmatprep.subr.mxu0 0.0
  %3078 = vmatpush2.msra.mxu0 0.0
  %3079 = vmatprep.subr.mxu0 0.0
  %3080 = vmatpush2.msra.mxu0 0.0
  %3081 = vmatprep.subr.mxu0 0.0
  %3082 = vmatpush2.msra.mxu0 0.0
  %3083 = vmatprep.subr.mxu0 0.0
  %3084 = vmatpush2.msra.mxu0 0.0
  %3085 = vmatprep.subr.mxu0 0.0
  %3086 = vmatpush2.msra.mxu0 0.0
  %3087 = vmatprep.subr.mxu0 0.0
  %3088 = vmatpush2.msra.mxu0 0.0
  %3089 = vmatprep.subr.mxu0 0.0
  %3090 = vmatpush2.msra.mxu0 0.0
  %3091 = vmatprep.subr.mxu0 0.0
  %3092 = vmatpush2.msra.mxu0 0.0
  %3093 = vmatprep.subr.mxu0 0.0
  %3094 = vmatpush2.msra.mxu0 0.0
  %3095 = vmatprep.subr.mxu0 0.0
  %3096 = vmatpush2.msra.mxu0 0.0
  %3097 = vmatprep.subr.mxu0 0.0
  %3098 = vmatpush2.msra.mxu0 0.0
  %3099 = vmatprep.subr.mxu0 0.0
  %3100 = vmatpush2.msra.mxu0 0.0
  %3101 = vmatprep.subr.mxu0 0.0
  %3102 = vmatpush2.msra.mxu0 0.0
  %3103 = vmatprep.subr.mxu0 0.0
  %3104 = vmatpush2.msra.mxu0 0.0
  %3105 = vmatprep.subr.mxu0 0.0
  %3106 = vmatpush2.msra.mxu0 0.0
  %3107 = vmatprep.mubr.f32.mxu0 0.0
  %3108 = vmatmul.mubr.f32.gmra.mxu0 %v3038
  %v3109 = vpop.f32.mrf.mxu0
  %v3110 = vadd.f32 0.0, %v3109
  %v3111 = vpop.f32.mrf.mxu0
  %3112 = vmatprep.mubr.f32.mxu0 0.0
  %3113 = vmatmul.mubr.f32.gmra.mxu0 %v3041
  %v3114 = vpop.f32.mrf.mxu0
  %v3115 = vadd.f32 0.0, %v3114
  %v3116 = vpop.f32.mrf.mxu0
  %3117 = vdwg.mxu0
  %v3118 = vld [vmem:[%s18] sm:$0xff]
  %v3119 = vld [vmem:[%s18 + $0x8] sm:$0xff]
  %s3120 = scalar_lea.vmem %s17, 16
  %v3121 = vld [vmem:[%s3120] sm:$0xff]
  %v3122 = vld [vmem:[%s3120 + $0x8] sm:$0xff]
  %v3124 = vsel %vm3036, %v3121, 0
  %v3127 = vsel %vm3036, %v3122, 0
  %3129 = vmatprep.subr.mxu0 0.0
  %3130 = vmatpush1.msra.mxu0 0.0
  %3131 = vmatprep.subr.mxu0 0.0
  %3132 = vmatpush1.msra.mxu0 0.0
  %3133 = vmatprep.subr.mxu0 0.0
  %3134 = vmatpush1.msra.mxu0 0.0
  %3135 = vmatprep.subr.mxu0 0.0
  %3136 = vmatpush1.msra.mxu0 0.0
  %3137 = vmatprep.subr.mxu0 0.0
  %3138 = vmatpush1.msra.mxu0 0.0
  %3139 = vmatprep.subr.mxu0 0.0
  %3140 = vmatpush1.msra.mxu0 0.0
  %3141 = vmatprep.subr.mxu0 0.0
  %3142 = vmatpush1.msra.mxu0 0.0
  %3143 = vmatprep.subr.mxu0 0.0
  %3144 = vmatpush1.msra.mxu0 0.0
  %3145 = vmatprep.subr.mxu0 0.0
  %3146 = vmatpush1.msra.mxu0 0.0
  %3147 = vmatprep.subr.mxu0 0.0
  %3148 = vmatpush1.msra.mxu0 0.0
  %3149 = vmatprep.subr.mxu0 0.0
  %3150 = vmatpush1.msra.mxu0 0.0
  %3151 = vmatprep.subr.mxu0 0.0
  %3152 = vmatpush1.msra.mxu0 0.0
  %3153 = vmatprep.subr.mxu0 0.0
  %3154 = vmatpush1.msra.mxu0 %v3031
  %3155 = vmatprep.subr.mxu0 0.0
  %3156 = vmatpush1.msra.mxu0 %v3026
  %3157 = vmatprep.subr.mxu0 0.0
  %3158 = vmatpush1.msra.mxu0 %v3021
  %3159 = vmatprep.subr.mxu0 0.0
  %3160 = vmatpush1.msra.mxu0 %v3016
  %3161 = vmatprep.subr.mxu0 0.0
  %3162 = vmatpush2.msra.mxu0 0.0
  %3163 = vmatprep.subr.mxu0 0.0
  %3164 = vmatpush2.msra.mxu0 0.0
  %3165 = vmatprep.subr.mxu0 0.0
  %3166 = vmatpush2.msra.mxu0 0.0
  %3167 = vmatprep.subr.mxu0 0.0
  %3168 = vmatpush2.msra.mxu0 0.0
  %3169 = vmatprep.subr.mxu0 0.0
  %3170 = vmatpush2.msra.mxu0 0.0
  %3171 = vmatprep.subr.mxu0 0.0
  %3172 = vmatpush2.msra.mxu0 0.0
  %3173 = vmatprep.subr.mxu0 0.0
  %3174 = vmatpush2.msra.mxu0 0.0
  %3175 = vmatprep.subr.mxu0 0.0
  %3176 = vmatpush2.msra.mxu0 0.0
  %3177 = vmatprep.subr.mxu0 0.0
  %3178 = vmatpush2.msra.mxu0 0.0
  %3179 = vmatprep.subr.mxu0 0.0
  %3180 = vmatpush2.msra.mxu0 0.0
  %3181 = vmatprep.subr.mxu0 0.0
  %3182 = vmatpush2.msra.mxu0 0.0
  %3183 = vmatprep.subr.mxu0 0.0
  %3184 = vmatpush2.msra.mxu0 0.0
  %3185 = vmatprep.subr.mxu0 0.0
  %3186 = vmatpush2.msra.mxu0 0.0
  %3187 = vmatprep.subr.mxu0 0.0
  %3188 = vmatpush2.msra.mxu0 0.0
  %3189 = vmatprep.subr.mxu0 0.0
  %3190 = vmatpush2.msra.mxu0 0.0
  %3191 = vmatprep.subr.mxu0 0.0
  %3192 = vmatpush2.msra.mxu0 0.0
  %3193 = vmatprep.mubr.f32.mxu0 0.0
  %3194 = vmatmul.mubr.f32.gmra.mxu0 %v3124
  %v3195 = vpop.f32.mrf.mxu0
  %v3196 = vadd.f32 0.0, %v3195
  %v3197 = vpop.f32.mrf.mxu0
  %3198 = vmatprep.mubr.f32.mxu0 0.0
  %3199 = vmatmul.mubr.f32.gmra.mxu0 %v3127
  %v3200 = vpop.f32.mrf.mxu0
  %v3201 = vadd.f32 0.0, %v3200
  %v3202 = vpop.f32.mrf.mxu0
  %3203 = vdwg.mxu0
  %s3204 = scalar_lea.vmem %s18, 16
  %v3205 = vld [vmem:[%s3204] sm:$0xff]
  %v3206 = vld [vmem:[%s3204 + $0x8] sm:$0xff]
  %v3208 = vsel %vm2936, %v3196, 0
  %v3211 = vsel %vm2936, %v3201, 0
  %3213 = vmatprep.subr.mxu0 0.0
  %3214 = vmatpush1.msra.mxu0 0.0
  %3215 = vmatprep.subr.mxu0 0.0
  %3216 = vmatpush1.msra.mxu0 0.0
  %3217 = vmatprep.subr.mxu0 0.0
  %3218 = vmatpush1.msra.mxu0 0.0
  %3219 = vmatprep.subr.mxu0 0.0
  %3220 = vmatpush1.msra.mxu0 0.0
  %3221 = vmatprep.subr.mxu0 0.0
  %3222 = vmatpush1.msra.mxu0 0.0
  %3223 = vmatprep.subr.mxu0 0.0
  %3224 = vmatpush1.msra.mxu0 0.0
  %3225 = vmatprep.subr.mxu0 0.0
  %3226 = vmatpush1.msra.mxu0 0.0
  %3227 = vmatprep.subr.mxu0 0.0
  %3228 = vmatpush1.msra.mxu0 0.0
  %3229 = vmatprep.subr.mxu0 0.0
  %3230 = vmatpush1.msra.mxu0 0.0
  %3231 = vmatprep.subr.mxu0 0.0
  %3232 = vmatpush1.msra.mxu0 0.0
  %3233 = vmatprep.subr.mxu0 0.0
  %3234 = vmatpush1.msra.mxu0 0.0
  %3235 = vmatprep.subr.mxu0 0.0
  %3236 = vmatpush1.msra.mxu0 0.0
  %3237 = vmatprep.subr.mxu0 0.0
  %3238 = vmatpush1.msra.mxu0 0.0
  %3239 = vmatprep.subr.mxu0 0.0
  %3240 = vmatpush1.msra.mxu0 0.0
  %3241 = vmatprep.subr.mxu0 0.0
  %3242 = vmatpush1.msra.mxu0 %v3206
  %3243 = vmatprep.subr.mxu0 0.0
  %3244 = vmatpush1.msra.mxu0 %v3205
  %3245 = vmatprep.subr.mxu0 0.0
  %3246 = vmatpush2.msra.mxu0 0.0
  %3247 = vmatprep.subr.mxu0 0.0
  %3248 = vmatpush2.msra.mxu0 0.0
  %3249 = vmatprep.subr.mxu0 0.0
  %3250 = vmatpush2.msra.mxu0 0.0
  %3251 = vmatprep.subr.mxu0 0.0
  %3252 = vmatpush2.msra.mxu0 0.0
  %3253 = vmatprep.subr.mxu0 0.0
  %3254 = vmatpush2.msra.mxu0 0.0
  %3255 = vmatprep.subr.mxu0 0.0
  %3256 = vmatpush2.msra.mxu0 0.0
  %3257 = vmatprep.subr.mxu0 0.0
  %3258 = vmatpush2.msra.mxu0 0.0
  %3259 = vmatprep.subr.mxu0 0.0
  %3260 = vmatpush2.msra.mxu0 0.0
  %3261 = vmatprep.subr.mxu0 0.0
  %3262 = vmatpush2.msra.mxu0 0.0
  %3263 = vmatprep.subr.mxu0 0.0
  %3264 = vmatpush2.msra.mxu0 0.0
  %3265 = vmatprep.subr.mxu0 0.0
  %3266 = vmatpush2.msra.mxu0 0.0
  %3267 = vmatprep.subr.mxu0 0.0
  %3268 = vmatpush2.msra.mxu0 0.0
  %3269 = vmatprep.subr.mxu0 0.0
  %3270 = vmatpush2.msra.mxu0 0.0
  %3271 = vmatprep.subr.mxu0 0.0
  %3272 = vmatpush2.msra.mxu0 0.0
  %3273 = vmatprep.subr.mxu0 0.0
  %3274 = vmatpush2.msra.mxu0 0.0
  %3275 = vmatprep.subr.mxu0 0.0
  %3276 = vmatpush2.msra.mxu0 0.0
  %3277 = vmatprep.mubr.f32.mxu0 0.0
  %3278 = vmatmul.mubr.f32.gmra.mxu0 %v3208
  %v3279 = vpop.f32.mrf.mxu0
  %v3280 = vadd.f32 0.0, %v3279
  %v3281 = vpop.f32.mrf.mxu0
  %3282 = vmatprep.mubr.f32.mxu0 0.0
  %3283 = vmatmul.mubr.f32.gmra.mxu0 %v3211
  %v3284 = vpop.f32.mrf.mxu0
  %v3285 = vadd.f32 0.0, %v3284
  %v3286 = vpop.f32.mrf.mxu0
  %3287 = vdwg.mxu0
  %v3289 = vsel %vm2936, %v3110, 0
  %v3292 = vsel %vm2936, %v3115, 0
  %3294 = vmatprep.subr.mxu0 0.0
  %3295 = vmatpush1.msra.mxu0 0.0
  %3296 = vmatprep.subr.mxu0 0.0
  %3297 = vmatpush1.msra.mxu0 0.0
  %3298 = vmatprep.subr.mxu0 0.0
  %3299 = vmatpush1.msra.mxu0 0.0
  %3300 = vmatprep.subr.mxu0 0.0
  %3301 = vmatpush1.msra.mxu0 0.0
  %3302 = vmatprep.subr.mxu0 0.0
  %3303 = vmatpush1.msra.mxu0 0.0
  %3304 = vmatprep.subr.mxu0 0.0
  %3305 = vmatpush1.msra.mxu0 0.0
  %3306 = vmatprep.subr.mxu0 0.0
  %3307 = vmatpush1.msra.mxu0 0.0
  %3308 = vmatprep.subr.mxu0 0.0
  %3309 = vmatpush1.msra.mxu0 0.0
  %3310 = vmatprep.subr.mxu0 0.0
  %3311 = vmatpush1.msra.mxu0 0.0
  %3312 = vmatprep.subr.mxu0 0.0
  %3313 = vmatpush1.msra.mxu0 0.0
  %3314 = vmatprep.subr.mxu0 0.0
  %3315 = vmatpush1.msra.mxu0 0.0
  %3316 = vmatprep.subr.mxu0 0.0
  %3317 = vmatpush1.msra.mxu0 0.0
  %3318 = vmatprep.subr.mxu0 0.0
  %3319 = vmatpush1.msra.mxu0 0.0
  %3320 = vmatprep.subr.mxu0 0.0
  %3321 = vmatpush1.msra.mxu0 0.0
  %3322 = vmatprep.subr.mxu0 0.0
  %3323 = vmatpush1.msra.mxu0 %v3119
  %3324 = vmatprep.subr.mxu0 0.0
  %3325 = vmatpush1.msra.mxu0 %v3118
  %3326 = vmatprep.subr.mxu0 0.0
  %3327 = vmatpush2.msra.mxu0 0.0
  %3328 = vmatprep.subr.mxu0 0.0
  %3329 = vmatpush2.msra.mxu0 0.0
  %3330 = vmatprep.subr.mxu0 0.0
  %3331 = vmatpush2.msra.mxu0 0.0
  %3332 = vmatprep.subr.mxu0 0.0
  %3333 = vmatpush2.msra.mxu0 0.0
  %3334 = vmatprep.subr.mxu0 0.0
  %3335 = vmatpush2.msra.mxu0 0.0
  %3336 = vmatprep.subr.mxu0 0.0
  %3337 = vmatpush2.msra.mxu0 0.0
  %3338 = vmatprep.subr.mxu0 0.0
  %3339 = vmatpush2.msra.mxu0 0.0
  %3340 = vmatprep.subr.mxu0 0.0
  %3341 = vmatpush2.msra.mxu0 0.0
  %3342 = vmatprep.subr.mxu0 0.0
  %3343 = vmatpush2.msra.mxu0 0.0
  %3344 = vmatprep.subr.mxu0 0.0
  %3345 = vmatpush2.msra.mxu0 0.0
  %3346 = vmatprep.subr.mxu0 0.0
  %3347 = vmatpush2.msra.mxu0 0.0
  %3348 = vmatprep.subr.mxu0 0.0
  %3349 = vmatpush2.msra.mxu0 0.0
  %3350 = vmatprep.subr.mxu0 0.0
  %3351 = vmatpush2.msra.mxu0 0.0
  %3352 = vmatprep.subr.mxu0 0.0
  %3353 = vmatpush2.msra.mxu0 0.0
  %3354 = vmatprep.subr.mxu0 0.0
  %3355 = vmatpush2.msra.mxu0 0.0
  %3356 = vmatprep.subr.mxu0 0.0
  %3357 = vmatpush2.msra.mxu0 0.0
  %3358 = vmatprep.mubr.f32.mxu0 0.0
  %3359 = vmatmul.mubr.f32.gmra.mxu0 %v3289
  %v3360 = vpop.f32.mrf.mxu0
  %v3361 = vadd.f32 %v3280, %v3360
  %v3362 = vpop.f32.mrf.mxu0
  %3363 = vmatprep.mubr.f32.mxu0 0.0
  %3364 = vmatmul.mubr.f32.gmra.mxu0 %v3292
  %v3365 = vpop.f32.mrf.mxu0
  %v3366 = vadd.f32 %v3285, %v3365
  %v3367 = vpop.f32.mrf.mxu0
  %3368 = vdwg.mxu0
  %s3369 = scalar_lea.vmem %s17, 32
  %v3370 = vld [vmem:[%s3369] sm:$0xff]
  %v3371 = vld [vmem:[%s3369 + $0x8] sm:$0xff]
  %v3373 = vsel %vm3036, %v3370, 0
  %v3376 = vsel %vm3036, %v3371, 0
  %3378 = vmatprep.subr.mxu0 0.0
  %3379 = vmatpush1.msra.mxu0 0.0
  %3380 = vmatprep.subr.mxu0 0.0
  %3381 = vmatpush1.msra.mxu0 0.0
  %3382 = vmatprep.subr.mxu0 0.0
  %3383 = vmatpush1.msra.mxu0 0.0
  %3384 = vmatprep.subr.mxu0 0.0
  %3385 = vmatpush1.msra.mxu0 0.0
  %3386 = vmatprep.subr.mxu0 0.0
  %3387 = vmatpush1.msra.mxu0 0.0
  %3388 = vmatprep.subr.mxu0 0.0
  %3389 = vmatpush1.msra.mxu0 0.0
  %3390 = vmatprep.subr.mxu0 0.0
  %3391 = vmatpush1.msra.mxu0 0.0
  %3392 = vmatprep.subr.mxu0 0.0
  %3393 = vmatpush1.msra.mxu0 0.0
  %3394 = vmatprep.subr.mxu0 0.0
  %3395 = vmatpush1.msra.mxu0 0.0
  %3396 = vmatprep.subr.mxu0 0.0
  %3397 = vmatpush1.msra.mxu0 0.0
  %3398 = vmatprep.subr.mxu0 0.0
  %3399 = vmatpush1.msra.mxu0 0.0
  %3400 = vmatprep.subr.mxu0 0.0
  %3401 = vmatpush1.msra.mxu0 0.0
  %3402 = vmatprep.subr.mxu0 0.0
  %3403 = vmatpush1.msra.mxu0 %v3031
  %3404 = vmatprep.subr.mxu0 0.0
  %3405 = vmatpush1.msra.mxu0 %v3026
  %3406 = vmatprep.subr.mxu0 0.0
  %3407 = vmatpush1.msra.mxu0 %v3021
  %3408 = vmatprep.subr.mxu0 0.0
  %3409 = vmatpush1.msra.mxu0 %v3016
  %3410 = vmatprep.subr.mxu0 0.0
  %3411 = vmatpush2.msra.mxu0 0.0
  %3412 = vmatprep.subr.mxu0 0.0
  %3413 = vmatpush2.msra.mxu0 0.0
  %3414 = vmatprep.subr.mxu0 0.0
  %3415 = vmatpush2.msra.mxu0 0.0
  %3416 = vmatprep.subr.mxu0 0.0
  %3417 = vmatpush2.msra.mxu0 0.0
  %3418 = vmatprep.subr.mxu0 0.0
  %3419 = vmatpush2.msra.mxu0 0.0
  %3420 = vmatprep.subr.mxu0 0.0
  %3421 = vmatpush2.msra.mxu0 0.0
  %3422 = vmatprep.subr.mxu0 0.0
  %3423 = vmatpush2.msra.mxu0 0.0
  %3424 = vmatprep.subr.mxu0 0.0
  %3425 = vmatpush2.msra.mxu0 0.0
  %3426 = vmatprep.subr.mxu0 0.0
  %3427 = vmatpush2.msra.mxu0 0.0
  %3428 = vmatprep.subr.mxu0 0.0
  %3429 = vmatpush2.msra.mxu0 0.0
  %3430 = vmatprep.subr.mxu0 0.0
  %3431 = vmatpush2.msra.mxu0 0.0
  %3432 = vmatprep.subr.mxu0 0.0
  %3433 = vmatpush2.msra.mxu0 0.0
  %3434 = vmatprep.subr.mxu0 0.0
  %3435 = vmatpush2.msra.mxu0 0.0
  %3436 = vmatprep.subr.mxu0 0.0
  %3437 = vmatpush2.msra.mxu0 0.0
  %3438 = vmatprep.subr.mxu0 0.0
  %3439 = vmatpush2.msra.mxu0 0.0
  %3440 = vmatprep.subr.mxu0 0.0
  %3441 = vmatpush2.msra.mxu0 0.0
  %3442 = vmatprep.mubr.f32.mxu0 0.0
  %3443 = vmatmul.mubr.f32.gmra.mxu0 %v3373
  %v3444 = vpop.f32.mrf.mxu0
  %v3445 = vadd.f32 0.0, %v3444
  %v3446 = vpop.f32.mrf.mxu0
  %3447 = vmatprep.mubr.f32.mxu0 0.0
  %3448 = vmatmul.mubr.f32.gmra.mxu0 %v3376
  %v3449 = vpop.f32.mrf.mxu0
  %v3450 = vadd.f32 0.0, %v3449
  %v3451 = vpop.f32.mrf.mxu0
  %3452 = vdwg.mxu0
  %s3453 = scalar_lea.vmem %s18, 32
  %v3454 = vld [vmem:[%s3453] sm:$0xff]
  %v3455 = vld [vmem:[%s3453 + $0x8] sm:$0xff]
  %v3457 = vsel %vm2936, %v3445, 0
  %v3460 = vsel %vm2936, %v3450, 0
  %3462 = vmatprep.subr.mxu0 0.0
  %3463 = vmatpush1.msra.mxu0 0.0
  %3464 = vmatprep.subr.mxu0 0.0
  %3465 = vmatpush1.msra.mxu0 0.0
  %3466 = vmatprep.subr.mxu0 0.0
  %3467 = vmatpush1.msra.mxu0 0.0
  %3468 = vmatprep.subr.mxu0 0.0
  %3469 = vmatpush1.msra.mxu0 0.0
  %3470 = vmatprep.subr.mxu0 0.0
  %3471 = vmatpush1.msra.mxu0 0.0
  %3472 = vmatprep.subr.mxu0 0.0
  %3473 = vmatpush1.msra.mxu0 0.0
  %3474 = vmatprep.subr.mxu0 0.0
  %3475 = vmatpush1.msra.mxu0 0.0
  %3476 = vmatprep.subr.mxu0 0.0
  %3477 = vmatpush1.msra.mxu0 0.0
  %3478 = vmatprep.subr.mxu0 0.0
  %3479 = vmatpush1.msra.mxu0 0.0
  %3480 = vmatprep.subr.mxu0 0.0
  %3481 = vmatpush1.msra.mxu0 0.0
  %3482 = vmatprep.subr.mxu0 0.0
  %3483 = vmatpush1.msra.mxu0 0.0
  %3484 = vmatprep.subr.mxu0 0.0
  %3485 = vmatpush1.msra.mxu0 0.0
  %3486 = vmatprep.subr.mxu0 0.0
  %3487 = vmatpush1.msra.mxu0 0.0
  %3488 = vmatprep.subr.mxu0 0.0
  %3489 = vmatpush1.msra.mxu0 0.0
  %3490 = vmatprep.subr.mxu0 0.0
  %3491 = vmatpush1.msra.mxu0 %v3455
  %3492 = vmatprep.subr.mxu0 0.0
  %3493 = vmatpush1.msra.mxu0 %v3454
  %3494 = vmatprep.subr.mxu0 0.0
  %3495 = vmatpush2.msra.mxu0 0.0
  %3496 = vmatprep.subr.mxu0 0.0
  %3497 = vmatpush2.msra.mxu0 0.0
  %3498 = vmatprep.subr.mxu0 0.0
  %3499 = vmatpush2.msra.mxu0 0.0
  %3500 = vmatprep.subr.mxu0 0.0
  %3501 = vmatpush2.msra.mxu0 0.0
  %3502 = vmatprep.subr.mxu0 0.0
  %3503 = vmatpush2.msra.mxu0 0.0
  %3504 = vmatprep.subr.mxu0 0.0
  %3505 = vmatpush2.msra.mxu0 0.0
  %3506 = vmatprep.subr.mxu0 0.0
  %3507 = vmatpush2.msra.mxu0 0.0
  %3508 = vmatprep.subr.mxu0 0.0
  %3509 = vmatpush2.msra.mxu0 0.0
  %3510 = vmatprep.subr.mxu0 0.0
  %3511 = vmatpush2.msra.mxu0 0.0
  %3512 = vmatprep.subr.mxu0 0.0
  %3513 = vmatpush2.msra.mxu0 0.0
  %3514 = vmatprep.subr.mxu0 0.0
  %3515 = vmatpush2.msra.mxu0 0.0
  %3516 = vmatprep.subr.mxu0 0.0
  %3517 = vmatpush2.msra.mxu0 0.0
  %3518 = vmatprep.subr.mxu0 0.0
  %3519 = vmatpush2.msra.mxu0 0.0
  %3520 = vmatprep.subr.mxu0 0.0
  %3521 = vmatpush2.msra.mxu0 0.0
  %3522 = vmatprep.subr.mxu0 0.0
  %3523 = vmatpush2.msra.mxu0 0.0
  %3524 = vmatprep.subr.mxu0 0.0
  %3525 = vmatpush2.msra.mxu0 0.0
  %3526 = vmatprep.mubr.f32.mxu0 0.0
  %3527 = vmatmul.mubr.f32.gmra.mxu0 %v3457
  %v3528 = vpop.f32.mrf.mxu0
  %v3529 = vadd.f32 0.0, %v3528
  %v3530 = vpop.f32.mrf.mxu0
  %3531 = vmatprep.mubr.f32.mxu0 0.0
  %3532 = vmatmul.mubr.f32.gmra.mxu0 %v3460
  %v3533 = vpop.f32.mrf.mxu0
  %v3534 = vadd.f32 0.0, %v3533
  %v3535 = vpop.f32.mrf.mxu0
  %3536 = vdwg.mxu0
  %v3537 = vadd.f32 %v3361, %v3529
  %v3538 = vadd.f32 %v3366, %v3534
  %s3539 = scalar_lea.vmem %s17, 48
  %v3540 = vld [vmem:[%s3539] sm:$0xff]
  %v3541 = vld [vmem:[%s3539 + $0x8] sm:$0xff]
  %v3543 = vsel %vm3036, %v3540, 0
  %v3546 = vsel %vm3036, %v3541, 0
  %3548 = vmatprep.subr.mxu0 0.0
  %3549 = vmatpush1.msra.mxu0 0.0
  %3550 = vmatprep.subr.mxu0 0.0
  %3551 = vmatpush1.msra.mxu0 0.0
  %3552 = vmatprep.subr.mxu0 0.0
  %3553 = vmatpush1.msra.mxu0 0.0
  %3554 = vmatprep.subr.mxu0 0.0
  %3555 = vmatpush1.msra.mxu0 0.0
  %3556 = vmatprep.subr.mxu0 0.0
  %3557 = vmatpush1.msra.mxu0 0.0
  %3558 = vmatprep.subr.mxu0 0.0
  %3559 = vmatpush1.msra.mxu0 0.0
  %3560 = vmatprep.subr.mxu0 0.0
  %3561 = vmatpush1.msra.mxu0 0.0
  %3562 = vmatprep.subr.mxu0 0.0
  %3563 = vmatpush1.msra.mxu0 0.0
  %3564 = vmatprep.subr.mxu0 0.0
  %3565 = vmatpush1.msra.mxu0 0.0
  %3566 = vmatprep.subr.mxu0 0.0
  %3567 = vmatpush1.msra.mxu0 0.0
  %3568 = vmatprep.subr.mxu0 0.0
  %3569 = vmatpush1.msra.mxu0 0.0
  %3570 = vmatprep.subr.mxu0 0.0
  %3571 = vmatpush1.msra.mxu0 0.0
  %3572 = vmatprep.subr.mxu0 0.0
  %3573 = vmatpush1.msra.mxu0 %v3031
  %3574 = vmatprep.subr.mxu0 0.0
  %3575 = vmatpush1.msra.mxu0 %v3026
  %3576 = vmatprep.subr.mxu0 0.0
  %3577 = vmatpush1.msra.mxu0 %v3021
  %3578 = vmatprep.subr.mxu0 0.0
  %3579 = vmatpush1.msra.mxu0 %v3016
  %3580 = vmatprep.subr.mxu0 0.0
  %3581 = vmatpush2.msra.mxu0 0.0
  %3582 = vmatprep.subr.mxu0 0.0
  %3583 = vmatpush2.msra.mxu0 0.0
  %3584 = vmatprep.subr.mxu0 0.0
  %3585 = vmatpush2.msra.mxu0 0.0
  %3586 = vmatprep.subr.mxu0 0.0
  %3587 = vmatpush2.msra.mxu0 0.0
  %3588 = vmatprep.subr.mxu0 0.0
  %3589 = vmatpush2.msra.mxu0 0.0
  %3590 = vmatprep.subr.mxu0 0.0
  %3591 = vmatpush2.msra.mxu0 0.0
  %3592 = vmatprep.subr.mxu0 0.0
  %3593 = vmatpush2.msra.mxu0 0.0
  %3594 = vmatprep.subr.mxu0 0.0
  %3595 = vmatpush2.msra.mxu0 0.0
  %3596 = vmatprep.subr.mxu0 0.0
  %3597 = vmatpush2.msra.mxu0 0.0
  %3598 = vmatprep.subr.mxu0 0.0
  %3599 = vmatpush2.msra.mxu0 0.0
  %3600 = vmatprep.subr.mxu0 0.0
  %3601 = vmatpush2.msra.mxu0 0.0
  %3602 = vmatprep.subr.mxu0 0.0
  %3603 = vmatpush2.msra.mxu0 0.0
  %3604 = vmatprep.subr.mxu0 0.0
  %3605 = vmatpush2.msra.mxu0 0.0
  %3606 = vmatprep.subr.mxu0 0.0
  %3607 = vmatpush2.msra.mxu0 0.0
  %3608 = vmatprep.subr.mxu0 0.0
  %3609 = vmatpush2.msra.mxu0 0.0
  %3610 = vmatprep.subr.mxu0 0.0
  %3611 = vmatpush2.msra.mxu0 0.0
  %3612 = vmatprep.mubr.f32.mxu0 0.0
  %3613 = vmatmul.mubr.f32.gmra.mxu0 %v3543
  %v3614 = vpop.f32.mrf.mxu0
  %v3615 = vadd.f32 0.0, %v3614
  %v3616 = vpop.f32.mrf.mxu0
  %3617 = vmatprep.mubr.f32.mxu0 0.0
  %3618 = vmatmul.mubr.f32.gmra.mxu0 %v3546
  %v3619 = vpop.f32.mrf.mxu0
  %v3620 = vadd.f32 0.0, %v3619
  %v3621 = vpop.f32.mrf.mxu0
  %3622 = vdwg.mxu0
  %s3623 = scalar_lea.vmem %s18, 48
  %v3624 = vld [vmem:[%s3623] sm:$0xff]
  %v3625 = vld [vmem:[%s3623 + $0x8] sm:$0xff]
  %v3627 = vsel %vm2936, %v3615, 0
  %v3630 = vsel %vm2936, %v3620, 0
  %3632 = vmatprep.subr.mxu0 0.0
  %3633 = vmatpush1.msra.mxu0 0.0
  %3634 = vmatprep.subr.mxu0 0.0
  %3635 = vmatpush1.msra.mxu0 0.0
  %3636 = vmatprep.subr.mxu0 0.0
  %3637 = vmatpush1.msra.mxu0 0.0
  %3638 = vmatprep.subr.mxu0 0.0
  %3639 = vmatpush1.msra.mxu0 0.0
  %3640 = vmatprep.subr.mxu0 0.0
  %3641 = vmatpush1.msra.mxu0 0.0
  %3642 = vmatprep.subr.mxu0 0.0
  %3643 = vmatpush1.msra.mxu0 0.0
  %3644 = vmatprep.subr.mxu0 0.0
  %3645 = vmatpush1.msra.mxu0 0.0
  %3646 = vmatprep.subr.mxu0 0.0
  %3647 = vmatpush1.msra.mxu0 0.0
  %3648 = vmatprep.subr.mxu0 0.0
  %3649 = vmatpush1.msra.mxu0 0.0
  %3650 = vmatprep.subr.mxu0 0.0
  %3651 = vmatpush1.msra.mxu0 0.0
  %3652 = vmatprep.subr.mxu0 0.0
  %3653 = vmatpush1.msra.mxu0 0.0
  %3654 = vmatprep.subr.mxu0 0.0
  %3655 = vmatpush1.msra.mxu0 0.0
  %3656 = vmatprep.subr.mxu0 0.0
  %3657 = vmatpush1.msra.mxu0 0.0
  %3658 = vmatprep.subr.mxu0 0.0
  %3659 = vmatpush1.msra.mxu0 0.0
  %3660 = vmatprep.subr.mxu0 0.0
  %3661 = vmatpush1.msra.mxu0 %v3625
  %3662 = vmatprep.subr.mxu0 0.0
  %3663 = vmatpush1.msra.mxu0 %v3624
  %3664 = vmatprep.subr.mxu0 0.0
  %3665 = vmatpush2.msra.mxu0 0.0
  %3666 = vmatprep.subr.mxu0 0.0
  %3667 = vmatpush2.msra.mxu0 0.0
  %3668 = vmatprep.subr.mxu0 0.0
  %3669 = vmatpush2.msra.mxu0 0.0
  %3670 = vmatprep.subr.mxu0 0.0
  %3671 = vmatpush2.msra.mxu0 0.0
  %3672 = vmatprep.subr.mxu0 0.0
  %3673 = vmatpush2.msra.mxu0 0.0
  %3674 = vmatprep.subr.mxu0 0.0
  %3675 = vmatpush2.msra.mxu0 0.0
  %3676 = vmatprep.subr.mxu0 0.0
  %3677 = vmatpush2.msra.mxu0 0.0
  %3678 = vmatprep.subr.mxu0 0.0
  %3679 = vmatpush2.msra.mxu0 0.0
  %3680 = vmatprep.subr.mxu0 0.0
  %3681 = vmatpush2.msra.mxu0 0.0
  %3682 = vmatprep.subr.mxu0 0.0
  %3683 = vmatpush2.msra.mxu0 0.0
  %3684 = vmatprep.subr.mxu0 0.0
  %3685 = vmatpush2.msra.mxu0 0.0
  %3686 = vmatprep.subr.mxu0 0.0
  %3687 = vmatpush2.msra.mxu0 0.0
  %3688 = vmatprep.subr.mxu0 0.0
  %3689 = vmatpush2.msra.mxu0 0.0
  %3690 = vmatprep.subr.mxu0 0.0
  %3691 = vmatpush2.msra.mxu0 0.0
  %3692 = vmatprep.subr.mxu0 0.0
  %3693 = vmatpush2.msra.mxu0 0.0
  %3694 = vmatprep.subr.mxu0 0.0
  %3695 = vmatpush2.msra.mxu0 0.0
  %3696 = vmatprep.mubr.f32.mxu0 0.0
  %3697 = vmatmul.mubr.f32.gmra.mxu0 %v3627
  %v3698 = vpop.f32.mrf.mxu0
  %v3699 = vadd.f32 0.0, %v3698
  %v3700 = vpop.f32.mrf.mxu0
  %3701 = vmatprep.mubr.f32.mxu0 0.0
  %3702 = vmatmul.mubr.f32.gmra.mxu0 %v3630
  %v3703 = vpop.f32.mrf.mxu0
  %v3704 = vadd.f32 0.0, %v3703
  %v3705 = vpop.f32.mrf.mxu0
  %3706 = vdwg.mxu0
  %v3707 = vadd.f32 %v3537, %v3699
  %v3708 = vadd.f32 %v3538, %v3704
  %s3709 = scalar_lea.vmem %s17, 64
  %v3710 = vld [vmem:[%s3709] sm:$0xff]
  %v3711 = vld [vmem:[%s3709 + $0x8] sm:$0xff]
  %v3713 = vsel %vm3036, %v3710, 0
  %v3716 = vsel %vm3036, %v3711, 0
  %3718 = vmatprep.subr.mxu0 0.0
  %3719 = vmatpush1.msra.mxu0 0.0
  %3720 = vmatprep.subr.mxu0 0.0
  %3721 = vmatpush1.msra.mxu0 0.0
  %3722 = vmatprep.subr.mxu0 0.0
  %3723 = vmatpush1.msra.mxu0 0.0
  %3724 = vmatprep.subr.mxu0 0.0
  %3725 = vmatpush1.msra.mxu0 0.0
  %3726 = vmatprep.subr.mxu0 0.0
  %3727 = vmatpush1.msra.mxu0 0.0
  %3728 = vmatprep.subr.mxu0 0.0
  %3729 = vmatpush1.msra.mxu0 0.0
  %3730 = vmatprep.subr.mxu0 0.0
  %3731 = vmatpush1.msra.mxu0 0.0
  %3732 = vmatprep.subr.mxu0 0.0
  %3733 = vmatpush1.msra.mxu0 0.0
  %3734 = vmatprep.subr.mxu0 0.0
  %3735 = vmatpush1.msra.mxu0 0.0
  %3736 = vmatprep.subr.mxu0 0.0
  %3737 = vmatpush1.msra.mxu0 0.0
  %3738 = vmatprep.subr.mxu0 0.0
  %3739 = vmatpush1.msra.mxu0 0.0
  %3740 = vmatprep.subr.mxu0 0.0
  %3741 = vmatpush1.msra.mxu0 0.0
  %3742 = vmatprep.subr.mxu0 0.0
  %3743 = vmatpush1.msra.mxu0 %v3031
  %3744 = vmatprep.subr.mxu0 0.0
  %3745 = vmatpush1.msra.mxu0 %v3026
  %3746 = vmatprep.subr.mxu0 0.0
  %3747 = vmatpush1.msra.mxu0 %v3021
  %3748 = vmatprep.subr.mxu0 0.0
  %3749 = vmatpush1.msra.mxu0 %v3016
  %3750 = vmatprep.subr.mxu0 0.0
  %3751 = vmatpush2.msra.mxu0 0.0
  %3752 = vmatprep.subr.mxu0 0.0
  %3753 = vmatpush2.msra.mxu0 0.0
  %3754 = vmatprep.subr.mxu0 0.0
  %3755 = vmatpush2.msra.mxu0 0.0
  %3756 = vmatprep.subr.mxu0 0.0
  %3757 = vmatpush2.msra.mxu0 0.0
  %3758 = vmatprep.subr.mxu0 0.0
  %3759 = vmatpush2.msra.mxu0 0.0
  %3760 = vmatprep.subr.mxu0 0.0
  %3761 = vmatpush2.msra.mxu0 0.0
  %3762 = vmatprep.subr.mxu0 0.0
  %3763 = vmatpush2.msra.mxu0 0.0
  %3764 = vmatprep.subr.mxu0 0.0
  %3765 = vmatpush2.msra.mxu0 0.0
  %3766 = vmatprep.subr.mxu0 0.0
  %3767 = vmatpush2.msra.mxu0 0.0
  %3768 = vmatprep.subr.mxu0 0.0
  %3769 = vmatpush2.msra.mxu0 0.0
  %3770 = vmatprep.subr.mxu0 0.0
  %3771 = vmatpush2.msra.mxu0 0.0
  %3772 = vmatprep.subr.mxu0 0.0
  %3773 = vmatpush2.msra.mxu0 0.0
  %3774 = vmatprep.subr.mxu0 0.0
  %3775 = vmatpush2.msra.mxu0 0.0
  %3776 = vmatprep.subr.mxu0 0.0
  %3777 = vmatpush2.msra.mxu0 0.0
  %3778 = vmatprep.subr.mxu0 0.0
  %3779 = vmatpush2.msra.mxu0 0.0
  %3780 = vmatprep.subr.mxu0 0.0
  %3781 = vmatpush2.msra.mxu0 0.0
  %3782 = vmatprep.mubr.f32.mxu0 0.0
  %3783 = vmatmul.mubr.f32.gmra.mxu0 %v3713
  %v3784 = vpop.f32.mrf.mxu0
  %v3785 = vadd.f32 0.0, %v3784
  %v3786 = vpop.f32.mrf.mxu0
  %3787 = vmatprep.mubr.f32.mxu0 0.0
  %3788 = vmatmul.mubr.f32.gmra.mxu0 %v3716
  %v3789 = vpop.f32.mrf.mxu0
  %v3790 = vadd.f32 0.0, %v3789
  %v3791 = vpop.f32.mrf.mxu0
  %3792 = vdwg.mxu0
  %s3793 = scalar_lea.vmem %s18, 64
  %v3794 = vld [vmem:[%s3793] sm:$0xff]
  %v3795 = vld [vmem:[%s3793 + $0x8] sm:$0xff]
  %v3797 = vsel %vm2936, %v3785, 0
  %v3800 = vsel %vm2936, %v3790, 0
  %3802 = vmatprep.subr.mxu0 0.0
  %3803 = vmatpush1.msra.mxu0 0.0
  %3804 = vmatprep.subr.mxu0 0.0
  %3805 = vmatpush1.msra.mxu0 0.0
  %3806 = vmatprep.subr.mxu0 0.0
  %3807 = vmatpush1.msra.mxu0 0.0
  %3808 = vmatprep.subr.mxu0 0.0
  %3809 = vmatpush1.msra.mxu0 0.0
  %3810 = vmatprep.subr.mxu0 0.0
  %3811 = vmatpush1.msra.mxu0 0.0
  %3812 = vmatprep.subr.mxu0 0.0
  %3813 = vmatpush1.msra.mxu0 0.0
  %3814 = vmatprep.subr.mxu0 0.0
  %3815 = vmatpush1.msra.mxu0 0.0
  %3816 = vmatprep.subr.mxu0 0.0
  %3817 = vmatpush1.msra.mxu0 0.0
  %3818 = vmatprep.subr.mxu0 0.0
  %3819 = vmatpush1.msra.mxu0 0.0
  %3820 = vmatprep.subr.mxu0 0.0
  %3821 = vmatpush1.msra.mxu0 0.0
  %3822 = vmatprep.subr.mxu0 0.0
  %3823 = vmatpush1.msra.mxu0 0.0
  %3824 = vmatprep.subr.mxu0 0.0
  %3825 = vmatpush1.msra.mxu0 0.0
  %3826 = vmatprep.subr.mxu0 0.0
  %3827 = vmatpush1.msra.mxu0 0.0
  %3828 = vmatprep.subr.mxu0 0.0
  %3829 = vmatpush1.msra.mxu0 0.0
  %3830 = vmatprep.subr.mxu0 0.0
  %3831 = vmatpush1.msra.mxu0 %v3795
  %3832 = vmatprep.subr.mxu0 0.0
  %3833 = vmatpush1.msra.mxu0 %v3794
  %3834 = vmatprep.subr.mxu0 0.0
  %3835 = vmatpush2.msra.mxu0 0.0
  %3836 = vmatprep.subr.mxu0 0.0
  %3837 = vmatpush2.msra.mxu0 0.0
  %3838 = vmatprep.subr.mxu0 0.0
  %3839 = vmatpush2.msra.mxu0 0.0
  %3840 = vmatprep.subr.mxu0 0.0
  %3841 = vmatpush2.msra.mxu0 0.0
  %3842 = vmatprep.subr.mxu0 0.0
  %3843 = vmatpush2.msra.mxu0 0.0
  %3844 = vmatprep.subr.mxu0 0.0
  %3845 = vmatpush2.msra.mxu0 0.0
  %3846 = vmatprep.subr.mxu0 0.0
  %3847 = vmatpush2.msra.mxu0 0.0
  %3848 = vmatprep.subr.mxu0 0.0
  %3849 = vmatpush2.msra.mxu0 0.0
  %3850 = vmatprep.subr.mxu0 0.0
  %3851 = vmatpush2.msra.mxu0 0.0
  %3852 = vmatprep.subr.mxu0 0.0
  %3853 = vmatpush2.msra.mxu0 0.0
  %3854 = vmatprep.subr.mxu0 0.0
  %3855 = vmatpush2.msra.mxu0 0.0
  %3856 = vmatprep.subr.mxu0 0.0
  %3857 = vmatpush2.msra.mxu0 0.0
  %3858 = vmatprep.subr.mxu0 0.0
  %3859 = vmatpush2.msra.mxu0 0.0
  %3860 = vmatprep.subr.mxu0 0.0
  %3861 = vmatpush2.msra.mxu0 0.0
  %3862 = vmatprep.subr.mxu0 0.0
  %3863 = vmatpush2.msra.mxu0 0.0
  %3864 = vmatprep.subr.mxu0 0.0
  %3865 = vmatpush2.msra.mxu0 0.0
  %3866 = vmatprep.mubr.f32.mxu0 0.0
  %3867 = vmatmul.mubr.f32.gmra.mxu0 %v3797
  %v3868 = vpop.f32.mrf.mxu0
  %v3869 = vadd.f32 0.0, %v3868
  %v3870 = vpop.f32.mrf.mxu0
  %3871 = vmatprep.mubr.f32.mxu0 0.0
  %3872 = vmatmul.mubr.f32.gmra.mxu0 %v3800
  %v3873 = vpop.f32.mrf.mxu0
  %v3874 = vadd.f32 0.0, %v3873
  %v3875 = vpop.f32.mrf.mxu0
  %3876 = vdwg.mxu0
  %v3877 = vadd.f32 %v3707, %v3869
  %v3878 = vadd.f32 %v3708, %v3874
  %s3879 = scalar_lea.vmem %s17, 80
  %v3880 = vld [vmem:[%s3879] sm:$0xff]
  %v3881 = vld [vmem:[%s3879 + $0x8] sm:$0xff]
  %v3883 = vsel %vm3036, %v3880, 0
  %v3886 = vsel %vm3036, %v3881, 0
  %3888 = vmatprep.subr.mxu0 0.0
  %3889 = vmatpush1.msra.mxu0 0.0
  %3890 = vmatprep.subr.mxu0 0.0
  %3891 = vmatpush1.msra.mxu0 0.0
  %3892 = vmatprep.subr.mxu0 0.0
  %3893 = vmatpush1.msra.mxu0 0.0
  %3894 = vmatprep.subr.mxu0 0.0
  %3895 = vmatpush1.msra.mxu0 0.0
  %3896 = vmatprep.subr.mxu0 0.0
  %3897 = vmatpush1.msra.mxu0 0.0
  %3898 = vmatprep.subr.mxu0 0.0
  %3899 = vmatpush1.msra.mxu0 0.0
  %3900 = vmatprep.subr.mxu0 0.0
  %3901 = vmatpush1.msra.mxu0 0.0
  %3902 = vmatprep.subr.mxu0 0.0
  %3903 = vmatpush1.msra.mxu0 0.0
  %3904 = vmatprep.subr.mxu0 0.0
  %3905 = vmatpush1.msra.mxu0 0.0
  %3906 = vmatprep.subr.mxu0 0.0
  %3907 = vmatpush1.msra.mxu0 0.0
  %3908 = vmatprep.subr.mxu0 0.0
  %3909 = vmatpush1.msra.mxu0 0.0
  %3910 = vmatprep.subr.mxu0 0.0
  %3911 = vmatpush1.msra.mxu0 0.0
  %3912 = vmatprep.subr.mxu0 0.0
  %3913 = vmatpush1.msra.mxu0 %v3031
  %3914 = vmatprep.subr.mxu0 0.0
  %3915 = vmatpush1.msra.mxu0 %v3026
  %3916 = vmatprep.subr.mxu0 0.0
  %3917 = vmatpush1.msra.mxu0 %v3021
  %3918 = vmatprep.subr.mxu0 0.0
  %3919 = vmatpush1.msra.mxu0 %v3016
  %3920 = vmatprep.subr.mxu0 0.0
  %3921 = vmatpush2.msra.mxu0 0.0
  %3922 = vmatprep.subr.mxu0 0.0
  %3923 = vmatpush2.msra.mxu0 0.0
  %3924 = vmatprep.subr.mxu0 0.0
  %3925 = vmatpush2.msra.mxu0 0.0
  %3926 = vmatprep.subr.mxu0 0.0
  %3927 = vmatpush2.msra.mxu0 0.0
  %3928 = vmatprep.subr.mxu0 0.0
  %3929 = vmatpush2.msra.mxu0 0.0
  %3930 = vmatprep.subr.mxu0 0.0
  %3931 = vmatpush2.msra.mxu0 0.0
  %3932 = vmatprep.subr.mxu0 0.0
  %3933 = vmatpush2.msra.mxu0 0.0
  %3934 = vmatprep.subr.mxu0 0.0
  %3935 = vmatpush2.msra.mxu0 0.0
  %3936 = vmatprep.subr.mxu0 0.0
  %3937 = vmatpush2.msra.mxu0 0.0
  %3938 = vmatprep.subr.mxu0 0.0
  %3939 = vmatpush2.msra.mxu0 0.0
  %3940 = vmatprep.subr.mxu0 0.0
  %3941 = vmatpush2.msra.mxu0 0.0
  %3942 = vmatprep.subr.mxu0 0.0
  %3943 = vmatpush2.msra.mxu0 0.0
  %3944 = vmatprep.subr.mxu0 0.0
  %3945 = vmatpush2.msra.mxu0 0.0
  %3946 = vmatprep.subr.mxu0 0.0
  %3947 = vmatpush2.msra.mxu0 0.0
  %3948 = vmatprep.subr.mxu0 0.0
  %3949 = vmatpush2.msra.mxu0 0.0
  %3950 = vmatprep.subr.mxu0 0.0
  %3951 = vmatpush2.msra.mxu0 0.0
  %3952 = vmatprep.mubr.f32.mxu0 0.0
  %3953 = vmatmul.mubr.f32.gmra.mxu0 %v3883
  %v3954 = vpop.f32.mrf.mxu0
  %v3955 = vadd.f32 0.0, %v3954
  %v3956 = vpop.f32.mrf.mxu0
  %3957 = vmatprep.mubr.f32.mxu0 0.0
  %3958 = vmatmul.mubr.f32.gmra.mxu0 %v3886
  %v3959 = vpop.f32.mrf.mxu0
  %v3960 = vadd.f32 0.0, %v3959
  %v3961 = vpop.f32.mrf.mxu0
  %3962 = vdwg.mxu0
  %s3963 = scalar_lea.vmem %s18, 80
  %v3964 = vld [vmem:[%s3963] sm:$0xff]
  %v3965 = vld [vmem:[%s3963 + $0x8] sm:$0xff]
  %v3967 = vsel %vm2936, %v3955, 0
  %v3970 = vsel %vm2936, %v3960, 0
  %3972 = vmatprep.subr.mxu0 0.0
  %3973 = vmatpush1.msra.mxu0 0.0
  %3974 = vmatprep.subr.mxu0 0.0
  %3975 = vmatpush1.msra.mxu0 0.0
  %3976 = vmatprep.subr.mxu0 0.0
  %3977 = vmatpush1.msra.mxu0 0.0
  %3978 = vmatprep.subr.mxu0 0.0
  %3979 = vmatpush1.msra.mxu0 0.0
  %3980 = vmatprep.subr.mxu0 0.0
  %3981 = vmatpush1.msra.mxu0 0.0
  %3982 = vmatprep.subr.mxu0 0.0
  %3983 = vmatpush1.msra.mxu0 0.0
  %3984 = vmatprep.subr.mxu0 0.0
  %3985 = vmatpush1.msra.mxu0 0.0
  %3986 = vmatprep.subr.mxu0 0.0
  %3987 = vmatpush1.msra.mxu0 0.0
  %3988 = vmatprep.subr.mxu0 0.0
  %3989 = vmatpush1.msra.mxu0 0.0
  %3990 = vmatprep.subr.mxu0 0.0
  %3991 = vmatpush1.msra.mxu0 0.0
  %3992 = vmatprep.subr.mxu0 0.0
  %3993 = vmatpush1.msra.mxu0 0.0
  %3994 = vmatprep.subr.mxu0 0.0
  %3995 = vmatpush1.msra.mxu0 0.0
  %3996 = vmatprep.subr.mxu0 0.0
  %3997 = vmatpush1.msra.mxu0 0.0
  %3998 = vmatprep.subr.mxu0 0.0
  %3999 = vmatpush1.msra.mxu0 0.0
  %4000 = vmatprep.subr.mxu0 0.0
  %4001 = vmatpush1.msra.mxu0 %v3965
  %4002 = vmatprep.subr.mxu0 0.0
  %4003 = vmatpush1.msra.mxu0 %v3964
  %4004 = vmatprep.subr.mxu0 0.0
  %4005 = vmatpush2.msra.mxu0 0.0
  %4006 = vmatprep.subr.mxu0 0.0
  %4007 = vmatpush2.msra.mxu0 0.0
  %4008 = vmatprep.subr.mxu0 0.0
  %4009 = vmatpush2.msra.mxu0 0.0
  %4010 = vmatprep.subr.mxu0 0.0
  %4011 = vmatpush2.msra.mxu0 0.0
  %4012 = vmatprep.subr.mxu0 0.0
  %4013 = vmatpush2.msra.mxu0 0.0
  %4014 = vmatprep.subr.mxu0 0.0
  %4015 = vmatpush2.msra.mxu0 0.0
  %4016 = vmatprep.subr.mxu0 0.0
  %4017 = vmatpush2.msra.mxu0 0.0
  %4018 = vmatprep.subr.mxu0 0.0
  %4019 = vmatpush2.msra.mxu0 0.0
  %4020 = vmatprep.subr.mxu0 0.0
  %4021 = vmatpush2.msra.mxu0 0.0
  %4022 = vmatprep.subr.mxu0 0.0
  %4023 = vmatpush2.msra.mxu0 0.0
  %4024 = vmatprep.subr.mxu0 0.0
  %4025 = vmatpush2.msra.mxu0 0.0
  %4026 = vmatprep.subr.mxu0 0.0
  %4027 = vmatpush2.msra.mxu0 0.0
  %4028 = vmatprep.subr.mxu0 0.0
  %4029 = vmatpush2.msra.mxu0 0.0
  %4030 = vmatprep.subr.mxu0 0.0
  %4031 = vmatpush2.msra.mxu0 0.0
  %4032 = vmatprep.subr.mxu0 0.0
  %4033 = vmatpush2.msra.mxu0 0.0
  %4034 = vmatprep.subr.mxu0 0.0
  %4035 = vmatpush2.msra.mxu0 0.0
  %4036 = vmatprep.mubr.f32.mxu0 0.0
  %4037 = vmatmul.mubr.f32.gmra.mxu0 %v3967
  %v4038 = vpop.f32.mrf.mxu0
  %v4039 = vadd.f32 0.0, %v4038
  %v4040 = vpop.f32.mrf.mxu0
  %4041 = vmatprep.mubr.f32.mxu0 0.0
  %4042 = vmatmul.mubr.f32.gmra.mxu0 %v3970
  %v4043 = vpop.f32.mrf.mxu0
  %v4044 = vadd.f32 0.0, %v4043
  %v4045 = vpop.f32.mrf.mxu0
  %4046 = vdwg.mxu0
  %v4047 = vadd.f32 %v3877, %v4039
  %v4048 = vadd.f32 %v3878, %v4044
  %s4049 = scalar_lea.vmem %s17, 96
  %v4050 = vld [vmem:[%s4049] sm:$0xff]
  %v4051 = vld [vmem:[%s4049 + $0x8] sm:$0xff]
  %v4053 = vsel %vm3036, %v4050, 0
  %v4056 = vsel %vm3036, %v4051, 0
  %4058 = vmatprep.subr.mxu0 0.0
  %4059 = vmatpush1.msra.mxu0 0.0
  %4060 = vmatprep.subr.mxu0 0.0
  %4061 = vmatpush1.msra.mxu0 0.0
  %4062 = vmatprep.subr.mxu0 0.0
  %4063 = vmatpush1.msra.mxu0 0.0
  %4064 = vmatprep.subr.mxu0 0.0
  %4065 = vmatpush1.msra.mxu0 0.0
  %4066 = vmatprep.subr.mxu0 0.0
  %4067 = vmatpush1.msra.mxu0 0.0
  %4068 = vmatprep.subr.mxu0 0.0
  %4069 = vmatpush1.msra.mxu0 0.0
  %4070 = vmatprep.subr.mxu0 0.0
  %4071 = vmatpush1.msra.mxu0 0.0
  %4072 = vmatprep.subr.mxu0 0.0
  %4073 = vmatpush1.msra.mxu0 0.0
  %4074 = vmatprep.subr.mxu0 0.0
  %4075 = vmatpush1.msra.mxu0 0.0
  %4076 = vmatprep.subr.mxu0 0.0
  %4077 = vmatpush1.msra.mxu0 0.0
  %4078 = vmatprep.subr.mxu0 0.0
  %4079 = vmatpush1.msra.mxu0 0.0
  %4080 = vmatprep.subr.mxu0 0.0
  %4081 = vmatpush1.msra.mxu0 0.0
  %4082 = vmatprep.subr.mxu0 0.0
  %4083 = vmatpush1.msra.mxu0 %v3031
  %4084 = vmatprep.subr.mxu0 0.0
  %4085 = vmatpush1.msra.mxu0 %v3026
  %4086 = vmatprep.subr.mxu0 0.0
  %4087 = vmatpush1.msra.mxu0 %v3021
  %4088 = vmatprep.subr.mxu0 0.0
  %4089 = vmatpush1.msra.mxu0 %v3016
  %4090 = vmatprep.subr.mxu0 0.0
  %4091 = vmatpush2.msra.mxu0 0.0
  %4092 = vmatprep.subr.mxu0 0.0
  %4093 = vmatpush2.msra.mxu0 0.0
  %4094 = vmatprep.subr.mxu0 0.0
  %4095 = vmatpush2.msra.mxu0 0.0
  %4096 = vmatprep.subr.mxu0 0.0
  %4097 = vmatpush2.msra.mxu0 0.0
  %4098 = vmatprep.subr.mxu0 0.0
  %4099 = vmatpush2.msra.mxu0 0.0
  %4100 = vmatprep.subr.mxu0 0.0
  %4101 = vmatpush2.msra.mxu0 0.0
  %4102 = vmatprep.subr.mxu0 0.0
  %4103 = vmatpush2.msra.mxu0 0.0
  %4104 = vmatprep.subr.mxu0 0.0
  %4105 = vmatpush2.msra.mxu0 0.0
  %4106 = vmatprep.subr.mxu0 0.0
  %4107 = vmatpush2.msra.mxu0 0.0
  %4108 = vmatprep.subr.mxu0 0.0
  %4109 = vmatpush2.msra.mxu0 0.0
  %4110 = vmatprep.subr.mxu0 0.0
  %4111 = vmatpush2.msra.mxu0 0.0
  %4112 = vmatprep.subr.mxu0 0.0
  %4113 = vmatpush2.msra.mxu0 0.0
  %4114 = vmatprep.subr.mxu0 0.0
  %4115 = vmatpush2.msra.mxu0 0.0
  %4116 = vmatprep.subr.mxu0 0.0
  %4117 = vmatpush2.msra.mxu0 0.0
  %4118 = vmatprep.subr.mxu0 0.0
  %4119 = vmatpush2.msra.mxu0 0.0
  %4120 = vmatprep.subr.mxu0 0.0
  %4121 = vmatpush2.msra.mxu0 0.0
  %4122 = vmatprep.mubr.f32.mxu0 0.0
  %4123 = vmatmul.mubr.f32.gmra.mxu0 %v4053
  %v4124 = vpop.f32.mrf.mxu0
  %v4125 = vadd.f32 0.0, %v4124
  %v4126 = vpop.f32.mrf.mxu0
  %4127 = vmatprep.mubr.f32.mxu0 0.0
  %4128 = vmatmul.mubr.f32.gmra.mxu0 %v4056
  %v4129 = vpop.f32.mrf.mxu0
  %v4130 = vadd.f32 0.0, %v4129
  %v4131 = vpop.f32.mrf.mxu0
  %4132 = vdwg.mxu0
  %s4133 = scalar_lea.vmem %s18, 96
  %v4134 = vld [vmem:[%s4133] sm:$0xff]
  %v4135 = vld [vmem:[%s4133 + $0x8] sm:$0xff]
  %v4137 = vsel %vm2936, %v4125, 0
  %v4140 = vsel %vm2936, %v4130, 0
  %4142 = vmatprep.subr.mxu0 0.0
  %4143 = vmatpush1.msra.mxu0 0.0
  %4144 = vmatprep.subr.mxu0 0.0
  %4145 = vmatpush1.msra.mxu0 0.0
  %4146 = vmatprep.subr.mxu0 0.0
  %4147 = vmatpush1.msra.mxu0 0.0
  %4148 = vmatprep.subr.mxu0 0.0
  %4149 = vmatpush1.msra.mxu0 0.0
  %4150 = vmatprep.subr.mxu0 0.0
  %4151 = vmatpush1.msra.mxu0 0.0
  %4152 = vmatprep.subr.mxu0 0.0
  %4153 = vmatpush1.msra.mxu0 0.0
  %4154 = vmatprep.subr.mxu0 0.0
  %4155 = vmatpush1.msra.mxu0 0.0
  %4156 = vmatprep.subr.mxu0 0.0
  %4157 = vmatpush1.msra.mxu0 0.0
  %4158 = vmatprep.subr.mxu0 0.0
  %4159 = vmatpush1.msra.mxu0 0.0
  %4160 = vmatprep.subr.mxu0 0.0
  %4161 = vmatpush1.msra.mxu0 0.0
  %4162 = vmatprep.subr.mxu0 0.0
  %4163 = vmatpush1.msra.mxu0 0.0
  %4164 = vmatprep.subr.mxu0 0.0
  %4165 = vmatpush1.msra.mxu0 0.0
  %4166 = vmatprep.subr.mxu0 0.0
  %4167 = vmatpush1.msra.mxu0 0.0
  %4168 = vmatprep.subr.mxu0 0.0
  %4169 = vmatpush1.msra.mxu0 0.0
  %4170 = vmatprep.subr.mxu0 0.0
  %4171 = vmatpush1.msra.mxu0 %v4135
  %4172 = vmatprep.subr.mxu0 0.0
  %4173 = vmatpush1.msra.mxu0 %v4134
  %4174 = vmatprep.subr.mxu0 0.0
  %4175 = vmatpush2.msra.mxu0 0.0
  %4176 = vmatprep.subr.mxu0 0.0
  %4177 = vmatpush2.msra.mxu0 0.0
  %4178 = vmatprep.subr.mxu0 0.0
  %4179 = vmatpush2.msra.mxu0 0.0
  %4180 = vmatprep.subr.mxu0 0.0
  %4181 = vmatpush2.msra.mxu0 0.0
  %4182 = vmatprep.subr.mxu0 0.0
  %4183 = vmatpush2.msra.mxu0 0.0
  %4184 = vmatprep.subr.mxu0 0.0
  %4185 = vmatpush2.msra.mxu0 0.0
  %4186 = vmatprep.subr.mxu0 0.0
  %4187 = vmatpush2.msra.mxu0 0.0
  %4188 = vmatprep.subr.mxu0 0.0
  %4189 = vmatpush2.msra.mxu0 0.0
  %4190 = vmatprep.subr.mxu0 0.0
  %4191 = vmatpush2.msra.mxu0 0.0
  %4192 = vmatprep.subr.mxu0 0.0
  %4193 = vmatpush2.msra.mxu0 0.0
  %4194 = vmatprep.subr.mxu0 0.0
  %4195 = vmatpush2.msra.mxu0 0.0
  %4196 = vmatprep.subr.mxu0 0.0
  %4197 = vmatpush2.msra.mxu0 0.0
  %4198 = vmatprep.subr.mxu0 0.0
  %4199 = vmatpush2.msra.mxu0 0.0
  %4200 = vmatprep.subr.mxu0 0.0
  %4201 = vmatpush2.msra.mxu0 0.0
  %4202 = vmatprep.subr.mxu0 0.0
  %4203 = vmatpush2.msra.mxu0 0.0
  %4204 = vmatprep.subr.mxu0 0.0
  %4205 = vmatpush2.msra.mxu0 0.0
  %4206 = vmatprep.mubr.f32.mxu0 0.0
  %4207 = vmatmul.mubr.f32.gmra.mxu0 %v4137
  %v4208 = vpop.f32.mrf.mxu0
  %v4209 = vadd.f32 0.0, %v4208
  %v4210 = vpop.f32.mrf.mxu0
  %4211 = vmatprep.mubr.f32.mxu0 0.0
  %4212 = vmatmul.mubr.f32.gmra.mxu0 %v4140
  %v4213 = vpop.f32.mrf.mxu0
  %v4214 = vadd.f32 0.0, %v4213
  %v4215 = vpop.f32.mrf.mxu0
  %4216 = vdwg.mxu0
  %v4217 = vadd.f32 %v4047, %v4209
  %v4218 = vadd.f32 %v4048, %v4214
  %s4219 = sld [smem:[#allocation3]]
  %v4220 = vstv %s4219
  %v4221 = vadd.f32 %v4217, %v4220
  %v4222 = vadd.f32 %v4218, %v4220
  %v4223 = vxor.u32 %v4221, 2147483648
  %v4224 = vxor.u32 %v4222, 2147483648
  %v4225 = vmul.f32 %v4223, 1.442695
  %v4226 = vpow.pop %v4225
  %v4227 = vmul.f32 %v4224, 1.442695
  %v4228 = vpow.pop %v4227
  %v4229 = vadd.f32 %v4226, 1.0
  %v4230 = vadd.f32 %v4228, 1.0
  %v4231 = vrcp.pop %v4229
  %v4232 = vmul.f32 1.0, %v4231
  %v4233 = vrcp.pop %v4230
  %v4234 = vmul.f32 1.0, %v4233
  %v4236 = vsel %vm2936, %v4232, 0
  %v4239 = vsel %vm2936, %v4234, 0
  %4241 = vmatprep.subr.mxu0 0.0
  %4242 = vmatpush1.msra.mxu0 0.0
  %4243 = vmatprep.subr.mxu0 0.0
  %4244 = vmatpush1.msra.mxu0 0.0
  %4245 = vmatprep.subr.mxu0 0.0
  %4246 = vmatpush1.msra.mxu0 0.0
  %4247 = vmatprep.subr.mxu0 0.0
  %4248 = vmatpush1.msra.mxu0 0.0
  %4249 = vmatprep.subr.mxu0 0.0
  %4250 = vmatpush1.msra.mxu0 0.0
  %4251 = vmatprep.subr.mxu0 0.0
  %4252 = vmatpush1.msra.mxu0 0.0
  %4253 = vmatprep.subr.mxu0 0.0
  %4254 = vmatpush1.msra.mxu0 0.0
  %4255 = vmatprep.subr.mxu0 0.0
  %4256 = vmatpush1.msra.mxu0 0.0
  %4257 = vmatprep.subr.mxu0 0.0
  %4258 = vmatpush1.msra.mxu0 0.0
  %4259 = vmatprep.subr.mxu0 0.0
  %4260 = vmatpush1.msra.mxu0 0.0
  %4261 = vmatprep.subr.mxu0 0.0
  %4262 = vmatpush1.msra.mxu0 0.0
  %4263 = vmatprep.subr.mxu0 0.0
  %4264 = vmatpush1.msra.mxu0 0.0
  %4265 = vmatprep.subr.mxu0 0.0
  %4266 = vmatpush1.msra.mxu0 0.0
  %4267 = vmatprep.subr.mxu0 0.0
  %4268 = vmatpush1.msra.mxu0 0.0
  %4269 = vmatprep.subr.mxu0 %v2698
  %4270 = vmatpush1.msra.mxu0 %v2697
  %4271 = vmatprep.subr.mxu0 %v2696
  %4272 = vmatpush1.msra.mxu0 %v2695
  %4273 = vmatprep.subr.mxu0 0.0
  %4274 = vmatpush2.msra.mxu0 0.0
  %4275 = vmatprep.subr.mxu0 0.0
  %4276 = vmatpush2.msra.mxu0 0.0
  %4277 = vmatprep.subr.mxu0 0.0
  %4278 = vmatpush2.msra.mxu0 0.0
  %4279 = vmatprep.subr.mxu0 0.0
  %4280 = vmatpush2.msra.mxu0 0.0
  %4281 = vmatprep.subr.mxu0 0.0
  %4282 = vmatpush2.msra.mxu0 0.0
  %4283 = vmatprep.subr.mxu0 0.0
  %4284 = vmatpush2.msra.mxu0 0.0
  %4285 = vmatprep.subr.mxu0 0.0
  %4286 = vmatpush2.msra.mxu0 0.0
  %4287 = vmatprep.subr.mxu0 0.0
  %4288 = vmatpush2.msra.mxu0 0.0
  %4289 = vmatprep.subr.mxu0 0.0
  %4290 = vmatpush2.msra.mxu0 0.0
  %4291 = vmatprep.subr.mxu0 0.0
  %4292 = vmatpush2.msra.mxu0 0.0
  %4293 = vmatprep.subr.mxu0 0.0
  %4294 = vmatpush2.msra.mxu0 0.0
  %4295 = vmatprep.subr.mxu0 0.0
  %4296 = vmatpush2.msra.mxu0 0.0
  %4297 = vmatprep.subr.mxu0 0.0
  %4298 = vmatpush2.msra.mxu0 0.0
  %4299 = vmatprep.subr.mxu0 0.0
  %4300 = vmatpush2.msra.mxu0 0.0
  %4301 = vmatprep.subr.mxu0 0.0
  %4302 = vmatpush2.msra.mxu0 0.0
  %4303 = vmatprep.subr.mxu0 0.0
  %4304 = vmatpush2.msra.mxu0 0.0
  %4305 = vmatprep.mubr.f32.mxu0 0.0
  %4306 = vmatmul.mubr.f32.gmra.mxu0 %v4236
  %v4307 = vpop.f32.mrf.mxu0
  %v4308 = vadd.f32 0.0, %v4307
  %v4309 = vpop.f32.mrf.mxu0
  %v4310 = vadd.f32 0.0, %v4309
  %4311 = vmatprep.mubr.f32.mxu0 0.0
  %4312 = vmatmul.mubr.f32.gmra.mxu0 %v4239
  %v4313 = vpop.f32.mrf.mxu0
  %v4314 = vadd.f32 0.0, %v4313
  %v4315 = vpop.f32.mrf.mxu0
  %v4316 = vadd.f32 0.0, %v4315
  %4317 = vdwg.mxu0
  %v4318 = vmul.f32 %v4308, %v2659
  %v4319 = vmul.f32 %v4310, %v2660
  %v4320 = vmul.f32 %v4314, %v2661
  %v4321 = vmul.f32 %v4316, %v2662
  %v4322 = vadd.f32 %v4318, %v4320
  %v4323 = vrot.slane %v4322, 4
  %v4324 = vadd.f32 %v4322, %v4323
  %v4325 = vrot.slane %v4324, 2
  %v4326 = vadd.f32 %v4324, %v4325
  %v4327 = vrot.slane %v4326, 1
  %v4328 = vadd.f32 %v4326, %v4327
  %v4329 = vadd.f32 %v4319, %v4321
  %v4330 = vrot.slane %v4329, 4
  %v4331 = vadd.f32 %v4329, %v4330
  %v4332 = vrot.slane %v4331, 2
  %v4333 = vadd.f32 %v4331, %v4332
  %v4334 = vrot.slane %v4333, 1
  %v4335 = vadd.f32 %v4333, %v4334
  %v4336 = vmul.f32 %v2339, %v4328
  %v4337 = vmul.f32 %v2340, %v4335
  %v4338 = vmul.f32 %v2341, %v4328
  %v4339 = vmul.f32 %v2342, %v4335
  %v4340 = vmul.f32 %v2343, %v4328
  %v4341 = vmul.f32 %v2344, %v4335
  %v4342 = vmul.f32 %v2345, %v4328
  %v4343 = vmul.f32 %v2346, %v4335
  %v4344 = vmul.f32 %v2659, %v2621
  %v4345 = vmul.f32 %v2660, %v2622
  %v4346 = vmul.f32 %v2661, %v2621
  %v4347 = vmul.f32 %v2662, %v2622
  %4348 = vmatprep.subr.mxu0 0.0
  %4349 = vmatpush1.msra.mxu0 %v2678
  %4350 = vmatprep.subr.mxu0 0.0
  %4351 = vmatpush1.msra.mxu0 %v2677
  %4352 = vmatprep.subr.mxu0 0.0
  %4353 = vmatpush1.msra.mxu0 %v2676
  %4354 = vmatprep.subr.mxu0 0.0
  %4355 = vmatpush1.msra.mxu0 %v2675
  %4356 = vmatprep.subr.mxu0 0.0
  %4357 = vmatpush1.msra.mxu0 %v2674
  %4358 = vmatprep.subr.mxu0 0.0
  %4359 = vmatpush1.msra.mxu0 %v2673
  %4360 = vmatprep.subr.mxu0 0.0
  %4361 = vmatpush1.msra.mxu0 %v2672
  %4362 = vmatprep.subr.mxu0 0.0
  %4363 = vmatpush1.msra.mxu0 %v2671
  %4364 = vmatprep.subr.mxu0 0.0
  %4365 = vmatpush1.msra.mxu0 %v2670
  %4366 = vmatprep.subr.mxu0 0.0
  %4367 = vmatpush1.msra.mxu0 %v2669
  %4368 = vmatprep.subr.mxu0 0.0
  %4369 = vmatpush1.msra.mxu0 %v2668
  %4370 = vmatprep.subr.mxu0 0.0
  %4371 = vmatpush1.msra.mxu0 %v2667
  %4372 = vmatprep.subr.mxu0 0.0
  %4373 = vmatpush1.msra.mxu0 %v2666
  %4374 = vmatprep.subr.mxu0 0.0
  %4375 = vmatpush1.msra.mxu0 %v2665
  %4376 = vmatprep.subr.mxu0 0.0
  %4377 = vmatpush1.msra.mxu0 %v2664
  %4378 = vmatprep.subr.mxu0 0.0
  %4379 = vmatpush1.msra.mxu0 %v2663
  %4380 = vmatprep.subr.mxu0 0.0
  %4381 = vmatpush2.msra.mxu0 %v2694
  %4382 = vmatprep.subr.mxu0 0.0
  %4383 = vmatpush2.msra.mxu0 %v2693
  %4384 = vmatprep.subr.mxu0 0.0
  %4385 = vmatpush2.msra.mxu0 %v2692
  %4386 = vmatprep.subr.mxu0 0.0
  %4387 = vmatpush2.msra.mxu0 %v2691
  %4388 = vmatprep.subr.mxu0 0.0
  %4389 = vmatpush2.msra.mxu0 %v2690
  %4390 = vmatprep.subr.mxu0 0.0
  %4391 = vmatpush2.msra.mxu0 %v2689
  %4392 = vmatprep.subr.mxu0 0.0
  %4393 = vmatpush2.msra.mxu0 %v2688
  %4394 = vmatprep.subr.mxu0 0.0
  %4395 = vmatpush2.msra.mxu0 %v2687
  %4396 = vmatprep.subr.mxu0 0.0
  %4397 = vmatpush2.msra.mxu0 %v2686
  %4398 = vmatprep.subr.mxu0 0.0
  %4399 = vmatpush2.msra.mxu0 %v2685
  %4400 = vmatprep.subr.mxu0 0.0
  %4401 = vmatpush2.msra.mxu0 %v2684
  %4402 = vmatprep.subr.mxu0 0.0
  %4403 = vmatpush2.msra.mxu0 %v2683
  %4404 = vmatprep.subr.mxu0 0.0
  %4405 = vmatpush2.msra.mxu0 %v2682
  %4406 = vmatprep.subr.mxu0 0.0
  %4407 = vmatpush2.msra.mxu0 %v2681
  %4408 = vmatprep.subr.mxu0 0.0
  %4409 = vmatpush2.msra.mxu0 %v2680
  %4410 = vmatprep.subr.mxu0 0.0
  %4411 = vmatpush2.msra.mxu0 %v2679
  %4412 = vmatprep.mubr.f32.mxu0 %v4345
  %4413 = vmatmul.mubr.f32.gmra.mxu0 %v4344
  %v4414 = vpop.f32.mrf.mxu0
  %v4415 = vadd.f32 0.0, %v4414
  %v4416 = vpop.f32.mrf.mxu0
  %4417 = vmatprep.mubr.f32.mxu0 %v4347
  %4418 = vmatmul.mubr.f32.gmra.mxu0 %v4346
  %v4419 = vpop.f32.mrf.mxu0
  %v4420 = vadd.f32 0.0, %v4419
  %v4421 = vpop.f32.mrf.mxu0
  %4422 = vdwg.mxu0
  %v4423 = vmul.f32 %v2659, %v2649
  %v4424 = vmul.f32 %v2660, %v2658
  %v4425 = vmul.f32 %v2661, %v2649
  %v4426 = vmul.f32 %v2662, %v2658
  %4427 = vmatprep.subr.mxu0 0.0
  %4428 = vmatpush1.msra.mxu0 %v2678
  %4429 = vmatprep.subr.mxu0 0.0
  %4430 = vmatpush1.msra.mxu0 %v2677
  %4431 = vmatprep.subr.mxu0 0.0
  %4432 = vmatpush1.msra.mxu0 %v2676
  %4433 = vmatprep.subr.mxu0 0.0
  %4434 = vmatpush1.msra.mxu0 %v2675
  %4435 = vmatprep.subr.mxu0 0.0
  %4436 = vmatpush1.msra.mxu0 %v2674
  %4437 = vmatprep.subr.mxu0 0.0
  %4438 = vmatpush1.msra.mxu0 %v2673
  %4439 = vmatprep.subr.mxu0 0.0
  %4440 = vmatpush1.msra.mxu0 %v2672
  %4441 = vmatprep.subr.mxu0 0.0
  %4442 = vmatpush1.msra.mxu0 %v2671
  %4443 = vmatprep.subr.mxu0 0.0
  %4444 = vmatpush1.msra.mxu0 %v2670
  %4445 = vmatprep.subr.mxu0 0.0
  %4446 = vmatpush1.msra.mxu0 %v2669
  %4447 = vmatprep.subr.mxu0 0.0
  %4448 = vmatpush1.msra.mxu0 %v2668
  %4449 = vmatprep.subr.mxu0 0.0
  %4450 = vmatpush1.msra.mxu0 %v2667
  %4451 = vmatprep.subr.mxu0 0.0
  %4452 = vmatpush1.msra.mxu0 %v2666
  %4453 = vmatprep.subr.mxu0 0.0
  %4454 = vmatpush1.msra.mxu0 %v2665
  %4455 = vmatprep.subr.mxu0 0.0
  %4456 = vmatpush1.msra.mxu0 %v2664
  %4457 = vmatprep.subr.mxu0 0.0
  %4458 = vmatpush1.msra.mxu0 %v2663
  %4459 = vmatprep.subr.mxu0 0.0
  %4460 = vmatpush2.msra.mxu0 %v2694
  %4461 = vmatprep.subr.mxu0 0.0
  %4462 = vmatpush2.msra.mxu0 %v2693
  %4463 = vmatprep.subr.mxu0 0.0
  %4464 = vmatpush2.msra.mxu0 %v2692
  %4465 = vmatprep.subr.mxu0 0.0
  %4466 = vmatpush2.msra.mxu0 %v2691
  %4467 = vmatprep.subr.mxu0 0.0
  %4468 = vmatpush2.msra.mxu0 %v2690
  %4469 = vmatprep.subr.mxu0 0.0
  %4470 = vmatpush2.msra.mxu0 %v2689
  %4471 = vmatprep.subr.mxu0 0.0
  %4472 = vmatpush2.msra.mxu0 %v2688
  %4473 = vmatprep.subr.mxu0 0.0
  %4474 = vmatpush2.msra.mxu0 %v2687
  %4475 = vmatprep.subr.mxu0 0.0
  %4476 = vmatpush2.msra.mxu0 %v2686
  %4477 = vmatprep.subr.mxu0 0.0
  %4478 = vmatpush2.msra.mxu0 %v2685
  %4479 = vmatprep.subr.mxu0 0.0
  %4480 = vmatpush2.msra.mxu0 %v2684
  %4481 = vmatprep.subr.mxu0 0.0
  %4482 = vmatpush2.msra.mxu0 %v2683
  %4483 = vmatprep.subr.mxu0 0.0
  %4484 = vmatpush2.msra.mxu0 %v2682
  %4485 = vmatprep.subr.mxu0 0.0
  %4486 = vmatpush2.msra.mxu0 %v2681
  %4487 = vmatprep.subr.mxu0 0.0
  %4488 = vmatpush2.msra.mxu0 %v2680
  %4489 = vmatprep.subr.mxu0 0.0
  %4490 = vmatpush2.msra.mxu0 %v2679
  %4491 = vmatprep.mubr.f32.mxu0 %v4424
  %4492 = vmatmul.mubr.f32.gmra.mxu0 %v4423
  %v4493 = vpop.f32.mrf.mxu0
  %v4494 = vadd.f32 0.0, %v4493
  %v4495 = vpop.f32.mrf.mxu0
  %4496 = vmatprep.mubr.f32.mxu0 %v4426
  %4497 = vmatmul.mubr.f32.gmra.mxu0 %v4425
  %v4498 = vpop.f32.mrf.mxu0
  %v4499 = vadd.f32 0.0, %v4498
  %v4500 = vpop.f32.mrf.mxu0
  %4501 = vdwg.mxu0
  %v4502 = vmul.f32 %v2659, %v2581
  %v4503 = vmul.f32 %v2660, %v2582
  %v4504 = vmul.f32 %v2661, %v2581
  %v4505 = vmul.f32 %v2662, %v2582
  %4506 = vmatprep.subr.mxu0 0.0
  %4507 = vmatpush1.msra.mxu0 %v2678
  %4508 = vmatprep.subr.mxu0 0.0
  %4509 = vmatpush1.msra.mxu0 %v2677
  %4510 = vmatprep.subr.mxu0 0.0
  %4511 = vmatpush1.msra.mxu0 %v2676
  %4512 = vmatprep.subr.mxu0 0.0
  %4513 = vmatpush1.msra.mxu0 %v2675
  %4514 = vmatprep.subr.mxu0 0.0
  %4515 = vmatpush1.msra.mxu0 %v2674
  %4516 = vmatprep.subr.mxu0 0.0
  %4517 = vmatpush1.msra.mxu0 %v2673
  %4518 = vmatprep.subr.mxu0 0.0
  %4519 = vmatpush1.msra.mxu0 %v2672
  %4520 = vmatprep.subr.mxu0 0.0
  %4521 = vmatpush1.msra.mxu0 %v2671
  %4522 = vmatprep.subr.mxu0 0.0
  %4523 = vmatpush1.msra.mxu0 %v2670
  %4524 = vmatprep.subr.mxu0 0.0
  %4525 = vmatpush1.msra.mxu0 %v2669
  %4526 = vmatprep.subr.mxu0 0.0
  %4527 = vmatpush1.msra.mxu0 %v2668
  %4528 = vmatprep.subr.mxu0 0.0
  %4529 = vmatpush1.msra.mxu0 %v2667
  %4530 = vmatprep.subr.mxu0 0.0
  %4531 = vmatpush1.msra.mxu0 %v2666
  %4532 = vmatprep.subr.mxu0 0.0
  %4533 = vmatpush1.msra.mxu0 %v2665
  %4534 = vmatprep.subr.mxu0 0.0
  %4535 = vmatpush1.msra.mxu0 %v2664
  %4536 = vmatprep.subr.mxu0 0.0
  %4537 = vmatpush1.msra.mxu0 %v2663
  %4538 = vmatprep.subr.mxu0 0.0
  %4539 = vmatpush2.msra.mxu0 %v2694
  %4540 = vmatprep.subr.mxu0 0.0
  %4541 = vmatpush2.msra.mxu0 %v2693
  %4542 = vmatprep.subr.mxu0 0.0
  %4543 = vmatpush2.msra.mxu0 %v2692
  %4544 = vmatprep.subr.mxu0 0.0
  %4545 = vmatpush2.msra.mxu0 %v2691
  %4546 = vmatprep.subr.mxu0 0.0
  %4547 = vmatpush2.msra.mxu0 %v2690
  %4548 = vmatprep.subr.mxu0 0.0
  %4549 = vmatpush2.msra.mxu0 %v2689
  %4550 = vmatprep.subr.mxu0 0.0
  %4551 = vmatpush2.msra.mxu0 %v2688
  %4552 = vmatprep.subr.mxu0 0.0
  %4553 = vmatpush2.msra.mxu0 %v2687
  %4554 = vmatprep.subr.mxu0 0.0
  %4555 = vmatpush2.msra.mxu0 %v2686
  %4556 = vmatprep.subr.mxu0 0.0
  %4557 = vmatpush2.msra.mxu0 %v2685
  %4558 = vmatprep.subr.mxu0 0.0
  %4559 = vmatpush2.msra.mxu0 %v2684
  %4560 = vmatprep.subr.mxu0 0.0
  %4561 = vmatpush2.msra.mxu0 %v2683
  %4562 = vmatprep.subr.mxu0 0.0
  %4563 = vmatpush2.msra.mxu0 %v2682
  %4564 = vmatprep.subr.mxu0 0.0
  %4565 = vmatpush2.msra.mxu0 %v2681
  %4566 = vmatprep.subr.mxu0 0.0
  %4567 = vmatpush2.msra.mxu0 %v2680
  %4568 = vmatprep.subr.mxu0 0.0
  %4569 = vmatpush2.msra.mxu0 %v2679
  %4570 = vmatprep.mubr.f32.mxu0 %v4503
  %4571 = vmatmul.mubr.f32.gmra.mxu0 %v4502
  %v4572 = vpop.f32.mrf.mxu0
  %v4573 = vadd.f32 0.0, %v4572
  %v4574 = vpop.f32.mrf.mxu0
  %4575 = vmatprep.mubr.f32.mxu0 %v4505
  %4576 = vmatmul.mubr.f32.gmra.mxu0 %v4504
  %v4577 = vpop.f32.mrf.mxu0
  %v4578 = vadd.f32 0.0, %v4577
  %v4579 = vpop.f32.mrf.mxu0
  %4580 = vdwg.mxu0
  %v4582 = vsel %vm2936, %v4415, 0
  %v4585 = vsel %vm2936, %v4420, 0
  %v4588 = vsel %vm2936, %v4494, 0
  %v4591 = vsel %vm2936, %v4499, 0
  %4593 = vmatprep.subr.mxu0 0.0
  %4594 = vmatpush1.msra.mxu0 0.0
  %4595 = vmatprep.subr.mxu0 0.0
  %4596 = vmatpush1.msra.mxu0 0.0
  %4597 = vmatprep.subr.mxu0 0.0
  %4598 = vmatpush1.msra.mxu0 0.0
  %4599 = vmatprep.subr.mxu0 0.0
  %4600 = vmatpush1.msra.mxu0 0.0
  %4601 = vmatprep.subr.mxu0 0.0
  %4602 = vmatpush1.msra.mxu0 0.0
  %4603 = vmatprep.subr.mxu0 0.0
  %4604 = vmatpush1.msra.mxu0 0.0
  %4605 = vmatprep.subr.mxu0 0.0
  %4606 = vmatpush1.msra.mxu0 0.0
  %4607 = vmatprep.subr.mxu0 0.0
  %4608 = vmatpush1.msra.mxu0 0.0
  %4609 = vmatprep.subr.mxu0 0.0
  %4610 = vmatpush1.msra.mxu0 0.0
  %4611 = vmatprep.subr.mxu0 0.0
  %4612 = vmatpush1.msra.mxu0 0.0
  %4613 = vmatprep.subr.mxu0 0.0
  %4614 = vmatpush1.msra.mxu0 0.0
  %4615 = vmatprep.subr.mxu0 0.0
  %4616 = vmatpush1.msra.mxu0 0.0
  %4617 = vmatprep.subr.mxu0 0.0
  %4618 = vmatpush1.msra.mxu0 0.0
  %4619 = vmatprep.subr.mxu0 0.0
  %4620 = vmatpush1.msra.mxu0 0.0
  %4621 = vmatprep.subr.mxu0 0.0
  %4622 = vmatpush1.msra.mxu0 %v4578
  %4623 = vmatprep.subr.mxu0 0.0
  %4624 = vmatpush1.msra.mxu0 %v4573
  %4625 = vmatprep.subr.mxu0 0.0
  %4626 = vmatpush2.msra.mxu0 0.0
  %4627 = vmatprep.subr.mxu0 0.0
  %4628 = vmatpush2.msra.mxu0 0.0
  %4629 = vmatprep.subr.mxu0 0.0
  %4630 = vmatpush2.msra.mxu0 0.0
  %4631 = vmatprep.subr.mxu0 0.0
  %4632 = vmatpush2.msra.mxu0 0.0
  %4633 = vmatprep.subr.mxu0 0.0
  %4634 = vmatpush2.msra.mxu0 0.0
  %4635 = vmatprep.subr.mxu0 0.0
  %4636 = vmatpush2.msra.mxu0 0.0
  %4637 = vmatprep.subr.mxu0 0.0
  %4638 = vmatpush2.msra.mxu0 0.0
  %4639 = vmatprep.subr.mxu0 0.0
  %4640 = vmatpush2.msra.mxu0 0.0
  %4641 = vmatprep.subr.mxu0 0.0
  %4642 = vmatpush2.msra.mxu0 0.0
  %4643 = vmatprep.subr.mxu0 0.0
  %4644 = vmatpush2.msra.mxu0 0.0
  %4645 = vmatprep.subr.mxu0 0.0
  %4646 = vmatpush2.msra.mxu0 0.0
  %4647 = vmatprep.subr.mxu0 0.0
  %4648 = vmatpush2.msra.mxu0 0.0
  %4649 = vmatprep.subr.mxu0 0.0
  %4650 = vmatpush2.msra.mxu0 0.0
  %4651 = vmatprep.subr.mxu0 0.0
  %4652 = vmatpush2.msra.mxu0 0.0
  %4653 = vmatprep.subr.mxu0 0.0
  %4654 = vmatpush2.msra.mxu0 0.0
  %4655 = vmatprep.subr.mxu0 0.0
  %4656 = vmatpush2.msra.mxu0 0.0
  %4657 = vmatprep.mubr.f32.mxu0 0.0
  %4658 = vmatmul.mubr.f32.gmra.mxu0 %v4582
  %v4659 = vpop.f32.mrf.mxu0
  %v4660 = vadd.f32 0.0, %v4659
  %v4661 = vpop.f32.mrf.mxu0
  %4662 = vmatprep.mubr.f32.mxu0 0.0
  %4663 = vmatmul.mubr.f32.gmra.mxu0 %v4585
  %v4664 = vpop.f32.mrf.mxu0
  %v4665 = vadd.f32 0.0, %v4664
  %v4666 = vpop.f32.mrf.mxu0
  %4667 = vmatprep.mubr.f32.mxu0 0.0
  %4668 = vmatmul.mubr.f32.gmra.mxu0 %v4588
  %v4669 = vpop.f32.mrf.mxu0
  %v4670 = vadd.f32 0.0, %v4669
  %v4671 = vpop.f32.mrf.mxu0
  %4672 = vmatprep.mubr.f32.mxu0 0.0
  %4673 = vmatmul.mubr.f32.gmra.mxu0 %v4591
  %v4674 = vpop.f32.mrf.mxu0
  %v4675 = vadd.f32 0.0, %v4674
  %v4676 = vpop.f32.mrf.mxu0
  %4677 = vdwg.mxu0
  %4678 = vmatprep.subr.mxu0 0.0
  %4679 = vmatpush1.msra.mxu0 0.0
  %4680 = vmatprep.subr.mxu0 0.0
  %4681 = vmatpush1.msra.mxu0 0.0
  %4682 = vmatprep.subr.mxu0 0.0
  %4683 = vmatpush1.msra.mxu0 0.0
  %4684 = vmatprep.subr.mxu0 0.0
  %4685 = vmatpush1.msra.mxu0 0.0
  %4686 = vmatprep.subr.mxu0 0.0
  %4687 = vmatpush1.msra.mxu0 0.0
  %4688 = vmatprep.subr.mxu0 0.0
  %4689 = vmatpush1.msra.mxu0 0.0
  %4690 = vmatprep.subr.mxu0 0.0
  %4691 = vmatpush1.msra.mxu0 0.0
  %4692 = vmatprep.subr.mxu0 0.0
  %4693 = vmatpush1.msra.mxu0 0.0
  %4694 = vmatprep.subr.mxu0 0.0
  %4695 = vmatpush1.msra.mxu0 0.0
  %4696 = vmatprep.subr.mxu0 0.0
  %4697 = vmatpush1.msra.mxu0 0.0
  %4698 = vmatprep.subr.mxu0 0.0
  %4699 = vmatpush1.msra.mxu0 0.0
  %4700 = vmatprep.subr.mxu0 0.0
  %4701 = vmatpush1.msra.mxu0 0.0
  %4702 = vmatprep.subr.mxu0 0.0
  %4703 = vmatpush1.msra.mxu0 %v4675
  %4704 = vmatprep.subr.mxu0 0.0
  %4705 = vmatpush1.msra.mxu0 %v4670
  %4706 = vmatprep.subr.mxu0 0.0
  %4707 = vmatpush1.msra.mxu0 %v4665
  %4708 = vmatprep.subr.mxu0 0.0
  %4709 = vmatpush1.msra.mxu0 %v4660
  %4710 = vmatprep.subr.mxu0 0.0
  %4711 = vmatpush2.msra.mxu0 0.0
  %4712 = vmatprep.subr.mxu0 0.0
  %4713 = vmatpush2.msra.mxu0 0.0
  %4714 = vmatprep.subr.mxu0 0.0
  %4715 = vmatpush2.msra.mxu0 0.0
  %4716 = vmatprep.subr.mxu0 0.0
  %4717 = vmatpush2.msra.mxu0 0.0
  %4718 = vmatprep.subr.mxu0 0.0
  %4719 = vmatpush2.msra.mxu0 0.0
  %4720 = vmatprep.subr.mxu0 0.0
  %4721 = vmatpush2.msra.mxu0 0.0
  %4722 = vmatprep.subr.mxu0 0.0
  %4723 = vmatpush2.msra.mxu0 0.0
  %4724 = vmatprep.subr.mxu0 0.0
  %4725 = vmatpush2.msra.mxu0 0.0
  %4726 = vmatprep.subr.mxu0 0.0
  %4727 = vmatpush2.msra.mxu0 0.0
  %4728 = vmatprep.subr.mxu0 0.0
  %4729 = vmatpush2.msra.mxu0 0.0
  %4730 = vmatprep.subr.mxu0 0.0
  %4731 = vmatpush2.msra.mxu0 0.0
  %4732 = vmatprep.subr.mxu0 0.0
  %4733 = vmatpush2.msra.mxu0 0.0
  %4734 = vmatprep.subr.mxu0 0.0
  %4735 = vmatpush2.msra.mxu0 0.0
  %4736 = vmatprep.subr.mxu0 0.0
  %4737 = vmatpush2.msra.mxu0 0.0
  %4738 = vmatprep.subr.mxu0 0.0
  %4739 = vmatpush2.msra.mxu0 0.0
  %4740 = vmatprep.subr.mxu0 0.0
  %4741 = vmatpush2.msra.mxu0 0.0
  %4742 = vmatprep.mubr.f32.mxu0 0.0
  %4743 = vmatmul.mubr.f32.gmra.mxu0 %v3038
  %v4744 = vpop.f32.mrf.mxu0
  %v4745 = vadd.f32 0.0, %v4744
  %v4746 = vpop.f32.mrf.mxu0
  %4747 = vmatprep.mubr.f32.mxu0 0.0
  %4748 = vmatmul.mubr.f32.gmra.mxu0 %v3041
  %v4749 = vpop.f32.mrf.mxu0
  %v4750 = vadd.f32 0.0, %v4749
  %v4751 = vpop.f32.mrf.mxu0
  %4752 = vdwg.mxu0
  %4753 = vmatprep.subr.mxu0 0.0
  %4754 = vmatpush1.msra.mxu0 0.0
  %4755 = vmatprep.subr.mxu0 0.0
  %4756 = vmatpush1.msra.mxu0 0.0
  %4757 = vmatprep.subr.mxu0 0.0
  %4758 = vmatpush1.msra.mxu0 0.0
  %4759 = vmatprep.subr.mxu0 0.0
  %4760 = vmatpush1.msra.mxu0 0.0
  %4761 = vmatprep.subr.mxu0 0.0
  %4762 = vmatpush1.msra.mxu0 0.0
  %4763 = vmatprep.subr.mxu0 0.0
  %4764 = vmatpush1.msra.mxu0 0.0
  %4765 = vmatprep.subr.mxu0 0.0
  %4766 = vmatpush1.msra.mxu0 0.0
  %4767 = vmatprep.subr.mxu0 0.0
  %4768 = vmatpush1.msra.mxu0 0.0
  %4769 = vmatprep.subr.mxu0 0.0
  %4770 = vmatpush1.msra.mxu0 0.0
  %4771 = vmatprep.subr.mxu0 0.0
  %4772 = vmatpush1.msra.mxu0 0.0
  %4773 = vmatprep.subr.mxu0 0.0
  %4774 = vmatpush1.msra.mxu0 0.0
  %4775 = vmatprep.subr.mxu0 0.0
  %4776 = vmatpush1.msra.mxu0 0.0
  %4777 = vmatprep.subr.mxu0 0.0
  %4778 = vmatpush1.msra.mxu0 %v4675
  %4779 = vmatprep.subr.mxu0 0.0
  %4780 = vmatpush1.msra.mxu0 %v4670
  %4781 = vmatprep.subr.mxu0 0.0
  %4782 = vmatpush1.msra.mxu0 %v4665
  %4783 = vmatprep.subr.mxu0 0.0
  %4784 = vmatpush1.msra.mxu0 %v4660
  %4785 = vmatprep.subr.mxu0 0.0
  %4786 = vmatpush2.msra.mxu0 0.0
  %4787 = vmatprep.subr.mxu0 0.0
  %4788 = vmatpush2.msra.mxu0 0.0
  %4789 = vmatprep.subr.mxu0 0.0
  %4790 = vmatpush2.msra.mxu0 0.0
  %4791 = vmatprep.subr.mxu0 0.0
  %4792 = vmatpush2.msra.mxu0 0.0
  %4793 = vmatprep.subr.mxu0 0.0
  %4794 = vmatpush2.msra.mxu0 0.0
  %4795 = vmatprep.subr.mxu0 0.0
  %4796 = vmatpush2.msra.mxu0 0.0
  %4797 = vmatprep.subr.mxu0 0.0
  %4798 = vmatpush2.msra.mxu0 0.0
  %4799 = vmatprep.subr.mxu0 0.0
  %4800 = vmatpush2.msra.mxu0 0.0
  %4801 = vmatprep.subr.mxu0 0.0
  %4802 = vmatpush2.msra.mxu0 0.0
  %4803 = vmatprep.subr.mxu0 0.0
  %4804 = vmatpush2.msra.mxu0 0.0
  %4805 = vmatprep.subr.mxu0 0.0
  %4806 = vmatpush2.msra.mxu0 0.0
  %4807 = vmatprep.subr.mxu0 0.0
  %4808 = vmatpush2.msra.mxu0 0.0
  %4809 = vmatprep.subr.mxu0 0.0
  %4810 = vmatpush2.msra.mxu0 0.0
  %4811 = vmatprep.subr.mxu0 0.0
  %4812 = vmatpush2.msra.mxu0 0.0
  %4813 = vmatprep.subr.mxu0 0.0
  %4814 = vmatpush2.msra.mxu0 0.0
  %4815 = vmatprep.subr.mxu0 0.0
  %4816 = vmatpush2.msra.mxu0 0.0
  %4817 = vmatprep.mubr.f32.mxu0 0.0
  %4818 = vmatmul.mubr.f32.gmra.mxu0 %v3124
  %v4819 = vpop.f32.mrf.mxu0
  %v4820 = vadd.f32 0.0, %v4819
  %v4821 = vpop.f32.mrf.mxu0
  %4822 = vmatprep.mubr.f32.mxu0 0.0
  %4823 = vmatmul.mubr.f32.gmra.mxu0 %v3127
  %v4824 = vpop.f32.mrf.mxu0
  %v4825 = vadd.f32 0.0, %v4824
  %v4826 = vpop.f32.mrf.mxu0
  %4827 = vdwg.mxu0
  %v4829 = vsel %vm2936, %v4820, 0
  %v4832 = vsel %vm2936, %v4825, 0
  %4834 = vmatprep.subr.mxu0 0.0
  %4835 = vmatpush1.msra.mxu0 0.0
  %4836 = vmatprep.subr.mxu0 0.0
  %4837 = vmatpush1.msra.mxu0 0.0
  %4838 = vmatprep.subr.mxu0 0.0
  %4839 = vmatpush1.msra.mxu0 0.0
  %4840 = vmatprep.subr.mxu0 0.0
  %4841 = vmatpush1.msra.mxu0 0.0
  %4842 = vmatprep.subr.mxu0 0.0
  %4843 = vmatpush1.msra.mxu0 0.0
  %4844 = vmatprep.subr.mxu0 0.0
  %4845 = vmatpush1.msra.mxu0 0.0
  %4846 = vmatprep.subr.mxu0 0.0
  %4847 = vmatpush1.msra.mxu0 0.0
  %4848 = vmatprep.subr.mxu0 0.0
  %4849 = vmatpush1.msra.mxu0 0.0
  %4850 = vmatprep.subr.mxu0 0.0
  %4851 = vmatpush1.msra.mxu0 0.0
  %4852 = vmatprep.subr.mxu0 0.0
  %4853 = vmatpush1.msra.mxu0 0.0
  %4854 = vmatprep.subr.mxu0 0.0
  %4855 = vmatpush1.msra.mxu0 0.0
  %4856 = vmatprep.subr.mxu0 0.0
  %4857 = vmatpush1.msra.mxu0 0.0
  %4858 = vmatprep.subr.mxu0 0.0
  %4859 = vmatpush1.msra.mxu0 0.0
  %4860 = vmatprep.subr.mxu0 0.0
  %4861 = vmatpush1.msra.mxu0 0.0
  %4862 = vmatprep.subr.mxu0 0.0
  %4863 = vmatpush1.msra.mxu0 %v3206
  %4864 = vmatprep.subr.mxu0 0.0
  %4865 = vmatpush1.msra.mxu0 %v3205
  %4866 = vmatprep.subr.mxu0 0.0
  %4867 = vmatpush2.msra.mxu0 0.0
  %4868 = vmatprep.subr.mxu0 0.0
  %4869 = vmatpush2.msra.mxu0 0.0
  %4870 = vmatprep.subr.mxu0 0.0
  %4871 = vmatpush2.msra.mxu0 0.0
  %4872 = vmatprep.subr.mxu0 0.0
  %4873 = vmatpush2.msra.mxu0 0.0
  %4874 = vmatprep.subr.mxu0 0.0
  %4875 = vmatpush2.msra.mxu0 0.0
  %4876 = vmatprep.subr.mxu0 0.0
  %4877 = vmatpush2.msra.mxu0 0.0
  %4878 = vmatprep.subr.mxu0 0.0
  %4879 = vmatpush2.msra.mxu0 0.0
  %4880 = vmatprep.subr.mxu0 0.0
  %4881 = vmatpush2.msra.mxu0 0.0
  %4882 = vmatprep.subr.mxu0 0.0
  %4883 = vmatpush2.msra.mxu0 0.0
  %4884 = vmatprep.subr.mxu0 0.0
  %4885 = vmatpush2.msra.mxu0 0.0
  %4886 = vmatprep.subr.mxu0 0.0
  %4887 = vmatpush2.msra.mxu0 0.0
  %4888 = vmatprep.subr.mxu0 0.0
  %4889 = vmatpush2.msra.mxu0 0.0
  %4890 = vmatprep.subr.mxu0 0.0
  %4891 = vmatpush2.msra.mxu0 0.0
  %4892 = vmatprep.subr.mxu0 0.0
  %4893 = vmatpush2.msra.mxu0 0.0
  %4894 = vmatprep.subr.mxu0 0.0
  %4895 = vmatpush2.msra.mxu0 0.0
  %4896 = vmatprep.subr.mxu0 0.0
  %4897 = vmatpush2.msra.mxu0 0.0
  %4898 = vmatprep.mubr.f32.mxu0 0.0
  %4899 = vmatmul.mubr.f32.gmra.mxu0 %v4829
  %v4900 = vpop.f32.mrf.mxu0
  %v4901 = vadd.f32 0.0, %v4900
  %v4902 = vpop.f32.mrf.mxu0
  %4903 = vmatprep.mubr.f32.mxu0 0.0
  %4904 = vmatmul.mubr.f32.gmra.mxu0 %v4832
  %v4905 = vpop.f32.mrf.mxu0
  %v4906 = vadd.f32 0.0, %v4905
  %v4907 = vpop.f32.mrf.mxu0
  %4908 = vdwg.mxu0
  %v4910 = vsel %vm2936, %v4745, 0
  %v4913 = vsel %vm2936, %v4750, 0
  %4915 = vmatprep.subr.mxu0 0.0
  %4916 = vmatpush1.msra.mxu0 0.0
  %4917 = vmatprep.subr.mxu0 0.0
  %4918 = vmatpush1.msra.mxu0 0.0
  %4919 = vmatprep.subr.mxu0 0.0
  %4920 = vmatpush1.msra.mxu0 0.0
  %4921 = vmatprep.subr.mxu0 0.0
  %4922 = vmatpush1.msra.mxu0 0.0
  %4923 = vmatprep.subr.mxu0 0.0
  %4924 = vmatpush1.msra.mxu0 0.0
  %4925 = vmatprep.subr.mxu0 0.0
  %4926 = vmatpush1.msra.mxu0 0.0
  %4927 = vmatprep.subr.mxu0 0.0
  %4928 = vmatpush1.msra.mxu0 0.0
  %4929 = vmatprep.subr.mxu0 0.0
  %4930 = vmatpush1.msra.mxu0 0.0
  %4931 = vmatprep.subr.mxu0 0.0
  %4932 = vmatpush1.msra.mxu0 0.0
  %4933 = vmatprep.subr.mxu0 0.0
  %4934 = vmatpush1.msra.mxu0 0.0
  %4935 = vmatprep.subr.mxu0 0.0
  %4936 = vmatpush1.msra.mxu0 0.0
  %4937 = vmatprep.subr.mxu0 0.0
  %4938 = vmatpush1.msra.mxu0 0.0
  %4939 = vmatprep.subr.mxu0 0.0
  %4940 = vmatpush1.msra.mxu0 0.0
  %4941 = vmatprep.subr.mxu0 0.0
  %4942 = vmatpush1.msra.mxu0 0.0
  %4943 = vmatprep.subr.mxu0 0.0
  %4944 = vmatpush1.msra.mxu0 %v3119
  %4945 = vmatprep.subr.mxu0 0.0
  %4946 = vmatpush1.msra.mxu0 %v3118
  %4947 = vmatprep.subr.mxu0 0.0
  %4948 = vmatpush2.msra.mxu0 0.0
  %4949 = vmatprep.subr.mxu0 0.0
  %4950 = vmatpush2.msra.mxu0 0.0
  %4951 = vmatprep.subr.mxu0 0.0
  %4952 = vmatpush2.msra.mxu0 0.0
  %4953 = vmatprep.subr.mxu0 0.0
  %4954 = vmatpush2.msra.mxu0 0.0
  %4955 = vmatprep.subr.mxu0 0.0
  %4956 = vmatpush2.msra.mxu0 0.0
  %4957 = vmatprep.subr.mxu0 0.0
  %4958 = vmatpush2.msra.mxu0 0.0
  %4959 = vmatprep.subr.mxu0 0.0
  %4960 = vmatpush2.msra.mxu0 0.0
  %4961 = vmatprep.subr.mxu0 0.0
  %4962 = vmatpush2.msra.mxu0 0.0
  %4963 = vmatprep.subr.mxu0 0.0
  %4964 = vmatpush2.msra.mxu0 0.0
  %4965 = vmatprep.subr.mxu0 0.0
  %4966 = vmatpush2.msra.mxu0 0.0
  %4967 = vmatprep.subr.mxu0 0.0
  %4968 = vmatpush2.msra.mxu0 0.0
  %4969 = vmatprep.subr.mxu0 0.0
  %4970 = vmatpush2.msra.mxu0 0.0
  %4971 = vmatprep.subr.mxu0 0.0
  %4972 = vmatpush2.msra.mxu0 0.0
  %4973 = vmatprep.subr.mxu0 0.0
  %4974 = vmatpush2.msra.mxu0 0.0
  %4975 = vmatprep.subr.mxu0 0.0
  %4976 = vmatpush2.msra.mxu0 0.0
  %4977 = vmatprep.subr.mxu0 0.0
  %4978 = vmatpush2.msra.mxu0 0.0
  %4979 = vmatprep.mubr.f32.mxu0 0.0
  %4980 = vmatmul.mubr.f32.gmra.mxu0 %v4910
  %v4981 = vpop.f32.mrf.mxu0
  %v4982 = vadd.f32 %v4901, %v4981
  %v4983 = vpop.f32.mrf.mxu0
  %4984 = vmatprep.mubr.f32.mxu0 0.0
  %4985 = vmatmul.mubr.f32.gmra.mxu0 %v4913
  %v4986 = vpop.f32.mrf.mxu0
  %v4987 = vadd.f32 %v4906, %v4986
  %v4988 = vpop.f32.mrf.mxu0
  %4989 = vdwg.mxu0
  %4990 = vmatprep.subr.mxu0 0.0
  %4991 = vmatpush1.msra.mxu0 0.0
  %4992 = vmatprep.subr.mxu0 0.0
  %4993 = vmatpush1.msra.mxu0 0.0
  %4994 = vmatprep.subr.mxu0 0.0
  %4995 = vmatpush1.msra.mxu0 0.0
  %4996 = vmatprep.subr.mxu0 0.0
  %4997 = vmatpush1.msra.mxu0 0.0
  %4998 = vmatprep.subr.mxu0 0.0
  %4999 = vmatpush1.msra.mxu0 0.0
  %5000 = vmatprep.subr.mxu0 0.0
  %5001 = vmatpush1.msra.mxu0 0.0
  %5002 = vmatprep.subr.mxu0 0.0
  %5003 = vmatpush1.msra.mxu0 0.0
  %5004 = vmatprep.subr.mxu0 0.0
  %5005 = vmatpush1.msra.mxu0 0.0
  %5006 = vmatprep.subr.mxu0 0.0
  %5007 = vmatpush1.msra.mxu0 0.0
  %5008 = vmatprep.subr.mxu0 0.0
  %5009 = vmatpush1.msra.mxu0 0.0
  %5010 = vmatprep.subr.mxu0 0.0
  %5011 = vmatpush1.msra.mxu0 0.0
  %5012 = vmatprep.subr.mxu0 0.0
  %5013 = vmatpush1.msra.mxu0 0.0
  %5014 = vmatprep.subr.mxu0 0.0
  %5015 = vmatpush1.msra.mxu0 %v4675
  %5016 = vmatprep.subr.mxu0 0.0
  %5017 = vmatpush1.msra.mxu0 %v4670
  %5018 = vmatprep.subr.mxu0 0.0
  %5019 = vmatpush1.msra.mxu0 %v4665
  %5020 = vmatprep.subr.mxu0 0.0
  %5021 = vmatpush1.msra.mxu0 %v4660
  %5022 = vmatprep.subr.mxu0 0.0
  %5023 = vmatpush2.msra.mxu0 0.0
  %5024 = vmatprep.subr.mxu0 0.0
  %5025 = vmatpush2.msra.mxu0 0.0
  %5026 = vmatprep.subr.mxu0 0.0
  %5027 = vmatpush2.msra.mxu0 0.0
  %5028 = vmatprep.subr.mxu0 0.0
  %5029 = vmatpush2.msra.mxu0 0.0
  %5030 = vmatprep.subr.mxu0 0.0
  %5031 = vmatpush2.msra.mxu0 0.0
  %5032 = vmatprep.subr.mxu0 0.0
  %5033 = vmatpush2.msra.mxu0 0.0
  %5034 = vmatprep.subr.mxu0 0.0
  %5035 = vmatpush2.msra.mxu0 0.0
  %5036 = vmatprep.subr.mxu0 0.0
  %5037 = vmatpush2.msra.mxu0 0.0
  %5038 = vmatprep.subr.mxu0 0.0
  %5039 = vmatpush2.msra.mxu0 0.0
  %5040 = vmatprep.subr.mxu0 0.0
  %5041 = vmatpush2.msra.mxu0 0.0
  %5042 = vmatprep.subr.mxu0 0.0
  %5043 = vmatpush2.msra.mxu0 0.0
  %5044 = vmatprep.subr.mxu0 0.0
  %5045 = vmatpush2.msra.mxu0 0.0
  %5046 = vmatprep.subr.mxu0 0.0
  %5047 = vmatpush2.msra.mxu0 0.0
  %5048 = vmatprep.subr.mxu0 0.0
  %5049 = vmatpush2.msra.mxu0 0.0
  %5050 = vmatprep.subr.mxu0 0.0
  %5051 = vmatpush2.msra.mxu0 0.0
  %5052 = vmatprep.subr.mxu0 0.0
  %5053 = vmatpush2.msra.mxu0 0.0
  %5054 = vmatprep.mubr.f32.mxu0 0.0
  %5055 = vmatmul.mubr.f32.gmra.mxu0 %v3373
  %v5056 = vpop.f32.mrf.mxu0
  %v5057 = vadd.f32 0.0, %v5056
  %v5058 = vpop.f32.mrf.mxu0
  %5059 = vmatprep.mubr.f32.mxu0 0.0
  %5060 = vmatmul.mubr.f32.gmra.mxu0 %v3376
  %v5061 = vpop.f32.mrf.mxu0
  %v5062 = vadd.f32 0.0, %v5061
  %v5063 = vpop.f32.mrf.mxu0
  %5064 = vdwg.mxu0
  %v5066 = vsel %vm2936, %v5057, 0
  %v5069 = vsel %vm2936, %v5062, 0
  %5071 = vmatprep.subr.mxu0 0.0
  %5072 = vmatpush1.msra.mxu0 0.0
  %5073 = vmatprep.subr.mxu0 0.0
  %5074 = vmatpush1.msra.mxu0 0.0
  %5075 = vmatprep.subr.mxu0 0.0
  %5076 = vmatpush1.msra.mxu0 0.0
  %5077 = vmatprep.subr.mxu0 0.0
  %5078 = vmatpush1.msra.mxu0 0.0
  %5079 = vmatprep.subr.mxu0 0.0
  %5080 = vmatpush1.msra.mxu0 0.0
  %5081 = vmatprep.subr.mxu0 0.0
  %5082 = vmatpush1.msra.mxu0 0.0
  %5083 = vmatprep.subr.mxu0 0.0
  %5084 = vmatpush1.msra.mxu0 0.0
  %5085 = vmatprep.subr.mxu0 0.0
  %5086 = vmatpush1.msra.mxu0 0.0
  %5087 = vmatprep.subr.mxu0 0.0
  %5088 = vmatpush1.msra.mxu0 0.0
  %5089 = vmatprep.subr.mxu0 0.0
  %5090 = vmatpush1.msra.mxu0 0.0
  %5091 = vmatprep.subr.mxu0 0.0
  %5092 = vmatpush1.msra.mxu0 0.0
  %5093 = vmatprep.subr.mxu0 0.0
  %5094 = vmatpush1.msra.mxu0 0.0
  %5095 = vmatprep.subr.mxu0 0.0
  %5096 = vmatpush1.msra.mxu0 0.0
  %5097 = vmatprep.subr.mxu0 0.0
  %5098 = vmatpush1.msra.mxu0 0.0
  %5099 = vmatprep.subr.mxu0 0.0
  %5100 = vmatpush1.msra.mxu0 %v3455
  %5101 = vmatprep.subr.mxu0 0.0
  %5102 = vmatpush1.msra.mxu0 %v3454
  %5103 = vmatprep.subr.mxu0 0.0
  %5104 = vmatpush2.msra.mxu0 0.0
  %5105 = vmatprep.subr.mxu0 0.0
  %5106 = vmatpush2.msra.mxu0 0.0
  %5107 = vmatprep.subr.mxu0 0.0
  %5108 = vmatpush2.msra.mxu0 0.0
  %5109 = vmatprep.subr.mxu0 0.0
  %5110 = vmatpush2.msra.mxu0 0.0
  %5111 = vmatprep.subr.mxu0 0.0
  %5112 = vmatpush2.msra.mxu0 0.0
  %5113 = vmatprep.subr.mxu0 0.0
  %5114 = vmatpush2.msra.mxu0 0.0
  %5115 = vmatprep.subr.mxu0 0.0
  %5116 = vmatpush2.msra.mxu0 0.0
  %5117 = vmatprep.subr.mxu0 0.0
  %5118 = vmatpush2.msra.mxu0 0.0
  %5119 = vmatprep.subr.mxu0 0.0
  %5120 = vmatpush2.msra.mxu0 0.0
  %5121 = vmatprep.subr.mxu0 0.0
  %5122 = vmatpush2.msra.mxu0 0.0
  %5123 = vmatprep.subr.mxu0 0.0
  %5124 = vmatpush2.msra.mxu0 0.0
  %5125 = vmatprep.subr.mxu0 0.0
  %5126 = vmatpush2.msra.mxu0 0.0
  %5127 = vmatprep.subr.mxu0 0.0
  %5128 = vmatpush2.msra.mxu0 0.0
  %5129 = vmatprep.subr.mxu0 0.0
  %5130 = vmatpush2.msra.mxu0 0.0
  %5131 = vmatprep.subr.mxu0 0.0
  %5132 = vmatpush2.msra.mxu0 0.0
  %5133 = vmatprep.subr.mxu0 0.0
  %5134 = vmatpush2.msra.mxu0 0.0
  %5135 = vmatprep.mubr.f32.mxu0 0.0
  %5136 = vmatmul.mubr.f32.gmra.mxu0 %v5066
  %v5137 = vpop.f32.mrf.mxu0
  %v5138 = vadd.f32 0.0, %v5137
  %v5139 = vpop.f32.mrf.mxu0
  %5140 = vmatprep.mubr.f32.mxu0 0.0
  %5141 = vmatmul.mubr.f32.gmra.mxu0 %v5069
  %v5142 = vpop.f32.mrf.mxu0
  %v5143 = vadd.f32 0.0, %v5142
  %v5144 = vpop.f32.mrf.mxu0
  %5145 = vdwg.mxu0
  %v5146 = vadd.f32 %v4982, %v5138
  %v5147 = vadd.f32 %v4987, %v5143
  %5148 = vmatprep.subr.mxu0 0.0
  %5149 = vmatpush1.msra.mxu0 0.0
  %5150 = vmatprep.subr.mxu0 0.0
  %5151 = vmatpush1.msra.mxu0 0.0
  %5152 = vmatprep.subr.mxu0 0.0
  %5153 = vmatpush1.msra.mxu0 0.0
  %5154 = vmatprep.subr.mxu0 0.0
  %5155 = vmatpush1.msra.mxu0 0.0
  %5156 = vmatprep.subr.mxu0 0.0
  %5157 = vmatpush1.msra.mxu0 0.0
  %5158 = vmatprep.subr.mxu0 0.0
  %5159 = vmatpush1.msra.mxu0 0.0
  %5160 = vmatprep.subr.mxu0 0.0
  %5161 = vmatpush1.msra.mxu0 0.0
  %5162 = vmatprep.subr.mxu0 0.0
  %5163 = vmatpush1.msra.mxu0 0.0
  %5164 = vmatprep.subr.mxu0 0.0
  %5165 = vmatpush1.msra.mxu0 0.0
  %5166 = vmatprep.subr.mxu0 0.0
  %5167 = vmatpush1.msra.mxu0 0.0
  %5168 = vmatprep.subr.mxu0 0.0
  %5169 = vmatpush1.msra.mxu0 0.0
  %5170 = vmatprep.subr.mxu0 0.0
  %5171 = vmatpush1.msra.mxu0 0.0
  %5172 = vmatprep.subr.mxu0 0.0
  %5173 = vmatpush1.msra.mxu0 %v4675
  %5174 = vmatprep.subr.mxu0 0.0
  %5175 = vmatpush1.msra.mxu0 %v4670
  %5176 = vmatprep.subr.mxu0 0.0
  %5177 = vmatpush1.msra.mxu0 %v4665
  %5178 = vmatprep.subr.mxu0 0.0
  %5179 = vmatpush1.msra.mxu0 %v4660
  %5180 = vmatprep.subr.mxu0 0.0
  %5181 = vmatpush2.msra.mxu0 0.0
  %5182 = vmatprep.subr.mxu0 0.0
  %5183 = vmatpush2.msra.mxu0 0.0
  %5184 = vmatprep.subr.mxu0 0.0
  %5185 = vmatpush2.msra.mxu0 0.0
  %5186 = vmatprep.subr.mxu0 0.0
  %5187 = vmatpush2.msra.mxu0 0.0
  %5188 = vmatprep.subr.mxu0 0.0
  %5189 = vmatpush2.msra.mxu0 0.0
  %5190 = vmatprep.subr.mxu0 0.0
  %5191 = vmatpush2.msra.mxu0 0.0
  %5192 = vmatprep.subr.mxu0 0.0
  %5193 = vmatpush2.msra.mxu0 0.0
  %5194 = vmatprep.subr.mxu0 0.0
  %5195 = vmatpush2.msra.mxu0 0.0
  %5196 = vmatprep.subr.mxu0 0.0
  %5197 = vmatpush2.msra.mxu0 0.0
  %5198 = vmatprep.subr.mxu0 0.0
  %5199 = vmatpush2.msra.mxu0 0.0
  %5200 = vmatprep.subr.mxu0 0.0
  %5201 = vmatpush2.msra.mxu0 0.0
  %5202 = vmatprep.subr.mxu0 0.0
  %5203 = vmatpush2.msra.mxu0 0.0
  %5204 = vmatprep.subr.mxu0 0.0
  %5205 = vmatpush2.msra.mxu0 0.0
  %5206 = vmatprep.subr.mxu0 0.0
  %5207 = vmatpush2.msra.mxu0 0.0
  %5208 = vmatprep.subr.mxu0 0.0
  %5209 = vmatpush2.msra.mxu0 0.0
  %5210 = vmatprep.subr.mxu0 0.0
  %5211 = vmatpush2.msra.mxu0 0.0
  %5212 = vmatprep.mubr.f32.mxu0 0.0
  %5213 = vmatmul.mubr.f32.gmra.mxu0 %v3543
  %v5214 = vpop.f32.mrf.mxu0
  %v5215 = vadd.f32 0.0, %v5214
  %v5216 = vpop.f32.mrf.mxu0
  %5217 = vmatprep.mubr.f32.mxu0 0.0
  %5218 = vmatmul.mubr.f32.gmra.mxu0 %v3546
  %v5219 = vpop.f32.mrf.mxu0
  %v5220 = vadd.f32 0.0, %v5219
  %v5221 = vpop.f32.mrf.mxu0
  %5222 = vdwg.mxu0
  %v5224 = vsel %vm2936, %v5215, 0
  %v5227 = vsel %vm2936, %v5220, 0
  %5229 = vmatprep.subr.mxu0 0.0
  %5230 = vmatpush1.msra.mxu0 0.0
  %5231 = vmatprep.subr.mxu0 0.0
  %5232 = vmatpush1.msra.mxu0 0.0
  %5233 = vmatprep.subr.mxu0 0.0
  %5234 = vmatpush1.msra.mxu0 0.0
  %5235 = vmatprep.subr.mxu0 0.0
  %5236 = vmatpush1.msra.mxu0 0.0
  %5237 = vmatprep.subr.mxu0 0.0
  %5238 = vmatpush1.msra.mxu0 0.0
  %5239 = vmatprep.subr.mxu0 0.0
  %5240 = vmatpush1.msra.mxu0 0.0
  %5241 = vmatprep.subr.mxu0 0.0
  %5242 = vmatpush1.msra.mxu0 0.0
  %5243 = vmatprep.subr.mxu0 0.0
  %5244 = vmatpush1.msra.mxu0 0.0
  %5245 = vmatprep.subr.mxu0 0.0
  %5246 = vmatpush1.msra.mxu0 0.0
  %5247 = vmatprep.subr.mxu0 0.0
  %5248 = vmatpush1.msra.mxu0 0.0
  %5249 = vmatprep.subr.mxu0 0.0
  %5250 = vmatpush1.msra.mxu0 0.0
  %5251 = vmatprep.subr.mxu0 0.0
  %5252 = vmatpush1.msra.mxu0 0.0
  %5253 = vmatprep.subr.mxu0 0.0
  %5254 = vmatpush1.msra.mxu0 0.0
  %5255 = vmatprep.subr.mxu0 0.0
  %5256 = vmatpush1.msra.mxu0 0.0
  %5257 = vmatprep.subr.mxu0 0.0
  %5258 = vmatpush1.msra.mxu0 %v3625
  %5259 = vmatprep.subr.mxu0 0.0
  %5260 = vmatpush1.msra.mxu0 %v3624
  %5261 = vmatprep.subr.mxu0 0.0
  %5262 = vmatpush2.msra.mxu0 0.0
  %5263 = vmatprep.subr.mxu0 0.0
  %5264 = vmatpush2.msra.mxu0 0.0
  %5265 = vmatprep.subr.mxu0 0.0
  %5266 = vmatpush2.msra.mxu0 0.0
  %5267 = vmatprep.subr.mxu0 0.0
  %5268 = vmatpush2.msra.mxu0 0.0
  %5269 = vmatprep.subr.mxu0 0.0
  %5270 = vmatpush2.msra.mxu0 0.0
  %5271 = vmatprep.subr.mxu0 0.0
  %5272 = vmatpush2.msra.mxu0 0.0
  %5273 = vmatprep.subr.mxu0 0.0
  %5274 = vmatpush2.msra.mxu0 0.0
  %5275 = vmatprep.subr.mxu0 0.0
  %5276 = vmatpush2.msra.mxu0 0.0
  %5277 = vmatprep.subr.mxu0 0.0
  %5278 = vmatpush2.msra.mxu0 0.0
  %5279 = vmatprep.subr.mxu0 0.0
  %5280 = vmatpush2.msra.mxu0 0.0
  %5281 = vmatprep.subr.mxu0 0.0
  %5282 = vmatpush2.msra.mxu0 0.0
  %5283 = vmatprep.subr.mxu0 0.0
  %5284 = vmatpush2.msra.mxu0 0.0
  %5285 = vmatprep.subr.mxu0 0.0
  %5286 = vmatpush2.msra.mxu0 0.0
  %5287 = vmatprep.subr.mxu0 0.0
  %5288 = vmatpush2.msra.mxu0 0.0
  %5289 = vmatprep.subr.mxu0 0.0
  %5290 = vmatpush2.msra.mxu0 0.0
  %5291 = vmatprep.subr.mxu0 0.0
  %5292 = vmatpush2.msra.mxu0 0.0
  %5293 = vmatprep.mubr.f32.mxu0 0.0
  %5294 = vmatmul.mubr.f32.gmra.mxu0 %v5224
  %v5295 = vpop.f32.mrf.mxu0
  %v5296 = vadd.f32 0.0, %v5295
  %v5297 = vpop.f32.mrf.mxu0
  %5298 = vmatprep.mubr.f32.mxu0 0.0
  %5299 = vmatmul.mubr.f32.gmra.mxu0 %v5227
  %v5300 = vpop.f32.mrf.mxu0
  %v5301 = vadd.f32 0.0, %v5300
  %v5302 = vpop.f32.mrf.mxu0
  %5303 = vdwg.mxu0
  %v5304 = vadd.f32 %v5146, %v5296
  %v5305 = vadd.f32 %v5147, %v5301
  %5306 = vmatprep.subr.mxu0 0.0
  %5307 = vmatpush1.msra.mxu0 0.0
  %5308 = vmatprep.subr.mxu0 0.0
  %5309 = vmatpush1.msra.mxu0 0.0
  %5310 = vmatprep.subr.mxu0 0.0
  %5311 = vmatpush1.msra.mxu0 0.0
  %5312 = vmatprep.subr.mxu0 0.0
  %5313 = vmatpush1.msra.mxu0 0.0
  %5314 = vmatprep.subr.mxu0 0.0
  %5315 = vmatpush1.msra.mxu0 0.0
  %5316 = vmatprep.subr.mxu0 0.0
  %5317 = vmatpush1.msra.mxu0 0.0
  %5318 = vmatprep.subr.mxu0 0.0
  %5319 = vmatpush1.msra.mxu0 0.0
  %5320 = vmatprep.subr.mxu0 0.0
  %5321 = vmatpush1.msra.mxu0 0.0
  %5322 = vmatprep.subr.mxu0 0.0
  %5323 = vmatpush1.msra.mxu0 0.0
  %5324 = vmatprep.subr.mxu0 0.0
  %5325 = vmatpush1.msra.mxu0 0.0
  %5326 = vmatprep.subr.mxu0 0.0
  %5327 = vmatpush1.msra.mxu0 0.0
  %5328 = vmatprep.subr.mxu0 0.0
  %5329 = vmatpush1.msra.mxu0 0.0
  %5330 = vmatprep.subr.mxu0 0.0
  %5331 = vmatpush1.msra.mxu0 %v4675
  %5332 = vmatprep.subr.mxu0 0.0
  %5333 = vmatpush1.msra.mxu0 %v4670
  %5334 = vmatprep.subr.mxu0 0.0
  %5335 = vmatpush1.msra.mxu0 %v4665
  %5336 = vmatprep.subr.mxu0 0.0
  %5337 = vmatpush1.msra.mxu0 %v4660
  %5338 = vmatprep.subr.mxu0 0.0
  %5339 = vmatpush2.msra.mxu0 0.0
  %5340 = vmatprep.subr.mxu0 0.0
  %5341 = vmatpush2.msra.mxu0 0.0
  %5342 = vmatprep.subr.mxu0 0.0
  %5343 = vmatpush2.msra.mxu0 0.0
  %5344 = vmatprep.subr.mxu0 0.0
  %5345 = vmatpush2.msra.mxu0 0.0
  %5346 = vmatprep.subr.mxu0 0.0
  %5347 = vmatpush2.msra.mxu0 0.0
  %5348 = vmatprep.subr.mxu0 0.0
  %5349 = vmatpush2.msra.mxu0 0.0
  %5350 = vmatprep.subr.mxu0 0.0
  %5351 = vmatpush2.msra.mxu0 0.0
  %5352 = vmatprep.subr.mxu0 0.0
  %5353 = vmatpush2.msra.mxu0 0.0
  %5354 = vmatprep.subr.mxu0 0.0
  %5355 = vmatpush2.msra.mxu0 0.0
  %5356 = vmatprep.subr.mxu0 0.0
  %5357 = vmatpush2.msra.mxu0 0.0
  %5358 = vmatprep.subr.mxu0 0.0
  %5359 = vmatpush2.msra.mxu0 0.0
  %5360 = vmatprep.subr.mxu0 0.0
  %5361 = vmatpush2.msra.mxu0 0.0
  %5362 = vmatprep.subr.mxu0 0.0
  %5363 = vmatpush2.msra.mxu0 0.0
  %5364 = vmatprep.subr.mxu0 0.0
  %5365 = vmatpush2.msra.mxu0 0.0
  %5366 = vmatprep.subr.mxu0 0.0
  %5367 = vmatpush2.msra.mxu0 0.0
  %5368 = vmatprep.subr.mxu0 0.0
  %5369 = vmatpush2.msra.mxu0 0.0
  %5370 = vmatprep.mubr.f32.mxu0 0.0
  %5371 = vmatmul.mubr.f32.gmra.mxu0 %v3713
  %v5372 = vpop.f32.mrf.mxu0
  %v5373 = vadd.f32 0.0, %v5372
  %v5374 = vpop.f32.mrf.mxu0
  %5375 = vmatprep.mubr.f32.mxu0 0.0
  %5376 = vmatmul.mubr.f32.gmra.mxu0 %v3716
  %v5377 = vpop.f32.mrf.mxu0
  %v5378 = vadd.f32 0.0, %v5377
  %v5379 = vpop.f32.mrf.mxu0
  %5380 = vdwg.mxu0
  %v5382 = vsel %vm2936, %v5373, 0
  %v5385 = vsel %vm2936, %v5378, 0
  %5387 = vmatprep.subr.mxu0 0.0
  %5388 = vmatpush1.msra.mxu0 0.0
  %5389 = vmatprep.subr.mxu0 0.0
  %5390 = vmatpush1.msra.mxu0 0.0
  %5391 = vmatprep.subr.mxu0 0.0
  %5392 = vmatpush1.msra.mxu0 0.0
  %5393 = vmatprep.subr.mxu0 0.0
  %5394 = vmatpush1.msra.mxu0 0.0
  %5395 = vmatprep.subr.mxu0 0.0
  %5396 = vmatpush1.msra.mxu0 0.0
  %5397 = vmatprep.subr.mxu0 0.0
  %5398 = vmatpush1.msra.mxu0 0.0
  %5399 = vmatprep.subr.mxu0 0.0
  %5400 = vmatpush1.msra.mxu0 0.0
  %5401 = vmatprep.subr.mxu0 0.0
  %5402 = vmatpush1.msra.mxu0 0.0
  %5403 = vmatprep.subr.mxu0 0.0
  %5404 = vmatpush1.msra.mxu0 0.0
  %5405 = vmatprep.subr.mxu0 0.0
  %5406 = vmatpush1.msra.mxu0 0.0
  %5407 = vmatprep.subr.mxu0 0.0
  %5408 = vmatpush1.msra.mxu0 0.0
  %5409 = vmatprep.subr.mxu0 0.0
  %5410 = vmatpush1.msra.mxu0 0.0
  %5411 = vmatprep.subr.mxu0 0.0
  %5412 = vmatpush1.msra.mxu0 0.0
  %5413 = vmatprep.subr.mxu0 0.0
  %5414 = vmatpush1.msra.mxu0 0.0
  %5415 = vmatprep.subr.mxu0 0.0
  %5416 = vmatpush1.msra.mxu0 %v3795
  %5417 = vmatprep.subr.mxu0 0.0
  %5418 = vmatpush1.msra.mxu0 %v3794
  %5419 = vmatprep.subr.mxu0 0.0
  %5420 = vmatpush2.msra.mxu0 0.0
  %5421 = vmatprep.subr.mxu0 0.0
  %5422 = vmatpush2.msra.mxu0 0.0
  %5423 = vmatprep.subr.mxu0 0.0
  %5424 = vmatpush2.msra.mxu0 0.0
  %5425 = vmatprep.subr.mxu0 0.0
  %5426 = vmatpush2.msra.mxu0 0.0
  %5427 = vmatprep.subr.mxu0 0.0
  %5428 = vmatpush2.msra.mxu0 0.0
  %5429 = vmatprep.subr.mxu0 0.0
  %5430 = vmatpush2.msra.mxu0 0.0
  %5431 = vmatprep.subr.mxu0 0.0
  %5432 = vmatpush2.msra.mxu0 0.0
  %5433 = vmatprep.subr.mxu0 0.0
  %5434 = vmatpush2.msra.mxu0 0.0
  %5435 = vmatprep.subr.mxu0 0.0
  %5436 = vmatpush2.msra.mxu0 0.0
  %5437 = vmatprep.subr.mxu0 0.0
  %5438 = vmatpush2.msra.mxu0 0.0
  %5439 = vmatprep.subr.mxu0 0.0
  %5440 = vmatpush2.msra.mxu0 0.0
  %5441 = vmatprep.subr.mxu0 0.0
  %5442 = vmatpush2.msra.mxu0 0.0
  %5443 = vmatprep.subr.mxu0 0.0
  %5444 = vmatpush2.msra.mxu0 0.0
  %5445 = vmatprep.subr.mxu0 0.0
  %5446 = vmatpush2.msra.mxu0 0.0
  %5447 = vmatprep.subr.mxu0 0.0
  %5448 = vmatpush2.msra.mxu0 0.0
  %5449 = vmatprep.subr.mxu0 0.0
  %5450 = vmatpush2.msra.mxu0 0.0
  %5451 = vmatprep.mubr.f32.mxu0 0.0
  %5452 = vmatmul.mubr.f32.gmra.mxu0 %v5382
  %v5453 = vpop.f32.mrf.mxu0
  %v5454 = vadd.f32 0.0, %v5453
  %v5455 = vpop.f32.mrf.mxu0
  %5456 = vmatprep.mubr.f32.mxu0 0.0
  %5457 = vmatmul.mubr.f32.gmra.mxu0 %v5385
  %v5458 = vpop.f32.mrf.mxu0
  %v5459 = vadd.f32 0.0, %v5458
  %v5460 = vpop.f32.mrf.mxu0
  %5461 = vdwg.mxu0
  %v5462 = vadd.f32 %v5304, %v5454
  %v5463 = vadd.f32 %v5305, %v5459
  %5464 = vmatprep.subr.mxu0 0.0
  %5465 = vmatpush1.msra.mxu0 0.0
  %5466 = vmatprep.subr.mxu0 0.0
  %5467 = vmatpush1.msra.mxu0 0.0
  %5468 = vmatprep.subr.mxu0 0.0
  %5469 = vmatpush1.msra.mxu0 0.0
  %5470 = vmatprep.subr.mxu0 0.0
  %5471 = vmatpush1.msra.mxu0 0.0
  %5472 = vmatprep.subr.mxu0 0.0
  %5473 = vmatpush1.msra.mxu0 0.0
  %5474 = vmatprep.subr.mxu0 0.0
  %5475 = vmatpush1.msra.mxu0 0.0
  %5476 = vmatprep.subr.mxu0 0.0
  %5477 = vmatpush1.msra.mxu0 0.0
  %5478 = vmatprep.subr.mxu0 0.0
  %5479 = vmatpush1.msra.mxu0 0.0
  %5480 = vmatprep.subr.mxu0 0.0
  %5481 = vmatpush1.msra.mxu0 0.0
  %5482 = vmatprep.subr.mxu0 0.0
  %5483 = vmatpush1.msra.mxu0 0.0
  %5484 = vmatprep.subr.mxu0 0.0
  %5485 = vmatpush1.msra.mxu0 0.0
  %5486 = vmatprep.subr.mxu0 0.0
  %5487 = vmatpush1.msra.mxu0 0.0
  %5488 = vmatprep.subr.mxu0 0.0
  %5489 = vmatpush1.msra.mxu0 %v4675
  %5490 = vmatprep.subr.mxu0 0.0
  %5491 = vmatpush1.msra.mxu0 %v4670
  %5492 = vmatprep.subr.mxu0 0.0
  %5493 = vmatpush1.msra.mxu0 %v4665
  %5494 = vmatprep.subr.mxu0 0.0
  %5495 = vmatpush1.msra.mxu0 %v4660
  %5496 = vmatprep.subr.mxu0 0.0
  %5497 = vmatpush2.msra.mxu0 0.0
  %5498 = vmatprep.subr.mxu0 0.0
  %5499 = vmatpush2.msra.mxu0 0.0
  %5500 = vmatprep.subr.mxu0 0.0
  %5501 = vmatpush2.msra.mxu0 0.0
  %5502 = vmatprep.subr.mxu0 0.0
  %5503 = vmatpush2.msra.mxu0 0.0
  %5504 = vmatprep.subr.mxu0 0.0
  %5505 = vmatpush2.msra.mxu0 0.0
  %5506 = vmatprep.subr.mxu0 0.0
  %5507 = vmatpush2.msra.mxu0 0.0
  %5508 = vmatprep.subr.mxu0 0.0
  %5509 = vmatpush2.msra.mxu0 0.0
  %5510 = vmatprep.subr.mxu0 0.0
  %5511 = vmatpush2.msra.mxu0 0.0
  %5512 = vmatprep.subr.mxu0 0.0
  %5513 = vmatpush2.msra.mxu0 0.0
  %5514 = vmatprep.subr.mxu0 0.0
  %5515 = vmatpush2.msra.mxu0 0.0
  %5516 = vmatprep.subr.mxu0 0.0
  %5517 = vmatpush2.msra.mxu0 0.0
  %5518 = vmatprep.subr.mxu0 0.0
  %5519 = vmatpush2.msra.mxu0 0.0
  %5520 = vmatprep.subr.mxu0 0.0
  %5521 = vmatpush2.msra.mxu0 0.0
  %5522 = vmatprep.subr.mxu0 0.0
  %5523 = vmatpush2.msra.mxu0 0.0
  %5524 = vmatprep.subr.mxu0 0.0
  %5525 = vmatpush2.msra.mxu0 0.0
  %5526 = vmatprep.subr.mxu0 0.0
  %5527 = vmatpush2.msra.mxu0 0.0
  %5528 = vmatprep.mubr.f32.mxu0 0.0
  %5529 = vmatmul.mubr.f32.gmra.mxu0 %v3883
  %v5530 = vpop.f32.mrf.mxu0
  %v5531 = vadd.f32 0.0, %v5530
  %v5532 = vpop.f32.mrf.mxu0
  %5533 = vmatprep.mubr.f32.mxu0 0.0
  %5534 = vmatmul.mubr.f32.gmra.mxu0 %v3886
  %v5535 = vpop.f32.mrf.mxu0
  %v5536 = vadd.f32 0.0, %v5535
  %v5537 = vpop.f32.mrf.mxu0
  %5538 = vdwg.mxu0
  %v5540 = vsel %vm2936, %v5531, 0
  %v5543 = vsel %vm2936, %v5536, 0
  %5545 = vmatprep.subr.mxu0 0.0
  %5546 = vmatpush1.msra.mxu0 0.0
  %5547 = vmatprep.subr.mxu0 0.0
  %5548 = vmatpush1.msra.mxu0 0.0
  %5549 = vmatprep.subr.mxu0 0.0
  %5550 = vmatpush1.msra.mxu0 0.0
  %5551 = vmatprep.subr.mxu0 0.0
  %5552 = vmatpush1.msra.mxu0 0.0
  %5553 = vmatprep.subr.mxu0 0.0
  %5554 = vmatpush1.msra.mxu0 0.0
  %5555 = vmatprep.subr.mxu0 0.0
  %5556 = vmatpush1.msra.mxu0 0.0
  %5557 = vmatprep.subr.mxu0 0.0
  %5558 = vmatpush1.msra.mxu0 0.0
  %5559 = vmatprep.subr.mxu0 0.0
  %5560 = vmatpush1.msra.mxu0 0.0
  %5561 = vmatprep.subr.mxu0 0.0
  %5562 = vmatpush1.msra.mxu0 0.0
  %5563 = vmatprep.subr.mxu0 0.0
  %5564 = vmatpush1.msra.mxu0 0.0
  %5565 = vmatprep.subr.mxu0 0.0
  %5566 = vmatpush1.msra.mxu0 0.0
  %5567 = vmatprep.subr.mxu0 0.0
  %5568 = vmatpush1.msra.mxu0 0.0
  %5569 = vmatprep.subr.mxu0 0.0
  %5570 = vmatpush1.msra.mxu0 0.0
  %5571 = vmatprep.subr.mxu0 0.0
  %5572 = vmatpush1.msra.mxu0 0.0
  %5573 = vmatprep.subr.mxu0 0.0
  %5574 = vmatpush1.msra.mxu0 %v3965
  %5575 = vmatprep.subr.mxu0 0.0
  %5576 = vmatpush1.msra.mxu0 %v3964
  %5577 = vmatprep.subr.mxu0 0.0
  %5578 = vmatpush2.msra.mxu0 0.0
  %5579 = vmatprep.subr.mxu0 0.0
  %5580 = vmatpush2.msra.mxu0 0.0
  %5581 = vmatprep.subr.mxu0 0.0
  %5582 = vmatpush2.msra.mxu0 0.0
  %5583 = vmatprep.subr.mxu0 0.0
  %5584 = vmatpush2.msra.mxu0 0.0
  %5585 = vmatprep.subr.mxu0 0.0
  %5586 = vmatpush2.msra.mxu0 0.0
  %5587 = vmatprep.subr.mxu0 0.0
  %5588 = vmatpush2.msra.mxu0 0.0
  %5589 = vmatprep.subr.mxu0 0.0
  %5590 = vmatpush2.msra.mxu0 0.0
  %5591 = vmatprep.subr.mxu0 0.0
  %5592 = vmatpush2.msra.mxu0 0.0
  %5593 = vmatprep.subr.mxu0 0.0
  %5594 = vmatpush2.msra.mxu0 0.0
  %5595 = vmatprep.subr.mxu0 0.0
  %5596 = vmatpush2.msra.mxu0 0.0
  %5597 = vmatprep.subr.mxu0 0.0
  %5598 = vmatpush2.msra.mxu0 0.0
  %5599 = vmatprep.subr.mxu0 0.0
  %5600 = vmatpush2.msra.mxu0 0.0
  %5601 = vmatprep.subr.mxu0 0.0
  %5602 = vmatpush2.msra.mxu0 0.0
  %5603 = vmatprep.subr.mxu0 0.0
  %5604 = vmatpush2.msra.mxu0 0.0
  %5605 = vmatprep.subr.mxu0 0.0
  %5606 = vmatpush2.msra.mxu0 0.0
  %5607 = vmatprep.subr.mxu0 0.0
  %5608 = vmatpush2.msra.mxu0 0.0
  %5609 = vmatprep.mubr.f32.mxu0 0.0
  %5610 = vmatmul.mubr.f32.gmra.mxu0 %v5540
  %v5611 = vpop.f32.mrf.mxu0
  %v5612 = vadd.f32 0.0, %v5611
  %v5613 = vpop.f32.mrf.mxu0
  %5614 = vmatprep.mubr.f32.mxu0 0.0
  %5615 = vmatmul.mubr.f32.gmra.mxu0 %v5543
  %v5616 = vpop.f32.mrf.mxu0
  %v5617 = vadd.f32 0.0, %v5616
  %v5618 = vpop.f32.mrf.mxu0
  %5619 = vdwg.mxu0
  %v5620 = vadd.f32 %v5462, %v5612
  %v5621 = vadd.f32 %v5463, %v5617
  %5622 = vmatprep.subr.mxu0 0.0
  %5623 = vmatpush1.msra.mxu0 0.0
  %5624 = vmatprep.subr.mxu0 0.0
  %5625 = vmatpush1.msra.mxu0 0.0
  %5626 = vmatprep.subr.mxu0 0.0
  %5627 = vmatpush1.msra.mxu0 0.0
  %5628 = vmatprep.subr.mxu0 0.0
  %5629 = vmatpush1.msra.mxu0 0.0
  %5630 = vmatprep.subr.mxu0 0.0
  %5631 = vmatpush1.msra.mxu0 0.0
  %5632 = vmatprep.subr.mxu0 0.0
  %5633 = vmatpush1.msra.mxu0 0.0
  %5634 = vmatprep.subr.mxu0 0.0
  %5635 = vmatpush1.msra.mxu0 0.0
  %5636 = vmatprep.subr.mxu0 0.0
  %5637 = vmatpush1.msra.mxu0 0.0
  %5638 = vmatprep.subr.mxu0 0.0
  %5639 = vmatpush1.msra.mxu0 0.0
  %5640 = vmatprep.subr.mxu0 0.0
  %5641 = vmatpush1.msra.mxu0 0.0
  %5642 = vmatprep.subr.mxu0 0.0
  %5643 = vmatpush1.msra.mxu0 0.0
  %5644 = vmatprep.subr.mxu0 0.0
  %5645 = vmatpush1.msra.mxu0 0.0
  %5646 = vmatprep.subr.mxu0 0.0
  %5647 = vmatpush1.msra.mxu0 %v4675
  %5648 = vmatprep.subr.mxu0 0.0
  %5649 = vmatpush1.msra.mxu0 %v4670
  %5650 = vmatprep.subr.mxu0 0.0
  %5651 = vmatpush1.msra.mxu0 %v4665
  %5652 = vmatprep.subr.mxu0 0.0
  %5653 = vmatpush1.msra.mxu0 %v4660
  %5654 = vmatprep.subr.mxu0 0.0
  %5655 = vmatpush2.msra.mxu0 0.0
  %5656 = vmatprep.subr.mxu0 0.0
  %5657 = vmatpush2.msra.mxu0 0.0
  %5658 = vmatprep.subr.mxu0 0.0
  %5659 = vmatpush2.msra.mxu0 0.0
  %5660 = vmatprep.subr.mxu0 0.0
  %5661 = vmatpush2.msra.mxu0 0.0
  %5662 = vmatprep.subr.mxu0 0.0
  %5663 = vmatpush2.msra.mxu0 0.0
  %5664 = vmatprep.subr.mxu0 0.0
  %5665 = vmatpush2.msra.mxu0 0.0
  %5666 = vmatprep.subr.mxu0 0.0
  %5667 = vmatpush2.msra.mxu0 0.0
  %5668 = vmatprep.subr.mxu0 0.0
  %5669 = vmatpush2.msra.mxu0 0.0
  %5670 = vmatprep.subr.mxu0 0.0
  %5671 = vmatpush2.msra.mxu0 0.0
  %5672 = vmatprep.subr.mxu0 0.0
  %5673 = vmatpush2.msra.mxu0 0.0
  %5674 = vmatprep.subr.mxu0 0.0
  %5675 = vmatpush2.msra.mxu0 0.0
  %5676 = vmatprep.subr.mxu0 0.0
  %5677 = vmatpush2.msra.mxu0 0.0
  %5678 = vmatprep.subr.mxu0 0.0
  %5679 = vmatpush2.msra.mxu0 0.0
  %5680 = vmatprep.subr.mxu0 0.0
  %5681 = vmatpush2.msra.mxu0 0.0
  %5682 = vmatprep.subr.mxu0 0.0
  %5683 = vmatpush2.msra.mxu0 0.0
  %5684 = vmatprep.subr.mxu0 0.0
  %5685 = vmatpush2.msra.mxu0 0.0
  %5686 = vmatprep.mubr.f32.mxu0 0.0
  %5687 = vmatmul.mubr.f32.gmra.mxu0 %v4053
  %v5688 = vpop.f32.mrf.mxu0
  %v5689 = vadd.f32 0.0, %v5688
  %v5690 = vpop.f32.mrf.mxu0
  %5691 = vmatprep.mubr.f32.mxu0 0.0
  %5692 = vmatmul.mubr.f32.gmra.mxu0 %v4056
  %v5693 = vpop.f32.mrf.mxu0
  %v5694 = vadd.f32 0.0, %v5693
  %v5695 = vpop.f32.mrf.mxu0
  %5696 = vdwg.mxu0
  %v5698 = vsel %vm2936, %v5689, 0
  %v5701 = vsel %vm2936, %v5694, 0
  %5703 = vmatprep.subr.mxu0 0.0
  %5704 = vmatpush1.msra.mxu0 0.0
  %5705 = vmatprep.subr.mxu0 0.0
  %5706 = vmatpush1.msra.mxu0 0.0
  %5707 = vmatprep.subr.mxu0 0.0
  %5708 = vmatpush1.msra.mxu0 0.0
  %5709 = vmatprep.subr.mxu0 0.0
  %5710 = vmatpush1.msra.mxu0 0.0
  %5711 = vmatprep.subr.mxu0 0.0
  %5712 = vmatpush1.msra.mxu0 0.0
  %5713 = vmatprep.subr.mxu0 0.0
  %5714 = vmatpush1.msra.mxu0 0.0
  %5715 = vmatprep.subr.mxu0 0.0
  %5716 = vmatpush1.msra.mxu0 0.0
  %5717 = vmatprep.subr.mxu0 0.0
  %5718 = vmatpush1.msra.mxu0 0.0
  %5719 = vmatprep.subr.mxu0 0.0
  %5720 = vmatpush1.msra.mxu0 0.0
  %5721 = vmatprep.subr.mxu0 0.0
  %5722 = vmatpush1.msra.mxu0 0.0
  %5723 = vmatprep.subr.mxu0 0.0
  %5724 = vmatpush1.msra.mxu0 0.0
  %5725 = vmatprep.subr.mxu0 0.0
  %5726 = vmatpush1.msra.mxu0 0.0
  %5727 = vmatprep.subr.mxu0 0.0
  %5728 = vmatpush1.msra.mxu0 0.0
  %5729 = vmatprep.subr.mxu0 0.0
  %5730 = vmatpush1.msra.mxu0 0.0
  %5731 = vmatprep.subr.mxu0 0.0
  %5732 = vmatpush1.msra.mxu0 %v4135
  %5733 = vmatprep.subr.mxu0 0.0
  %5734 = vmatpush1.msra.mxu0 %v4134
  %5735 = vmatprep.subr.mxu0 0.0
  %5736 = vmatpush2.msra.mxu0 0.0
  %5737 = vmatprep.subr.mxu0 0.0
  %5738 = vmatpush2.msra.mxu0 0.0
  %5739 = vmatprep.subr.mxu0 0.0
  %5740 = vmatpush2.msra.mxu0 0.0
  %5741 = vmatprep.subr.mxu0 0.0
  %5742 = vmatpush2.msra.mxu0 0.0
  %5743 = vmatprep.subr.mxu0 0.0
  %5744 = vmatpush2.msra.mxu0 0.0
  %5745 = vmatprep.subr.mxu0 0.0
  %5746 = vmatpush2.msra.mxu0 0.0
  %5747 = vmatprep.subr.mxu0 0.0
  %5748 = vmatpush2.msra.mxu0 0.0
  %5749 = vmatprep.subr.mxu0 0.0
  %5750 = vmatpush2.msra.mxu0 0.0
  %5751 = vmatprep.subr.mxu0 0.0
  %5752 = vmatpush2.msra.mxu0 0.0
  %5753 = vmatprep.subr.mxu0 0.0
  %5754 = vmatpush2.msra.mxu0 0.0
  %5755 = vmatprep.subr.mxu0 0.0
  %5756 = vmatpush2.msra.mxu0 0.0
  %5757 = vmatprep.subr.mxu0 0.0
  %5758 = vmatpush2.msra.mxu0 0.0
  %5759 = vmatprep.subr.mxu0 0.0
  %5760 = vmatpush2.msra.mxu0 0.0
  %5761 = vmatprep.subr.mxu0 0.0
  %5762 = vmatpush2.msra.mxu0 0.0
  %5763 = vmatprep.subr.mxu0 0.0
  %5764 = vmatpush2.msra.mxu0 0.0
  %5765 = vmatprep.subr.mxu0 0.0
  %5766 = vmatpush2.msra.mxu0 0.0
  %5767 = vmatprep.mubr.f32.mxu0 0.0
  %5768 = vmatmul.mubr.f32.gmra.mxu0 %v5698
  %v5769 = vpop.f32.mrf.mxu0
  %v5770 = vadd.f32 0.0, %v5769
  %v5771 = vpop.f32.mrf.mxu0
  %5772 = vmatprep.mubr.f32.mxu0 0.0
  %5773 = vmatmul.mubr.f32.gmra.mxu0 %v5701
  %v5774 = vpop.f32.mrf.mxu0
  %v5775 = vadd.f32 0.0, %v5774
  %v5776 = vpop.f32.mrf.mxu0
  %5777 = vdwg.mxu0
  %v5778 = vadd.f32 %v5620, %v5770
  %v5779 = vadd.f32 %v5621, %v5775
  %v5780 = vadd.f32 %v5778, %v4220
  %v5781 = vadd.f32 %v5779, %v4220
  %v5782 = vxor.u32 %v5780, 2147483648
  %v5783 = vxor.u32 %v5781, 2147483648
  %v5784 = vmul.f32 %v5782, 1.442695
  %v5785 = vpow.pop %v5784
  %v5786 = vmul.f32 %v5783, 1.442695
  %v5787 = vpow.pop %v5786
  %v5788 = vadd.f32 %v5785, 1.0
  %v5789 = vadd.f32 %v5787, 1.0
  %v5790 = vrcp.pop %v5788
  %v5791 = vmul.f32 1.0, %v5790
  %v5792 = vrcp.pop %v5789
  %v5793 = vmul.f32 1.0, %v5792
  %v5795 = vsel %vm2936, %v5791, 0
  %v5798 = vsel %vm2936, %v5793, 0
  %5800 = vmatprep.subr.mxu0 0.0
  %5801 = vmatpush1.msra.mxu0 0.0
  %5802 = vmatprep.subr.mxu0 0.0
  %5803 = vmatpush1.msra.mxu0 0.0
  %5804 = vmatprep.subr.mxu0 0.0
  %5805 = vmatpush1.msra.mxu0 0.0
  %5806 = vmatprep.subr.mxu0 0.0
  %5807 = vmatpush1.msra.mxu0 0.0
  %5808 = vmatprep.subr.mxu0 0.0
  %5809 = vmatpush1.msra.mxu0 0.0
  %5810 = vmatprep.subr.mxu0 0.0
  %5811 = vmatpush1.msra.mxu0 0.0
  %5812 = vmatprep.subr.mxu0 0.0
  %5813 = vmatpush1.msra.mxu0 0.0
  %5814 = vmatprep.subr.mxu0 0.0
  %5815 = vmatpush1.msra.mxu0 0.0
  %5816 = vmatprep.subr.mxu0 0.0
  %5817 = vmatpush1.msra.mxu0 0.0
  %5818 = vmatprep.subr.mxu0 0.0
  %5819 = vmatpush1.msra.mxu0 0.0
  %5820 = vmatprep.subr.mxu0 0.0
  %5821 = vmatpush1.msra.mxu0 0.0
  %5822 = vmatprep.subr.mxu0 0.0
  %5823 = vmatpush1.msra.mxu0 0.0
  %5824 = vmatprep.subr.mxu0 0.0
  %5825 = vmatpush1.msra.mxu0 0.0
  %5826 = vmatprep.subr.mxu0 0.0
  %5827 = vmatpush1.msra.mxu0 0.0
  %5828 = vmatprep.subr.mxu0 %v2698
  %5829 = vmatpush1.msra.mxu0 %v2697
  %5830 = vmatprep.subr.mxu0 %v2696
  %5831 = vmatpush1.msra.mxu0 %v2695
  %5832 = vmatprep.subr.mxu0 0.0
  %5833 = vmatpush2.msra.mxu0 0.0
  %5834 = vmatprep.subr.mxu0 0.0
  %5835 = vmatpush2.msra.mxu0 0.0
  %5836 = vmatprep.subr.mxu0 0.0
  %5837 = vmatpush2.msra.mxu0 0.0
  %5838 = vmatprep.subr.mxu0 0.0
  %5839 = vmatpush2.msra.mxu0 0.0
  %5840 = vmatprep.subr.mxu0 0.0
  %5841 = vmatpush2.msra.mxu0 0.0
  %5842 = vmatprep.subr.mxu0 0.0
  %5843 = vmatpush2.msra.mxu0 0.0
  %5844 = vmatprep.subr.mxu0 0.0
  %5845 = vmatpush2.msra.mxu0 0.0
  %5846 = vmatprep.subr.mxu0 0.0
  %5847 = vmatpush2.msra.mxu0 0.0
  %5848 = vmatprep.subr.mxu0 0.0
  %5849 = vmatpush2.msra.mxu0 0.0
  %5850 = vmatprep.subr.mxu0 0.0
  %5851 = vmatpush2.msra.mxu0 0.0
  %5852 = vmatprep.subr.mxu0 0.0
  %5853 = vmatpush2.msra.mxu0 0.0
  %5854 = vmatprep.subr.mxu0 0.0
  %5855 = vmatpush2.msra.mxu0 0.0
  %5856 = vmatprep.subr.mxu0 0.0
  %5857 = vmatpush2.msra.mxu0 0.0
  %5858 = vmatprep.subr.mxu0 0.0
  %5859 = vmatpush2.msra.mxu0 0.0
  %5860 = vmatprep.subr.mxu0 0.0
  %5861 = vmatpush2.msra.mxu0 0.0
  %5862 = vmatprep.subr.mxu0 0.0
  %5863 = vmatpush2.msra.mxu0 0.0
  %5864 = vmatprep.mubr.f32.mxu0 0.0
  %5865 = vmatmul.mubr.f32.gmra.mxu0 %v5795
  %v5866 = vpop.f32.mrf.mxu0
  %v5867 = vadd.f32 0.0, %v5866
  %v5868 = vpop.f32.mrf.mxu0
  %v5869 = vadd.f32 0.0, %v5868
  %5870 = vmatprep.mubr.f32.mxu0 0.0
  %5871 = vmatmul.mubr.f32.gmra.mxu0 %v5798
  %v5872 = vpop.f32.mrf.mxu0
  %v5873 = vadd.f32 0.0, %v5872
  %v5874 = vpop.f32.mrf.mxu0
  %v5875 = vadd.f32 0.0, %v5874
  %5876 = vdwg.mxu0
  %v5877 = vmul.f32 %v5867, %v2659
  %v5878 = vmul.f32 %v5869, %v2660
  %v5879 = vmul.f32 %v5873, %v2661
  %v5880 = vmul.f32 %v5875, %v2662
  %v5881 = vadd.f32 %v5877, %v5879
  %v5882 = vrot.slane %v5881, 4
  %v5883 = vadd.f32 %v5881, %v5882
  %v5884 = vrot.slane %v5883, 2
  %v5885 = vadd.f32 %v5883, %v5884
  %v5886 = vrot.slane %v5885, 1
  %v5887 = vadd.f32 %v5885, %v5886
  %v5888 = vadd.f32 %v5878, %v5880
  %v5889 = vrot.slane %v5888, 4
  %v5890 = vadd.f32 %v5888, %v5889
  %v5891 = vrot.slane %v5890, 2
  %v5892 = vadd.f32 %v5890, %v5891
  %v5893 = vrot.slane %v5892, 1
  %v5894 = vadd.f32 %v5892, %v5893
  %v5895 = vmul.f32 %v2471, %v5887
  %v5896 = vmul.f32 %v2472, %v5894
  %v5897 = vmul.f32 %v2473, %v5887
  %v5898 = vmul.f32 %v2474, %v5894
  %v5899 = vmul.f32 %v2475, %v5887
  %v5900 = vmul.f32 %v2476, %v5894
  %v5901 = vmul.f32 %v2477, %v5887
  %v5902 = vmul.f32 %v2478, %v5894
  %v5903 = vld [vmem:[%s20] sm:$0xff]
  %v5905 = vsel %vm3036, %v5903, 0
  %5907 = vmatprep.subr.mxu0 0.0
  %5908 = vmatpush1.msra.mxu0 0.0
  %5909 = vmatprep.subr.mxu0 0.0
  %5910 = vmatpush1.msra.mxu0 0.0
  %5911 = vmatprep.subr.mxu0 0.0
  %5912 = vmatpush1.msra.mxu0 0.0
  %5913 = vmatprep.subr.mxu0 0.0
  %5914 = vmatpush1.msra.mxu0 0.0
  %5915 = vmatprep.subr.mxu0 0.0
  %5916 = vmatpush1.msra.mxu0 0.0
  %5917 = vmatprep.subr.mxu0 0.0
  %5918 = vmatpush1.msra.mxu0 0.0
  %5919 = vmatprep.subr.mxu0 0.0
  %5920 = vmatpush1.msra.mxu0 0.0
  %5921 = vmatprep.subr.mxu0 0.0
  %5922 = vmatpush1.msra.mxu0 0.0
  %5923 = vmatprep.subr.mxu0 0.0
  %5924 = vmatpush1.msra.mxu0 0.0
  %5925 = vmatprep.subr.mxu0 0.0
  %5926 = vmatpush1.msra.mxu0 0.0
  %5927 = vmatprep.subr.mxu0 0.0
  %5928 = vmatpush1.msra.mxu0 0.0
  %5929 = vmatprep.subr.mxu0 0.0
  %5930 = vmatpush1.msra.mxu0 0.0
  %5931 = vmatprep.subr.mxu0 %v4343
  %5932 = vmatpush1.msra.mxu0 %v4342
  %5933 = vmatprep.subr.mxu0 %v4341
  %5934 = vmatpush1.msra.mxu0 %v4340
  %5935 = vmatprep.subr.mxu0 %v4339
  %5936 = vmatpush1.msra.mxu0 %v4338
  %5937 = vmatprep.subr.mxu0 %v4337
  %5938 = vmatpush1.msra.mxu0 %v4336
  %5939 = vmatprep.subr.mxu0 0.0
  %5940 = vmatpush2.msra.mxu0 0.0
  %5941 = vmatprep.subr.mxu0 0.0
  %5942 = vmatpush2.msra.mxu0 0.0
  %5943 = vmatprep.subr.mxu0 0.0
  %5944 = vmatpush2.msra.mxu0 0.0
  %5945 = vmatprep.subr.mxu0 0.0
  %5946 = vmatpush2.msra.mxu0 0.0
  %5947 = vmatprep.subr.mxu0 0.0
  %5948 = vmatpush2.msra.mxu0 0.0
  %5949 = vmatprep.subr.mxu0 0.0
  %5950 = vmatpush2.msra.mxu0 0.0
  %5951 = vmatprep.subr.mxu0 0.0
  %5952 = vmatpush2.msra.mxu0 0.0
  %5953 = vmatprep.subr.mxu0 0.0
  %5954 = vmatpush2.msra.mxu0 0.0
  %5955 = vmatprep.subr.mxu0 0.0
  %5956 = vmatpush2.msra.mxu0 0.0
  %5957 = vmatprep.subr.mxu0 0.0
  %5958 = vmatpush2.msra.mxu0 0.0
  %5959 = vmatprep.subr.mxu0 0.0
  %5960 = vmatpush2.msra.mxu0 0.0
  %5961 = vmatprep.subr.mxu0 0.0
  %5962 = vmatpush2.msra.mxu0 0.0
  %5963 = vmatprep.subr.mxu0 0.0
  %5964 = vmatpush2.msra.mxu0 0.0
  %5965 = vmatprep.subr.mxu0 0.0
  %5966 = vmatpush2.msra.mxu0 0.0
  %5967 = vmatprep.subr.mxu0 0.0
  %5968 = vmatpush2.msra.mxu0 0.0
  %5969 = vmatprep.subr.mxu0 0.0
  %5970 = vmatpush2.msra.mxu0 0.0
  %5971 = vmatprep.mubr.f32.mxu0 0.0
  %5972 = vmatmul.mubr.f32.gmra.mxu0 %v5905
  %v5973 = vpop.f32.mrf.mxu0
  %v5974 = vadd.f32 0.0, %v5973
  %v5975 = vpop.f32.mrf.mxu0
  %v5976 = vadd.f32 0.0, %v5975
  %5977 = vdwg.mxu0
  %5978 = vmatprep.subr.mxu0 0.0
  %5979 = vmatpush1.msra.mxu0 0.0
  %5980 = vmatprep.subr.mxu0 0.0
  %5981 = vmatpush1.msra.mxu0 0.0
  %5982 = vmatprep.subr.mxu0 0.0
  %5983 = vmatpush1.msra.mxu0 0.0
  %5984 = vmatprep.subr.mxu0 0.0
  %5985 = vmatpush1.msra.mxu0 0.0
  %5986 = vmatprep.subr.mxu0 0.0
  %5987 = vmatpush1.msra.mxu0 0.0
  %5988 = vmatprep.subr.mxu0 0.0
  %5989 = vmatpush1.msra.mxu0 0.0
  %5990 = vmatprep.subr.mxu0 0.0
  %5991 = vmatpush1.msra.mxu0 0.0
  %5992 = vmatprep.subr.mxu0 0.0
  %5993 = vmatpush1.msra.mxu0 0.0
  %5994 = vmatprep.subr.mxu0 0.0
  %5995 = vmatpush1.msra.mxu0 0.0
  %5996 = vmatprep.subr.mxu0 0.0
  %5997 = vmatpush1.msra.mxu0 0.0
  %5998 = vmatprep.subr.mxu0 0.0
  %5999 = vmatpush1.msra.mxu0 0.0
  %6000 = vmatprep.subr.mxu0 0.0
  %6001 = vmatpush1.msra.mxu0 0.0
  %6002 = vmatprep.subr.mxu0 %v5902
  %6003 = vmatpush1.msra.mxu0 %v5901
  %6004 = vmatprep.subr.mxu0 %v5900
  %6005 = vmatpush1.msra.mxu0 %v5899
  %6006 = vmatprep.subr.mxu0 %v5898
  %6007 = vmatpush1.msra.mxu0 %v5897
  %6008 = vmatprep.subr.mxu0 %v5896
  %6009 = vmatpush1.msra.mxu0 %v5895
  %6010 = vmatprep.subr.mxu0 0.0
  %6011 = vmatpush2.msra.mxu0 0.0
  %6012 = vmatprep.subr.mxu0 0.0
  %6013 = vmatpush2.msra.mxu0 0.0
  %6014 = vmatprep.subr.mxu0 0.0
  %6015 = vmatpush2.msra.mxu0 0.0
  %6016 = vmatprep.subr.mxu0 0.0
  %6017 = vmatpush2.msra.mxu0 0.0
  %6018 = vmatprep.subr.mxu0 0.0
  %6019 = vmatpush2.msra.mxu0 0.0
  %6020 = vmatprep.subr.mxu0 0.0
  %6021 = vmatpush2.msra.mxu0 0.0
  %6022 = vmatprep.subr.mxu0 0.0
  %6023 = vmatpush2.msra.mxu0 0.0
  %6024 = vmatprep.subr.mxu0 0.0
  %6025 = vmatpush2.msra.mxu0 0.0
  %6026 = vmatprep.subr.mxu0 0.0
  %6027 = vmatpush2.msra.mxu0 0.0
  %6028 = vmatprep.subr.mxu0 0.0
  %6029 = vmatpush2.msra.mxu0 0.0
  %6030 = vmatprep.subr.mxu0 0.0
  %6031 = vmatpush2.msra.mxu0 0.0
  %6032 = vmatprep.subr.mxu0 0.0
  %6033 = vmatpush2.msra.mxu0 0.0
  %6034 = vmatprep.subr.mxu0 0.0
  %6035 = vmatpush2.msra.mxu0 0.0
  %6036 = vmatprep.subr.mxu0 0.0
  %6037 = vmatpush2.msra.mxu0 0.0
  %6038 = vmatprep.subr.mxu0 0.0
  %6039 = vmatpush2.msra.mxu0 0.0
  %6040 = vmatprep.subr.mxu0 0.0
  %6041 = vmatpush2.msra.mxu0 0.0
  %6042 = vmatprep.mubr.f32.mxu0 0.0
  %6043 = vmatmul.mubr.f32.gmra.mxu0 %v5905
  %v6044 = vpop.f32.mrf.mxu0
  %v6045 = vadd.f32 0.0, %v6044
  %v6046 = vpop.f32.mrf.mxu0
  %v6047 = vadd.f32 0.0, %v6046
  %6048 = vdwg.mxu0
  %v6049 = vld [vmem:[%s21] sm:$0xff]
  %v6050 = vld [vmem:[%s22] sm:$0xff]
  %v6051 = vadd.f32 %v5974, %v5976
  %v6052 = vadd.f32 %v6051, %v6045
  %v6053 = vadd.f32 %v6052, %v6047
  %6054 = vadd.xlane.f32.xlu0 %v6053
  %v6055 = vpop.xlane.xlu0 %6054
  %v6056 = vmul.f32 %v6055, 0.001953125
  %v6057 = vmul.f32 %v5974, %v5974
  %v6058 = vmul.f32 %v5976, %v5976
  %v6059 = vmul.f32 %v6045, %v6045
  %v6060 = vmul.f32 %v6047, %v6047
  %v6061 = vadd.f32 %v6057, %v6058
  %v6062 = vadd.f32 %v6061, %v6059
  %v6063 = vadd.f32 %v6062, %v6060
  %6064 = vadd.xlane.f32.xlu0 %v6063
  %v6065 = vpop.xlane.xlu0 %6064
  %v6066 = vmul.f32 %v6065, 0.001953125
  %v6067 = vmul.f32 %v6056, %v6056
  %v6068 = vsub.f32 %v6066, %v6067
  %v6069 = vsub.f32 %v5974, %v6056
  %v6070 = vsub.f32 %v5976, %v6056
  %v6071 = vsub.f32 %v6045, %v6056
  %v6072 = vsub.f32 %v6047, %v6056
  %v6073 = vadd.f32 %v6068, 1e-05
  %v6074 = vrsqrt.pop %v6073
  %v6075 = vmul.f32 %v6069, %v6074
  %v6076 = vmul.f32 %v6070, %v6074
  %v6077 = vmul.f32 %v6071, %v6074
  %v6078 = vmul.f32 %v6072, %v6074
  %6080 = vset.pattern.permute.xlu0 0
  %6081 = vperm.xlu0 %6080, %v6049
  %v6082 = vpop.permute.xlu0 %6081
  %v6084 = vmul.f32 %v6075, %v6082
  %v6085 = vmul.f32 %v6076, %v6082
  %v6086 = vmul.f32 %v6077, %v6082
  %v6087 = vmul.f32 %v6078, %v6082
  %6089 = vset.pattern.permute.xlu0 0
  %6090 = vperm.xlu0 %6089, %v6050
  %v6091 = vpop.permute.xlu0 %6090
  %v6093 = vadd.f32 %v6084, %v6091
  %v6094 = vadd.f32 %v6085, %v6091
  %v6095 = vadd.f32 %v6086, %v6091
  %v6096 = vadd.f32 %v6087, %v6091
  %v6097 = vadd.f32 %v76, %v6093
  %v6098 = vadd.f32 %v77, %v6094
  %v6099 = vadd.f32 %v78, %v6095
  %v6100 = vadd.f32 %v79, %v6096
  %6101 = vst [vmem:[%s23] sm:$0xff] %v6097
  %6102 = vst [vmem:[%s23 + $0x8] sm:$0xff] %v6098
  %6103 = vst [vmem:[%s23 + $0x10] sm:$0xff] %v6099
  %6104 = vst [vmem:[%s23 + $0x18] sm:$0xff] %v6100
  // Predicated region
  $region94: #{mbconv_forward.1} parent=0 // pred_check
    _
  $region95: #{mbconv_forward.1} parent=0 // pred_check_branch
    %6106 = sbr.rel (0) target = $region97
  $region96: #{mbconv_forward.1} parent=0 // pred_region
    _
  $region97: #{mbconv_forward.1} parent=0 // pred_fallthru
    _
  // Predicated region
  $region98: #{mbconv_forward.1} parent=0 // pred_check
    _
  $region99: #{mbconv_forward.1} parent=0 // pred_check_branch
    %6108 = sbr.rel (0) target = $region101
  $region100: #{mbconv_forward.1} parent=0 // pred_region
    _
  $region101: #{mbconv_forward.1} parent=0 // pred_fallthru
    _

</llo_original>
